<compile_context>
chip_gen: v6e
topology: v6e:2x2x1
jax: 0.10.0
libtpu: 0.0.40
codegen_flags: <defaults>
</compile_context>

<pallas_src>
import functools

import jax
import jax.numpy as jnp
from jax.experimental import pallas as pl
from jax.experimental.pallas import tpu as pltpu


def _resblock_kernel(x_ref, w1_ref, w2_ref, b1_ref, b2_ref, o_ref, xpad_ref,
                     *, K, TH, res_scale):
    # x_ref: (H, W, C) f32 (whole image, resident across the tile axis)
    # w*_ref: (K*K*C, C) mm_dtype,  b*_ref: (1, C) f32
    # o_ref: (TH, W, C),  xpad_ref: (TH+4P, Wp, C) mm_dtype scratch
    H, W, C = x_ref.shape
    P = K // 2
    Wp = W + 2 * P
    R1 = TH + 2 * P                      # conv1 output rows (halo for conv2)
    mm_dtype = xpad_ref.dtype

    t = pl.program_id(1)
    n_tiles = pl.num_programs(1)
    row0 = pl.multiple_of(t * TH, TH)    # first image row of this tile

    def load_rows(start, num):
        # (num, W, C) f32 slab of the resident input image.
        return x_ref[pl.ds(start, num), :, :]

    def wpad(v):
        # (R, W, C) -> (R, Wp, C): fold the zero column halo into the value so
        # every scratch store is a full-width plane store (no stripe zeroing).
        if P == 0:
            return v
        z = jnp.zeros((v.shape[0], P, C), v.dtype)
        return jnp.concatenate([z, v, z], axis=1)

    def conv_taps(w_ref, rows):
        # sum_{ky,kx} patch(ky,kx) @ w[ky,kx] -> (rows*W, C) f32 accumulator.
        acc = jnp.zeros((rows * W, C), jnp.float32)
        for ky in range(K):
            for kx in range(K):
                patch = xpad_ref[ky:ky + rows, kx:kx + W, :].reshape(rows * W, C)
                tap = ky * K + kx
                wtap = w_ref[tap * C:(tap + 1) * C, :]
                acc = acc + jnp.dot(patch, wtap,
                                    preferred_element_type=jnp.float32)
        return acc

    # ---- conv1 padded input: image rows [row0-2P, row0+TH+2P) + W halo ----
    xpad_ref[2 * P:2 * P + TH] = wpad(load_rows(row0, TH).astype(mm_dtype))

    @pl.when(t == 0)
    def _():
        xpad_ref[0:2 * P] = jnp.zeros((2 * P, Wp, C), mm_dtype)

    @pl.when(t > 0)
    def _():
        xpad_ref[0:2 * P] = wpad(load_rows(row0 - 2 * P, 2 * P).astype(mm_dtype))

    @pl.when(t == n_tiles - 1)
    def _():
        xpad_ref[2 * P + TH:4 * P + TH] = jnp.zeros((2 * P, Wp, C), mm_dtype)

    @pl.when(t < n_tiles - 1)
    def _():
        xpad_ref[2 * P + TH:4 * P + TH] = wpad(
            load_rows(row0 + TH, 2 * P).astype(mm_dtype))

    # ---- conv1 + bias + ReLU over TH + 2P rows (halo rows for conv2) ----
    h = jnp.maximum(conv_taps(w1_ref, R1) + b1_ref[...], 0.0)

    # ---- conv2 padded input: reuse the same scratch, rows [0, R1) ----
    xpad_ref[0:R1] = wpad(h.reshape(R1, W, C).astype(mm_dtype))

    # conv1-output rows that fall outside the image must look like conv2's
    # zero padding (not conv1 applied to zero padding).
    @pl.when(t == 0)
    def _():
        xpad_ref[0:P] = jnp.zeros((P, Wp, C), mm_dtype)

    @pl.when(t == n_tiles - 1)
    def _():
        xpad_ref[TH + P:TH + 2 * P] = jnp.zeros((P, Wp, C), mm_dtype)

    # ---- conv2 + bias, then residual (f32) ----
    res = conv_taps(w2_ref, TH) + b2_ref[...]
    if res_scale != 1.0:
        res = res * res_scale
    out = res + load_rows(row0, TH).reshape(TH * W, C).astype(jnp.float32)
    o_ref[...] = out.reshape(TH, W, C).astype(o_ref.dtype)


def _padded_bytes(shape, dtype):
    """Rough VMEM footprint of `shape` with (8,128)-tile padding on minor dims."""
    lead = 1
    for d in shape[:-2]:
        lead *= int(d)
    s = shape[-2] if len(shape) >= 2 else 1
    l = shape[-1]
    s_p = -(-int(s) // 8) * 8
    l_p = -(-int(l) // 128) * 128
    return lead * s_p * l_p * jnp.dtype(dtype).itemsize


def resblock_forward(x_nhwc, w1, w2, b1, b2, *, res_scale=1.0,
                     use_bf16_matmul=True, tile_h=None):
    """x_nhwc: [N, H, W, C] f32.  w: [K, K, Cin=C, Cout=C] (HWIO).  b: [C]."""
    N, H, W, C = x_nhwc.shape
    K = w1.shape[0]
    P = K // 2
    Wp = W + 2 * P

    TH = H if tile_h is None else int(tile_h)
    assert H % TH == 0, "tile_h must divide H"
    assert TH >= 2 * P, "tile_h must be >= 2 * (kernel_size // 2)"
    n_tiles = H // TH
    R1 = TH + 2 * P

    mm_dtype = jnp.bfloat16 if use_bf16_matmul else jnp.float32
    # One-time reshape of the conv weights to per-tap GEMM form (K*K*Cin, Cout);
    # row order (ky, kx, ci) matches the in-kernel tap slices.
    w1_mat = w1.reshape(K * K * C, C).astype(mm_dtype)
    w2_mat = w2.reshape(K * K * C, C).astype(mm_dtype)
    b1_2d = b1.reshape(1, C).astype(jnp.float32)
    b2_2d = b2.reshape(1, C).astype(jnp.float32)

    kernel = functools.partial(_resblock_kernel, K=K, TH=TH,
                               res_scale=float(res_scale))

    # VMEM budget (double-buffered blocks + scratch + accumulator/temps).
    est = (2 * _padded_bytes((H, W, C), jnp.float32)          # x block
           + 2 * _padded_bytes((TH, W, C), x_nhwc.dtype)      # out block
           + 4 * _padded_bytes((K * K * C, C), mm_dtype)      # w1, w2
           + 4 * _padded_bytes((1, C), jnp.float32)           # b1, b2
           + _padded_bytes((TH + 4 * P, Wp, C), mm_dtype)     # padded scratch
           + 3 * _padded_bytes((R1 * W, C), jnp.float32))     # acc + temps
    vmem_limit = None if est < (24 << 20) else int(min(96 << 20, 2 * est))

    cost = pl.CostEstimate(
        flops=4 * N * H * W * K * K * C * C,                  # 2 convs, 2 flop/MAC
        transcendentals=0,
        bytes_accessed=(2 * x_nhwc.size * x_nhwc.dtype.itemsize
                        + 2 * K * K * C * C * jnp.dtype(mm_dtype).itemsize
                        + 2 * C * 4))

    return pl.pallas_call(
        kernel,
        out_shape=jax.ShapeDtypeStruct((N, H, W, C), x_nhwc.dtype),
        grid_spec=pltpu.PrefetchScalarGridSpec(
            num_scalar_prefetch=0,
            grid=(N, n_tiles),
            in_specs=[
                # Whole image resident across the tile axis (index map ignores
                # t, so Pallas does not re-fetch it per tile).
                pl.BlockSpec((None, H, W, C), lambda n, t: (n, 0, 0, 0)),   # x
                pl.BlockSpec((K * K * C, C), lambda n, t: (0, 0)),          # w1
                pl.BlockSpec((K * K * C, C), lambda n, t: (0, 0)),          # w2
                pl.BlockSpec((1, C), lambda n, t: (0, 0)),                  # b1
                pl.BlockSpec((1, C), lambda n, t: (0, 0)),                  # b2
            ],
            out_specs=pl.BlockSpec((None, TH, W, C), lambda n, t: (n, t, 0, 0)),
            scratch_shapes=[pltpu.VMEM((TH + 4 * P, Wp, C), mm_dtype)],
        ),
        compiler_params=pltpu.CompilerParams(
            dimension_semantics=("parallel", "parallel"),
            vmem_limit_bytes=vmem_limit),
        cost_estimate=cost,
    )(x_nhwc, w1_mat, w2_mat, b1_2d, b2_2d)


def _reference(x_nhwc, w1, w2, b1, b2, res_scale=1.0):
    """Pure-JAX reference (NHWC / HWIO convs), for correctness check."""
    dn = ("NHWC", "HWIO", "NHWC")
    h = jax.lax.conv_general_dilated(x_nhwc, w1, (1, 1), "SAME",
                                     dimension_numbers=dn) + b1
    h = jnp.maximum(h, 0.0)
    h = jax.lax.conv_general_dilated(h, w2, (1, 1), "SAME",
                                     dimension_numbers=dn) + b2
    return h * res_scale + x_nhwc


if __name__ == "__main__":
    # Small shapes consistent with the module: n_feats=4, kernel_size=3.
    N, H, W, C, K = 2, 16, 16, 4, 3

    key = jax.random.PRNGKey(0)
    kx, kw1, kw2, kb1, kb2 = jax.random.split(key, 5)

    x = jax.random.normal(kx, (N, H, W, C), dtype=jnp.float32)
    w1 = jax.random.normal(kw1, (K, K, C, C), dtype=jnp.float32) * 0.1
    w2 = jax.random.normal(kw2, (K, K, C, C), dtype=jnp.float32) * 0.1
    b1 = jax.random.normal(kb1, (C,), dtype=jnp.float32) * 0.1
    b2 = jax.random.normal(kb2, (C,), dtype=jnp.float32) * 0.1

    ref1 = _reference(x, w1, w2, b1, b2, res_scale=1.0)

    # 1) Single-tile, bf16 MXU operands with f32 accumulation.
    out_a = jax.block_until_ready(
        resblock_forward(x, w1, w2, b1, b2, res_scale=1.0,
                         use_bf16_matmul=True, tile_h=None))
    assert out_a.shape == (N, H, W, C)
    assert jnp.allclose(out_a, ref1, atol=5e-2, rtol=5e-2), \
        f"bf16 (untiled) max err {jnp.max(jnp.abs(out_a - ref1))}"

    # 2) Spatially H-tiled path (exercises halo + boundary handling), bf16.
    out_b = jax.block_until_ready(
        resblock_forward(x, w1, w2, b1, b2, res_scale=1.0,
                         use_bf16_matmul=True, tile_h=8))
    assert jnp.allclose(out_b, ref1, atol=5e-2, rtol=5e-2), \
        f"bf16 (tiled) max err {jnp.max(jnp.abs(out_b - ref1))}"

    # 3) Full-f32 tiled path, tighter tolerance.
    out_c = jax.block_until_ready(
        resblock_forward(x, w1, w2, b1, b2, res_scale=1.0,
                         use_bf16_matmul=False, tile_h=8))
    assert jnp.allclose(out_c, ref1, atol=2e-3, rtol=2e-3), \
        f"f32 (tiled) max err {jnp.max(jnp.abs(out_c - ref1))}"

    # 4) Non-unit res_scale (exercises the scale branch), f32.
    ref2 = _reference(x, w1, w2, b1, b2, res_scale=0.1)
    out_d = jax.block_until_ready(
        resblock_forward(x, w1, w2, b1, b2, res_scale=0.1,
                         use_bf16_matmul=False, tile_h=8))
    assert jnp.allclose(out_d, ref2, atol=2e-3, rtol=2e-3), \
        f"res_scale max err {jnp.max(jnp.abs(out_d - ref2))}"

    print("KERNEL_OK")
</pallas_src>

<mosaic_0001>
module attributes {stable_mosaic.version = 11 : i64} {
  func.func @_resblock_kernel(%arg0: i32, %arg1: i32, %arg2: memref<1x16x16x4xf32, #tpu.memory_space<vmem>>, %arg3: memref<36x4xbf16, #tpu.memory_space<vmem>>, %arg4: memref<36x4xbf16, #tpu.memory_space<vmem>>, %arg5: memref<1x4xf32, #tpu.memory_space<vmem>>, %arg6: memref<1x4xf32, #tpu.memory_space<vmem>>, %arg7: memref<1x16x16x4xf32, #tpu.memory_space<vmem>>, %arg8: memref<20x18x4xbf16, #tpu.memory_space<vmem>>) attributes {dimension_semantics = [#tpu.dimension_semantics<parallel>, #tpu.dimension_semantics<parallel>], iteration_bounds = array<i64: 2, 1>, scalar_prefetch = 0 : i64, scratch_operands = 1 : i64, tpu.core_type = #tpu.core_type<tc>, window_params = [{transform_indices = @transform_0, window_bounds = array<i64: 1, 16, 16, 4>}, {pipeline_mode = #tpu.pipeline_mode<synchronous>, transform_indices = @transform_1, window_bounds = array<i64: 36, 4>}, {pipeline_mode = #tpu.pipeline_mode<synchronous>, transform_indices = @transform_2, window_bounds = array<i64: 36, 4>}, {pipeline_mode = #tpu.pipeline_mode<synchronous>, transform_indices = @transform_3, window_bounds = array<i64: 1, 4>}, {pipeline_mode = #tpu.pipeline_mode<synchronous>, transform_indices = @transform_4, window_bounds = array<i64: 1, 4>}, {transform_indices = @transform_5, window_bounds = array<i64: 1, 16, 16, 4>}]} {
    %c16_i32 = arith.constant 16 : i32
    %0 = arith.muli %arg1, %c16_i32 : i32
    %1 = tpu.assume_multiple %0, 16 : i32
    %c0 = arith.constant 0 : index
    %2 = arith.index_cast %1 : i32 to index
    %c0_0 = arith.constant 0 : index
    %c0_1 = arith.constant 0 : index
    %3 = vector.load %arg2[%c0, %2, %c0_0, %c0_1] : memref<1x16x16x4xf32, #tpu.memory_space<vmem>>, vector<1x16x16x4xf32>
    %4 = vector.shape_cast %3 : vector<1x16x16x4xf32> to vector<16x16x4xf32>
    %5 = arith.truncf %4 : vector<16x16x4xf32> to vector<16x16x4xbf16>
    %cst = arith.constant 0.000000e+00 : bf16
    %6 = vector.broadcast %cst : bf16 to vector<16x1x4xbf16>
    %7 = tpu.concatenate %6, %5, %6 in 1 : vector<16x1x4xbf16>, vector<16x16x4xbf16>, vector<16x1x4xbf16> -> vector<16x18x4xbf16>
    %c2 = arith.constant 2 : index
    %c0_2 = arith.constant 0 : index
    %c0_3 = arith.constant 0 : index
    %8 = vector.load %arg8[%c2, %c0_2, %c0_3] : memref<20x18x4xbf16, #tpu.memory_space<vmem>>, vector<16x18x4xbf16>
    tpu.vector_store %arg8[%c2, %c0_2, %c0_3], %7 {strides = array<i32>} : memref<20x18x4xbf16, #tpu.memory_space<vmem>>, vector<16x18x4xbf16>,
    %c0_i32 = arith.constant 0 : i32
    %9 = arith.cmpi eq, %arg1, %c0_i32 : i32
    %10 = arith.extui %9 : i1 to i32
    %c0_i32_4 = arith.constant 0 : i32
    %11 = arith.cmpi ne, %10, %c0_i32_4 : i32
    scf.if %11 {
      %cst_132 = arith.constant 0.000000e+00 : bf16
      %141 = vector.broadcast %cst_132 : bf16 to vector<2x18x4xbf16>
      %c0_133 = arith.constant 0 : index
      %c0_134 = arith.constant 0 : index
      %c0_135 = arith.constant 0 : index
      %142 = vector.load %arg8[%c0_133, %c0_134, %c0_135] : memref<20x18x4xbf16, #tpu.memory_space<vmem>>, vector<2x18x4xbf16>
      tpu.vector_store %arg8[%c0_133, %c0_134, %c0_135], %141 {strides = array<i32>} : memref<20x18x4xbf16, #tpu.memory_space<vmem>>, vector<2x18x4xbf16>,
    } else {
    }
    %c0_i32_5 = arith.constant 0 : i32
    %12 = arith.cmpi sgt, %arg1, %c0_i32_5 : i32
    %13 = arith.extui %12 : i1 to i32
    %c0_i32_6 = arith.constant 0 : i32
    %14 = arith.cmpi ne, %13, %c0_i32_6 : i32
    scf.if %14 {
      %c2_i32 = arith.constant 2 : i32
      %141 = arith.subi %1, %c2_i32 : i32
      %c0_132 = arith.constant 0 : index
      %142 = arith.index_cast %141 : i32 to index
      %c0_133 = arith.constant 0 : index
      %c0_134 = arith.constant 0 : index
      %143 = vector.load %arg2[%c0_132, %142, %c0_133, %c0_134] : memref<1x16x16x4xf32, #tpu.memory_space<vmem>>, vector<1x2x16x4xf32>
      %144 = vector.shape_cast %143 : vector<1x2x16x4xf32> to vector<2x16x4xf32>
      %145 = arith.truncf %144 : vector<2x16x4xf32> to vector<2x16x4xbf16>
      %cst_135 = arith.constant 0.000000e+00 : bf16
      %146 = vector.broadcast %cst_135 : bf16 to vector<2x1x4xbf16>
      %147 = tpu.concatenate %146, %145, %146 in 1 : vector<2x1x4xbf16>, vector<2x16x4xbf16>, vector<2x1x4xbf16> -> vector<2x18x4xbf16>
      %c0_136 = arith.constant 0 : index
      %c0_137 = arith.constant 0 : index
      %c0_138 = arith.constant 0 : index
      %148 = vector.load %arg8[%c0_136, %c0_137, %c0_138] : memref<20x18x4xbf16, #tpu.memory_space<vmem>>, vector<2x18x4xbf16>
      tpu.vector_store %arg8[%c0_136, %c0_137, %c0_138], %147 {strides = array<i32>} : memref<20x18x4xbf16, #tpu.memory_space<vmem>>, vector<2x18x4xbf16>,
    } else {
    }
    %c0_i32_7 = arith.constant 0 : i32
    %15 = arith.cmpi eq, %arg1, %c0_i32_7 : i32
    %16 = arith.extui %15 : i1 to i32
    %c0_i32_8 = arith.constant 0 : i32
    %17 = arith.cmpi ne, %16, %c0_i32_8 : i32
    scf.if %17 {
      %cst_132 = arith.constant 0.000000e+00 : bf16
      %141 = vector.broadcast %cst_132 : bf16 to vector<2x18x4xbf16>
      %c18 = arith.constant 18 : index
      %c0_133 = arith.constant 0 : index
      %c0_134 = arith.constant 0 : index
      %142 = vector.load %arg8[%c18, %c0_133, %c0_134] : memref<20x18x4xbf16, #tpu.memory_space<vmem>>, vector<2x18x4xbf16>
      tpu.vector_store %arg8[%c18, %c0_133, %c0_134], %141 {strides = array<i32>} : memref<20x18x4xbf16, #tpu.memory_space<vmem>>, vector<2x18x4xbf16>,
    } else {
    }
    %c0_i32_9 = arith.constant 0 : i32
    %18 = arith.cmpi slt, %arg1, %c0_i32_9 : i32
    %19 = arith.extui %18 : i1 to i32
    %c0_i32_10 = arith.constant 0 : i32
    %20 = arith.cmpi ne, %19, %c0_i32_10 : i32
    scf.if %20 {
      %c16_i32_132 = arith.constant 16 : i32
      %141 = arith.addi %1, %c16_i32_132 : i32
      %c0_133 = arith.constant 0 : index
      %142 = arith.index_cast %141 : i32 to index
      %c0_134 = arith.constant 0 : index
      %c0_135 = arith.constant 0 : index
      %143 = vector.load %arg2[%c0_133, %142, %c0_134, %c0_135] : memref<1x16x16x4xf32, #tpu.memory_space<vmem>>, vector<1x2x16x4xf32>
      %144 = vector.shape_cast %143 : vector<1x2x16x4xf32> to vector<2x16x4xf32>
      %145 = arith.truncf %144 : vector<2x16x4xf32> to vector<2x16x4xbf16>
      %cst_136 = arith.constant 0.000000e+00 : bf16
      %146 = vector.broadcast %cst_136 : bf16 to vector<2x1x4xbf16>
      %147 = tpu.concatenate %146, %145, %146 in 1 : vector<2x1x4xbf16>, vector<2x16x4xbf16>, vector<2x1x4xbf16> -> vector<2x18x4xbf16>
      %c18 = arith.constant 18 : index
      %c0_137 = arith.constant 0 : index
      %c0_138 = arith.constant 0 : index
      %148 = vector.load %arg8[%c18, %c0_137, %c0_138] : memref<20x18x4xbf16, #tpu.memory_space<vmem>>, vector<2x18x4xbf16>
      tpu.vector_store %arg8[%c18, %c0_137, %c0_138], %147 {strides = array<i32>} : memref<20x18x4xbf16, #tpu.memory_space<vmem>>, vector<2x18x4xbf16>,
    } else {
    }
    %cst_11 = arith.constant 0.000000e+00 : f32
    %21 = vector.broadcast %cst_11 : f32 to vector<288x4xf32>
    %c0_12 = arith.constant 0 : index
    %c0_13 = arith.constant 0 : index
    %c0_14 = arith.constant 0 : index
    %22 = vector.load %arg8[%c0_12, %c0_13, %c0_14] : memref<20x18x4xbf16, #tpu.memory_space<vmem>>, vector<18x16x4xbf16>
    %23 = vector.shape_cast %22 : vector<18x16x4xbf16> to vector<288x4xbf16>
    %c0_15 = arith.constant 0 : index
    %c0_16 = arith.constant 0 : index
    %24 = vector.load %arg3[%c0_15, %c0_16] : memref<36x4xbf16, #tpu.memory_space<vmem>>, vector<4x4xbf16>
    %cst_17 = arith.constant dense<0.000000e+00> : vector<288x4xf32>
    %25 = tpu.matmul %23, %24, %cst_17 {dimension_numbers = #tpu.dot_dimension_numbers<[1], [0], [0], [1], [0, 0, 1, 1], [], []>} : vector<288x4xbf16>, vector<4x4xbf16>, vector<288x4xf32> -> vector<288x4xf32>
    %26 = arith.addf %21, %25 : vector<288x4xf32>
    %c0_18 = arith.constant 0 : index
    %c1 = arith.constant 1 : index
    %c0_19 = arith.constant 0 : index
    %27 = vector.load %arg8[%c0_18, %c1, %c0_19] : memref<20x18x4xbf16, #tpu.memory_space<vmem>>, vector<18x16x4xbf16>
    %28 = vector.shape_cast %27 : vector<18x16x4xbf16> to vector<288x4xbf16>
    %c4 = arith.constant 4 : index
    %c0_20 = arith.constant 0 : index
    %29 = vector.load %arg3[%c4, %c0_20] : memref<36x4xbf16, #tpu.memory_space<vmem>>, vector<4x4xbf16>
    %cst_21 = arith.constant dense<0.000000e+00> : vector<288x4xf32>
    %30 = tpu.matmul %28, %29, %cst_21 {dimension_numbers = #tpu.dot_dimension_numbers<[1], [0], [0], [1], [0, 0, 1, 1], [], []>} : vector<288x4xbf16>, vector<4x4xbf16>, vector<288x4xf32> -> vector<288x4xf32>
    %31 = arith.addf %26, %30 : vector<288x4xf32>
    %c0_22 = arith.constant 0 : index
    %c2_23 = arith.constant 2 : index
    %c0_24 = arith.constant 0 : index
    %32 = vector.load %arg8[%c0_22, %c2_23, %c0_24] : memref<20x18x4xbf16, #tpu.memory_space<vmem>>, vector<18x16x4xbf16>
    %33 = vector.shape_cast %32 : vector<18x16x4xbf16> to vector<288x4xbf16>
    %c8 = arith.constant 8 : index
    %c0_25 = arith.constant 0 : index
    %34 = vector.load %arg3[%c8, %c0_25] : memref<36x4xbf16, #tpu.memory_space<vmem>>, vector<4x4xbf16>
    %cst_26 = arith.constant dense<0.000000e+00> : vector<288x4xf32>
    %35 = tpu.matmul %33, %34, %cst_26 {dimension_numbers = #tpu.dot_dimension_numbers<[1], [0], [0], [1], [0, 0, 1, 1], [], []>} : vector<288x4xbf16>, vector<4x4xbf16>, vector<288x4xf32> -> vector<288x4xf32>
    %36 = arith.addf %31, %35 : vector<288x4xf32>
    %c1_27 = arith.constant 1 : index
    %c0_28 = arith.constant 0 : index
    %c0_29 = arith.constant 0 : index
    %37 = vector.load %arg8[%c1_27, %c0_28, %c0_29] : memref<20x18x4xbf16, #tpu.memory_space<vmem>>, vector<18x16x4xbf16>
    %38 = vector.shape_cast %37 : vector<18x16x4xbf16> to vector<288x4xbf16>
    %c12 = arith.constant 12 : index
    %c0_30 = arith.constant 0 : index
    %39 = vector.load %arg3[%c12, %c0_30] : memref<36x4xbf16, #tpu.memory_space<vmem>>, vector<4x4xbf16>
    %cst_31 = arith.constant dense<0.000000e+00> : vector<288x4xf32>
    %40 = tpu.matmul %38, %39, %cst_31 {dimension_numbers = #tpu.dot_dimension_numbers<[1], [0], [0], [1], [0, 0, 1, 1], [], []>} : vector<288x4xbf16>, vector<4x4xbf16>, vector<288x4xf32> -> vector<288x4xf32>
    %41 = arith.addf %36, %40 : vector<288x4xf32>
    %c1_32 = arith.constant 1 : index
    %c1_33 = arith.constant 1 : index
    %c0_34 = arith.constant 0 : index
    %42 = vector.load %arg8[%c1_32, %c1_33, %c0_34] : memref<20x18x4xbf16, #tpu.memory_space<vmem>>, vector<18x16x4xbf16>
    %43 = vector.shape_cast %42 : vector<18x16x4xbf16> to vector<288x4xbf16>
    %c16 = arith.constant 16 : index
    %c0_35 = arith.constant 0 : index
    %44 = vector.load %arg3[%c16, %c0_35] : memref<36x4xbf16, #tpu.memory_space<vmem>>, vector<4x4xbf16>
    %cst_36 = arith.constant dense<0.000000e+00> : vector<288x4xf32>
    %45 = tpu.matmul %43, %44, %cst_36 {dimension_numbers = #tpu.dot_dimension_numbers<[1], [0], [0], [1], [0, 0, 1, 1], [], []>} : vector<288x4xbf16>, vector<4x4xbf16>, vector<288x4xf32> -> vector<288x4xf32>
    %46 = arith.addf %41, %45 : vector<288x4xf32>
    %c1_37 = arith.constant 1 : index
    %c2_38 = arith.constant 2 : index
    %c0_39 = arith.constant 0 : index
    %47 = vector.load %arg8[%c1_37, %c2_38, %c0_39] : memref<20x18x4xbf16, #tpu.memory_space<vmem>>, vector<18x16x4xbf16>
    %48 = vector.shape_cast %47 : vector<18x16x4xbf16> to vector<288x4xbf16>
    %c20 = arith.constant 20 : index
    %c0_40 = arith.constant 0 : index
    %49 = vector.load %arg3[%c20, %c0_40] : memref<36x4xbf16, #tpu.memory_space<vmem>>, vector<4x4xbf16>
    %cst_41 = arith.constant dense<0.000000e+00> : vector<288x4xf32>
    %50 = tpu.matmul %48, %49, %cst_41 {dimension_numbers = #tpu.dot_dimension_numbers<[1], [0], [0], [1], [0, 0, 1, 1], [], []>} : vector<288x4xbf16>, vector<4x4xbf16>, vector<288x4xf32> -> vector<288x4xf32>
    %51 = arith.addf %46, %50 : vector<288x4xf32>
    %c2_42 = arith.constant 2 : index
    %c0_43 = arith.constant 0 : index
    %c0_44 = arith.constant 0 : index
    %52 = vector.load %arg8[%c2_42, %c0_43, %c0_44] : memref<20x18x4xbf16, #tpu.memory_space<vmem>>, vector<18x16x4xbf16>
    %53 = vector.shape_cast %52 : vector<18x16x4xbf16> to vector<288x4xbf16>
    %c24 = arith.constant 24 : index
    %c0_45 = arith.constant 0 : index
    %54 = vector.load %arg3[%c24, %c0_45] : memref<36x4xbf16, #tpu.memory_space<vmem>>, vector<4x4xbf16>
    %cst_46 = arith.constant dense<0.000000e+00> : vector<288x4xf32>
    %55 = tpu.matmul %53, %54, %cst_46 {dimension_numbers = #tpu.dot_dimension_numbers<[1], [0], [0], [1], [0, 0, 1, 1], [], []>} : vector<288x4xbf16>, vector<4x4xbf16>, vector<288x4xf32> -> vector<288x4xf32>
    %56 = arith.addf %51, %55 : vector<288x4xf32>
    %c2_47 = arith.constant 2 : index
    %c1_48 = arith.constant 1 : index
    %c0_49 = arith.constant 0 : index
    %57 = vector.load %arg8[%c2_47, %c1_48, %c0_49] : memref<20x18x4xbf16, #tpu.memory_space<vmem>>, vector<18x16x4xbf16>
    %58 = vector.shape_cast %57 : vector<18x16x4xbf16> to vector<288x4xbf16>
    %c28 = arith.constant 28 : index
    %c0_50 = arith.constant 0 : index
    %59 = vector.load %arg3[%c28, %c0_50] : memref<36x4xbf16, #tpu.memory_space<vmem>>, vector<4x4xbf16>
    %cst_51 = arith.constant dense<0.000000e+00> : vector<288x4xf32>
    %60 = tpu.matmul %58, %59, %cst_51 {dimension_numbers = #tpu.dot_dimension_numbers<[1], [0], [0], [1], [0, 0, 1, 1], [], []>} : vector<288x4xbf16>, vector<4x4xbf16>, vector<288x4xf32> -> vector<288x4xf32>
    %61 = arith.addf %56, %60 : vector<288x4xf32>
    %c2_52 = arith.constant 2 : index
    %c2_53 = arith.constant 2 : index
    %c0_54 = arith.constant 0 : index
    %62 = vector.load %arg8[%c2_52, %c2_53, %c0_54] : memref<20x18x4xbf16, #tpu.memory_space<vmem>>, vector<18x16x4xbf16>
    %63 = vector.shape_cast %62 : vector<18x16x4xbf16> to vector<288x4xbf16>
    %c32 = arith.constant 32 : index
    %c0_55 = arith.constant 0 : index
    %64 = vector.load %arg3[%c32, %c0_55] : memref<36x4xbf16, #tpu.memory_space<vmem>>, vector<4x4xbf16>
    %cst_56 = arith.constant dense<0.000000e+00> : vector<288x4xf32>
    %65 = tpu.matmul %63, %64, %cst_56 {dimension_numbers = #tpu.dot_dimension_numbers<[1], [0], [0], [1], [0, 0, 1, 1], [], []>} : vector<288x4xbf16>, vector<4x4xbf16>, vector<288x4xf32> -> vector<288x4xf32>
    %66 = arith.addf %61, %65 : vector<288x4xf32>
    %c0_57 = arith.constant 0 : index
    %c0_58 = arith.constant 0 : index
    %67 = vector.load %arg5[%c0_57, %c0_58] : memref<1x4xf32, #tpu.memory_space<vmem>>, vector<1x4xf32>
    %68 = vector.broadcast %67 : vector<1x4xf32> to vector<288x4xf32>
    %69 = arith.addf %66, %68 : vector<288x4xf32>
    %cst_59 = arith.constant 0.000000e+00 : f32
    %70 = vector.broadcast %cst_59 : f32 to vector<288x4xf32>
    %71 = arith.maximumf %69, %70 : vector<288x4xf32>
    %72 = vector.shape_cast %71 : vector<288x4xf32> to vector<18x16x4xf32>
    %73 = arith.truncf %72 : vector<18x16x4xf32> to vector<18x16x4xbf16>
    %cst_60 = arith.constant 0.000000e+00 : bf16
    %74 = vector.broadcast %cst_60 : bf16 to vector<18x1x4xbf16>
    %75 = tpu.concatenate %74, %73, %74 in 1 : vector<18x1x4xbf16>, vector<18x16x4xbf16>, vector<18x1x4xbf16> -> vector<18x18x4xbf16>
    %c0_61 = arith.constant 0 : index
    %c0_62 = arith.constant 0 : index
    %c0_63 = arith.constant 0 : index
    %76 = vector.load %arg8[%c0_61, %c0_62, %c0_63] : memref<20x18x4xbf16, #tpu.memory_space<vmem>>, vector<18x18x4xbf16>
    tpu.vector_store %arg8[%c0_61, %c0_62, %c0_63], %75 {strides = array<i32>} : memref<20x18x4xbf16, #tpu.memory_space<vmem>>, vector<18x18x4xbf16>,
    %c0_i32_64 = arith.constant 0 : i32
    %77 = arith.cmpi eq, %arg1, %c0_i32_64 : i32
    %78 = arith.extui %77 : i1 to i32
    %c0_i32_65 = arith.constant 0 : i32
    %79 = arith.cmpi ne, %78, %c0_i32_65 : i32
    scf.if %79 {
      %cst_132 = arith.constant 0.000000e+00 : bf16
      %141 = vector.broadcast %cst_132 : bf16 to vector<1x18x4xbf16>
      %c0_133 = arith.constant 0 : index
      %c0_134 = arith.constant 0 : index
      %c0_135 = arith.constant 0 : index
      %142 = vector.load %arg8[%c0_133, %c0_134, %c0_135] : memref<20x18x4xbf16, #tpu.memory_space<vmem>>, vector<1x18x4xbf16>
      tpu.vector_store %arg8[%c0_133, %c0_134, %c0_135], %141 {strides = array<i32>} : memref<20x18x4xbf16, #tpu.memory_space<vmem>>, vector<1x18x4xbf16>,
    } else {
    }
    %c0_i32_66 = arith.constant 0 : i32
    %80 = arith.cmpi eq, %arg1, %c0_i32_66 : i32
    %81 = arith.extui %80 : i1 to i32
    %c0_i32_67 = arith.constant 0 : i32
    %82 = arith.cmpi ne, %81, %c0_i32_67 : i32
    scf.if %82 {
      %cst_132 = arith.constant 0.000000e+00 : bf16
      %141 = vector.broadcast %cst_132 : bf16 to vector<1x18x4xbf16>
      %c17 = arith.constant 17 : index
      %c0_133 = arith.constant 0 : index
      %c0_134 = arith.constant 0 : index
      %142 = vector.load %arg8[%c17, %c0_133, %c0_134] : memref<20x18x4xbf16, #tpu.memory_space<vmem>>, vector<1x18x4xbf16>
      tpu.vector_store %arg8[%c17, %c0_133, %c0_134], %141 {strides = array<i32>} : memref<20x18x4xbf16, #tpu.memory_space<vmem>>, vector<1x18x4xbf16>,
    } else {
    }
    %cst_68 = arith.constant 0.000000e+00 : f32
    %83 = vector.broadcast %cst_68 : f32 to vector<256x4xf32>
    %c0_69 = arith.constant 0 : index
    %c0_70 = arith.constant 0 : index
    %c0_71 = arith.constant 0 : index
    %84 = vector.load %arg8[%c0_69, %c0_70, %c0_71] : memref<20x18x4xbf16, #tpu.memory_space<vmem>>, vector<16x16x4xbf16>
    %85 = vector.shape_cast %84 : vector<16x16x4xbf16> to vector<256x4xbf16>
    %c0_72 = arith.constant 0 : index
    %c0_73 = arith.constant 0 : index
    %86 = vector.load %arg4[%c0_72, %c0_73] : memref<36x4xbf16, #tpu.memory_space<vmem>>, vector<4x4xbf16>
    %cst_74 = arith.constant dense<0.000000e+00> : vector<256x4xf32>
    %87 = tpu.matmul %85, %86, %cst_74 {dimension_numbers = #tpu.dot_dimension_numbers<[1], [0], [0], [1], [0, 0, 1, 1], [], []>} : vector<256x4xbf16>, vector<4x4xbf16>, vector<256x4xf32> -> vector<256x4xf32>
    %88 = arith.addf %83, %87 : vector<256x4xf32>
    %c0_75 = arith.constant 0 : index
    %c1_76 = arith.constant 1 : index
    %c0_77 = arith.constant 0 : index
    %89 = vector.load %arg8[%c0_75, %c1_76, %c0_77] : memref<20x18x4xbf16, #tpu.memory_space<vmem>>, vector<16x16x4xbf16>
    %90 = vector.shape_cast %89 : vector<16x16x4xbf16> to vector<256x4xbf16>
    %c4_78 = arith.constant 4 : index
    %c0_79 = arith.constant 0 : index
    %91 = vector.load %arg4[%c4_78, %c0_79] : memref<36x4xbf16, #tpu.memory_space<vmem>>, vector<4x4xbf16>
    %cst_80 = arith.constant dense<0.000000e+00> : vector<256x4xf32>
    %92 = tpu.matmul %90, %91, %cst_80 {dimension_numbers = #tpu.dot_dimension_numbers<[1], [0], [0], [1], [0, 0, 1, 1], [], []>} : vector<256x4xbf16>, vector<4x4xbf16>, vector<256x4xf32> -> vector<256x4xf32>
    %93 = arith.addf %88, %92 : vector<256x4xf32>
    %c0_81 = arith.constant 0 : index
    %c2_82 = arith.constant 2 : index
    %c0_83 = arith.constant 0 : index
    %94 = vector.load %arg8[%c0_81, %c2_82, %c0_83] : memref<20x18x4xbf16, #tpu.memory_space<vmem>>, vector<16x16x4xbf16>
    %95 = vector.shape_cast %94 : vector<16x16x4xbf16> to vector<256x4xbf16>
    %c8_84 = arith.constant 8 : index
    %c0_85 = arith.constant 0 : index
    %96 = vector.load %arg4[%c8_84, %c0_85] : memref<36x4xbf16, #tpu.memory_space<vmem>>, vector<4x4xbf16>
    %cst_86 = arith.constant dense<0.000000e+00> : vector<256x4xf32>
    %97 = tpu.matmul %95, %96, %cst_86 {dimension_numbers = #tpu.dot_dimension_numbers<[1], [0], [0], [1], [0, 0, 1, 1], [], []>} : vector<256x4xbf16>, vector<4x4xbf16>, vector<256x4xf32> -> vector<256x4xf32>
    %98 = arith.addf %93, %97 : vector<256x4xf32>
    %c1_87 = arith.constant 1 : index
    %c0_88 = arith.constant 0 : index
    %c0_89 = arith.constant 0 : index
    %99 = vector.load %arg8[%c1_87, %c0_88, %c0_89] : memref<20x18x4xbf16, #tpu.memory_space<vmem>>, vector<16x16x4xbf16>
    %100 = vector.shape_cast %99 : vector<16x16x4xbf16> to vector<256x4xbf16>
    %c12_90 = arith.constant 12 : index
    %c0_91 = arith.constant 0 : index
    %101 = vector.load %arg4[%c12_90, %c0_91] : memref<36x4xbf16, #tpu.memory_space<vmem>>, vector<4x4xbf16>
    %cst_92 = arith.constant dense<0.000000e+00> : vector<256x4xf32>
    %102 = tpu.matmul %100, %101, %cst_92 {dimension_numbers = #tpu.dot_dimension_numbers<[1], [0], [0], [1], [0, 0, 1, 1], [], []>} : vector<256x4xbf16>, vector<4x4xbf16>, vector<256x4xf32> -> vector<256x4xf32>
    %103 = arith.addf %98, %102 : vector<256x4xf32>
    %c1_93 = arith.constant 1 : index
    %c1_94 = arith.constant 1 : index
    %c0_95 = arith.constant 0 : index
    %104 = vector.load %arg8[%c1_93, %c1_94, %c0_95] : memref<20x18x4xbf16, #tpu.memory_space<vmem>>, vector<16x16x4xbf16>
    %105 = vector.shape_cast %104 : vector<16x16x4xbf16> to vector<256x4xbf16>
    %c16_96 = arith.constant 16 : index
    %c0_97 = arith.constant 0 : index
    %106 = vector.load %arg4[%c16_96, %c0_97] : memref<36x4xbf16, #tpu.memory_space<vmem>>, vector<4x4xbf16>
    %cst_98 = arith.constant dense<0.000000e+00> : vector<256x4xf32>
    %107 = tpu.matmul %105, %106, %cst_98 {dimension_numbers = #tpu.dot_dimension_numbers<[1], [0], [0], [1], [0, 0, 1, 1], [], []>} : vector<256x4xbf16>, vector<4x4xbf16>, vector<256x4xf32> -> vector<256x4xf32>
    %108 = arith.addf %103, %107 : vector<256x4xf32>
    %c1_99 = arith.constant 1 : index
    %c2_100 = arith.constant 2 : index
    %c0_101 = arith.constant 0 : index
    %109 = vector.load %arg8[%c1_99, %c2_100, %c0_101] : memref<20x18x4xbf16, #tpu.memory_space<vmem>>, vector<16x16x4xbf16>
    %110 = vector.shape_cast %109 : vector<16x16x4xbf16> to vector<256x4xbf16>
    %c20_102 = arith.constant 20 : index
    %c0_103 = arith.constant 0 : index
    %111 = vector.load %arg4[%c20_102, %c0_103] : memref<36x4xbf16, #tpu.memory_space<vmem>>, vector<4x4xbf16>
    %cst_104 = arith.constant dense<0.000000e+00> : vector<256x4xf32>
    %112 = tpu.matmul %110, %111, %cst_104 {dimension_numbers = #tpu.dot_dimension_numbers<[1], [0], [0], [1], [0, 0, 1, 1], [], []>} : vector<256x4xbf16>, vector<4x4xbf16>, vector<256x4xf32> -> vector<256x4xf32>
    %113 = arith.addf %108, %112 : vector<256x4xf32>
    %c2_105 = arith.constant 2 : index
    %c0_106 = arith.constant 0 : index
    %c0_107 = arith.constant 0 : index
    %114 = vector.load %arg8[%c2_105, %c0_106, %c0_107] : memref<20x18x4xbf16, #tpu.memory_space<vmem>>, vector<16x16x4xbf16>
    %115 = vector.shape_cast %114 : vector<16x16x4xbf16> to vector<256x4xbf16>
    %c24_108 = arith.constant 24 : index
    %c0_109 = arith.constant 0 : index
    %116 = vector.load %arg4[%c24_108, %c0_109] : memref<36x4xbf16, #tpu.memory_space<vmem>>, vector<4x4xbf16>
    %cst_110 = arith.constant dense<0.000000e+00> : vector<256x4xf32>
    %117 = tpu.matmul %115, %116, %cst_110 {dimension_numbers = #tpu.dot_dimension_numbers<[1], [0], [0], [1], [0, 0, 1, 1], [], []>} : vector<256x4xbf16>, vector<4x4xbf16>, vector<256x4xf32> -> vector<256x4xf32>
    %118 = arith.addf %113, %117 : vector<256x4xf32>
    %c2_111 = arith.constant 2 : index
    %c1_112 = arith.constant 1 : index
    %c0_113 = arith.constant 0 : index
    %119 = vector.load %arg8[%c2_111, %c1_112, %c0_113] : memref<20x18x4xbf16, #tpu.memory_space<vmem>>, vector<16x16x4xbf16>
    %120 = vector.shape_cast %119 : vector<16x16x4xbf16> to vector<256x4xbf16>
    %c28_114 = arith.constant 28 : index
    %c0_115 = arith.constant 0 : index
    %121 = vector.load %arg4[%c28_114, %c0_115] : memref<36x4xbf16, #tpu.memory_space<vmem>>, vector<4x4xbf16>
    %cst_116 = arith.constant dense<0.000000e+00> : vector<256x4xf32>
    %122 = tpu.matmul %120, %121, %cst_116 {dimension_numbers = #tpu.dot_dimension_numbers<[1], [0], [0], [1], [0, 0, 1, 1], [], []>} : vector<256x4xbf16>, vector<4x4xbf16>, vector<256x4xf32> -> vector<256x4xf32>
    %123 = arith.addf %118, %122 : vector<256x4xf32>
    %c2_117 = arith.constant 2 : index
    %c2_118 = arith.constant 2 : index
    %c0_119 = arith.constant 0 : index
    %124 = vector.load %arg8[%c2_117, %c2_118, %c0_119] : memref<20x18x4xbf16, #tpu.memory_space<vmem>>, vector<16x16x4xbf16>
    %125 = vector.shape_cast %124 : vector<16x16x4xbf16> to vector<256x4xbf16>
    %c32_120 = arith.constant 32 : index
    %c0_121 = arith.constant 0 : index
    %126 = vector.load %arg4[%c32_120, %c0_121] : memref<36x4xbf16, #tpu.memory_space<vmem>>, vector<4x4xbf16>
    %cst_122 = arith.constant dense<0.000000e+00> : vector<256x4xf32>
    %127 = tpu.matmul %125, %126, %cst_122 {dimension_numbers = #tpu.dot_dimension_numbers<[1], [0], [0], [1], [0, 0, 1, 1], [], []>} : vector<256x4xbf16>, vector<4x4xbf16>, vector<256x4xf32> -> vector<256x4xf32>
    %128 = arith.addf %123, %127 : vector<256x4xf32>
    %c0_123 = arith.constant 0 : index
    %c0_124 = arith.constant 0 : index
    %129 = vector.load %arg6[%c0_123, %c0_124] : memref<1x4xf32, #tpu.memory_space<vmem>>, vector<1x4xf32>
    %130 = vector.broadcast %129 : vector<1x4xf32> to vector<256x4xf32>
    %131 = arith.addf %128, %130 : vector<256x4xf32>
    %c0_125 = arith.constant 0 : index
    %132 = arith.index_cast %1 : i32 to index
    %c0_126 = arith.constant 0 : index
    %c0_127 = arith.constant 0 : index
    %133 = vector.load %arg2[%c0_125, %132, %c0_126, %c0_127] : memref<1x16x16x4xf32, #tpu.memory_space<vmem>>, vector<1x16x16x4xf32>
    %134 = vector.shape_cast %133 : vector<1x16x16x4xf32> to vector<16x16x4xf32>
    %135 = vector.shape_cast %134 : vector<16x16x4xf32> to vector<256x4xf32>
    %136 = arith.addf %131, %135 : vector<256x4xf32>
    %137 = vector.shape_cast %136 : vector<256x4xf32> to vector<16x16x4xf32>
    %c0_128 = arith.constant 0 : index
    %c0_129 = arith.constant 0 : index
    %c0_130 = arith.constant 0 : index
    %c0_131 = arith.constant 0 : index
    %138 = vector.load %arg7[%c0_128, %c0_129, %c0_130, %c0_131] : memref<1x16x16x4xf32, #tpu.memory_space<vmem>>, vector<1x16x16x4xf32>
    %139 = vector.shape_cast %138 : vector<1x16x16x4xf32> to vector<16x16x4xf32>
    %140 = vector.shape_cast %137 : vector<16x16x4xf32> to vector<1x16x16x4xf32>
    tpu.vector_store %arg7[%c0_128, %c0_129, %c0_130, %c0_131], %140 {strides = array<i32>} : memref<1x16x16x4xf32, #tpu.memory_space<vmem>>, vector<1x16x16x4xf32>,
    return
  }
  func.func @transform_0(%arg0: i32, %arg1: i32) -> (i32, i32, i32, i32) {
    %c0_i32 = arith.constant 0 : i32
    %c0_i32_0 = arith.constant 0 : i32
    %c0_i32_1 = arith.constant 0 : i32
    %c0_i32_2 = arith.constant 0 : i32
    return %arg0, %c0_i32, %c0_i32_0, %c0_i32_1 : i32, i32, i32, i32
  }
  func.func @transform_1(%arg0: i32, %arg1: i32) -> (i32, i32) {
    %c0_i32 = arith.constant 0 : i32
    %c0_i32_0 = arith.constant 0 : i32
    %c0_i32_1 = arith.constant 0 : i32
    return %c0_i32, %c0_i32_0 : i32, i32
  }
  func.func @transform_2(%arg0: i32, %arg1: i32) -> (i32, i32) {
    %c0_i32 = arith.constant 0 : i32
    %c0_i32_0 = arith.constant 0 : i32
    %c0_i32_1 = arith.constant 0 : i32
    return %c0_i32, %c0_i32_0 : i32, i32
  }
  func.func @transform_3(%arg0: i32, %arg1: i32) -> (i32, i32) {
    %c0_i32 = arith.constant 0 : i32
    %c0_i32_0 = arith.constant 0 : i32
    %c0_i32_1 = arith.constant 0 : i32
    return %c0_i32, %c0_i32_0 : i32, i32
  }
  func.func @transform_4(%arg0: i32, %arg1: i32) -> (i32, i32) {
    %c0_i32 = arith.constant 0 : i32
    %c0_i32_0 = arith.constant 0 : i32
    %c0_i32_1 = arith.constant 0 : i32
    return %c0_i32, %c0_i32_0 : i32, i32
  }
  func.func @transform_5(%arg0: i32, %arg1: i32) -> (i32, i32, i32, i32) {
    %c0_i32 = arith.constant 0 : i32
    %c0_i32_0 = arith.constant 0 : i32
    %c0_i32_1 = arith.constant 0 : i32
    return %arg0, %arg1, %c0_i32, %c0_i32_0 : i32, i32, i32, i32
  }
}

</mosaic_0001>

<llo_original>
// kernel: tpu_custom_call.1
$region0: #{tpu_custom_call.1}
  #allocation0 [shape = 'u32[]', space=smem, size = 0x4, offset = 0x4, fixed_abs, tag = 'smem constant byte address 0x4 - core index']
  #allocation1 [shape = 'u32[144,128]{1,0:T(1,128)}', space=vmem, size = 0x12000, scoped, tag = 'internal scratch']
  #allocation2 [shape = 'bf16[20,18,4]{2,1,0:T(8,128)(2,1)}', space=vmem, size = 0x1e000, scoped, tag = 'scratch operand']
  %s0 = inlined_call_operand.vmem [shape: f32[2,16,16,4], index: 0, kind: input, shape index: {}]
  %s1 = inlined_call_operand.vmem [shape: bf16[36,4], index: 1, kind: input, shape index: {}]
  %s2 = inlined_call_operand.vmem [shape: bf16[36,4], index: 2, kind: input, shape index: {}]
  %s3 = inlined_call_operand.vmem [shape: f32[1,4], index: 3, kind: input, shape index: {}]
  %s4 = inlined_call_operand.vmem [shape: f32[1,4], index: 4, kind: input, shape index: {}]
  %s5 = inlined_call_operand.vmem [shape: f32[2,16,16,4], index: 5, kind: output, shape index: {}]
  %s6 = sld [smem:[#allocation0]]
  $region73: #{tpu_custom_call.1} parent=0
    _
  %s8 = ssub.s32 1, %s6
  %s9 = scalar_select 0, %s8, %s6
  loop: start=0, step=1, limit=4
  $region2: #{tpu_custom_call.1} parent=0 // loop_pre_header
    _
  $region3: #{tpu_custom_call.1} parent=0 // loop_header
    %s11 = sphi 0, %s15
    %p12 = scmp.ge.s32.totalorder %s11, 4
    %s18 = sphi 0, %s30
    %s19 = sphi 0, %s26
    %s20 = sphi 0, %s18
    %s21 = sphi 0, %s19
    %s22 = sphi 0, %s20
    %s23 = sphi 0, %s21
    %s33 = sphi 0, %s35
    %s36 = sphi 0, %s33
    %s37 = sphi 0, %s36
    %s53 = sphi 0, %s37
    %s57 = sphi 0, %s57
    %s59 = sphi 0, %s57
    %s60 = sphi 0, %s59
    %s74 = sphi 0, %s60
    %s78 = sphi 0, %s78
    %s80 = sphi 0, %s78
    %s81 = sphi 0, %s80
    %s95 = sphi 0, %s81
    %s99 = sphi 0, %s99
    %s101 = sphi 0, %s99
    %s102 = sphi 0, %s101
    %s116 = sphi 0, %s102
    %s120 = sphi 0, %s120
    %s122 = sphi 0, %s120
    %s123 = sphi 0, %s122
    %s137 = sphi 0, %s123
    %s145 = sphi 0, %s147
    %s148 = sphi 0, %s145
    %s149 = sphi 0, %s148
    %s165 = sphi 0, %s149
  $region4: #{tpu_custom_call.1} parent=0 // loop_header_branch
    %14 = sbr.rel (%p12) target = $region8
  $region5: #{tpu_custom_call.1} parent=0 // loop_body
    %s16 = ssub.s32 %s11, 1
    %s17 = ssub.s32 %s11, 2
    %s24 = sadd.s32 1, %s19
    %p25 = scmp.ge.s32.totalorder %s24, 1
    %s26 = scalar_select %p25, 0, %s24
    %s27 = sadd.s32 1, %s18
    %s28 = scalar_select %p25, %s27, %s18
    %p29 = scmp.ge.s32.totalorder %s28, 2
    %s30 = scalar_select %p29, 0, %s28
    %s31 = ssub.s32 %s18, %s30
    %p32 = scmp.eq.s32.totalorder %s31, 0
    %s34 = sadd.s32 %s33, 1
    %s35 = scalar_select %p32, %s33, %s34
    %p38 = pneg %p32
    %p39 = scmp.eq.s32.totalorder %s11, 1
    %p40 = por %p38, %p39
    %p41 = scmp.ne.s32.totalorder %s33, %s36
    %p42 = scmp.eq.s32.totalorder %s11, 0
    %p43 = por %p41, %p42
    %p44 = scmp.ne.s32.totalorder %s33, %s36
    %p45 = scmp.eq.s32.totalorder %s16, 1
    %p46 = por %p44, %p45
    %p47 = scmp.ne.s32.totalorder %s36, %s37
    %p48 = scmp.eq.s32.totalorder %s16, 0
    %p49 = por %p47, %p48
    %p50 = scmp.ne.s32.totalorder %s36, %s37
    %p51 = scmp.eq.s32.totalorder %s17, 1
    %p52 = por %p50, %p51
    %p54 = scmp.ne.s32.totalorder %s37, %s53
    %p55 = scmp.eq.s32.totalorder %s17, 0
    %p56 = por %p54, %p55
    %s58 = sadd.s32 %s57, 1
    %p61 = scmp.eq.s32.totalorder %s11, 1
    %p62 = scmp.ne.s32.totalorder %s57, %s59
    %p63 = scmp.eq.s32.totalorder %s11, 0
    %p64 = por %p62, %p63
    %p65 = scmp.ne.s32.totalorder %s57, %s59
    %p66 = scmp.eq.s32.totalorder %s16, 1
    %p67 = por %p65, %p66
    %p68 = scmp.ne.s32.totalorder %s59, %s60
    %p69 = scmp.eq.s32.totalorder %s16, 0
    %p70 = por %p68, %p69
    %p71 = scmp.ne.s32.totalorder %s59, %s60
    %p72 = scmp.eq.s32.totalorder %s17, 1
    %p73 = por %p71, %p72
    %p75 = scmp.ne.s32.totalorder %s60, %s74
    %p76 = scmp.eq.s32.totalorder %s17, 0
    %p77 = por %p75, %p76
    %s79 = sadd.s32 %s78, 1
    %p82 = scmp.eq.s32.totalorder %s11, 1
    %p83 = scmp.ne.s32.totalorder %s78, %s80
    %p84 = scmp.eq.s32.totalorder %s11, 0
    %p85 = por %p83, %p84
    %p86 = scmp.ne.s32.totalorder %s78, %s80
    %p87 = scmp.eq.s32.totalorder %s16, 1
    %p88 = por %p86, %p87
    %p89 = scmp.ne.s32.totalorder %s80, %s81
    %p90 = scmp.eq.s32.totalorder %s16, 0
    %p91 = por %p89, %p90
    %p92 = scmp.ne.s32.totalorder %s80, %s81
    %p93 = scmp.eq.s32.totalorder %s17, 1
    %p94 = por %p92, %p93
    %p96 = scmp.ne.s32.totalorder %s81, %s95
    %p97 = scmp.eq.s32.totalorder %s17, 0
    %p98 = por %p96, %p97
    %s100 = sadd.s32 %s99, 1
    %p103 = scmp.eq.s32.totalorder %s11, 1
    %p104 = scmp.ne.s32.totalorder %s99, %s101
    %p105 = scmp.eq.s32.totalorder %s11, 0
    %p106 = por %p104, %p105
    %p107 = scmp.ne.s32.totalorder %s99, %s101
    %p108 = scmp.eq.s32.totalorder %s16, 1
    %p109 = por %p107, %p108
    %p110 = scmp.ne.s32.totalorder %s101, %s102
    %p111 = scmp.eq.s32.totalorder %s16, 0
    %p112 = por %p110, %p111
    %p113 = scmp.ne.s32.totalorder %s101, %s102
    %p114 = scmp.eq.s32.totalorder %s17, 1
    %p115 = por %p113, %p114
    %p117 = scmp.ne.s32.totalorder %s102, %s116
    %p118 = scmp.eq.s32.totalorder %s17, 0
    %p119 = por %p117, %p118
    %s121 = sadd.s32 %s120, 1
    %p124 = scmp.eq.s32.totalorder %s11, 1
    %p125 = scmp.ne.s32.totalorder %s120, %s122
    %p126 = scmp.eq.s32.totalorder %s11, 0
    %p127 = por %p125, %p126
    %p128 = scmp.ne.s32.totalorder %s120, %s122
    %p129 = scmp.eq.s32.totalorder %s16, 1
    %p130 = por %p128, %p129
    %p131 = scmp.ne.s32.totalorder %s122, %s123
    %p132 = scmp.eq.s32.totalorder %s16, 0
    %p133 = por %p131, %p132
    %p134 = scmp.ne.s32.totalorder %s122, %s123
    %p135 = scmp.eq.s32.totalorder %s17, 1
    %p136 = por %p134, %p135
    %p138 = scmp.ne.s32.totalorder %s123, %s137
    %p139 = scmp.eq.s32.totalorder %s17, 0
    %p140 = por %p138, %p139
    %s141 = ssub.s32 %s18, %s30
    %s142 = ssub.s32 %s19, %s26
    %s143 = sor.u32 %s141, %s142
    %p144 = scmp.eq.s32.totalorder %s143, 0
    %s146 = sadd.s32 %s145, 1
    %s147 = scalar_select %p144, %s145, %s146
    %p150 = pneg %p144
    %p151 = scmp.eq.s32.totalorder %s11, 1
    %p152 = por %p150, %p151
    %p153 = scmp.ne.s32.totalorder %s145, %s148
    %p154 = scmp.eq.s32.totalorder %s11, 0
    %p155 = por %p153, %p154
    %p156 = scmp.ne.s32.totalorder %s145, %s148
    %p157 = scmp.eq.s32.totalorder %s16, 1
    %p158 = por %p156, %p157
    %p159 = scmp.ne.s32.totalorder %s148, %s149
    %p160 = scmp.eq.s32.totalorder %s16, 0
    %p161 = por %p159, %p160
    %p162 = scmp.ne.s32.totalorder %s148, %s149
    %p163 = scmp.eq.s32.totalorder %s17, 1
    %p164 = por %p162, %p163
    %p166 = scmp.ne.s32.totalorder %s149, %s165
    %p167 = scmp.eq.s32.totalorder %s17, 0
    %p168 = por %p166, %p167
    %p169 = scmp.le.s32.totalorder 1, %s11
    %p170 = scmp.lt.s32.totalorder %s11, 3
    %p171 = pnand %p169, %p170
    %p172 = pneg %p171
    // Predicated region
    $region9: #{tpu_custom_call.1} parent=5 // pred_check
      _
    $region10: #{tpu_custom_call.1} parent=5 // pred_check_branch
      %174 = sbr.rel (%p171) target = $region12
    $region11: #{tpu_custom_call.1} parent=5 // pred_region
      %s175 = ssub.s32 %s11, 1
      // Predicated region
      $region13: #{tpu_custom_call.1} parent=11 // pred_check
        %p176 = pneg %p70
      $region14: #{tpu_custom_call.1} parent=11 // pred_check_branch
        %178 = sbr.rel (%p176) target = $region16
      $region15: #{tpu_custom_call.1} parent=11 // pred_region
        _
      $region16: #{tpu_custom_call.1} parent=11 // pred_fallthru
        _
      // Predicated region
      $region17: #{tpu_custom_call.1} parent=11 // pred_check
        %p179 = pneg %p91
      $region18: #{tpu_custom_call.1} parent=11 // pred_check_branch
        %181 = sbr.rel (%p179) target = $region20
      $region19: #{tpu_custom_call.1} parent=11 // pred_region
        _
      $region20: #{tpu_custom_call.1} parent=11 // pred_fallthru
        _
      // Predicated region
      $region21: #{tpu_custom_call.1} parent=11 // pred_check
        %p182 = pneg %p112
      $region22: #{tpu_custom_call.1} parent=11 // pred_check_branch
        %184 = sbr.rel (%p182) target = $region24
      $region23: #{tpu_custom_call.1} parent=11 // pred_region
        _
      $region24: #{tpu_custom_call.1} parent=11 // pred_fallthru
        _
      // Predicated region
      $region25: #{tpu_custom_call.1} parent=11 // pred_check
        %p185 = pneg %p133
      $region26: #{tpu_custom_call.1} parent=11 // pred_check_branch
        %187 = sbr.rel (%p185) target = $region28
      $region27: #{tpu_custom_call.1} parent=11 // pred_region
        _
      $region28: #{tpu_custom_call.1} parent=11 // pred_fallthru
        _
    $region12: #{tpu_custom_call.1} parent=5 // pred_fallthru
      _
    %p188 = scmp.lt.s32.totalorder %s11, 2
    // Predicated region
    $region29: #{tpu_custom_call.1} parent=5 // pred_check
      %p189 = pneg %p188
    $region30: #{tpu_custom_call.1} parent=5 // pred_check_branch
      %191 = sbr.rel (%p189) target = $region32
    $region31: #{tpu_custom_call.1} parent=5 // pred_region
      // Predicated region
      $region33: #{tpu_custom_call.1} parent=31 // pred_check
        %p192 = pneg %p43
      $region34: #{tpu_custom_call.1} parent=31 // pred_check_branch
        %194 = sbr.rel (%p192) target = $region36
      $region35: #{tpu_custom_call.1} parent=31 // pred_region
        %p195 = scmp.lt.s32.totalorder %s18, 1
        %s196 = scalar_select %p195, %s18, 1
        %s197 = smul.addr %s196, 32
        %s198 = smul.addr %s197, 8
        %s199 = scalar_lea.vmem %s0, %s198
      $region36: #{tpu_custom_call.1} parent=31 // pred_fallthru
        _
    $region32: #{tpu_custom_call.1} parent=5 // pred_fallthru
      _
    %p200 = scmp.le.s32.totalorder 1, %s11
    %p201 = scmp.lt.s32.totalorder %s11, 3
    %p202 = pnand %p200, %p201
    %p203 = pneg %p202
    // Predicated region
    $region37: #{tpu_custom_call.1} parent=5 // pred_check
      _
    $region38: #{tpu_custom_call.1} parent=5 // pred_check_branch
      %205 = sbr.rel (%p202) target = $region40
    $region39: #{tpu_custom_call.1} parent=5 // pred_region
      %s206 = ssub.s32 %s11, 1
      %p207 = scmp.lt.s32.totalorder %s20, 1
      %s208 = scalar_select %p207, %s20, 1
      %s209 = smul.addr %s208, 32
      %s210 = smul.addr %s209, 8
      %s211 = scalar_lea.vmem %s0, %s210
      %p212 = pneg %p49
      %p213 = pneg %p46
      %p214 = pneg %p70
      %p215 = pneg %p67
      %p216 = pneg %p91
      %p217 = pneg %p88
      %p218 = pneg %p112
      %p219 = pneg %p109
      %p220 = pneg %p133
      %p221 = pneg %p130
      %p222 = pneg %p161
      %p223 = pneg %p158
      %s224 = smul.u32 16, %s21
      %p225 = scmp.lt.s32.totalorder %s20, 1
      %s226 = scalar_select %p225, %s20, 1
      %p227 = scmp.lt.s32.totalorder %s224, 15
      %s228 = scalar_select %p227, %s224, 15
      %s229 = smul.addr %s228, 2
      %s230 = smul.addr %s226, 32
      %s231 = sadd.s32 %s229, %s230
      %s232 = smul.addr %s231, 8
      %s233 = scalar_lea.vmem %s5, %s232
      %p234 = scmp.lt.s32.totalorder %s20, 1
      %s235 = scalar_select %p234, %s20, 1
      %s236 = smul.addr %s235, 32
      %s237 = smul.addr %s236, 8
      %s238 = scalar_lea.vmem %s0, %s237
      %s239 = smul.u32 16, %s21
      %p240 = scmp.lt.s32.totalorder %s20, 1
      %s241 = scalar_select %p240, %s20, 1
      %p242 = scmp.lt.s32.totalorder %s239, 15
      %s243 = scalar_select %p242, %s239, 15
      %s244 = smul.addr %s243, 2
      %s245 = smul.addr %s241, 32
      %s246 = sadd.s32 %s244, %s245
      %s247 = smul.addr %s246, 8
      %s248 = scalar_lea.vmem %s5, %s247
      %s249 = smul.u32 16, %s21
      %s251 = smul.u32 %s21, 16
      %s252 = smul.u32 %s251, 16
      %s253 = scalar_lea.vmem %s238, %s252
      %v254 = vld [vmem:[%s253] sm:$0xff]
      %v255 = vld [vmem:[%s253 + $0x8] sm:$0xff]
      %v256 = vld [vmem:[%s253 + $0x10] sm:$0xff]
      %v257 = vld [vmem:[%s253 + $0x18] sm:$0xff]
      %v258 = vld [vmem:[%s253 + $0x20] sm:$0xff]
      %v259 = vld [vmem:[%s253 + $0x28] sm:$0xff]
      %v260 = vld [vmem:[%s253 + $0x30] sm:$0xff]
      %v261 = vld [vmem:[%s253 + $0x38] sm:$0xff]
      %v262 = vld [vmem:[%s253 + $0x40] sm:$0xff]
      %v263 = vld [vmem:[%s253 + $0x48] sm:$0xff]
      %v264 = vld [vmem:[%s253 + $0x50] sm:$0xff]
      %v265 = vld [vmem:[%s253 + $0x58] sm:$0xff]
      %v266 = vld [vmem:[%s253 + $0x60] sm:$0xff]
      %v267 = vld [vmem:[%s253 + $0x68] sm:$0xff]
      %v268 = vld [vmem:[%s253 + $0x70] sm:$0xff]
      %v269 = vld [vmem:[%s253 + $0x78] sm:$0xff]
      %v270 = vld [vmem:[%s253 + $0x80] sm:$0xff]
      %v271 = vld [vmem:[%s253 + $0x88] sm:$0xff]
      %v272 = vld [vmem:[%s253 + $0x90] sm:$0xff]
      %v273 = vld [vmem:[%s253 + $0x98] sm:$0xff]
      %v274 = vld [vmem:[%s253 + $0xa0] sm:$0xff]
      %v275 = vld [vmem:[%s253 + $0xa8] sm:$0xff]
      %v276 = vld [vmem:[%s253 + $0xb0] sm:$0xff]
      %v277 = vld [vmem:[%s253 + $0xb8] sm:$0xff]
      %v278 = vld [vmem:[%s253 + $0xc0] sm:$0xff]
      %v279 = vld [vmem:[%s253 + $0xc8] sm:$0xff]
      %v280 = vld [vmem:[%s253 + $0xd0] sm:$0xff]
      %v281 = vld [vmem:[%s253 + $0xd8] sm:$0xff]
      %v282 = vld [vmem:[%s253 + $0xe0] sm:$0xff]
      %v283 = vld [vmem:[%s253 + $0xe8] sm:$0xff]
      %v284 = vld [vmem:[%s253 + $0xf0] sm:$0xff]
      %v285 = vld [vmem:[%s253 + $0xf8] sm:$0xff]
      %v286 = vpack.c.bf16 %v255, %v254
      %v287 = vpack.c.bf16 %v257, %v256
      %v288 = vpack.c.bf16 %v259, %v258
      %v289 = vpack.c.bf16 %v261, %v260
      %v290 = vpack.c.bf16 %v263, %v262
      %v291 = vpack.c.bf16 %v265, %v264
      %v292 = vpack.c.bf16 %v267, %v266
      %v293 = vpack.c.bf16 %v269, %v268
      %v294 = vpack.c.bf16 %v271, %v270
      %v295 = vpack.c.bf16 %v273, %v272
      %v296 = vpack.c.bf16 %v275, %v274
      %v297 = vpack.c.bf16 %v277, %v276
      %v298 = vpack.c.bf16 %v279, %v278
      %v299 = vpack.c.bf16 %v281, %v280
      %v300 = vpack.c.bf16 %v283, %v282
      %v301 = vpack.c.bf16 %v285, %v284
      %v303 = vshrl.u32 %v286, 16
      %v305 = vrot.slane %v303, 7
      %v306 = vshll.u32 %v286, 16
      %v308 = vor.u32 %v305, %v306
      %v310 = vshrl.u32 %v287, 16
      %v312 = vrot.slane %v310, 7
      %v313 = vshll.u32 %v287, 16
      %v315 = vor.u32 %v312, %v313
      %v317 = vshrl.u32 %v288, 16
      %v319 = vrot.slane %v317, 7
      %v320 = vshll.u32 %v288, 16
      %v322 = vor.u32 %v319, %v320
      %v324 = vshrl.u32 %v289, 16
      %v326 = vrot.slane %v324, 7
      %v327 = vshll.u32 %v289, 16
      %v329 = vor.u32 %v326, %v327
      %v331 = vshrl.u32 %v290, 16
      %v333 = vrot.slane %v331, 7
      %v334 = vshll.u32 %v290, 16
      %v336 = vor.u32 %v333, %v334
      %v338 = vshrl.u32 %v291, 16
      %v340 = vrot.slane %v338, 7
      %v341 = vshll.u32 %v291, 16
      %v343 = vor.u32 %v340, %v341
      %v345 = vshrl.u32 %v292, 16
      %v347 = vrot.slane %v345, 7
      %v348 = vshll.u32 %v292, 16
      %v350 = vor.u32 %v347, %v348
      %v352 = vshrl.u32 %v293, 16
      %v354 = vrot.slane %v352, 7
      %v355 = vshll.u32 %v293, 16
      %v357 = vor.u32 %v354, %v355
      %v359 = vshrl.u32 %v294, 16
      %v361 = vrot.slane %v359, 7
      %v362 = vshll.u32 %v294, 16
      %v364 = vor.u32 %v361, %v362
      %v366 = vshrl.u32 %v295, 16
      %v368 = vrot.slane %v366, 7
      %v369 = vshll.u32 %v295, 16
      %v371 = vor.u32 %v368, %v369
      %v373 = vshrl.u32 %v296, 16
      %v375 = vrot.slane %v373, 7
      %v376 = vshll.u32 %v296, 16
      %v378 = vor.u32 %v375, %v376
      %v380 = vshrl.u32 %v297, 16
      %v382 = vrot.slane %v380, 7
      %v383 = vshll.u32 %v297, 16
      %v385 = vor.u32 %v382, %v383
      %v387 = vshrl.u32 %v298, 16
      %v389 = vrot.slane %v387, 7
      %v390 = vshll.u32 %v298, 16
      %v392 = vor.u32 %v389, %v390
      %v394 = vshrl.u32 %v299, 16
      %v396 = vrot.slane %v394, 7
      %v397 = vshll.u32 %v299, 16
      %v399 = vor.u32 %v396, %v397
      %v401 = vshrl.u32 %v300, 16
      %v403 = vrot.slane %v401, 7
      %v404 = vshll.u32 %v300, 16
      %v406 = vor.u32 %v403, %v404
      %v408 = vshrl.u32 %v301, 16
      %v410 = vrot.slane %v408, 7
      %v411 = vshll.u32 %v301, 16
      %v413 = vor.u32 %v410, %v411
      %vm446 = vcmask 1040384
      %vm447 = vsmask.f32 256
      %vm448 = vmand %vm446, %vm447
      %v449 = vsel %vm448, 0, %v308
      %v450 = vsel %vm448, 0, %v315
      %v451 = vsel %vm448, 0, %v322
      %v452 = vsel %vm448, 0, %v329
      %v453 = vsel %vm448, 0, %v336
      %v454 = vsel %vm448, 0, %v343
      %v455 = vsel %vm448, 0, %v350
      %v456 = vsel %vm448, 0, %v357
      %v457 = vsel %vm448, 0, %v364
      %v458 = vsel %vm448, 0, %v371
      %v459 = vsel %vm448, 0, %v378
      %v460 = vsel %vm448, 0, %v385
      %v461 = vsel %vm448, 0, %v392
      %v462 = vsel %vm448, 0, %v399
      %v463 = vsel %vm448, 0, %v406
      %v464 = vsel %vm448, 0, %v413
      %v465 = vsel %vm448, %v305, 0
      %v466 = vsel %vm448, %v312, 0
      %v467 = vsel %vm448, %v319, 0
      %v468 = vsel %vm448, %v326, 0
      %v469 = vsel %vm448, %v333, 0
      %v470 = vsel %vm448, %v340, 0
      %v471 = vsel %vm448, %v347, 0
      %v472 = vsel %vm448, %v354, 0
      %v473 = vsel %vm448, %v361, 0
      %v474 = vsel %vm448, %v368, 0
      %v475 = vsel %vm448, %v375, 0
      %v476 = vsel %vm448, %v382, 0
      %v477 = vsel %vm448, %v389, 0
      %v478 = vsel %vm448, %v396, 0
      %v479 = vsel %vm448, %v403, 0
      %v480 = vsel %vm448, %v410, 0
      %v513 = vunpack.c.l.b16 %v449
      %v514 = vunpack.c.h.b16 %v449
      %v515 = vunpack.c.l.b16 %v465
      %v516 = vunpack.c.l.b16 %v450
      %v517 = vunpack.c.h.b16 %v450
      %v518 = vunpack.c.l.b16 %v466
      %v519 = vunpack.c.l.b16 %v451
      %v520 = vunpack.c.h.b16 %v451
      %v521 = vunpack.c.l.b16 %v467
      %v522 = vunpack.c.l.b16 %v452
      %v523 = vunpack.c.h.b16 %v452
      %v524 = vunpack.c.l.b16 %v468
      %v525 = vunpack.c.l.b16 %v453
      %v526 = vunpack.c.h.b16 %v453
      %v527 = vunpack.c.l.b16 %v469
      %v528 = vunpack.c.l.b16 %v454
      %v529 = vunpack.c.h.b16 %v454
      %v530 = vunpack.c.l.b16 %v470
      %v531 = vunpack.c.l.b16 %v455
      %v532 = vunpack.c.h.b16 %v455
      %v533 = vunpack.c.l.b16 %v471
      %v534 = vunpack.c.l.b16 %v456
      %v535 = vunpack.c.h.b16 %v456
      %v536 = vunpack.c.l.b16 %v472
      %v537 = vunpack.c.l.b16 %v457
      %v538 = vunpack.c.h.b16 %v457
      %v539 = vunpack.c.l.b16 %v473
      %v540 = vunpack.c.l.b16 %v458
      %v541 = vunpack.c.h.b16 %v458
      %v542 = vunpack.c.l.b16 %v474
      %v543 = vunpack.c.l.b16 %v459
      %v544 = vunpack.c.h.b16 %v459
      %v545 = vunpack.c.l.b16 %v475
      %v546 = vunpack.c.l.b16 %v460
      %v547 = vunpack.c.h.b16 %v460
      %v548 = vunpack.c.l.b16 %v476
      %v549 = vunpack.c.l.b16 %v461
      %v550 = vunpack.c.h.b16 %v461
      %v551 = vunpack.c.l.b16 %v477
      %v552 = vunpack.c.l.b16 %v462
      %v553 = vunpack.c.h.b16 %v462
      %v554 = vunpack.c.l.b16 %v478
      %v555 = vunpack.c.l.b16 %v463
      %v556 = vunpack.c.h.b16 %v463
      %v557 = vunpack.c.l.b16 %v479
      %v558 = vunpack.c.l.b16 %v464
      %v559 = vunpack.c.h.b16 %v464
      %v560 = vunpack.c.l.b16 %v480
      %v561 = vpack.c.b16 %v513, %v513
      %v562 = vpack.c.b16 %v514, %v514
      %v563 = vpack.c.b16 %v515, %v515
      %v564 = vpack.c.b16 %v516, %v516
      %v565 = vpack.c.b16 %v517, %v517
      %v566 = vpack.c.b16 %v518, %v518
      %v567 = vpack.c.b16 %v519, %v519
      %v568 = vpack.c.b16 %v520, %v520
      %v569 = vpack.c.b16 %v521, %v521
      %v570 = vpack.c.b16 %v522, %v522
      %v571 = vpack.c.b16 %v523, %v523
      %v572 = vpack.c.b16 %v524, %v524
      %v573 = vpack.c.b16 %v525, %v525
      %v574 = vpack.c.b16 %v526, %v526
      %v575 = vpack.c.b16 %v527, %v527
      %v576 = vpack.c.b16 %v528, %v528
      %v577 = vpack.c.b16 %v529, %v529
      %v578 = vpack.c.b16 %v530, %v530
      %v579 = vpack.c.b16 %v531, %v531
      %v580 = vpack.c.b16 %v532, %v532
      %v581 = vpack.c.b16 %v533, %v533
      %v582 = vpack.c.b16 %v534, %v534
      %v583 = vpack.c.b16 %v535, %v535
      %v584 = vpack.c.b16 %v536, %v536
      %v585 = vpack.c.b16 %v537, %v537
      %v586 = vpack.c.b16 %v538, %v538
      %v587 = vpack.c.b16 %v539, %v539
      %v588 = vpack.c.b16 %v540, %v540
      %v589 = vpack.c.b16 %v541, %v541
      %v590 = vpack.c.b16 %v542, %v542
      %v591 = vpack.c.b16 %v543, %v543
      %v592 = vpack.c.b16 %v544, %v544
      %v593 = vpack.c.b16 %v545, %v545
      %v594 = vpack.c.b16 %v546, %v546
      %v595 = vpack.c.b16 %v547, %v547
      %v596 = vpack.c.b16 %v548, %v548
      %v597 = vpack.c.b16 %v549, %v549
      %v598 = vpack.c.b16 %v550, %v550
      %v599 = vpack.c.b16 %v551, %v551
      %v600 = vpack.c.b16 %v552, %v552
      %v601 = vpack.c.b16 %v553, %v553
      %v602 = vpack.c.b16 %v554, %v554
      %v603 = vpack.c.b16 %v555, %v555
      %v604 = vpack.c.b16 %v556, %v556
      %v605 = vpack.c.b16 %v557, %v557
      %v606 = vpack.c.b16 %v558, %v558
      %v607 = vpack.c.b16 %v559, %v559
      %v608 = vpack.c.b16 %v560, %v560
      %s657 = scalar_lea.vmem [#allocation2], 24
      %vm658 = vcmask 27648
      %659 = vst.msk [vmem:[%s657] sm:$0xf] %vm658, %v561
      %660 = vst.msk [vmem:[%s657 + $0x4] sm:$0xf] %vm658, %v562
      %vm661 = vcmask 24576
      %662 = vst.msk [vmem:[%s657 + $0x8] sm:$0x1] %vm661, %v563
      %663 = vst.msk [vmem:[%s657 + $0xc] sm:$0xf] %vm658, %v564
      %664 = vst.msk [vmem:[%s657 + $0x10] sm:$0xf] %vm658, %v565
      %665 = vst.msk [vmem:[%s657 + $0x14] sm:$0x1] %vm661, %v566
      %666 = vst.msk [vmem:[%s657 + $0x18] sm:$0xf] %vm658, %v567
      %667 = vst.msk [vmem:[%s657 + $0x1c] sm:$0xf] %vm658, %v568
      %668 = vst.msk [vmem:[%s657 + $0x20] sm:$0x1] %vm661, %v569
      %669 = vst.msk [vmem:[%s657 + $0x24] sm:$0xf] %vm658, %v570
      %670 = vst.msk [vmem:[%s657 + $0x28] sm:$0xf] %vm658, %v571
      %671 = vst.msk [vmem:[%s657 + $0x2c] sm:$0x1] %vm661, %v572
      %672 = vst.msk [vmem:[%s657 + $0x30] sm:$0xf] %vm658, %v573
      %673 = vst.msk [vmem:[%s657 + $0x34] sm:$0xf] %vm658, %v574
      %674 = vst.msk [vmem:[%s657 + $0x38] sm:$0x1] %vm661, %v575
      %675 = vst.msk [vmem:[%s657 + $0x3c] sm:$0xf] %vm658, %v576
      %676 = vst.msk [vmem:[%s657 + $0x40] sm:$0xf] %vm658, %v577
      %677 = vst.msk [vmem:[%s657 + $0x44] sm:$0x1] %vm661, %v578
      %678 = vst.msk [vmem:[%s657 + $0x48] sm:$0xf] %vm658, %v579
      %679 = vst.msk [vmem:[%s657 + $0x4c] sm:$0xf] %vm658, %v580
      %680 = vst.msk [vmem:[%s657 + $0x50] sm:$0x1] %vm661, %v581
      %681 = vst.msk [vmem:[%s657 + $0x54] sm:$0xf] %vm658, %v582
      %682 = vst.msk [vmem:[%s657 + $0x58] sm:$0xf] %vm658, %v583
      %683 = vst.msk [vmem:[%s657 + $0x5c] sm:$0x1] %vm661, %v584
      %684 = vst.msk [vmem:[%s657 + $0x60] sm:$0xf] %vm658, %v585
      %685 = vst.msk [vmem:[%s657 + $0x64] sm:$0xf] %vm658, %v586
      %686 = vst.msk [vmem:[%s657 + $0x68] sm:$0x1] %vm661, %v587
      %687 = vst.msk [vmem:[%s657 + $0x6c] sm:$0xf] %vm658, %v588
      %688 = vst.msk [vmem:[%s657 + $0x70] sm:$0xf] %vm658, %v589
      %689 = vst.msk [vmem:[%s657 + $0x74] sm:$0x1] %vm661, %v590
      %690 = vst.msk [vmem:[%s657 + $0x78] sm:$0xf] %vm658, %v591
      %691 = vst.msk [vmem:[%s657 + $0x7c] sm:$0xf] %vm658, %v592
      %692 = vst.msk [vmem:[%s657 + $0x80] sm:$0x1] %vm661, %v593
      %693 = vst.msk [vmem:[%s657 + $0x84] sm:$0xf] %vm658, %v594
      %694 = vst.msk [vmem:[%s657 + $0x88] sm:$0xf] %vm658, %v595
      %695 = vst.msk [vmem:[%s657 + $0x8c] sm:$0x1] %vm661, %v596
      %696 = vst.msk [vmem:[%s657 + $0x90] sm:$0xf] %vm658, %v597
      %697 = vst.msk [vmem:[%s657 + $0x94] sm:$0xf] %vm658, %v598
      %698 = vst.msk [vmem:[%s657 + $0x98] sm:$0x1] %vm661, %v599
      %699 = vst.msk [vmem:[%s657 + $0x9c] sm:$0xf] %vm658, %v600
      %700 = vst.msk [vmem:[%s657 + $0xa0] sm:$0xf] %vm658, %v601
      %701 = vst.msk [vmem:[%s657 + $0xa4] sm:$0x1] %vm661, %v602
      %702 = vst.msk [vmem:[%s657 + $0xa8] sm:$0xf] %vm658, %v603
      %703 = vst.msk [vmem:[%s657 + $0xac] sm:$0xf] %vm658, %v604
      %704 = vst.msk [vmem:[%s657 + $0xb0] sm:$0x1] %vm661, %v605
      %705 = vst.msk [vmem:[%s657 + $0xb4] sm:$0xf] %vm658, %v606
      %706 = vst.msk [vmem:[%s657 + $0xb8] sm:$0xf] %vm658, %v607
      %707 = vst.msk [vmem:[%s657 + $0xbc] sm:$0x1] %vm661, %v608
      %p708 = scmp.eq.s32.totalorder %s21, 0
      // Predicated region
      $region41: #{tpu_custom_call.1} parent=39 // pred_check
        %p709 = pneg %p708
      $region42: #{tpu_custom_call.1} parent=39 // pred_check_branch
        %711 = sbr.rel (%p709) target = $region44
      $region43: #{tpu_custom_call.1} parent=39 // pred_region
        %712 = vst.msk [vmem:[#allocation2] sm:$0xf] %vm658, 0
        %713 = vst.msk [vmem:[#allocation2 + $0x4] sm:$0xf] %vm658, 0
        %714 = vst.msk [vmem:[#allocation2 + $0x8] sm:$0x1] %vm661, 0
        %715 = vst.msk [vmem:[#allocation2 + $0xc] sm:$0xf] %vm658, 0
        %716 = vst.msk [vmem:[#allocation2 + $0x10] sm:$0xf] %vm658, 0
        %717 = vst.msk [vmem:[#allocation2 + $0x14] sm:$0x1] %vm661, 0
      $region44: #{tpu_custom_call.1} parent=39 // pred_fallthru
        _
      %p718 = scmp.gt.s32.totalorder %s21, 0
      // Predicated region
      $region45: #{tpu_custom_call.1} parent=39 // pred_check
        %p719 = pneg %p718
      $region46: #{tpu_custom_call.1} parent=39 // pred_check_branch
        %721 = sbr.rel (%p719) target = $region48
      $region47: #{tpu_custom_call.1} parent=39 // pred_region
        %s722 = ssub.s32 %s251, 2
        %s723 = smul.u32 %s722, 16
        %s724 = scalar_lea.vmem %s238, %s723
        %v725 = vld [vmem:[%s724] sm:$0xff]
        %v726 = vld [vmem:[%s724 + $0x8] sm:$0xff]
        %v727 = vld [vmem:[%s724 + $0x10] sm:$0xff]
        %v728 = vld [vmem:[%s724 + $0x18] sm:$0xff]
        %v729 = vpack.c.bf16 %v726, %v725
        %v730 = vpack.c.bf16 %v728, %v727
        %v732 = vshrl.u32 %v729, 16
        %v734 = vrot.slane %v732, 7
        %v735 = vshll.u32 %v729, 16
        %v737 = vor.u32 %v734, %v735
        %v739 = vshrl.u32 %v730, 16
        %v741 = vrot.slane %v739, 7
        %v742 = vshll.u32 %v730, 16
        %v744 = vor.u32 %v741, %v742
        %v749 = vsel %vm448, 0, %v737
        %v750 = vsel %vm448, 0, %v744
        %v751 = vsel %vm448, %v734, 0
        %v752 = vsel %vm448, %v741, 0
        %v757 = vunpack.c.l.b16 %v749
        %v758 = vunpack.c.h.b16 %v749
        %v759 = vunpack.c.l.b16 %v751
        %v760 = vunpack.c.l.b16 %v750
        %v761 = vunpack.c.h.b16 %v750
        %v762 = vunpack.c.l.b16 %v752
        %v763 = vpack.c.b16 %v757, %v757
        %v764 = vpack.c.b16 %v758, %v758
        %v765 = vpack.c.b16 %v759, %v759
        %v766 = vpack.c.b16 %v760, %v760
        %v767 = vpack.c.b16 %v761, %v761
        %v768 = vpack.c.b16 %v762, %v762
        %775 = vst.msk [vmem:[#allocation2] sm:$0xf] %vm658, %v763
        %776 = vst.msk [vmem:[#allocation2 + $0x4] sm:$0xf] %vm658, %v764
        %777 = vst.msk [vmem:[#allocation2 + $0x8] sm:$0x1] %vm661, %v765
        %778 = vst.msk [vmem:[#allocation2 + $0xc] sm:$0xf] %vm658, %v766
        %779 = vst.msk [vmem:[#allocation2 + $0x10] sm:$0xf] %vm658, %v767
        %780 = vst.msk [vmem:[#allocation2 + $0x14] sm:$0x1] %vm661, %v768
      $region48: #{tpu_custom_call.1} parent=39 // pred_fallthru
        _
      // Predicated region
      $region49: #{tpu_custom_call.1} parent=39 // pred_check
        %p781 = pneg %p708
      $region50: #{tpu_custom_call.1} parent=39 // pred_check_branch
        %783 = sbr.rel (%p781) target = $region52
      $region51: #{tpu_custom_call.1} parent=39 // pred_region
        %s784 = scalar_lea.vmem [#allocation2], 216
        %785 = vst.msk [vmem:[%s784] sm:$0xf] %vm658, 0
        %786 = vst.msk [vmem:[%s784 + $0x4] sm:$0xf] %vm658, 0
        %787 = vst.msk [vmem:[%s784 + $0x8] sm:$0x1] %vm661, 0
        %788 = vst.msk [vmem:[%s784 + $0xc] sm:$0xf] %vm658, 0
        %789 = vst.msk [vmem:[%s784 + $0x10] sm:$0xf] %vm658, 0
        %790 = vst.msk [vmem:[%s784 + $0x14] sm:$0x1] %vm661, 0
      $region52: #{tpu_custom_call.1} parent=39 // pred_fallthru
        _
      %p791 = scmp.lt.s32.totalorder %s21, 0
      // Predicated region
      $region53: #{tpu_custom_call.1} parent=39 // pred_check
        %p792 = pneg %p791
      $region54: #{tpu_custom_call.1} parent=39 // pred_check_branch
        %794 = sbr.rel (%p792) target = $region56
      $region55: #{tpu_custom_call.1} parent=39 // pred_region
        %s795 = sadd.s32 %s251, 16
        %s796 = smul.u32 %s795, 16
        %s797 = scalar_lea.vmem %s238, %s796
        %v798 = vld [vmem:[%s797] sm:$0xff]
        %v799 = vld [vmem:[%s797 + $0x8] sm:$0xff]
        %v800 = vld [vmem:[%s797 + $0x10] sm:$0xff]
        %v801 = vld [vmem:[%s797 + $0x18] sm:$0xff]
        %v802 = vpack.c.bf16 %v799, %v798
        %v803 = vpack.c.bf16 %v801, %v800
        %v805 = vshrl.u32 %v802, 16
        %v807 = vrot.slane %v805, 7
        %v808 = vshll.u32 %v802, 16
        %v810 = vor.u32 %v807, %v808
        %v812 = vshrl.u32 %v803, 16
        %v814 = vrot.slane %v812, 7
        %v815 = vshll.u32 %v803, 16
        %v817 = vor.u32 %v814, %v815
        %v822 = vsel %vm448, 0, %v810
        %v823 = vsel %vm448, 0, %v817
        %v824 = vsel %vm448, %v807, 0
        %v825 = vsel %vm448, %v814, 0
        %v830 = vunpack.c.l.b16 %v822
        %v831 = vunpack.c.h.b16 %v822
        %v832 = vunpack.c.l.b16 %v824
        %v833 = vunpack.c.l.b16 %v823
        %v834 = vunpack.c.h.b16 %v823
        %v835 = vunpack.c.l.b16 %v825
        %v836 = vpack.c.b16 %v830, %v830
        %v837 = vpack.c.b16 %v831, %v831
        %v838 = vpack.c.b16 %v832, %v832
        %v839 = vpack.c.b16 %v833, %v833
        %v840 = vpack.c.b16 %v834, %v834
        %v841 = vpack.c.b16 %v835, %v835
        %s848 = scalar_lea.vmem [#allocation2], 216
        %849 = vst.msk [vmem:[%s848] sm:$0xf] %vm658, %v836
        %850 = vst.msk [vmem:[%s848 + $0x4] sm:$0xf] %vm658, %v837
        %851 = vst.msk [vmem:[%s848 + $0x8] sm:$0x1] %vm661, %v838
        %852 = vst.msk [vmem:[%s848 + $0xc] sm:$0xf] %vm658, %v839
        %853 = vst.msk [vmem:[%s848 + $0x10] sm:$0xf] %vm658, %v840
        %854 = vst.msk [vmem:[%s848 + $0x14] sm:$0x1] %vm661, %v841
      $region56: #{tpu_custom_call.1} parent=39 // pred_fallthru
        _
      %v855 = vld [vmem:[#allocation2] sm:$0xf]
      %v856 = vld [vmem:[#allocation2 + $0x4] sm:$0xf]
      %v857 = vld [vmem:[#allocation2 + $0xc] sm:$0xf]
      %v858 = vld [vmem:[#allocation2 + $0x10] sm:$0xf]
      %v859 = vld [vmem:[#allocation2 + $0x18] sm:$0xf]
      %v860 = vld [vmem:[#allocation2 + $0x1c] sm:$0xf]
      %v861 = vld [vmem:[#allocation2 + $0x24] sm:$0xf]
      %v862 = vld [vmem:[#allocation2 + $0x28] sm:$0xf]
      %v863 = vld [vmem:[#allocation2 + $0x30] sm:$0xf]
      %v864 = vld [vmem:[#allocation2 + $0x34] sm:$0xf]
      %v865 = vld [vmem:[#allocation2 + $0x3c] sm:$0xf]
      %v866 = vld [vmem:[#allocation2 + $0x40] sm:$0xf]
      %v867 = vld [vmem:[#allocation2 + $0x48] sm:$0xf]
      %v868 = vld [vmem:[#allocation2 + $0x4c] sm:$0xf]
      %v869 = vld [vmem:[#allocation2 + $0x54] sm:$0xf]
      %v870 = vld [vmem:[#allocation2 + $0x58] sm:$0xf]
      %v871 = vld [vmem:[#allocation2 + $0x60] sm:$0xf]
      %v872 = vld [vmem:[#allocation2 + $0x64] sm:$0xf]
      %v873 = vld [vmem:[#allocation2 + $0x6c] sm:$0xf]
      %v874 = vld [vmem:[#allocation2 + $0x70] sm:$0xf]
      %v875 = vld [vmem:[#allocation2 + $0x78] sm:$0xf]
      %v876 = vld [vmem:[#allocation2 + $0x7c] sm:$0xf]
      %v877 = vld [vmem:[#allocation2 + $0x84] sm:$0xf]
      %v878 = vld [vmem:[#allocation2 + $0x88] sm:$0xf]
      %v879 = vld [vmem:[#allocation2 + $0x90] sm:$0xf]
      %v880 = vld [vmem:[#allocation2 + $0x94] sm:$0xf]
      %v881 = vld [vmem:[#allocation2 + $0x9c] sm:$0xf]
      %v882 = vld [vmem:[#allocation2 + $0xa0] sm:$0xf]
      %v883 = vld [vmem:[#allocation2 + $0xa8] sm:$0xf]
      %v884 = vld [vmem:[#allocation2 + $0xac] sm:$0xf]
      %v885 = vld [vmem:[#allocation2 + $0xb4] sm:$0xf]
      %v886 = vld [vmem:[#allocation2 + $0xb8] sm:$0xf]
      %v887 = vld [vmem:[#allocation2 + $0xc0] sm:$0xf]
      %v888 = vld [vmem:[#allocation2 + $0xc4] sm:$0xf]
      %v889 = vld [vmem:[#allocation2 + $0xcc] sm:$0xf]
      %v890 = vld [vmem:[#allocation2 + $0xd0] sm:$0xf]
      %v891 = vld [vmem:[%s1] sm:$0x3]
      %v892 = vld [vmem:[#allocation2 + $0x8] sm:$0x1]
      %v893 = vld [vmem:[#allocation2 + $0x14] sm:$0x1]
      %v894 = vld [vmem:[#allocation2 + $0x20] sm:$0x1]
      %v895 = vld [vmem:[#allocation2 + $0x2c] sm:$0x1]
      %v896 = vld [vmem:[#allocation2 + $0x38] sm:$0x1]
      %v897 = vld [vmem:[#allocation2 + $0x44] sm:$0x1]
      %v898 = vld [vmem:[#allocation2 + $0x50] sm:$0x1]
      %v899 = vld [vmem:[#allocation2 + $0x5c] sm:$0x1]
      %v900 = vld [vmem:[#allocation2 + $0x68] sm:$0x1]
      %v901 = vld [vmem:[#allocation2 + $0x74] sm:$0x1]
      %v902 = vld [vmem:[#allocation2 + $0x80] sm:$0x1]
      %v903 = vld [vmem:[#allocation2 + $0x8c] sm:$0x1]
      %v904 = vld [vmem:[#allocation2 + $0x98] sm:$0x1]
      %v905 = vld [vmem:[#allocation2 + $0xa4] sm:$0x1]
      %v906 = vld [vmem:[#allocation2 + $0xb0] sm:$0x1]
      %v907 = vld [vmem:[#allocation2 + $0xbc] sm:$0x1]
      %v908 = vld [vmem:[#allocation2 + $0xc8] sm:$0x1]
      %v909 = vld [vmem:[#allocation2 + $0xd4] sm:$0x1]
      %vm910 = vsmask.f32 3328
      %vm911 = vsmask.f32 7440
      %vm912 = vmor %vm910, %vm911
      %v914 = vshrl.u32 %v855, 16
      %v916 = vrot.slane %v914, 4
      %v917 = vshll.u32 %v855, 16
      %v919 = vrot.slane %v917, 5
      %v920 = vor.u32 %v916, %v919
      %v921 = vrot.slane %v920, 4
      %v923 = vshll.u32 %v856, 16
      %v925 = vrot.slane %v923, 5
      %v926 = vsel %vm912, %v921, %v925
      %v927 = vshrl.u32 %v856, 16
      %v929 = vrot.slane %v927, 4
      %v930 = vor.u32 %v929, %v925
      %v931 = vrot.slane %v930, 4
      %v933 = vshll.u32 %v892, 16
      %v935 = vrot.slane %v933, 5
      %v936 = vsel %vm912, %v931, %v935
      %v938 = vshrl.u32 %v857, 16
      %v940 = vrot.slane %v938, 4
      %v941 = vshll.u32 %v857, 16
      %v943 = vrot.slane %v941, 5
      %v944 = vor.u32 %v940, %v943
      %v945 = vrot.slane %v944, 4
      %v947 = vshll.u32 %v858, 16
      %v949 = vrot.slane %v947, 5
      %v950 = vsel %vm912, %v945, %v949
      %v951 = vshrl.u32 %v858, 16
      %v953 = vrot.slane %v951, 4
      %v954 = vor.u32 %v953, %v949
      %v955 = vrot.slane %v954, 4
      %v957 = vshll.u32 %v893, 16
      %v959 = vrot.slane %v957, 5
      %v960 = vsel %vm912, %v955, %v959
      %v962 = vshrl.u32 %v859, 16
      %v964 = vrot.slane %v962, 4
      %v965 = vshll.u32 %v859, 16
      %v967 = vrot.slane %v965, 5
      %v968 = vor.u32 %v964, %v967
      %v969 = vrot.slane %v968, 4
      %v971 = vshll.u32 %v860, 16
      %v973 = vrot.slane %v971, 5
      %v974 = vsel %vm912, %v969, %v973
      %v975 = vshrl.u32 %v860, 16
      %v977 = vrot.slane %v975, 4
      %v978 = vor.u32 %v977, %v973
      %v979 = vrot.slane %v978, 4
      %v981 = vshll.u32 %v894, 16
      %v983 = vrot.slane %v981, 5
      %v984 = vsel %vm912, %v979, %v983
      %v986 = vshrl.u32 %v861, 16
      %v988 = vrot.slane %v986, 4
      %v989 = vshll.u32 %v861, 16
      %v991 = vrot.slane %v989, 5
      %v992 = vor.u32 %v988, %v991
      %v993 = vrot.slane %v992, 4
      %v995 = vshll.u32 %v862, 16
      %v997 = vrot.slane %v995, 5
      %v998 = vsel %vm912, %v993, %v997
      %v999 = vshrl.u32 %v862, 16
      %v1001 = vrot.slane %v999, 4
      %v1002 = vor.u32 %v1001, %v997
      %v1003 = vrot.slane %v1002, 4
      %v1005 = vshll.u32 %v895, 16
      %v1007 = vrot.slane %v1005, 5
      %v1008 = vsel %vm912, %v1003, %v1007
      %v1010 = vshrl.u32 %v863, 16
      %v1012 = vrot.slane %v1010, 4
      %v1013 = vshll.u32 %v863, 16
      %v1015 = vrot.slane %v1013, 5
      %v1016 = vor.u32 %v1012, %v1015
      %v1017 = vrot.slane %v1016, 4
      %v1019 = vshll.u32 %v864, 16
      %v1021 = vrot.slane %v1019, 5
      %v1022 = vsel %vm912, %v1017, %v1021
      %v1023 = vshrl.u32 %v864, 16
      %v1025 = vrot.slane %v1023, 4
      %v1026 = vor.u32 %v1025, %v1021
      %v1027 = vrot.slane %v1026, 4
      %v1029 = vshll.u32 %v896, 16
      %v1031 = vrot.slane %v1029, 5
      %v1032 = vsel %vm912, %v1027, %v1031
      %v1034 = vshrl.u32 %v865, 16
      %v1036 = vrot.slane %v1034, 4
      %v1037 = vshll.u32 %v865, 16
      %v1039 = vrot.slane %v1037, 5
      %v1040 = vor.u32 %v1036, %v1039
      %v1041 = vrot.slane %v1040, 4
      %v1043 = vshll.u32 %v866, 16
      %v1045 = vrot.slane %v1043, 5
      %v1046 = vsel %vm912, %v1041, %v1045
      %v1047 = vshrl.u32 %v866, 16
      %v1049 = vrot.slane %v1047, 4
      %v1050 = vor.u32 %v1049, %v1045
      %v1051 = vrot.slane %v1050, 4
      %v1053 = vshll.u32 %v897, 16
      %v1055 = vrot.slane %v1053, 5
      %v1056 = vsel %vm912, %v1051, %v1055
      %v1058 = vshrl.u32 %v867, 16
      %v1060 = vrot.slane %v1058, 4
      %v1061 = vshll.u32 %v867, 16
      %v1063 = vrot.slane %v1061, 5
      %v1064 = vor.u32 %v1060, %v1063
      %v1065 = vrot.slane %v1064, 4
      %v1067 = vshll.u32 %v868, 16
      %v1069 = vrot.slane %v1067, 5
      %v1070 = vsel %vm912, %v1065, %v1069
      %v1071 = vshrl.u32 %v868, 16
      %v1073 = vrot.slane %v1071, 4
      %v1074 = vor.u32 %v1073, %v1069
      %v1075 = vrot.slane %v1074, 4
      %v1077 = vshll.u32 %v898, 16
      %v1079 = vrot.slane %v1077, 5
      %v1080 = vsel %vm912, %v1075, %v1079
      %v1082 = vshrl.u32 %v869, 16
      %v1084 = vrot.slane %v1082, 4
      %v1085 = vshll.u32 %v869, 16
      %v1087 = vrot.slane %v1085, 5
      %v1088 = vor.u32 %v1084, %v1087
      %v1089 = vrot.slane %v1088, 4
      %v1091 = vshll.u32 %v870, 16
      %v1093 = vrot.slane %v1091, 5
      %v1094 = vsel %vm912, %v1089, %v1093
      %v1095 = vshrl.u32 %v870, 16
      %v1097 = vrot.slane %v1095, 4
      %v1098 = vor.u32 %v1097, %v1093
      %v1099 = vrot.slane %v1098, 4
      %v1101 = vshll.u32 %v899, 16
      %v1103 = vrot.slane %v1101, 5
      %v1104 = vsel %vm912, %v1099, %v1103
      %v1106 = vshrl.u32 %v871, 16
      %v1108 = vrot.slane %v1106, 4
      %v1109 = vshll.u32 %v871, 16
      %v1111 = vrot.slane %v1109, 5
      %v1112 = vor.u32 %v1108, %v1111
      %v1113 = vrot.slane %v1112, 4
      %v1115 = vshll.u32 %v872, 16
      %v1117 = vrot.slane %v1115, 5
      %v1118 = vsel %vm912, %v1113, %v1117
      %v1119 = vshrl.u32 %v872, 16
      %v1121 = vrot.slane %v1119, 4
      %v1122 = vor.u32 %v1121, %v1117
      %v1123 = vrot.slane %v1122, 4
      %v1125 = vshll.u32 %v900, 16
      %v1127 = vrot.slane %v1125, 5
      %v1128 = vsel %vm912, %v1123, %v1127
      %v1130 = vshrl.u32 %v873, 16
      %v1132 = vrot.slane %v1130, 4
      %v1133 = vshll.u32 %v873, 16
      %v1135 = vrot.slane %v1133, 5
      %v1136 = vor.u32 %v1132, %v1135
      %v1137 = vrot.slane %v1136, 4
      %v1139 = vshll.u32 %v874, 16
      %v1141 = vrot.slane %v1139, 5
      %v1142 = vsel %vm912, %v1137, %v1141
      %v1143 = vshrl.u32 %v874, 16
      %v1145 = vrot.slane %v1143, 4
      %v1146 = vor.u32 %v1145, %v1141
      %v1147 = vrot.slane %v1146, 4
      %v1149 = vshll.u32 %v901, 16
      %v1151 = vrot.slane %v1149, 5
      %v1152 = vsel %vm912, %v1147, %v1151
      %v1154 = vshrl.u32 %v875, 16
      %v1156 = vrot.slane %v1154, 4
      %v1157 = vshll.u32 %v875, 16
      %v1159 = vrot.slane %v1157, 5
      %v1160 = vor.u32 %v1156, %v1159
      %v1161 = vrot.slane %v1160, 4
      %v1163 = vshll.u32 %v876, 16
      %v1165 = vrot.slane %v1163, 5
      %v1166 = vsel %vm912, %v1161, %v1165
      %v1167 = vshrl.u32 %v876, 16
      %v1169 = vrot.slane %v1167, 4
      %v1170 = vor.u32 %v1169, %v1165
      %v1171 = vrot.slane %v1170, 4
      %v1173 = vshll.u32 %v902, 16
      %v1175 = vrot.slane %v1173, 5
      %v1176 = vsel %vm912, %v1171, %v1175
      %v1178 = vshrl.u32 %v877, 16
      %v1180 = vrot.slane %v1178, 4
      %v1181 = vshll.u32 %v877, 16
      %v1183 = vrot.slane %v1181, 5
      %v1184 = vor.u32 %v1180, %v1183
      %v1185 = vrot.slane %v1184, 4
      %v1187 = vshll.u32 %v878, 16
      %v1189 = vrot.slane %v1187, 5
      %v1190 = vsel %vm912, %v1185, %v1189
      %v1191 = vshrl.u32 %v878, 16
      %v1193 = vrot.slane %v1191, 4
      %v1194 = vor.u32 %v1193, %v1189
      %v1195 = vrot.slane %v1194, 4
      %v1197 = vshll.u32 %v903, 16
      %v1199 = vrot.slane %v1197, 5
      %v1200 = vsel %vm912, %v1195, %v1199
      %v1202 = vshrl.u32 %v879, 16
      %v1204 = vrot.slane %v1202, 4
      %v1205 = vshll.u32 %v879, 16
      %v1207 = vrot.slane %v1205, 5
      %v1208 = vor.u32 %v1204, %v1207
      %v1209 = vrot.slane %v1208, 4
      %v1211 = vshll.u32 %v880, 16
      %v1213 = vrot.slane %v1211, 5
      %v1214 = vsel %vm912, %v1209, %v1213
      %v1215 = vshrl.u32 %v880, 16
      %v1217 = vrot.slane %v1215, 4
      %v1218 = vor.u32 %v1217, %v1213
      %v1219 = vrot.slane %v1218, 4
      %v1221 = vshll.u32 %v904, 16
      %v1223 = vrot.slane %v1221, 5
      %v1224 = vsel %vm912, %v1219, %v1223
      %v1226 = vshrl.u32 %v881, 16
      %v1228 = vrot.slane %v1226, 4
      %v1229 = vshll.u32 %v881, 16
      %v1231 = vrot.slane %v1229, 5
      %v1232 = vor.u32 %v1228, %v1231
      %v1233 = vrot.slane %v1232, 4
      %v1235 = vshll.u32 %v882, 16
      %v1237 = vrot.slane %v1235, 5
      %v1238 = vsel %vm912, %v1233, %v1237
      %v1239 = vshrl.u32 %v882, 16
      %v1241 = vrot.slane %v1239, 4
      %v1242 = vor.u32 %v1241, %v1237
      %v1243 = vrot.slane %v1242, 4
      %v1245 = vshll.u32 %v905, 16
      %v1247 = vrot.slane %v1245, 5
      %v1248 = vsel %vm912, %v1243, %v1247
      %v1250 = vshrl.u32 %v883, 16
      %v1252 = vrot.slane %v1250, 4
      %v1253 = vshll.u32 %v883, 16
      %v1255 = vrot.slane %v1253, 5
      %v1256 = vor.u32 %v1252, %v1255
      %v1257 = vrot.slane %v1256, 4
      %v1259 = vshll.u32 %v884, 16
      %v1261 = vrot.slane %v1259, 5
      %v1262 = vsel %vm912, %v1257, %v1261
      %v1263 = vshrl.u32 %v884, 16
      %v1265 = vrot.slane %v1263, 4
      %v1266 = vor.u32 %v1265, %v1261
      %v1267 = vrot.slane %v1266, 4
      %v1269 = vshll.u32 %v906, 16
      %v1271 = vrot.slane %v1269, 5
      %v1272 = vsel %vm912, %v1267, %v1271
      %v1274 = vshrl.u32 %v885, 16
      %v1276 = vrot.slane %v1274, 4
      %v1277 = vshll.u32 %v885, 16
      %v1279 = vrot.slane %v1277, 5
      %v1280 = vor.u32 %v1276, %v1279
      %v1281 = vrot.slane %v1280, 4
      %v1283 = vshll.u32 %v886, 16
      %v1285 = vrot.slane %v1283, 5
      %v1286 = vsel %vm912, %v1281, %v1285
      %v1287 = vshrl.u32 %v886, 16
      %v1289 = vrot.slane %v1287, 4
      %v1290 = vor.u32 %v1289, %v1285
      %v1291 = vrot.slane %v1290, 4
      %v1293 = vshll.u32 %v907, 16
      %v1295 = vrot.slane %v1293, 5
      %v1296 = vsel %vm912, %v1291, %v1295
      %v1298 = vshrl.u32 %v887, 16
      %v1300 = vrot.slane %v1298, 4
      %v1301 = vshll.u32 %v887, 16
      %v1303 = vrot.slane %v1301, 5
      %v1304 = vor.u32 %v1300, %v1303
      %v1305 = vrot.slane %v1304, 4
      %v1307 = vshll.u32 %v888, 16
      %v1309 = vrot.slane %v1307, 5
      %v1310 = vsel %vm912, %v1305, %v1309
      %v1311 = vshrl.u32 %v888, 16
      %v1313 = vrot.slane %v1311, 4
      %v1314 = vor.u32 %v1313, %v1309
      %v1315 = vrot.slane %v1314, 4
      %v1317 = vshll.u32 %v908, 16
      %v1319 = vrot.slane %v1317, 5
      %v1320 = vsel %vm912, %v1315, %v1319
      %v1322 = vshrl.u32 %v889, 16
      %v1324 = vrot.slane %v1322, 4
      %v1325 = vshll.u32 %v889, 16
      %v1327 = vrot.slane %v1325, 5
      %v1328 = vor.u32 %v1324, %v1327
      %v1329 = vrot.slane %v1328, 4
      %v1331 = vshll.u32 %v890, 16
      %v1333 = vrot.slane %v1331, 5
      %v1334 = vsel %vm912, %v1329, %v1333
      %v1335 = vshrl.u32 %v890, 16
      %v1337 = vrot.slane %v1335, 4
      %v1338 = vor.u32 %v1337, %v1333
      %v1339 = vrot.slane %v1338, 4
      %v1341 = vshll.u32 %v909, 16
      %v1343 = vrot.slane %v1341, 5
      %v1344 = vsel %vm912, %v1339, %v1343
      %v1345 = vld [vmem:[%s1] sm:$0xc]
      %v1346 = vunpack.c.l.b16 %v926
      %v1347 = vunpack.c.l.b16 %v936
      %v1348 = vunpack.c.l.b16 %v950
      %v1349 = vunpack.c.l.b16 %v960
      %v1350 = vunpack.c.l.b16 %v974
      %v1351 = vunpack.c.l.b16 %v984
      %v1352 = vunpack.c.l.b16 %v998
      %v1353 = vunpack.c.l.b16 %v1008
      %v1354 = vunpack.c.l.b16 %v1022
      %v1355 = vunpack.c.l.b16 %v1032
      %v1356 = vunpack.c.l.b16 %v1046
      %v1357 = vunpack.c.l.b16 %v1056
      %v1358 = vunpack.c.l.b16 %v1070
      %v1359 = vunpack.c.l.b16 %v1080
      %v1360 = vunpack.c.l.b16 %v1094
      %v1361 = vunpack.c.l.b16 %v1104
      %v1362 = vunpack.c.l.b16 %v1118
      %v1363 = vunpack.c.l.b16 %v1128
      %v1364 = vunpack.c.l.b16 %v1142
      %v1365 = vunpack.c.l.b16 %v1152
      %v1366 = vunpack.c.l.b16 %v1166
      %v1367 = vunpack.c.l.b16 %v1176
      %v1368 = vunpack.c.l.b16 %v1190
      %v1369 = vunpack.c.l.b16 %v1200
      %v1370 = vunpack.c.l.b16 %v1214
      %v1371 = vunpack.c.l.b16 %v1224
      %v1372 = vunpack.c.l.b16 %v1238
      %v1373 = vunpack.c.l.b16 %v1248
      %v1374 = vunpack.c.l.b16 %v1262
      %v1375 = vunpack.c.l.b16 %v1272
      %v1376 = vunpack.c.l.b16 %v1286
      %v1377 = vunpack.c.l.b16 %v1296
      %v1378 = vunpack.c.l.b16 %v1310
      %v1379 = vunpack.c.l.b16 %v1320
      %v1380 = vunpack.c.l.b16 %v1334
      %v1381 = vunpack.c.l.b16 %v1344
      %v1382 = vpack.c.b16 %v1347, %v1346
      %v1383 = vpack.c.b16 %v1349, %v1348
      %v1384 = vpack.c.b16 %v1351, %v1350
      %v1385 = vpack.c.b16 %v1353, %v1352
      %v1386 = vpack.c.b16 %v1355, %v1354
      %v1387 = vpack.c.b16 %v1357, %v1356
      %v1388 = vpack.c.b16 %v1359, %v1358
      %v1389 = vpack.c.b16 %v1361, %v1360
      %v1390 = vpack.c.b16 %v1363, %v1362
      %v1391 = vpack.c.b16 %v1365, %v1364
      %v1392 = vpack.c.b16 %v1367, %v1366
      %v1393 = vpack.c.b16 %v1369, %v1368
      %v1394 = vpack.c.b16 %v1371, %v1370
      %v1395 = vpack.c.b16 %v1373, %v1372
      %v1396 = vpack.c.b16 %v1375, %v1374
      %v1397 = vpack.c.b16 %v1377, %v1376
      %v1398 = vpack.c.b16 %v1379, %v1378
      %v1399 = vpack.c.b16 %v1381, %v1380
      %v1401 = vunpack.c.l.b16 %v1345
      %v1402 = vpack.c.b16 %v1401, %v1401
      %v1403 = vrot.slane %v1402, 2
      %vm1404 = vcmask 31744
      %v1406 = vsel %vm1404, %v1382, 0
      %v1409 = vsel %vm1404, %v1383, 0
      %v1412 = vsel %vm1404, %v1384, 0
      %v1415 = vsel %vm1404, %v1385, 0
      %v1418 = vsel %vm1404, %v1386, 0
      %v1421 = vsel %vm1404, %v1387, 0
      %v1424 = vsel %vm1404, %v1388, 0
      %v1427 = vsel %vm1404, %v1389, 0
      %v1430 = vsel %vm1404, %v1390, 0
      %v1433 = vsel %vm1404, %v1391, 0
      %v1436 = vsel %vm1404, %v1392, 0
      %v1439 = vsel %vm1404, %v1393, 0
      %v1442 = vsel %vm1404, %v1394, 0
      %v1445 = vsel %vm1404, %v1395, 0
      %v1448 = vsel %vm1404, %v1396, 0
      %v1451 = vsel %vm1404, %v1397, 0
      %v1454 = vsel %vm1404, %v1398, 0
      %v1457 = vsel %vm1404, %v1399, 0
      %vm1459 = vcmask 1041408
      %v1461 = vsel %vm1459, %v1403, 0
      %1463 = vmatprep.subr.bf16.mxu0 0
      %1464 = vmatpush1.bf16.msra.mxu0 0
      %1465 = vmatprep.subr.bf16.mxu0 0
      %1466 = vmatpush1.bf16.msra.mxu0 0
      %1467 = vmatprep.subr.bf16.mxu0 0
      %1468 = vmatpush1.bf16.msra.mxu0 0
      %1469 = vmatprep.subr.bf16.mxu0 0
      %1470 = vmatpush1.bf16.msra.mxu0 0
      %1471 = vmatprep.subr.bf16.mxu0 0
      %1472 = vmatpush1.bf16.msra.mxu0 0
      %1473 = vmatprep.subr.bf16.mxu0 0
      %1474 = vmatpush1.bf16.msra.mxu0 0
      %1475 = vmatprep.subr.bf16.mxu0 0
      %1476 = vmatpush1.bf16.msra.mxu0 0
      %1477 = vmatprep.subr.bf16.mxu0 0
      %1478 = vmatpush1.bf16.msra.mxu0 %v1461
      %1479 = vmatprep.subr.bf16.mxu0 0
      %1480 = vmatpush2.bf16.msra.mxu0 0
      %1481 = vmatprep.subr.bf16.mxu0 0
      %1482 = vmatpush2.bf16.msra.mxu0 0
      %1483 = vmatprep.subr.bf16.mxu0 0
      %1484 = vmatpush2.bf16.msra.mxu0 0
      %1485 = vmatprep.subr.bf16.mxu0 0
      %1486 = vmatpush2.bf16.msra.mxu0 0
      %1487 = vmatprep.subr.bf16.mxu0 0
      %1488 = vmatpush2.bf16.msra.mxu0 0
      %1489 = vmatprep.subr.bf16.mxu0 0
      %1490 = vmatpush2.bf16.msra.mxu0 0
      %1491 = vmatprep.subr.bf16.mxu0 0
      %1492 = vmatpush2.bf16.msra.mxu0 0
      %1493 = vmatprep.subr.bf16.mxu0 0
      %1494 = vmatpush2.bf16.msra.mxu0 0
      %1495 = vmatprep.mubr.bf16.mxu0 0
      %1496 = vmatmul.mubr.bf16.gmra.mxu0 %v1406
      %v1497 = vpop.f32.mrf.mxu0
      %v1498 = vadd.f32 0.0, %v1497
      %v1499 = vpop.f32.mrf.mxu0
      %v1500 = vpop.f32.mrf.mxu0
      %v1501 = vadd.f32 0.0, %v1500
      %v1502 = vpop.f32.mrf.mxu0
      %1503 = vmatprep.mubr.bf16.mxu0 0
      %1504 = vmatmul.mubr.bf16.gmra.mxu0 %v1409
      %v1505 = vpop.f32.mrf.mxu0
      %v1506 = vadd.f32 0.0, %v1505
      %v1507 = vpop.f32.mrf.mxu0
      %v1508 = vpop.f32.mrf.mxu0
      %v1509 = vadd.f32 0.0, %v1508
      %v1510 = vpop.f32.mrf.mxu0
      %1511 = vmatprep.mubr.bf16.mxu0 0
      %1512 = vmatmul.mubr.bf16.gmra.mxu0 %v1412
      %v1513 = vpop.f32.mrf.mxu0
      %v1514 = vadd.f32 0.0, %v1513
      %v1515 = vpop.f32.mrf.mxu0
      %v1516 = vpop.f32.mrf.mxu0
      %v1517 = vadd.f32 0.0, %v1516
      %v1518 = vpop.f32.mrf.mxu0
      %1519 = vmatprep.mubr.bf16.mxu0 0
      %1520 = vmatmul.mubr.bf16.gmra.mxu0 %v1415
      %v1521 = vpop.f32.mrf.mxu0
      %v1522 = vadd.f32 0.0, %v1521
      %v1523 = vpop.f32.mrf.mxu0
      %v1524 = vpop.f32.mrf.mxu0
      %v1525 = vadd.f32 0.0, %v1524
      %v1526 = vpop.f32.mrf.mxu0
      %1527 = vmatprep.mubr.bf16.mxu0 0
      %1528 = vmatmul.mubr.bf16.gmra.mxu0 %v1418
      %v1529 = vpop.f32.mrf.mxu0
      %v1530 = vadd.f32 0.0, %v1529
      %v1531 = vpop.f32.mrf.mxu0
      %v1532 = vpop.f32.mrf.mxu0
      %v1533 = vadd.f32 0.0, %v1532
      %v1534 = vpop.f32.mrf.mxu0
      %1535 = vmatprep.mubr.bf16.mxu0 0
      %1536 = vmatmul.mubr.bf16.gmra.mxu0 %v1421
      %v1537 = vpop.f32.mrf.mxu0
      %v1538 = vadd.f32 0.0, %v1537
      %v1539 = vpop.f32.mrf.mxu0
      %v1540 = vpop.f32.mrf.mxu0
      %v1541 = vadd.f32 0.0, %v1540
      %v1542 = vpop.f32.mrf.mxu0
      %1543 = vmatprep.mubr.bf16.mxu0 0
      %1544 = vmatmul.mubr.bf16.gmra.mxu0 %v1424
      %v1545 = vpop.f32.mrf.mxu0
      %v1546 = vadd.f32 0.0, %v1545
      %v1547 = vpop.f32.mrf.mxu0
      %v1548 = vpop.f32.mrf.mxu0
      %v1549 = vadd.f32 0.0, %v1548
      %v1550 = vpop.f32.mrf.mxu0
      %1551 = vmatprep.mubr.bf16.mxu0 0
      %1552 = vmatmul.mubr.bf16.gmra.mxu0 %v1427
      %v1553 = vpop.f32.mrf.mxu0
      %v1554 = vadd.f32 0.0, %v1553
      %v1555 = vpop.f32.mrf.mxu0
      %v1556 = vpop.f32.mrf.mxu0
      %v1557 = vadd.f32 0.0, %v1556
      %v1558 = vpop.f32.mrf.mxu0
      %1559 = vmatprep.mubr.bf16.mxu0 0
      %1560 = vmatmul.mubr.bf16.gmra.mxu0 %v1430
      %v1561 = vpop.f32.mrf.mxu0
      %v1562 = vadd.f32 0.0, %v1561
      %v1563 = vpop.f32.mrf.mxu0
      %v1564 = vpop.f32.mrf.mxu0
      %v1565 = vadd.f32 0.0, %v1564
      %v1566 = vpop.f32.mrf.mxu0
      %1567 = vmatprep.mubr.bf16.mxu0 0
      %1568 = vmatmul.mubr.bf16.gmra.mxu0 %v1433
      %v1569 = vpop.f32.mrf.mxu0
      %v1570 = vadd.f32 0.0, %v1569
      %v1571 = vpop.f32.mrf.mxu0
      %v1572 = vpop.f32.mrf.mxu0
      %v1573 = vadd.f32 0.0, %v1572
      %v1574 = vpop.f32.mrf.mxu0
      %1575 = vmatprep.mubr.bf16.mxu0 0
      %1576 = vmatmul.mubr.bf16.gmra.mxu0 %v1436
      %v1577 = vpop.f32.mrf.mxu0
      %v1578 = vadd.f32 0.0, %v1577
      %v1579 = vpop.f32.mrf.mxu0
      %v1580 = vpop.f32.mrf.mxu0
      %v1581 = vadd.f32 0.0, %v1580
      %v1582 = vpop.f32.mrf.mxu0
      %1583 = vmatprep.mubr.bf16.mxu0 0
      %1584 = vmatmul.mubr.bf16.gmra.mxu0 %v1439
      %v1585 = vpop.f32.mrf.mxu0
      %v1586 = vadd.f32 0.0, %v1585
      %v1587 = vpop.f32.mrf.mxu0
      %v1588 = vpop.f32.mrf.mxu0
      %v1589 = vadd.f32 0.0, %v1588
      %v1590 = vpop.f32.mrf.mxu0
      %1591 = vmatprep.mubr.bf16.mxu0 0
      %1592 = vmatmul.mubr.bf16.gmra.mxu0 %v1442
      %v1593 = vpop.f32.mrf.mxu0
      %v1594 = vadd.f32 0.0, %v1593
      %v1595 = vpop.f32.mrf.mxu0
      %v1596 = vpop.f32.mrf.mxu0
      %v1597 = vadd.f32 0.0, %v1596
      %v1598 = vpop.f32.mrf.mxu0
      %1599 = vmatprep.mubr.bf16.mxu0 0
      %1600 = vmatmul.mubr.bf16.gmra.mxu0 %v1445
      %v1601 = vpop.f32.mrf.mxu0
      %v1602 = vadd.f32 0.0, %v1601
      %v1603 = vpop.f32.mrf.mxu0
      %v1604 = vpop.f32.mrf.mxu0
      %v1605 = vadd.f32 0.0, %v1604
      %v1606 = vpop.f32.mrf.mxu0
      %1607 = vmatprep.mubr.bf16.mxu0 0
      %1608 = vmatmul.mubr.bf16.gmra.mxu0 %v1448
      %v1609 = vpop.f32.mrf.mxu0
      %v1610 = vadd.f32 0.0, %v1609
      %v1611 = vpop.f32.mrf.mxu0
      %v1612 = vpop.f32.mrf.mxu0
      %v1613 = vadd.f32 0.0, %v1612
      %v1614 = vpop.f32.mrf.mxu0
      %1615 = vmatprep.mubr.bf16.mxu0 0
      %1616 = vmatmul.mubr.bf16.gmra.mxu0 %v1451
      %v1617 = vpop.f32.mrf.mxu0
      %v1618 = vadd.f32 0.0, %v1617
      %v1619 = vpop.f32.mrf.mxu0
      %v1620 = vpop.f32.mrf.mxu0
      %v1621 = vadd.f32 0.0, %v1620
      %v1622 = vpop.f32.mrf.mxu0
      %1623 = vmatprep.mubr.bf16.mxu0 0
      %1624 = vmatmul.mubr.bf16.gmra.mxu0 %v1454
      %v1625 = vpop.f32.mrf.mxu0
      %v1626 = vadd.f32 0.0, %v1625
      %v1627 = vpop.f32.mrf.mxu0
      %v1628 = vpop.f32.mrf.mxu0
      %v1629 = vadd.f32 0.0, %v1628
      %v1630 = vpop.f32.mrf.mxu0
      %1631 = vmatprep.mubr.bf16.mxu0 0
      %1632 = vmatmul.mubr.bf16.gmra.mxu0 %v1457
      %v1633 = vpop.f32.mrf.mxu0
      %v1634 = vadd.f32 0.0, %v1633
      %v1635 = vpop.f32.mrf.mxu0
      %v1636 = vpop.f32.mrf.mxu0
      %v1637 = vadd.f32 0.0, %v1636
      %v1638 = vpop.f32.mrf.mxu0
      %1639 = vdwg.mxu0
      %v1676 = vunpack.c.l.b16 %v855
      %v1677 = vunpack.c.l.b16 %v856
      %v1678 = vunpack.c.l.b16 %v857
      %v1679 = vunpack.c.l.b16 %v858
      %v1680 = vunpack.c.l.b16 %v859
      %v1681 = vunpack.c.l.b16 %v860
      %v1682 = vunpack.c.l.b16 %v861
      %v1683 = vunpack.c.l.b16 %v862
      %v1684 = vunpack.c.l.b16 %v863
      %v1685 = vunpack.c.l.b16 %v864
      %v1686 = vunpack.c.l.b16 %v865
      %v1687 = vunpack.c.l.b16 %v866
      %v1688 = vunpack.c.l.b16 %v867
      %v1689 = vunpack.c.l.b16 %v868
      %v1690 = vunpack.c.l.b16 %v869
      %v1691 = vunpack.c.l.b16 %v870
      %v1692 = vunpack.c.l.b16 %v871
      %v1693 = vunpack.c.l.b16 %v872
      %v1694 = vunpack.c.l.b16 %v873
      %v1695 = vunpack.c.l.b16 %v874
      %v1696 = vunpack.c.l.b16 %v875
      %v1697 = vunpack.c.l.b16 %v876
      %v1698 = vunpack.c.l.b16 %v877
      %v1699 = vunpack.c.l.b16 %v878
      %v1700 = vunpack.c.l.b16 %v879
      %v1701 = vunpack.c.l.b16 %v880
      %v1702 = vunpack.c.l.b16 %v881
      %v1703 = vunpack.c.l.b16 %v882
      %v1704 = vunpack.c.l.b16 %v883
      %v1705 = vunpack.c.l.b16 %v884
      %v1706 = vunpack.c.l.b16 %v885
      %v1707 = vunpack.c.l.b16 %v886
      %v1708 = vunpack.c.l.b16 %v887
      %v1709 = vunpack.c.l.b16 %v888
      %v1710 = vunpack.c.l.b16 %v889
      %v1711 = vunpack.c.l.b16 %v890
      %v1712 = vpack.c.b16 %v1677, %v1676
      %v1713 = vpack.c.b16 %v1679, %v1678
      %v1714 = vpack.c.b16 %v1681, %v1680
      %v1715 = vpack.c.b16 %v1683, %v1682
      %v1716 = vpack.c.b16 %v1685, %v1684
      %v1717 = vpack.c.b16 %v1687, %v1686
      %v1718 = vpack.c.b16 %v1689, %v1688
      %v1719 = vpack.c.b16 %v1691, %v1690
      %v1720 = vpack.c.b16 %v1693, %v1692
      %v1721 = vpack.c.b16 %v1695, %v1694
      %v1722 = vpack.c.b16 %v1697, %v1696
      %v1723 = vpack.c.b16 %v1699, %v1698
      %v1724 = vpack.c.b16 %v1701, %v1700
      %v1725 = vpack.c.b16 %v1703, %v1702
      %v1726 = vpack.c.b16 %v1705, %v1704
      %v1727 = vpack.c.b16 %v1707, %v1706
      %v1728 = vpack.c.b16 %v1709, %v1708
      %v1729 = vpack.c.b16 %v1711, %v1710
      %v1731 = vsel %vm1404, %v1712, 0
      %v1734 = vsel %vm1404, %v1713, 0
      %v1737 = vsel %vm1404, %v1714, 0
      %v1740 = vsel %vm1404, %v1715, 0
      %v1743 = vsel %vm1404, %v1716, 0
      %v1746 = vsel %vm1404, %v1717, 0
      %v1749 = vsel %vm1404, %v1718, 0
      %v1752 = vsel %vm1404, %v1719, 0
      %v1755 = vsel %vm1404, %v1720, 0
      %v1758 = vsel %vm1404, %v1721, 0
      %v1761 = vsel %vm1404, %v1722, 0
      %v1764 = vsel %vm1404, %v1723, 0
      %v1767 = vsel %vm1404, %v1724, 0
      %v1770 = vsel %vm1404, %v1725, 0
      %v1773 = vsel %vm1404, %v1726, 0
      %v1776 = vsel %vm1404, %v1727, 0
      %v1779 = vsel %vm1404, %v1728, 0
      %v1782 = vsel %vm1404, %v1729, 0
      %v1785 = vsel %vm1459, %v891, 0
      %1787 = vmatprep.subr.bf16.mxu0 0
      %1788 = vmatpush1.bf16.msra.mxu0 0
      %1789 = vmatprep.subr.bf16.mxu0 0
      %1790 = vmatpush1.bf16.msra.mxu0 0
      %1791 = vmatprep.subr.bf16.mxu0 0
      %1792 = vmatpush1.bf16.msra.mxu0 0
      %1793 = vmatprep.subr.bf16.mxu0 0
      %1794 = vmatpush1.bf16.msra.mxu0 0
      %1795 = vmatprep.subr.bf16.mxu0 0
      %1796 = vmatpush1.bf16.msra.mxu0 0
      %1797 = vmatprep.subr.bf16.mxu0 0
      %1798 = vmatpush1.bf16.msra.mxu0 0
      %1799 = vmatprep.subr.bf16.mxu0 0
      %1800 = vmatpush1.bf16.msra.mxu0 0
      %1801 = vmatprep.subr.bf16.mxu0 0
      %1802 = vmatpush1.bf16.msra.mxu0 %v1785
      %1803 = vmatprep.subr.bf16.mxu0 0
      %1804 = vmatpush2.bf16.msra.mxu0 0
      %1805 = vmatprep.subr.bf16.mxu0 0
      %1806 = vmatpush2.bf16.msra.mxu0 0
      %1807 = vmatprep.subr.bf16.mxu0 0
      %1808 = vmatpush2.bf16.msra.mxu0 0
      %1809 = vmatprep.subr.bf16.mxu0 0
      %1810 = vmatpush2.bf16.msra.mxu0 0
      %1811 = vmatprep.subr.bf16.mxu0 0
      %1812 = vmatpush2.bf16.msra.mxu0 0
      %1813 = vmatprep.subr.bf16.mxu0 0
      %1814 = vmatpush2.bf16.msra.mxu0 0
      %1815 = vmatprep.subr.bf16.mxu0 0
      %1816 = vmatpush2.bf16.msra.mxu0 0
      %1817 = vmatprep.subr.bf16.mxu0 0
      %1818 = vmatpush2.bf16.msra.mxu0 0
      %1819 = vmatprep.mubr.bf16.mxu0 0
      %1820 = vmatmul.mubr.bf16.gmra.mxu0 %v1731
      %v1821 = vpop.f32.mrf.mxu0
      %v1822 = vadd.f32 %v1498, %v1821
      %v1823 = vpop.f32.mrf.mxu0
      %v1824 = vpop.f32.mrf.mxu0
      %v1825 = vadd.f32 %v1501, %v1824
      %v1826 = vpop.f32.mrf.mxu0
      %1827 = vmatprep.mubr.bf16.mxu0 0
      %1828 = vmatmul.mubr.bf16.gmra.mxu0 %v1734
      %v1829 = vpop.f32.mrf.mxu0
      %v1830 = vadd.f32 %v1506, %v1829
      %v1831 = vpop.f32.mrf.mxu0
      %v1832 = vpop.f32.mrf.mxu0
      %v1833 = vadd.f32 %v1509, %v1832
      %v1834 = vpop.f32.mrf.mxu0
      %1835 = vmatprep.mubr.bf16.mxu0 0
      %1836 = vmatmul.mubr.bf16.gmra.mxu0 %v1737
      %v1837 = vpop.f32.mrf.mxu0
      %v1838 = vadd.f32 %v1514, %v1837
      %v1839 = vpop.f32.mrf.mxu0
      %v1840 = vpop.f32.mrf.mxu0
      %v1841 = vadd.f32 %v1517, %v1840
      %v1842 = vpop.f32.mrf.mxu0
      %1843 = vmatprep.mubr.bf16.mxu0 0
      %1844 = vmatmul.mubr.bf16.gmra.mxu0 %v1740
      %v1845 = vpop.f32.mrf.mxu0
      %v1846 = vadd.f32 %v1522, %v1845
      %v1847 = vpop.f32.mrf.mxu0
      %v1848 = vpop.f32.mrf.mxu0
      %v1849 = vadd.f32 %v1525, %v1848
      %v1850 = vpop.f32.mrf.mxu0
      %1851 = vmatprep.mubr.bf16.mxu0 0
      %1852 = vmatmul.mubr.bf16.gmra.mxu0 %v1743
      %v1853 = vpop.f32.mrf.mxu0
      %v1854 = vadd.f32 %v1530, %v1853
      %v1855 = vpop.f32.mrf.mxu0
      %v1856 = vpop.f32.mrf.mxu0
      %v1857 = vadd.f32 %v1533, %v1856
      %v1858 = vpop.f32.mrf.mxu0
      %1859 = vmatprep.mubr.bf16.mxu0 0
      %1860 = vmatmul.mubr.bf16.gmra.mxu0 %v1746
      %v1861 = vpop.f32.mrf.mxu0
      %v1862 = vadd.f32 %v1538, %v1861
      %v1863 = vpop.f32.mrf.mxu0
      %v1864 = vpop.f32.mrf.mxu0
      %v1865 = vadd.f32 %v1541, %v1864
      %v1866 = vpop.f32.mrf.mxu0
      %1867 = vmatprep.mubr.bf16.mxu0 0
      %1868 = vmatmul.mubr.bf16.gmra.mxu0 %v1749
      %v1869 = vpop.f32.mrf.mxu0
      %v1870 = vadd.f32 %v1546, %v1869
      %v1871 = vpop.f32.mrf.mxu0
      %v1872 = vpop.f32.mrf.mxu0
      %v1873 = vadd.f32 %v1549, %v1872
      %v1874 = vpop.f32.mrf.mxu0
      %1875 = vmatprep.mubr.bf16.mxu0 0
      %1876 = vmatmul.mubr.bf16.gmra.mxu0 %v1752
      %v1877 = vpop.f32.mrf.mxu0
      %v1878 = vadd.f32 %v1554, %v1877
      %v1879 = vpop.f32.mrf.mxu0
      %v1880 = vpop.f32.mrf.mxu0
      %v1881 = vadd.f32 %v1557, %v1880
      %v1882 = vpop.f32.mrf.mxu0
      %1883 = vmatprep.mubr.bf16.mxu0 0
      %1884 = vmatmul.mubr.bf16.gmra.mxu0 %v1755
      %v1885 = vpop.f32.mrf.mxu0
      %v1886 = vadd.f32 %v1562, %v1885
      %v1887 = vpop.f32.mrf.mxu0
      %v1888 = vpop.f32.mrf.mxu0
      %v1889 = vadd.f32 %v1565, %v1888
      %v1890 = vpop.f32.mrf.mxu0
      %1891 = vmatprep.mubr.bf16.mxu0 0
      %1892 = vmatmul.mubr.bf16.gmra.mxu0 %v1758
      %v1893 = vpop.f32.mrf.mxu0
      %v1894 = vadd.f32 %v1570, %v1893
      %v1895 = vpop.f32.mrf.mxu0
      %v1896 = vpop.f32.mrf.mxu0
      %v1897 = vadd.f32 %v1573, %v1896
      %v1898 = vpop.f32.mrf.mxu0
      %1899 = vmatprep.mubr.bf16.mxu0 0
      %1900 = vmatmul.mubr.bf16.gmra.mxu0 %v1761
      %v1901 = vpop.f32.mrf.mxu0
      %v1902 = vadd.f32 %v1578, %v1901
      %v1903 = vpop.f32.mrf.mxu0
      %v1904 = vpop.f32.mrf.mxu0
      %v1905 = vadd.f32 %v1581, %v1904
      %v1906 = vpop.f32.mrf.mxu0
      %1907 = vmatprep.mubr.bf16.mxu0 0
      %1908 = vmatmul.mubr.bf16.gmra.mxu0 %v1764
      %v1909 = vpop.f32.mrf.mxu0
      %v1910 = vadd.f32 %v1586, %v1909
      %v1911 = vpop.f32.mrf.mxu0
      %v1912 = vpop.f32.mrf.mxu0
      %v1913 = vadd.f32 %v1589, %v1912
      %v1914 = vpop.f32.mrf.mxu0
      %1915 = vmatprep.mubr.bf16.mxu0 0
      %1916 = vmatmul.mubr.bf16.gmra.mxu0 %v1767
      %v1917 = vpop.f32.mrf.mxu0
      %v1918 = vadd.f32 %v1594, %v1917
      %v1919 = vpop.f32.mrf.mxu0
      %v1920 = vpop.f32.mrf.mxu0
      %v1921 = vadd.f32 %v1597, %v1920
      %v1922 = vpop.f32.mrf.mxu0
      %1923 = vmatprep.mubr.bf16.mxu0 0
      %1924 = vmatmul.mubr.bf16.gmra.mxu0 %v1770
      %v1925 = vpop.f32.mrf.mxu0
      %v1926 = vadd.f32 %v1602, %v1925
      %v1927 = vpop.f32.mrf.mxu0
      %v1928 = vpop.f32.mrf.mxu0
      %v1929 = vadd.f32 %v1605, %v1928
      %v1930 = vpop.f32.mrf.mxu0
      %1931 = vmatprep.mubr.bf16.mxu0 0
      %1932 = vmatmul.mubr.bf16.gmra.mxu0 %v1773
      %v1933 = vpop.f32.mrf.mxu0
      %v1934 = vadd.f32 %v1610, %v1933
      %v1935 = vpop.f32.mrf.mxu0
      %v1936 = vpop.f32.mrf.mxu0
      %v1937 = vadd.f32 %v1613, %v1936
      %v1938 = vpop.f32.mrf.mxu0
      %1939 = vmatprep.mubr.bf16.mxu0 0
      %1940 = vmatmul.mubr.bf16.gmra.mxu0 %v1776
      %v1941 = vpop.f32.mrf.mxu0
      %v1942 = vadd.f32 %v1618, %v1941
      %v1943 = vpop.f32.mrf.mxu0
      %v1944 = vpop.f32.mrf.mxu0
      %v1945 = vadd.f32 %v1621, %v1944
      %v1946 = vpop.f32.mrf.mxu0
      %1947 = vmatprep.mubr.bf16.mxu0 0
      %1948 = vmatmul.mubr.bf16.gmra.mxu0 %v1779
      %v1949 = vpop.f32.mrf.mxu0
      %v1950 = vadd.f32 %v1626, %v1949
      %v1951 = vpop.f32.mrf.mxu0
      %v1952 = vpop.f32.mrf.mxu0
      %v1953 = vadd.f32 %v1629, %v1952
      %v1954 = vpop.f32.mrf.mxu0
      %1955 = vmatprep.mubr.bf16.mxu0 0
      %1956 = vmatmul.mubr.bf16.gmra.mxu0 %v1782
      %v1957 = vpop.f32.mrf.mxu0
      %v1958 = vadd.f32 %v1634, %v1957
      %v1959 = vpop.f32.mrf.mxu0
      %v1960 = vpop.f32.mrf.mxu0
      %v1961 = vadd.f32 %v1637, %v1960
      %v1962 = vpop.f32.mrf.mxu0
      %1963 = vdwg.mxu0
      %v1964 = vld [vmem:[#allocation2] sm:$0xe]
      %v1965 = vld [vmem:[#allocation2 + $0xc] sm:$0xe]
      %v1966 = vld [vmem:[#allocation2 + $0x18] sm:$0xe]
      %v1967 = vld [vmem:[#allocation2 + $0x24] sm:$0xe]
      %v1968 = vld [vmem:[#allocation2 + $0x30] sm:$0xe]
      %v1969 = vld [vmem:[#allocation2 + $0x3c] sm:$0xe]
      %v1970 = vld [vmem:[#allocation2 + $0x48] sm:$0xe]
      %v1971 = vld [vmem:[#allocation2 + $0x54] sm:$0xe]
      %v1972 = vld [vmem:[#allocation2 + $0x60] sm:$0xe]
      %v1973 = vld [vmem:[#allocation2 + $0x6c] sm:$0xe]
      %v1974 = vld [vmem:[#allocation2 + $0x78] sm:$0xe]
      %v1975 = vld [vmem:[#allocation2 + $0x84] sm:$0xe]
      %v1976 = vld [vmem:[#allocation2 + $0x90] sm:$0xe]
      %v1977 = vld [vmem:[#allocation2 + $0x9c] sm:$0xe]
      %v1978 = vld [vmem:[#allocation2 + $0xa8] sm:$0xe]
      %v1979 = vld [vmem:[#allocation2 + $0xb4] sm:$0xe]
      %v1980 = vld [vmem:[#allocation2 + $0xc0] sm:$0xe]
      %v1981 = vld [vmem:[#allocation2 + $0xcc] sm:$0xe]
      %vm2018 = vcmask 1042432
      %vm2019 = vcmask 1046532
      %vm2020 = vmor %vm2018, %vm2019
      %v2021 = vrot.slane %v1964, 5
      %v2022 = vrot.slane %v2021, 4
      %v2023 = vrot.slane %v856, 5
      %v2024 = vsel %vm2020, %v2022, %v2023
      %v2025 = vrot.slane %v2023, 4
      %v2026 = vrot.slane %v892, 5
      %v2027 = vsel %vm2020, %v2025, %v2026
      %v2028 = vrot.slane %v1965, 5
      %v2029 = vrot.slane %v2028, 4
      %v2030 = vrot.slane %v858, 5
      %v2031 = vsel %vm2020, %v2029, %v2030
      %v2032 = vrot.slane %v2030, 4
      %v2033 = vrot.slane %v893, 5
      %v2034 = vsel %vm2020, %v2032, %v2033
      %v2035 = vrot.slane %v1966, 5
      %v2036 = vrot.slane %v2035, 4
      %v2037 = vrot.slane %v860, 5
      %v2038 = vsel %vm2020, %v2036, %v2037
      %v2039 = vrot.slane %v2037, 4
      %v2040 = vrot.slane %v894, 5
      %v2041 = vsel %vm2020, %v2039, %v2040
      %v2042 = vrot.slane %v1967, 5
      %v2043 = vrot.slane %v2042, 4
      %v2044 = vrot.slane %v862, 5
      %v2045 = vsel %vm2020, %v2043, %v2044
      %v2046 = vrot.slane %v2044, 4
      %v2047 = vrot.slane %v895, 5
      %v2048 = vsel %vm2020, %v2046, %v2047
      %v2049 = vrot.slane %v1968, 5
      %v2050 = vrot.slane %v2049, 4
      %v2051 = vrot.slane %v864, 5
      %v2052 = vsel %vm2020, %v2050, %v2051
      %v2053 = vrot.slane %v2051, 4
      %v2054 = vrot.slane %v896, 5
      %v2055 = vsel %vm2020, %v2053, %v2054
      %v2056 = vrot.slane %v1969, 5
      %v2057 = vrot.slane %v2056, 4
      %v2058 = vrot.slane %v866, 5
      %v2059 = vsel %vm2020, %v2057, %v2058
      %v2060 = vrot.slane %v2058, 4
      %v2061 = vrot.slane %v897, 5
      %v2062 = vsel %vm2020, %v2060, %v2061
      %v2063 = vrot.slane %v1970, 5
      %v2064 = vrot.slane %v2063, 4
      %v2065 = vrot.slane %v868, 5
      %v2066 = vsel %vm2020, %v2064, %v2065
      %v2067 = vrot.slane %v2065, 4
      %v2068 = vrot.slane %v898, 5
      %v2069 = vsel %vm2020, %v2067, %v2068
      %v2070 = vrot.slane %v1971, 5
      %v2071 = vrot.slane %v2070, 4
      %v2072 = vrot.slane %v870, 5
      %v2073 = vsel %vm2020, %v2071, %v2072
      %v2074 = vrot.slane %v2072, 4
      %v2075 = vrot.slane %v899, 5
      %v2076 = vsel %vm2020, %v2074, %v2075
      %v2077 = vrot.slane %v1972, 5
      %v2078 = vrot.slane %v2077, 4
      %v2079 = vrot.slane %v872, 5
      %v2080 = vsel %vm2020, %v2078, %v2079
      %v2081 = vrot.slane %v2079, 4
      %v2082 = vrot.slane %v900, 5
      %v2083 = vsel %vm2020, %v2081, %v2082
      %v2084 = vrot.slane %v1973, 5
      %v2085 = vrot.slane %v2084, 4
      %v2086 = vrot.slane %v874, 5
      %v2087 = vsel %vm2020, %v2085, %v2086
      %v2088 = vrot.slane %v2086, 4
      %v2089 = vrot.slane %v901, 5
      %v2090 = vsel %vm2020, %v2088, %v2089
      %v2091 = vrot.slane %v1974, 5
      %v2092 = vrot.slane %v2091, 4
      %v2093 = vrot.slane %v876, 5
      %v2094 = vsel %vm2020, %v2092, %v2093
      %v2095 = vrot.slane %v2093, 4
      %v2096 = vrot.slane %v902, 5
      %v2097 = vsel %vm2020, %v2095, %v2096
      %v2098 = vrot.slane %v1975, 5
      %v2099 = vrot.slane %v2098, 4
      %v2100 = vrot.slane %v878, 5
      %v2101 = vsel %vm2020, %v2099, %v2100
      %v2102 = vrot.slane %v2100, 4
      %v2103 = vrot.slane %v903, 5
      %v2104 = vsel %vm2020, %v2102, %v2103
      %v2105 = vrot.slane %v1976, 5
      %v2106 = vrot.slane %v2105, 4
      %v2107 = vrot.slane %v880, 5
      %v2108 = vsel %vm2020, %v2106, %v2107
      %v2109 = vrot.slane %v2107, 4
      %v2110 = vrot.slane %v904, 5
      %v2111 = vsel %vm2020, %v2109, %v2110
      %v2112 = vrot.slane %v1977, 5
      %v2113 = vrot.slane %v2112, 4
      %v2114 = vrot.slane %v882, 5
      %v2115 = vsel %vm2020, %v2113, %v2114
      %v2116 = vrot.slane %v2114, 4
      %v2117 = vrot.slane %v905, 5
      %v2118 = vsel %vm2020, %v2116, %v2117
      %v2119 = vrot.slane %v1978, 5
      %v2120 = vrot.slane %v2119, 4
      %v2121 = vrot.slane %v884, 5
      %v2122 = vsel %vm2020, %v2120, %v2121
      %v2123 = vrot.slane %v2121, 4
      %v2124 = vrot.slane %v906, 5
      %v2125 = vsel %vm2020, %v2123, %v2124
      %v2126 = vrot.slane %v1979, 5
      %v2127 = vrot.slane %v2126, 4
      %v2128 = vrot.slane %v886, 5
      %v2129 = vsel %vm2020, %v2127, %v2128
      %v2130 = vrot.slane %v2128, 4
      %v2131 = vrot.slane %v907, 5
      %v2132 = vsel %vm2020, %v2130, %v2131
      %v2133 = vrot.slane %v1980, 5
      %v2134 = vrot.slane %v2133, 4
      %v2135 = vrot.slane %v888, 5
      %v2136 = vsel %vm2020, %v2134, %v2135
      %v2137 = vrot.slane %v2135, 4
      %v2138 = vrot.slane %v908, 5
      %v2139 = vsel %vm2020, %v2137, %v2138
      %v2140 = vrot.slane %v1981, 5
      %v2141 = vrot.slane %v2140, 4
      %v2142 = vrot.slane %v890, 5
      %v2143 = vsel %vm2020, %v2141, %v2142
      %v2144 = vrot.slane %v2142, 4
      %v2145 = vrot.slane %v909, 5
      %v2146 = vsel %vm2020, %v2144, %v2145
      %v2147 = vld [vmem:[%s1 + $0x4] sm:$0x3]
      %v2148 = vunpack.c.l.b16 %v2024
      %v2149 = vunpack.c.l.b16 %v2027
      %v2150 = vunpack.c.l.b16 %v2031
      %v2151 = vunpack.c.l.b16 %v2034
      %v2152 = vunpack.c.l.b16 %v2038
      %v2153 = vunpack.c.l.b16 %v2041
      %v2154 = vunpack.c.l.b16 %v2045
      %v2155 = vunpack.c.l.b16 %v2048
      %v2156 = vunpack.c.l.b16 %v2052
      %v2157 = vunpack.c.l.b16 %v2055
      %v2158 = vunpack.c.l.b16 %v2059
      %v2159 = vunpack.c.l.b16 %v2062
      %v2160 = vunpack.c.l.b16 %v2066
      %v2161 = vunpack.c.l.b16 %v2069
      %v2162 = vunpack.c.l.b16 %v2073
      %v2163 = vunpack.c.l.b16 %v2076
      %v2164 = vunpack.c.l.b16 %v2080
      %v2165 = vunpack.c.l.b16 %v2083
      %v2166 = vunpack.c.l.b16 %v2087
      %v2167 = vunpack.c.l.b16 %v2090
      %v2168 = vunpack.c.l.b16 %v2094
      %v2169 = vunpack.c.l.b16 %v2097
      %v2170 = vunpack.c.l.b16 %v2101
      %v2171 = vunpack.c.l.b16 %v2104
      %v2172 = vunpack.c.l.b16 %v2108
      %v2173 = vunpack.c.l.b16 %v2111
      %v2174 = vunpack.c.l.b16 %v2115
      %v2175 = vunpack.c.l.b16 %v2118
      %v2176 = vunpack.c.l.b16 %v2122
      %v2177 = vunpack.c.l.b16 %v2125
      %v2178 = vunpack.c.l.b16 %v2129
      %v2179 = vunpack.c.l.b16 %v2132
      %v2180 = vunpack.c.l.b16 %v2136
      %v2181 = vunpack.c.l.b16 %v2139
      %v2182 = vunpack.c.l.b16 %v2143
      %v2183 = vunpack.c.l.b16 %v2146
      %v2184 = vpack.c.b16 %v2149, %v2148
      %v2185 = vpack.c.b16 %v2151, %v2150
      %v2186 = vpack.c.b16 %v2153, %v2152
      %v2187 = vpack.c.b16 %v2155, %v2154
      %v2188 = vpack.c.b16 %v2157, %v2156
      %v2189 = vpack.c.b16 %v2159, %v2158
      %v2190 = vpack.c.b16 %v2161, %v2160
      %v2191 = vpack.c.b16 %v2163, %v2162
      %v2192 = vpack.c.b16 %v2165, %v2164
      %v2193 = vpack.c.b16 %v2167, %v2166
      %v2194 = vpack.c.b16 %v2169, %v2168
      %v2195 = vpack.c.b16 %v2171, %v2170
      %v2196 = vpack.c.b16 %v2173, %v2172
      %v2197 = vpack.c.b16 %v2175, %v2174
      %v2198 = vpack.c.b16 %v2177, %v2176
      %v2199 = vpack.c.b16 %v2179, %v2178
      %v2200 = vpack.c.b16 %v2181, %v2180
      %v2201 = vpack.c.b16 %v2183, %v2182
      %v2203 = vsel %vm1404, %v2184, 0
      %v2206 = vsel %vm1404, %v2185, 0
      %v2209 = vsel %vm1404, %v2186, 0
      %v2212 = vsel %vm1404, %v2187, 0
      %v2215 = vsel %vm1404, %v2188, 0
      %v2218 = vsel %vm1404, %v2189, 0
      %v2221 = vsel %vm1404, %v2190, 0
      %v2224 = vsel %vm1404, %v2191, 0
      %v2227 = vsel %vm1404, %v2192, 0
      %v2230 = vsel %vm1404, %v2193, 0
      %v2233 = vsel %vm1404, %v2194, 0
      %v2236 = vsel %vm1404, %v2195, 0
      %v2239 = vsel %vm1404, %v2196, 0
      %v2242 = vsel %vm1404, %v2197, 0
      %v2245 = vsel %vm1404, %v2198, 0
      %v2248 = vsel %vm1404, %v2199, 0
      %v2251 = vsel %vm1404, %v2200, 0
      %v2254 = vsel %vm1404, %v2201, 0
      %v2257 = vsel %vm1459, %v2147, 0
      %2259 = vmatprep.subr.bf16.mxu0 0
      %2260 = vmatpush1.bf16.msra.mxu0 0
      %2261 = vmatprep.subr.bf16.mxu0 0
      %2262 = vmatpush1.bf16.msra.mxu0 0
      %2263 = vmatprep.subr.bf16.mxu0 0
      %2264 = vmatpush1.bf16.msra.mxu0 0
      %2265 = vmatprep.subr.bf16.mxu0 0
      %2266 = vmatpush1.bf16.msra.mxu0 0
      %2267 = vmatprep.subr.bf16.mxu0 0
      %2268 = vmatpush1.bf16.msra.mxu0 0
      %2269 = vmatprep.subr.bf16.mxu0 0
      %2270 = vmatpush1.bf16.msra.mxu0 0
      %2271 = vmatprep.subr.bf16.mxu0 0
      %2272 = vmatpush1.bf16.msra.mxu0 0
      %2273 = vmatprep.subr.bf16.mxu0 0
      %2274 = vmatpush1.bf16.msra.mxu0 %v2257
      %2275 = vmatprep.subr.bf16.mxu0 0
      %2276 = vmatpush2.bf16.msra.mxu0 0
      %2277 = vmatprep.subr.bf16.mxu0 0
      %2278 = vmatpush2.bf16.msra.mxu0 0
      %2279 = vmatprep.subr.bf16.mxu0 0
      %2280 = vmatpush2.bf16.msra.mxu0 0
      %2281 = vmatprep.subr.bf16.mxu0 0
      %2282 = vmatpush2.bf16.msra.mxu0 0
      %2283 = vmatprep.subr.bf16.mxu0 0
      %2284 = vmatpush2.bf16.msra.mxu0 0
      %2285 = vmatprep.subr.bf16.mxu0 0
      %2286 = vmatpush2.bf16.msra.mxu0 0
      %2287 = vmatprep.subr.bf16.mxu0 0
      %2288 = vmatpush2.bf16.msra.mxu0 0
      %2289 = vmatprep.subr.bf16.mxu0 0
      %2290 = vmatpush2.bf16.msra.mxu0 0
      %2291 = vmatprep.mubr.bf16.mxu0 0
      %2292 = vmatmul.mubr.bf16.gmra.mxu0 %v2203
      %v2293 = vpop.f32.mrf.mxu0
      %v2294 = vadd.f32 0.0, %v2293
      %v2295 = vpop.f32.mrf.mxu0
      %v2296 = vpop.f32.mrf.mxu0
      %v2297 = vadd.f32 0.0, %v2296
      %v2298 = vpop.f32.mrf.mxu0
      %2299 = vmatprep.mubr.bf16.mxu0 0
      %2300 = vmatmul.mubr.bf16.gmra.mxu0 %v2206
      %v2301 = vpop.f32.mrf.mxu0
      %v2302 = vadd.f32 0.0, %v2301
      %v2303 = vpop.f32.mrf.mxu0
      %v2304 = vpop.f32.mrf.mxu0
      %v2305 = vadd.f32 0.0, %v2304
      %v2306 = vpop.f32.mrf.mxu0
      %2307 = vmatprep.mubr.bf16.mxu0 0
      %2308 = vmatmul.mubr.bf16.gmra.mxu0 %v2209
      %v2309 = vpop.f32.mrf.mxu0
      %v2310 = vadd.f32 0.0, %v2309
      %v2311 = vpop.f32.mrf.mxu0
      %v2312 = vpop.f32.mrf.mxu0
      %v2313 = vadd.f32 0.0, %v2312
      %v2314 = vpop.f32.mrf.mxu0
      %2315 = vmatprep.mubr.bf16.mxu0 0
      %2316 = vmatmul.mubr.bf16.gmra.mxu0 %v2212
      %v2317 = vpop.f32.mrf.mxu0
      %v2318 = vadd.f32 0.0, %v2317
      %v2319 = vpop.f32.mrf.mxu0
      %v2320 = vpop.f32.mrf.mxu0
      %v2321 = vadd.f32 0.0, %v2320
      %v2322 = vpop.f32.mrf.mxu0
      %2323 = vmatprep.mubr.bf16.mxu0 0
      %2324 = vmatmul.mubr.bf16.gmra.mxu0 %v2215
      %v2325 = vpop.f32.mrf.mxu0
      %v2326 = vadd.f32 0.0, %v2325
      %v2327 = vpop.f32.mrf.mxu0
      %v2328 = vpop.f32.mrf.mxu0
      %v2329 = vadd.f32 0.0, %v2328
      %v2330 = vpop.f32.mrf.mxu0
      %2331 = vmatprep.mubr.bf16.mxu0 0
      %2332 = vmatmul.mubr.bf16.gmra.mxu0 %v2218
      %v2333 = vpop.f32.mrf.mxu0
      %v2334 = vadd.f32 0.0, %v2333
      %v2335 = vpop.f32.mrf.mxu0
      %v2336 = vpop.f32.mrf.mxu0
      %v2337 = vadd.f32 0.0, %v2336
      %v2338 = vpop.f32.mrf.mxu0
      %2339 = vmatprep.mubr.bf16.mxu0 0
      %2340 = vmatmul.mubr.bf16.gmra.mxu0 %v2221
      %v2341 = vpop.f32.mrf.mxu0
      %v2342 = vadd.f32 0.0, %v2341
      %v2343 = vpop.f32.mrf.mxu0
      %v2344 = vpop.f32.mrf.mxu0
      %v2345 = vadd.f32 0.0, %v2344
      %v2346 = vpop.f32.mrf.mxu0
      %2347 = vmatprep.mubr.bf16.mxu0 0
      %2348 = vmatmul.mubr.bf16.gmra.mxu0 %v2224
      %v2349 = vpop.f32.mrf.mxu0
      %v2350 = vadd.f32 0.0, %v2349
      %v2351 = vpop.f32.mrf.mxu0
      %v2352 = vpop.f32.mrf.mxu0
      %v2353 = vadd.f32 0.0, %v2352
      %v2354 = vpop.f32.mrf.mxu0
      %2355 = vmatprep.mubr.bf16.mxu0 0
      %2356 = vmatmul.mubr.bf16.gmra.mxu0 %v2227
      %v2357 = vpop.f32.mrf.mxu0
      %v2358 = vadd.f32 0.0, %v2357
      %v2359 = vpop.f32.mrf.mxu0
      %v2360 = vpop.f32.mrf.mxu0
      %v2361 = vadd.f32 0.0, %v2360
      %v2362 = vpop.f32.mrf.mxu0
      %2363 = vmatprep.mubr.bf16.mxu0 0
      %2364 = vmatmul.mubr.bf16.gmra.mxu0 %v2230
      %v2365 = vpop.f32.mrf.mxu0
      %v2366 = vadd.f32 0.0, %v2365
      %v2367 = vpop.f32.mrf.mxu0
      %v2368 = vpop.f32.mrf.mxu0
      %v2369 = vadd.f32 0.0, %v2368
      %v2370 = vpop.f32.mrf.mxu0
      %2371 = vmatprep.mubr.bf16.mxu0 0
      %2372 = vmatmul.mubr.bf16.gmra.mxu0 %v2233
      %v2373 = vpop.f32.mrf.mxu0
      %v2374 = vadd.f32 0.0, %v2373
      %v2375 = vpop.f32.mrf.mxu0
      %v2376 = vpop.f32.mrf.mxu0
      %v2377 = vadd.f32 0.0, %v2376
      %v2378 = vpop.f32.mrf.mxu0
      %2379 = vmatprep.mubr.bf16.mxu0 0
      %2380 = vmatmul.mubr.bf16.gmra.mxu0 %v2236
      %v2381 = vpop.f32.mrf.mxu0
      %v2382 = vadd.f32 0.0, %v2381
      %v2383 = vpop.f32.mrf.mxu0
      %v2384 = vpop.f32.mrf.mxu0
      %v2385 = vadd.f32 0.0, %v2384
      %v2386 = vpop.f32.mrf.mxu0
      %2387 = vmatprep.mubr.bf16.mxu0 0
      %2388 = vmatmul.mubr.bf16.gmra.mxu0 %v2239
      %v2389 = vpop.f32.mrf.mxu0
      %v2390 = vadd.f32 0.0, %v2389
      %v2391 = vpop.f32.mrf.mxu0
      %v2392 = vpop.f32.mrf.mxu0
      %v2393 = vadd.f32 0.0, %v2392
      %v2394 = vpop.f32.mrf.mxu0
      %2395 = vmatprep.mubr.bf16.mxu0 0
      %2396 = vmatmul.mubr.bf16.gmra.mxu0 %v2242
      %v2397 = vpop.f32.mrf.mxu0
      %v2398 = vadd.f32 0.0, %v2397
      %v2399 = vpop.f32.mrf.mxu0
      %v2400 = vpop.f32.mrf.mxu0
      %v2401 = vadd.f32 0.0, %v2400
      %v2402 = vpop.f32.mrf.mxu0
      %2403 = vmatprep.mubr.bf16.mxu0 0
      %2404 = vmatmul.mubr.bf16.gmra.mxu0 %v2245
      %v2405 = vpop.f32.mrf.mxu0
      %v2406 = vadd.f32 0.0, %v2405
      %v2407 = vpop.f32.mrf.mxu0
      %v2408 = vpop.f32.mrf.mxu0
      %v2409 = vadd.f32 0.0, %v2408
      %v2410 = vpop.f32.mrf.mxu0
      %2411 = vmatprep.mubr.bf16.mxu0 0
      %2412 = vmatmul.mubr.bf16.gmra.mxu0 %v2248
      %v2413 = vpop.f32.mrf.mxu0
      %v2414 = vadd.f32 0.0, %v2413
      %v2415 = vpop.f32.mrf.mxu0
      %v2416 = vpop.f32.mrf.mxu0
      %v2417 = vadd.f32 0.0, %v2416
      %v2418 = vpop.f32.mrf.mxu0
      %2419 = vmatprep.mubr.bf16.mxu0 0
      %2420 = vmatmul.mubr.bf16.gmra.mxu0 %v2251
      %v2421 = vpop.f32.mrf.mxu0
      %v2422 = vadd.f32 0.0, %v2421
      %v2423 = vpop.f32.mrf.mxu0
      %v2424 = vpop.f32.mrf.mxu0
      %v2425 = vadd.f32 0.0, %v2424
      %v2426 = vpop.f32.mrf.mxu0
      %2427 = vmatprep.mubr.bf16.mxu0 0
      %2428 = vmatmul.mubr.bf16.gmra.mxu0 %v2254
      %v2429 = vpop.f32.mrf.mxu0
      %v2430 = vadd.f32 0.0, %v2429
      %v2431 = vpop.f32.mrf.mxu0
      %v2432 = vpop.f32.mrf.mxu0
      %v2433 = vadd.f32 0.0, %v2432
      %v2434 = vpop.f32.mrf.mxu0
      %2435 = vdwg.mxu0
      %v2436 = vadd.f32 %v1822, %v2294
      %v2437 = vadd.f32 %v1825, %v2297
      %v2438 = vadd.f32 %v1830, %v2302
      %v2439 = vadd.f32 %v1833, %v2305
      %v2440 = vadd.f32 %v1838, %v2310
      %v2441 = vadd.f32 %v1841, %v2313
      %v2442 = vadd.f32 %v1846, %v2318
      %v2443 = vadd.f32 %v1849, %v2321
      %v2444 = vadd.f32 %v1854, %v2326
      %v2445 = vadd.f32 %v1857, %v2329
      %v2446 = vadd.f32 %v1862, %v2334
      %v2447 = vadd.f32 %v1865, %v2337
      %v2448 = vadd.f32 %v1870, %v2342
      %v2449 = vadd.f32 %v1873, %v2345
      %v2450 = vadd.f32 %v1878, %v2350
      %v2451 = vadd.f32 %v1881, %v2353
      %v2452 = vadd.f32 %v1886, %v2358
      %v2453 = vadd.f32 %v1889, %v2361
      %v2454 = vadd.f32 %v1894, %v2366
      %v2455 = vadd.f32 %v1897, %v2369
      %v2456 = vadd.f32 %v1902, %v2374
      %v2457 = vadd.f32 %v1905, %v2377
      %v2458 = vadd.f32 %v1910, %v2382
      %v2459 = vadd.f32 %v1913, %v2385
      %v2460 = vadd.f32 %v1918, %v2390
      %v2461 = vadd.f32 %v1921, %v2393
      %v2462 = vadd.f32 %v1926, %v2398
      %v2463 = vadd.f32 %v1929, %v2401
      %v2464 = vadd.f32 %v1934, %v2406
      %v2465 = vadd.f32 %v1937, %v2409
      %v2466 = vadd.f32 %v1942, %v2414
      %v2467 = vadd.f32 %v1945, %v2417
      %v2468 = vadd.f32 %v1950, %v2422
      %v2469 = vadd.f32 %v1953, %v2425
      %v2470 = vadd.f32 %v1958, %v2430
      %v2471 = vadd.f32 %v1961, %v2433
      %s2472 = scalar_lea.vmem [#allocation2], 12
      %v2473 = vld [vmem:[%s2472] sm:$0xf]
      %v2474 = vld [vmem:[%s2472 + $0x4] sm:$0xf]
      %v2475 = vld [vmem:[%s2472 + $0xc] sm:$0xf]
      %v2476 = vld [vmem:[%s2472 + $0x10] sm:$0xf]
      %v2477 = vld [vmem:[%s2472 + $0x18] sm:$0xf]
      %v2478 = vld [vmem:[%s2472 + $0x1c] sm:$0xf]
      %v2479 = vld [vmem:[%s2472 + $0x24] sm:$0xf]
      %v2480 = vld [vmem:[%s2472 + $0x28] sm:$0xf]
      %v2481 = vld [vmem:[%s2472 + $0x30] sm:$0xf]
      %v2482 = vld [vmem:[%s2472 + $0x34] sm:$0xf]
      %v2483 = vld [vmem:[%s2472 + $0x3c] sm:$0xf]
      %v2484 = vld [vmem:[%s2472 + $0x40] sm:$0xf]
      %v2485 = vld [vmem:[%s2472 + $0x48] sm:$0xf]
      %v2486 = vld [vmem:[%s2472 + $0x4c] sm:$0xf]
      %v2487 = vld [vmem:[%s2472 + $0x54] sm:$0xf]
      %v2488 = vld [vmem:[%s2472 + $0x58] sm:$0xf]
      %v2489 = vld [vmem:[%s2472 + $0x60] sm:$0xf]
      %v2490 = vld [vmem:[%s2472 + $0x64] sm:$0xf]
      %v2491 = vld [vmem:[%s2472 + $0x6c] sm:$0xf]
      %v2492 = vld [vmem:[%s2472 + $0x70] sm:$0xf]
      %v2493 = vld [vmem:[%s2472 + $0x78] sm:$0xf]
      %v2494 = vld [vmem:[%s2472 + $0x7c] sm:$0xf]
      %v2495 = vld [vmem:[%s2472 + $0x84] sm:$0xf]
      %v2496 = vld [vmem:[%s2472 + $0x88] sm:$0xf]
      %v2497 = vld [vmem:[%s2472 + $0x90] sm:$0xf]
      %v2498 = vld [vmem:[%s2472 + $0x94] sm:$0xf]
      %v2499 = vld [vmem:[%s2472 + $0x9c] sm:$0xf]
      %v2500 = vld [vmem:[%s2472 + $0xa0] sm:$0xf]
      %v2501 = vld [vmem:[%s2472 + $0xa8] sm:$0xf]
      %v2502 = vld [vmem:[%s2472 + $0xac] sm:$0xf]
      %v2503 = vld [vmem:[%s2472 + $0xb4] sm:$0xf]
      %v2504 = vld [vmem:[%s2472 + $0xb8] sm:$0xf]
      %v2505 = vld [vmem:[%s2472 + $0xc0] sm:$0xf]
      %v2506 = vld [vmem:[%s2472 + $0xc4] sm:$0xf]
      %v2507 = vld [vmem:[%s2472 + $0xcc] sm:$0xf]
      %v2508 = vld [vmem:[%s2472 + $0xd0] sm:$0xf]
      %v2509 = vld [vmem:[%s1 + $0x4] sm:$0xc]
      %v2546 = vunpack.c.l.b16 %v2473
      %v2547 = vunpack.c.l.b16 %v2474
      %v2548 = vunpack.c.l.b16 %v2475
      %v2549 = vunpack.c.l.b16 %v2476
      %v2550 = vunpack.c.l.b16 %v2477
      %v2551 = vunpack.c.l.b16 %v2478
      %v2552 = vunpack.c.l.b16 %v2479
      %v2553 = vunpack.c.l.b16 %v2480
      %v2554 = vunpack.c.l.b16 %v2481
      %v2555 = vunpack.c.l.b16 %v2482
      %v2556 = vunpack.c.l.b16 %v2483
      %v2557 = vunpack.c.l.b16 %v2484
      %v2558 = vunpack.c.l.b16 %v2485
      %v2559 = vunpack.c.l.b16 %v2486
      %v2560 = vunpack.c.l.b16 %v2487
      %v2561 = vunpack.c.l.b16 %v2488
      %v2562 = vunpack.c.l.b16 %v2489
      %v2563 = vunpack.c.l.b16 %v2490
      %v2564 = vunpack.c.l.b16 %v2491
      %v2565 = vunpack.c.l.b16 %v2492
      %v2566 = vunpack.c.l.b16 %v2493
      %v2567 = vunpack.c.l.b16 %v2494
      %v2568 = vunpack.c.l.b16 %v2495
      %v2569 = vunpack.c.l.b16 %v2496
      %v2570 = vunpack.c.l.b16 %v2497
      %v2571 = vunpack.c.l.b16 %v2498
      %v2572 = vunpack.c.l.b16 %v2499
      %v2573 = vunpack.c.l.b16 %v2500
      %v2574 = vunpack.c.l.b16 %v2501
      %v2575 = vunpack.c.l.b16 %v2502
      %v2576 = vunpack.c.l.b16 %v2503
      %v2577 = vunpack.c.l.b16 %v2504
      %v2578 = vunpack.c.l.b16 %v2505
      %v2579 = vunpack.c.l.b16 %v2506
      %v2580 = vunpack.c.l.b16 %v2507
      %v2581 = vunpack.c.l.b16 %v2508
      %v2582 = vpack.c.b16 %v2547, %v2546
      %v2583 = vpack.c.b16 %v2549, %v2548
      %v2584 = vpack.c.b16 %v2551, %v2550
      %v2585 = vpack.c.b16 %v2553, %v2552
      %v2586 = vpack.c.b16 %v2555, %v2554
      %v2587 = vpack.c.b16 %v2557, %v2556
      %v2588 = vpack.c.b16 %v2559, %v2558
      %v2589 = vpack.c.b16 %v2561, %v2560
      %v2590 = vpack.c.b16 %v2563, %v2562
      %v2591 = vpack.c.b16 %v2565, %v2564
      %v2592 = vpack.c.b16 %v2567, %v2566
      %v2593 = vpack.c.b16 %v2569, %v2568
      %v2594 = vpack.c.b16 %v2571, %v2570
      %v2595 = vpack.c.b16 %v2573, %v2572
      %v2596 = vpack.c.b16 %v2575, %v2574
      %v2597 = vpack.c.b16 %v2577, %v2576
      %v2598 = vpack.c.b16 %v2579, %v2578
      %v2599 = vpack.c.b16 %v2581, %v2580
      %v2601 = vunpack.c.l.b16 %v2509
      %v2602 = vpack.c.b16 %v2601, %v2601
      %v2603 = vrot.slane %v2602, 2
      %v2605 = vsel %vm1404, %v2582, 0
      %v2608 = vsel %vm1404, %v2583, 0
      %v2611 = vsel %vm1404, %v2584, 0
      %v2614 = vsel %vm1404, %v2585, 0
      %v2617 = vsel %vm1404, %v2586, 0
      %v2620 = vsel %vm1404, %v2587, 0
      %v2623 = vsel %vm1404, %v2588, 0
      %v2626 = vsel %vm1404, %v2589, 0
      %v2629 = vsel %vm1404, %v2590, 0
      %v2632 = vsel %vm1404, %v2591, 0
      %v2635 = vsel %vm1404, %v2592, 0
      %v2638 = vsel %vm1404, %v2593, 0
      %v2641 = vsel %vm1404, %v2594, 0
      %v2644 = vsel %vm1404, %v2595, 0
      %v2647 = vsel %vm1404, %v2596, 0
      %v2650 = vsel %vm1404, %v2597, 0
      %v2653 = vsel %vm1404, %v2598, 0
      %v2656 = vsel %vm1404, %v2599, 0
      %v2659 = vsel %vm1459, %v2603, 0
      %2661 = vmatprep.subr.bf16.mxu0 0
      %2662 = vmatpush1.bf16.msra.mxu0 0
      %2663 = vmatprep.subr.bf16.mxu0 0
      %2664 = vmatpush1.bf16.msra.mxu0 0
      %2665 = vmatprep.subr.bf16.mxu0 0
      %2666 = vmatpush1.bf16.msra.mxu0 0
      %2667 = vmatprep.subr.bf16.mxu0 0
      %2668 = vmatpush1.bf16.msra.mxu0 0
      %2669 = vmatprep.subr.bf16.mxu0 0
      %2670 = vmatpush1.bf16.msra.mxu0 0
      %2671 = vmatprep.subr.bf16.mxu0 0
      %2672 = vmatpush1.bf16.msra.mxu0 0
      %2673 = vmatprep.subr.bf16.mxu0 0
      %2674 = vmatpush1.bf16.msra.mxu0 0
      %2675 = vmatprep.subr.bf16.mxu0 0
      %2676 = vmatpush1.bf16.msra.mxu0 %v2659
      %2677 = vmatprep.subr.bf16.mxu0 0
      %2678 = vmatpush2.bf16.msra.mxu0 0
      %2679 = vmatprep.subr.bf16.mxu0 0
      %2680 = vmatpush2.bf16.msra.mxu0 0
      %2681 = vmatprep.subr.bf16.mxu0 0
      %2682 = vmatpush2.bf16.msra.mxu0 0
      %2683 = vmatprep.subr.bf16.mxu0 0
      %2684 = vmatpush2.bf16.msra.mxu0 0
      %2685 = vmatprep.subr.bf16.mxu0 0
      %2686 = vmatpush2.bf16.msra.mxu0 0
      %2687 = vmatprep.subr.bf16.mxu0 0
      %2688 = vmatpush2.bf16.msra.mxu0 0
      %2689 = vmatprep.subr.bf16.mxu0 0
      %2690 = vmatpush2.bf16.msra.mxu0 0
      %2691 = vmatprep.subr.bf16.mxu0 0
      %2692 = vmatpush2.bf16.msra.mxu0 0
      %2693 = vmatprep.mubr.bf16.mxu0 0
      %2694 = vmatmul.mubr.bf16.gmra.mxu0 %v2605
      %v2695 = vpop.f32.mrf.mxu0
      %v2696 = vadd.f32 0.0, %v2695
      %v2697 = vpop.f32.mrf.mxu0
      %v2698 = vpop.f32.mrf.mxu0
      %v2699 = vadd.f32 0.0, %v2698
      %v2700 = vpop.f32.mrf.mxu0
      %2701 = vmatprep.mubr.bf16.mxu0 0
      %2702 = vmatmul.mubr.bf16.gmra.mxu0 %v2608
      %v2703 = vpop.f32.mrf.mxu0
      %v2704 = vadd.f32 0.0, %v2703
      %v2705 = vpop.f32.mrf.mxu0
      %v2706 = vpop.f32.mrf.mxu0
      %v2707 = vadd.f32 0.0, %v2706
      %v2708 = vpop.f32.mrf.mxu0
      %2709 = vmatprep.mubr.bf16.mxu0 0
      %2710 = vmatmul.mubr.bf16.gmra.mxu0 %v2611
      %v2711 = vpop.f32.mrf.mxu0
      %v2712 = vadd.f32 0.0, %v2711
      %v2713 = vpop.f32.mrf.mxu0
      %v2714 = vpop.f32.mrf.mxu0
      %v2715 = vadd.f32 0.0, %v2714
      %v2716 = vpop.f32.mrf.mxu0
      %2717 = vmatprep.mubr.bf16.mxu0 0
      %2718 = vmatmul.mubr.bf16.gmra.mxu0 %v2614
      %v2719 = vpop.f32.mrf.mxu0
      %v2720 = vadd.f32 0.0, %v2719
      %v2721 = vpop.f32.mrf.mxu0
      %v2722 = vpop.f32.mrf.mxu0
      %v2723 = vadd.f32 0.0, %v2722
      %v2724 = vpop.f32.mrf.mxu0
      %2725 = vmatprep.mubr.bf16.mxu0 0
      %2726 = vmatmul.mubr.bf16.gmra.mxu0 %v2617
      %v2727 = vpop.f32.mrf.mxu0
      %v2728 = vadd.f32 0.0, %v2727
      %v2729 = vpop.f32.mrf.mxu0
      %v2730 = vpop.f32.mrf.mxu0
      %v2731 = vadd.f32 0.0, %v2730
      %v2732 = vpop.f32.mrf.mxu0
      %2733 = vmatprep.mubr.bf16.mxu0 0
      %2734 = vmatmul.mubr.bf16.gmra.mxu0 %v2620
      %v2735 = vpop.f32.mrf.mxu0
      %v2736 = vadd.f32 0.0, %v2735
      %v2737 = vpop.f32.mrf.mxu0
      %v2738 = vpop.f32.mrf.mxu0
      %v2739 = vadd.f32 0.0, %v2738
      %v2740 = vpop.f32.mrf.mxu0
      %2741 = vmatprep.mubr.bf16.mxu0 0
      %2742 = vmatmul.mubr.bf16.gmra.mxu0 %v2623
      %v2743 = vpop.f32.mrf.mxu0
      %v2744 = vadd.f32 0.0, %v2743
      %v2745 = vpop.f32.mrf.mxu0
      %v2746 = vpop.f32.mrf.mxu0
      %v2747 = vadd.f32 0.0, %v2746
      %v2748 = vpop.f32.mrf.mxu0
      %2749 = vmatprep.mubr.bf16.mxu0 0
      %2750 = vmatmul.mubr.bf16.gmra.mxu0 %v2626
      %v2751 = vpop.f32.mrf.mxu0
      %v2752 = vadd.f32 0.0, %v2751
      %v2753 = vpop.f32.mrf.mxu0
      %v2754 = vpop.f32.mrf.mxu0
      %v2755 = vadd.f32 0.0, %v2754
      %v2756 = vpop.f32.mrf.mxu0
      %2757 = vmatprep.mubr.bf16.mxu0 0
      %2758 = vmatmul.mubr.bf16.gmra.mxu0 %v2629
      %v2759 = vpop.f32.mrf.mxu0
      %v2760 = vadd.f32 0.0, %v2759
      %v2761 = vpop.f32.mrf.mxu0
      %v2762 = vpop.f32.mrf.mxu0
      %v2763 = vadd.f32 0.0, %v2762
      %v2764 = vpop.f32.mrf.mxu0
      %2765 = vmatprep.mubr.bf16.mxu0 0
      %2766 = vmatmul.mubr.bf16.gmra.mxu0 %v2632
      %v2767 = vpop.f32.mrf.mxu0
      %v2768 = vadd.f32 0.0, %v2767
      %v2769 = vpop.f32.mrf.mxu0
      %v2770 = vpop.f32.mrf.mxu0
      %v2771 = vadd.f32 0.0, %v2770
      %v2772 = vpop.f32.mrf.mxu0
      %2773 = vmatprep.mubr.bf16.mxu0 0
      %2774 = vmatmul.mubr.bf16.gmra.mxu0 %v2635
      %v2775 = vpop.f32.mrf.mxu0
      %v2776 = vadd.f32 0.0, %v2775
      %v2777 = vpop.f32.mrf.mxu0
      %v2778 = vpop.f32.mrf.mxu0
      %v2779 = vadd.f32 0.0, %v2778
      %v2780 = vpop.f32.mrf.mxu0
      %2781 = vmatprep.mubr.bf16.mxu0 0
      %2782 = vmatmul.mubr.bf16.gmra.mxu0 %v2638
      %v2783 = vpop.f32.mrf.mxu0
      %v2784 = vadd.f32 0.0, %v2783
      %v2785 = vpop.f32.mrf.mxu0
      %v2786 = vpop.f32.mrf.mxu0
      %v2787 = vadd.f32 0.0, %v2786
      %v2788 = vpop.f32.mrf.mxu0
      %2789 = vmatprep.mubr.bf16.mxu0 0
      %2790 = vmatmul.mubr.bf16.gmra.mxu0 %v2641
      %v2791 = vpop.f32.mrf.mxu0
      %v2792 = vadd.f32 0.0, %v2791
      %v2793 = vpop.f32.mrf.mxu0
      %v2794 = vpop.f32.mrf.mxu0
      %v2795 = vadd.f32 0.0, %v2794
      %v2796 = vpop.f32.mrf.mxu0
      %2797 = vmatprep.mubr.bf16.mxu0 0
      %2798 = vmatmul.mubr.bf16.gmra.mxu0 %v2644
      %v2799 = vpop.f32.mrf.mxu0
      %v2800 = vadd.f32 0.0, %v2799
      %v2801 = vpop.f32.mrf.mxu0
      %v2802 = vpop.f32.mrf.mxu0
      %v2803 = vadd.f32 0.0, %v2802
      %v2804 = vpop.f32.mrf.mxu0
      %2805 = vmatprep.mubr.bf16.mxu0 0
      %2806 = vmatmul.mubr.bf16.gmra.mxu0 %v2647
      %v2807 = vpop.f32.mrf.mxu0
      %v2808 = vadd.f32 0.0, %v2807
      %v2809 = vpop.f32.mrf.mxu0
      %v2810 = vpop.f32.mrf.mxu0
      %v2811 = vadd.f32 0.0, %v2810
      %v2812 = vpop.f32.mrf.mxu0
      %2813 = vmatprep.mubr.bf16.mxu0 0
      %2814 = vmatmul.mubr.bf16.gmra.mxu0 %v2650
      %v2815 = vpop.f32.mrf.mxu0
      %v2816 = vadd.f32 0.0, %v2815
      %v2817 = vpop.f32.mrf.mxu0
      %v2818 = vpop.f32.mrf.mxu0
      %v2819 = vadd.f32 0.0, %v2818
      %v2820 = vpop.f32.mrf.mxu0
      %2821 = vmatprep.mubr.bf16.mxu0 0
      %2822 = vmatmul.mubr.bf16.gmra.mxu0 %v2653
      %v2823 = vpop.f32.mrf.mxu0
      %v2824 = vadd.f32 0.0, %v2823
      %v2825 = vpop.f32.mrf.mxu0
      %v2826 = vpop.f32.mrf.mxu0
      %v2827 = vadd.f32 0.0, %v2826
      %v2828 = vpop.f32.mrf.mxu0
      %2829 = vmatprep.mubr.bf16.mxu0 0
      %2830 = vmatmul.mubr.bf16.gmra.mxu0 %v2656
      %v2831 = vpop.f32.mrf.mxu0
      %v2832 = vadd.f32 0.0, %v2831
      %v2833 = vpop.f32.mrf.mxu0
      %v2834 = vpop.f32.mrf.mxu0
      %v2835 = vadd.f32 0.0, %v2834
      %v2836 = vpop.f32.mrf.mxu0
      %2837 = vdwg.mxu0
      %v2838 = vadd.f32 %v2436, %v2696
      %v2839 = vadd.f32 %v2437, %v2699
      %v2840 = vadd.f32 %v2438, %v2704
      %v2841 = vadd.f32 %v2439, %v2707
      %v2842 = vadd.f32 %v2440, %v2712
      %v2843 = vadd.f32 %v2441, %v2715
      %v2844 = vadd.f32 %v2442, %v2720
      %v2845 = vadd.f32 %v2443, %v2723
      %v2846 = vadd.f32 %v2444, %v2728
      %v2847 = vadd.f32 %v2445, %v2731
      %v2848 = vadd.f32 %v2446, %v2736
      %v2849 = vadd.f32 %v2447, %v2739
      %v2850 = vadd.f32 %v2448, %v2744
      %v2851 = vadd.f32 %v2449, %v2747
      %v2852 = vadd.f32 %v2450, %v2752
      %v2853 = vadd.f32 %v2451, %v2755
      %v2854 = vadd.f32 %v2452, %v2760
      %v2855 = vadd.f32 %v2453, %v2763
      %v2856 = vadd.f32 %v2454, %v2768
      %v2857 = vadd.f32 %v2455, %v2771
      %v2858 = vadd.f32 %v2456, %v2776
      %v2859 = vadd.f32 %v2457, %v2779
      %v2860 = vadd.f32 %v2458, %v2784
      %v2861 = vadd.f32 %v2459, %v2787
      %v2862 = vadd.f32 %v2460, %v2792
      %v2863 = vadd.f32 %v2461, %v2795
      %v2864 = vadd.f32 %v2462, %v2800
      %v2865 = vadd.f32 %v2463, %v2803
      %v2866 = vadd.f32 %v2464, %v2808
      %v2867 = vadd.f32 %v2465, %v2811
      %v2868 = vadd.f32 %v2466, %v2816
      %v2869 = vadd.f32 %v2467, %v2819
      %v2870 = vadd.f32 %v2468, %v2824
      %v2871 = vadd.f32 %v2469, %v2827
      %v2872 = vadd.f32 %v2470, %v2832
      %v2873 = vadd.f32 %v2471, %v2835
      %v2874 = vld [vmem:[%s2472] sm:$0xf]
      %v2875 = vld [vmem:[%s2472 + $0x4] sm:$0xf]
      %v2876 = vld [vmem:[%s2472 + $0x8] sm:$0x1]
      %v2877 = vld [vmem:[%s2472 + $0xc] sm:$0xf]
      %v2878 = vld [vmem:[%s2472 + $0x10] sm:$0xf]
      %v2879 = vld [vmem:[%s2472 + $0x14] sm:$0x1]
      %v2880 = vld [vmem:[%s2472 + $0x18] sm:$0xf]
      %v2881 = vld [vmem:[%s2472 + $0x1c] sm:$0xf]
      %v2882 = vld [vmem:[%s2472 + $0x20] sm:$0x1]
      %v2883 = vld [vmem:[%s2472 + $0x24] sm:$0xf]
      %v2884 = vld [vmem:[%s2472 + $0x28] sm:$0xf]
      %v2885 = vld [vmem:[%s2472 + $0x2c] sm:$0x1]
      %v2886 = vld [vmem:[%s2472 + $0x30] sm:$0xf]
      %v2887 = vld [vmem:[%s2472 + $0x34] sm:$0xf]
      %v2888 = vld [vmem:[%s2472 + $0x38] sm:$0x1]
      %v2889 = vld [vmem:[%s2472 + $0x3c] sm:$0xf]
      %v2890 = vld [vmem:[%s2472 + $0x40] sm:$0xf]
      %v2891 = vld [vmem:[%s2472 + $0x44] sm:$0x1]
      %v2892 = vld [vmem:[%s2472 + $0x48] sm:$0xf]
      %v2893 = vld [vmem:[%s2472 + $0x4c] sm:$0xf]
      %v2894 = vld [vmem:[%s2472 + $0x50] sm:$0x1]
      %v2895 = vld [vmem:[%s2472 + $0x54] sm:$0xf]
      %v2896 = vld [vmem:[%s2472 + $0x58] sm:$0xf]
      %v2897 = vld [vmem:[%s2472 + $0x5c] sm:$0x1]
      %v2898 = vld [vmem:[%s2472 + $0x60] sm:$0xf]
      %v2899 = vld [vmem:[%s2472 + $0x64] sm:$0xf]
      %v2900 = vld [vmem:[%s2472 + $0x68] sm:$0x1]
      %v2901 = vld [vmem:[%s2472 + $0x6c] sm:$0xf]
      %v2902 = vld [vmem:[%s2472 + $0x70] sm:$0xf]
      %v2903 = vld [vmem:[%s2472 + $0x74] sm:$0x1]
      %v2904 = vld [vmem:[%s2472 + $0x78] sm:$0xf]
      %v2905 = vld [vmem:[%s2472 + $0x7c] sm:$0xf]
      %v2906 = vld [vmem:[%s2472 + $0x80] sm:$0x1]
      %v2907 = vld [vmem:[%s2472 + $0x84] sm:$0xf]
      %v2908 = vld [vmem:[%s2472 + $0x88] sm:$0xf]
      %v2909 = vld [vmem:[%s2472 + $0x8c] sm:$0x1]
      %v2910 = vld [vmem:[%s2472 + $0x90] sm:$0xf]
      %v2911 = vld [vmem:[%s2472 + $0x94] sm:$0xf]
      %v2912 = vld [vmem:[%s2472 + $0x98] sm:$0x1]
      %v2913 = vld [vmem:[%s2472 + $0x9c] sm:$0xf]
      %v2914 = vld [vmem:[%s2472 + $0xa0] sm:$0xf]
      %v2915 = vld [vmem:[%s2472 + $0xa4] sm:$0x1]
      %v2916 = vld [vmem:[%s2472 + $0xa8] sm:$0xf]
      %v2917 = vld [vmem:[%s2472 + $0xac] sm:$0xf]
      %v2918 = vld [vmem:[%s2472 + $0xb0] sm:$0x1]
      %v2919 = vld [vmem:[%s2472 + $0xb4] sm:$0xf]
      %v2920 = vld [vmem:[%s2472 + $0xb8] sm:$0xf]
      %v2921 = vld [vmem:[%s2472 + $0xbc] sm:$0x1]
      %v2922 = vld [vmem:[%s2472 + $0xc0] sm:$0xf]
      %v2923 = vld [vmem:[%s2472 + $0xc4] sm:$0xf]
      %v2924 = vld [vmem:[%s2472 + $0xc8] sm:$0x1]
      %v2925 = vld [vmem:[%s2472 + $0xcc] sm:$0xf]
      %v2926 = vld [vmem:[%s2472 + $0xd0] sm:$0xf]
      %v2927 = vld [vmem:[%s2472 + $0xd4] sm:$0x1]
      %v2929 = vshrl.u32 %v2874, 16
      %v2931 = vrot.slane %v2929, 4
      %v2932 = vshll.u32 %v2874, 16
      %v2934 = vrot.slane %v2932, 5
      %v2935 = vor.u32 %v2931, %v2934
      %v2936 = vrot.slane %v2935, 4
      %v2938 = vshll.u32 %v2875, 16
      %v2940 = vrot.slane %v2938, 5
      %v2941 = vsel %vm912, %v2936, %v2940
      %v2942 = vshrl.u32 %v2875, 16
      %v2944 = vrot.slane %v2942, 4
      %v2945 = vor.u32 %v2944, %v2940
      %v2946 = vrot.slane %v2945, 4
      %v2948 = vshll.u32 %v2876, 16
      %v2950 = vrot.slane %v2948, 5
      %v2951 = vsel %vm912, %v2946, %v2950
      %v2953 = vshrl.u32 %v2877, 16
      %v2955 = vrot.slane %v2953, 4
      %v2956 = vshll.u32 %v2877, 16
      %v2958 = vrot.slane %v2956, 5
      %v2959 = vor.u32 %v2955, %v2958
      %v2960 = vrot.slane %v2959, 4
      %v2962 = vshll.u32 %v2878, 16
      %v2964 = vrot.slane %v2962, 5
      %v2965 = vsel %vm912, %v2960, %v2964
      %v2966 = vshrl.u32 %v2878, 16
      %v2968 = vrot.slane %v2966, 4
      %v2969 = vor.u32 %v2968, %v2964
      %v2970 = vrot.slane %v2969, 4
      %v2972 = vshll.u32 %v2879, 16
      %v2974 = vrot.slane %v2972, 5
      %v2975 = vsel %vm912, %v2970, %v2974
      %v2977 = vshrl.u32 %v2880, 16
      %v2979 = vrot.slane %v2977, 4
      %v2980 = vshll.u32 %v2880, 16
      %v2982 = vrot.slane %v2980, 5
      %v2983 = vor.u32 %v2979, %v2982
      %v2984 = vrot.slane %v2983, 4
      %v2986 = vshll.u32 %v2881, 16
      %v2988 = vrot.slane %v2986, 5
      %v2989 = vsel %vm912, %v2984, %v2988
      %v2990 = vshrl.u32 %v2881, 16
      %v2992 = vrot.slane %v2990, 4
      %v2993 = vor.u32 %v2992, %v2988
      %v2994 = vrot.slane %v2993, 4
      %v2996 = vshll.u32 %v2882, 16
      %v2998 = vrot.slane %v2996, 5
      %v2999 = vsel %vm912, %v2994, %v2998
      %v3001 = vshrl.u32 %v2883, 16
      %v3003 = vrot.slane %v3001, 4
      %v3004 = vshll.u32 %v2883, 16
      %v3006 = vrot.slane %v3004, 5
      %v3007 = vor.u32 %v3003, %v3006
      %v3008 = vrot.slane %v3007, 4
      %v3010 = vshll.u32 %v2884, 16
      %v3012 = vrot.slane %v3010, 5
      %v3013 = vsel %vm912, %v3008, %v3012
      %v3014 = vshrl.u32 %v2884, 16
      %v3016 = vrot.slane %v3014, 4
      %v3017 = vor.u32 %v3016, %v3012
      %v3018 = vrot.slane %v3017, 4
      %v3020 = vshll.u32 %v2885, 16
      %v3022 = vrot.slane %v3020, 5
      %v3023 = vsel %vm912, %v3018, %v3022
      %v3025 = vshrl.u32 %v2886, 16
      %v3027 = vrot.slane %v3025, 4
      %v3028 = vshll.u32 %v2886, 16
      %v3030 = vrot.slane %v3028, 5
      %v3031 = vor.u32 %v3027, %v3030
      %v3032 = vrot.slane %v3031, 4
      %v3034 = vshll.u32 %v2887, 16
      %v3036 = vrot.slane %v3034, 5
      %v3037 = vsel %vm912, %v3032, %v3036
      %v3038 = vshrl.u32 %v2887, 16
      %v3040 = vrot.slane %v3038, 4
      %v3041 = vor.u32 %v3040, %v3036
      %v3042 = vrot.slane %v3041, 4
      %v3044 = vshll.u32 %v2888, 16
      %v3046 = vrot.slane %v3044, 5
      %v3047 = vsel %vm912, %v3042, %v3046
      %v3049 = vshrl.u32 %v2889, 16
      %v3051 = vrot.slane %v3049, 4
      %v3052 = vshll.u32 %v2889, 16
      %v3054 = vrot.slane %v3052, 5
      %v3055 = vor.u32 %v3051, %v3054
      %v3056 = vrot.slane %v3055, 4
      %v3058 = vshll.u32 %v2890, 16
      %v3060 = vrot.slane %v3058, 5
      %v3061 = vsel %vm912, %v3056, %v3060
      %v3062 = vshrl.u32 %v2890, 16
      %v3064 = vrot.slane %v3062, 4
      %v3065 = vor.u32 %v3064, %v3060
      %v3066 = vrot.slane %v3065, 4
      %v3068 = vshll.u32 %v2891, 16
      %v3070 = vrot.slane %v3068, 5
      %v3071 = vsel %vm912, %v3066, %v3070
      %v3073 = vshrl.u32 %v2892, 16
      %v3075 = vrot.slane %v3073, 4
      %v3076 = vshll.u32 %v2892, 16
      %v3078 = vrot.slane %v3076, 5
      %v3079 = vor.u32 %v3075, %v3078
      %v3080 = vrot.slane %v3079, 4
      %v3082 = vshll.u32 %v2893, 16
      %v3084 = vrot.slane %v3082, 5
      %v3085 = vsel %vm912, %v3080, %v3084
      %v3086 = vshrl.u32 %v2893, 16
      %v3088 = vrot.slane %v3086, 4
      %v3089 = vor.u32 %v3088, %v3084
      %v3090 = vrot.slane %v3089, 4
      %v3092 = vshll.u32 %v2894, 16
      %v3094 = vrot.slane %v3092, 5
      %v3095 = vsel %vm912, %v3090, %v3094
      %v3097 = vshrl.u32 %v2895, 16
      %v3099 = vrot.slane %v3097, 4
      %v3100 = vshll.u32 %v2895, 16
      %v3102 = vrot.slane %v3100, 5
      %v3103 = vor.u32 %v3099, %v3102
      %v3104 = vrot.slane %v3103, 4
      %v3106 = vshll.u32 %v2896, 16
      %v3108 = vrot.slane %v3106, 5
      %v3109 = vsel %vm912, %v3104, %v3108
      %v3110 = vshrl.u32 %v2896, 16
      %v3112 = vrot.slane %v3110, 4
      %v3113 = vor.u32 %v3112, %v3108
      %v3114 = vrot.slane %v3113, 4
      %v3116 = vshll.u32 %v2897, 16
      %v3118 = vrot.slane %v3116, 5
      %v3119 = vsel %vm912, %v3114, %v3118
      %v3121 = vshrl.u32 %v2898, 16
      %v3123 = vrot.slane %v3121, 4
      %v3124 = vshll.u32 %v2898, 16
      %v3126 = vrot.slane %v3124, 5
      %v3127 = vor.u32 %v3123, %v3126
      %v3128 = vrot.slane %v3127, 4
      %v3130 = vshll.u32 %v2899, 16
      %v3132 = vrot.slane %v3130, 5
      %v3133 = vsel %vm912, %v3128, %v3132
      %v3134 = vshrl.u32 %v2899, 16
      %v3136 = vrot.slane %v3134, 4
      %v3137 = vor.u32 %v3136, %v3132
      %v3138 = vrot.slane %v3137, 4
      %v3140 = vshll.u32 %v2900, 16
      %v3142 = vrot.slane %v3140, 5
      %v3143 = vsel %vm912, %v3138, %v3142
      %v3145 = vshrl.u32 %v2901, 16
      %v3147 = vrot.slane %v3145, 4
      %v3148 = vshll.u32 %v2901, 16
      %v3150 = vrot.slane %v3148, 5
      %v3151 = vor.u32 %v3147, %v3150
      %v3152 = vrot.slane %v3151, 4
      %v3154 = vshll.u32 %v2902, 16
      %v3156 = vrot.slane %v3154, 5
      %v3157 = vsel %vm912, %v3152, %v3156
      %v3158 = vshrl.u32 %v2902, 16
      %v3160 = vrot.slane %v3158, 4
      %v3161 = vor.u32 %v3160, %v3156
      %v3162 = vrot.slane %v3161, 4
      %v3164 = vshll.u32 %v2903, 16
      %v3166 = vrot.slane %v3164, 5
      %v3167 = vsel %vm912, %v3162, %v3166
      %v3169 = vshrl.u32 %v2904, 16
      %v3171 = vrot.slane %v3169, 4
      %v3172 = vshll.u32 %v2904, 16
      %v3174 = vrot.slane %v3172, 5
      %v3175 = vor.u32 %v3171, %v3174
      %v3176 = vrot.slane %v3175, 4
      %v3178 = vshll.u32 %v2905, 16
      %v3180 = vrot.slane %v3178, 5
      %v3181 = vsel %vm912, %v3176, %v3180
      %v3182 = vshrl.u32 %v2905, 16
      %v3184 = vrot.slane %v3182, 4
      %v3185 = vor.u32 %v3184, %v3180
      %v3186 = vrot.slane %v3185, 4
      %v3188 = vshll.u32 %v2906, 16
      %v3190 = vrot.slane %v3188, 5
      %v3191 = vsel %vm912, %v3186, %v3190
      %v3193 = vshrl.u32 %v2907, 16
      %v3195 = vrot.slane %v3193, 4
      %v3196 = vshll.u32 %v2907, 16
      %v3198 = vrot.slane %v3196, 5
      %v3199 = vor.u32 %v3195, %v3198
      %v3200 = vrot.slane %v3199, 4
      %v3202 = vshll.u32 %v2908, 16
      %v3204 = vrot.slane %v3202, 5
      %v3205 = vsel %vm912, %v3200, %v3204
      %v3206 = vshrl.u32 %v2908, 16
      %v3208 = vrot.slane %v3206, 4
      %v3209 = vor.u32 %v3208, %v3204
      %v3210 = vrot.slane %v3209, 4
      %v3212 = vshll.u32 %v2909, 16
      %v3214 = vrot.slane %v3212, 5
      %v3215 = vsel %vm912, %v3210, %v3214
      %v3217 = vshrl.u32 %v2910, 16
      %v3219 = vrot.slane %v3217, 4
      %v3220 = vshll.u32 %v2910, 16
      %v3222 = vrot.slane %v3220, 5
      %v3223 = vor.u32 %v3219, %v3222
      %v3224 = vrot.slane %v3223, 4
      %v3226 = vshll.u32 %v2911, 16
      %v3228 = vrot.slane %v3226, 5
      %v3229 = vsel %vm912, %v3224, %v3228
      %v3230 = vshrl.u32 %v2911, 16
      %v3232 = vrot.slane %v3230, 4
      %v3233 = vor.u32 %v3232, %v3228
      %v3234 = vrot.slane %v3233, 4
      %v3236 = vshll.u32 %v2912, 16
      %v3238 = vrot.slane %v3236, 5
      %v3239 = vsel %vm912, %v3234, %v3238
      %v3241 = vshrl.u32 %v2913, 16
      %v3243 = vrot.slane %v3241, 4
      %v3244 = vshll.u32 %v2913, 16
      %v3246 = vrot.slane %v3244, 5
      %v3247 = vor.u32 %v3243, %v3246
      %v3248 = vrot.slane %v3247, 4
      %v3250 = vshll.u32 %v2914, 16
      %v3252 = vrot.slane %v3250, 5
      %v3253 = vsel %vm912, %v3248, %v3252
      %v3254 = vshrl.u32 %v2914, 16
      %v3256 = vrot.slane %v3254, 4
      %v3257 = vor.u32 %v3256, %v3252
      %v3258 = vrot.slane %v3257, 4
      %v3260 = vshll.u32 %v2915, 16
      %v3262 = vrot.slane %v3260, 5
      %v3263 = vsel %vm912, %v3258, %v3262
      %v3265 = vshrl.u32 %v2916, 16
      %v3267 = vrot.slane %v3265, 4
      %v3268 = vshll.u32 %v2916, 16
      %v3270 = vrot.slane %v3268, 5
      %v3271 = vor.u32 %v3267, %v3270
      %v3272 = vrot.slane %v3271, 4
      %v3274 = vshll.u32 %v2917, 16
      %v3276 = vrot.slane %v3274, 5
      %v3277 = vsel %vm912, %v3272, %v3276
      %v3278 = vshrl.u32 %v2917, 16
      %v3280 = vrot.slane %v3278, 4
      %v3281 = vor.u32 %v3280, %v3276
      %v3282 = vrot.slane %v3281, 4
      %v3284 = vshll.u32 %v2918, 16
      %v3286 = vrot.slane %v3284, 5
      %v3287 = vsel %vm912, %v3282, %v3286
      %v3289 = vshrl.u32 %v2919, 16
      %v3291 = vrot.slane %v3289, 4
      %v3292 = vshll.u32 %v2919, 16
      %v3294 = vrot.slane %v3292, 5
      %v3295 = vor.u32 %v3291, %v3294
      %v3296 = vrot.slane %v3295, 4
      %v3298 = vshll.u32 %v2920, 16
      %v3300 = vrot.slane %v3298, 5
      %v3301 = vsel %vm912, %v3296, %v3300
      %v3302 = vshrl.u32 %v2920, 16
      %v3304 = vrot.slane %v3302, 4
      %v3305 = vor.u32 %v3304, %v3300
      %v3306 = vrot.slane %v3305, 4
      %v3308 = vshll.u32 %v2921, 16
      %v3310 = vrot.slane %v3308, 5
      %v3311 = vsel %vm912, %v3306, %v3310
      %v3313 = vshrl.u32 %v2922, 16
      %v3315 = vrot.slane %v3313, 4
      %v3316 = vshll.u32 %v2922, 16
      %v3318 = vrot.slane %v3316, 5
      %v3319 = vor.u32 %v3315, %v3318
      %v3320 = vrot.slane %v3319, 4
      %v3322 = vshll.u32 %v2923, 16
      %v3324 = vrot.slane %v3322, 5
      %v3325 = vsel %vm912, %v3320, %v3324
      %v3326 = vshrl.u32 %v2923, 16
      %v3328 = vrot.slane %v3326, 4
      %v3329 = vor.u32 %v3328, %v3324
      %v3330 = vrot.slane %v3329, 4
      %v3332 = vshll.u32 %v2924, 16
      %v3334 = vrot.slane %v3332, 5
      %v3335 = vsel %vm912, %v3330, %v3334
      %v3337 = vshrl.u32 %v2925, 16
      %v3339 = vrot.slane %v3337, 4
      %v3340 = vshll.u32 %v2925, 16
      %v3342 = vrot.slane %v3340, 5
      %v3343 = vor.u32 %v3339, %v3342
      %v3344 = vrot.slane %v3343, 4
      %v3346 = vshll.u32 %v2926, 16
      %v3348 = vrot.slane %v3346, 5
      %v3349 = vsel %vm912, %v3344, %v3348
      %v3350 = vshrl.u32 %v2926, 16
      %v3352 = vrot.slane %v3350, 4
      %v3353 = vor.u32 %v3352, %v3348
      %v3354 = vrot.slane %v3353, 4
      %v3356 = vshll.u32 %v2927, 16
      %v3358 = vrot.slane %v3356, 5
      %v3359 = vsel %vm912, %v3354, %v3358
      %v3360 = vld [vmem:[%s1 + $0x8] sm:$0x3]
      %v3361 = vunpack.c.l.b16 %v2941
      %v3362 = vunpack.c.l.b16 %v2951
      %v3363 = vunpack.c.l.b16 %v2965
      %v3364 = vunpack.c.l.b16 %v2975
      %v3365 = vunpack.c.l.b16 %v2989
      %v3366 = vunpack.c.l.b16 %v2999
      %v3367 = vunpack.c.l.b16 %v3013
      %v3368 = vunpack.c.l.b16 %v3023
      %v3369 = vunpack.c.l.b16 %v3037
      %v3370 = vunpack.c.l.b16 %v3047
      %v3371 = vunpack.c.l.b16 %v3061
      %v3372 = vunpack.c.l.b16 %v3071
      %v3373 = vunpack.c.l.b16 %v3085
      %v3374 = vunpack.c.l.b16 %v3095
      %v3375 = vunpack.c.l.b16 %v3109
      %v3376 = vunpack.c.l.b16 %v3119
      %v3377 = vunpack.c.l.b16 %v3133
      %v3378 = vunpack.c.l.b16 %v3143
      %v3379 = vunpack.c.l.b16 %v3157
      %v3380 = vunpack.c.l.b16 %v3167
      %v3381 = vunpack.c.l.b16 %v3181
      %v3382 = vunpack.c.l.b16 %v3191
      %v3383 = vunpack.c.l.b16 %v3205
      %v3384 = vunpack.c.l.b16 %v3215
      %v3385 = vunpack.c.l.b16 %v3229
      %v3386 = vunpack.c.l.b16 %v3239
      %v3387 = vunpack.c.l.b16 %v3253
      %v3388 = vunpack.c.l.b16 %v3263
      %v3389 = vunpack.c.l.b16 %v3277
      %v3390 = vunpack.c.l.b16 %v3287
      %v3391 = vunpack.c.l.b16 %v3301
      %v3392 = vunpack.c.l.b16 %v3311
      %v3393 = vunpack.c.l.b16 %v3325
      %v3394 = vunpack.c.l.b16 %v3335
      %v3395 = vunpack.c.l.b16 %v3349
      %v3396 = vunpack.c.l.b16 %v3359
      %v3397 = vpack.c.b16 %v3362, %v3361
      %v3398 = vpack.c.b16 %v3364, %v3363
      %v3399 = vpack.c.b16 %v3366, %v3365
      %v3400 = vpack.c.b16 %v3368, %v3367
      %v3401 = vpack.c.b16 %v3370, %v3369
      %v3402 = vpack.c.b16 %v3372, %v3371
      %v3403 = vpack.c.b16 %v3374, %v3373
      %v3404 = vpack.c.b16 %v3376, %v3375
      %v3405 = vpack.c.b16 %v3378, %v3377
      %v3406 = vpack.c.b16 %v3380, %v3379
      %v3407 = vpack.c.b16 %v3382, %v3381
      %v3408 = vpack.c.b16 %v3384, %v3383
      %v3409 = vpack.c.b16 %v3386, %v3385
      %v3410 = vpack.c.b16 %v3388, %v3387
      %v3411 = vpack.c.b16 %v3390, %v3389
      %v3412 = vpack.c.b16 %v3392, %v3391
      %v3413 = vpack.c.b16 %v3394, %v3393
      %v3414 = vpack.c.b16 %v3396, %v3395
      %v3416 = vsel %vm1404, %v3397, 0
      %v3419 = vsel %vm1404, %v3398, 0
      %v3422 = vsel %vm1404, %v3399, 0
      %v3425 = vsel %vm1404, %v3400, 0
      %v3428 = vsel %vm1404, %v3401, 0
      %v3431 = vsel %vm1404, %v3402, 0
      %v3434 = vsel %vm1404, %v3403, 0
      %v3437 = vsel %vm1404, %v3404, 0
      %v3440 = vsel %vm1404, %v3405, 0
      %v3443 = vsel %vm1404, %v3406, 0
      %v3446 = vsel %vm1404, %v3407, 0
      %v3449 = vsel %vm1404, %v3408, 0
      %v3452 = vsel %vm1404, %v3409, 0
      %v3455 = vsel %vm1404, %v3410, 0
      %v3458 = vsel %vm1404, %v3411, 0
      %v3461 = vsel %vm1404, %v3412, 0
      %v3464 = vsel %vm1404, %v3413, 0
      %v3467 = vsel %vm1404, %v3414, 0
      %v3470 = vsel %vm1459, %v3360, 0
      %3472 = vmatprep.subr.bf16.mxu0 0
      %3473 = vmatpush1.bf16.msra.mxu0 0
      %3474 = vmatprep.subr.bf16.mxu0 0
      %3475 = vmatpush1.bf16.msra.mxu0 0
      %3476 = vmatprep.subr.bf16.mxu0 0
      %3477 = vmatpush1.bf16.msra.mxu0 0
      %3478 = vmatprep.subr.bf16.mxu0 0
      %3479 = vmatpush1.bf16.msra.mxu0 0
      %3480 = vmatprep.subr.bf16.mxu0 0
      %3481 = vmatpush1.bf16.msra.mxu0 0
      %3482 = vmatprep.subr.bf16.mxu0 0
      %3483 = vmatpush1.bf16.msra.mxu0 0
      %3484 = vmatprep.subr.bf16.mxu0 0
      %3485 = vmatpush1.bf16.msra.mxu0 0
      %3486 = vmatprep.subr.bf16.mxu0 0
      %3487 = vmatpush1.bf16.msra.mxu0 %v3470
      %3488 = vmatprep.subr.bf16.mxu0 0
      %3489 = vmatpush2.bf16.msra.mxu0 0
      %3490 = vmatprep.subr.bf16.mxu0 0
      %3491 = vmatpush2.bf16.msra.mxu0 0
      %3492 = vmatprep.subr.bf16.mxu0 0
      %3493 = vmatpush2.bf16.msra.mxu0 0
      %3494 = vmatprep.subr.bf16.mxu0 0
      %3495 = vmatpush2.bf16.msra.mxu0 0
      %3496 = vmatprep.subr.bf16.mxu0 0
      %3497 = vmatpush2.bf16.msra.mxu0 0
      %3498 = vmatprep.subr.bf16.mxu0 0
      %3499 = vmatpush2.bf16.msra.mxu0 0
      %3500 = vmatprep.subr.bf16.mxu0 0
      %3501 = vmatpush2.bf16.msra.mxu0 0
      %3502 = vmatprep.subr.bf16.mxu0 0
      %3503 = vmatpush2.bf16.msra.mxu0 0
      %3504 = vmatprep.mubr.bf16.mxu0 0
      %3505 = vmatmul.mubr.bf16.gmra.mxu0 %v3416
      %v3506 = vpop.f32.mrf.mxu0
      %v3507 = vadd.f32 0.0, %v3506
      %v3508 = vpop.f32.mrf.mxu0
      %v3509 = vpop.f32.mrf.mxu0
      %v3510 = vadd.f32 0.0, %v3509
      %v3511 = vpop.f32.mrf.mxu0
      %3512 = vmatprep.mubr.bf16.mxu0 0
      %3513 = vmatmul.mubr.bf16.gmra.mxu0 %v3419
      %v3514 = vpop.f32.mrf.mxu0
      %v3515 = vadd.f32 0.0, %v3514
      %v3516 = vpop.f32.mrf.mxu0
      %v3517 = vpop.f32.mrf.mxu0
      %v3518 = vadd.f32 0.0, %v3517
      %v3519 = vpop.f32.mrf.mxu0
      %3520 = vmatprep.mubr.bf16.mxu0 0
      %3521 = vmatmul.mubr.bf16.gmra.mxu0 %v3422
      %v3522 = vpop.f32.mrf.mxu0
      %v3523 = vadd.f32 0.0, %v3522
      %v3524 = vpop.f32.mrf.mxu0
      %v3525 = vpop.f32.mrf.mxu0
      %v3526 = vadd.f32 0.0, %v3525
      %v3527 = vpop.f32.mrf.mxu0
      %3528 = vmatprep.mubr.bf16.mxu0 0
      %3529 = vmatmul.mubr.bf16.gmra.mxu0 %v3425
      %v3530 = vpop.f32.mrf.mxu0
      %v3531 = vadd.f32 0.0, %v3530
      %v3532 = vpop.f32.mrf.mxu0
      %v3533 = vpop.f32.mrf.mxu0
      %v3534 = vadd.f32 0.0, %v3533
      %v3535 = vpop.f32.mrf.mxu0
      %3536 = vmatprep.mubr.bf16.mxu0 0
      %3537 = vmatmul.mubr.bf16.gmra.mxu0 %v3428
      %v3538 = vpop.f32.mrf.mxu0
      %v3539 = vadd.f32 0.0, %v3538
      %v3540 = vpop.f32.mrf.mxu0
      %v3541 = vpop.f32.mrf.mxu0
      %v3542 = vadd.f32 0.0, %v3541
      %v3543 = vpop.f32.mrf.mxu0
      %3544 = vmatprep.mubr.bf16.mxu0 0
      %3545 = vmatmul.mubr.bf16.gmra.mxu0 %v3431
      %v3546 = vpop.f32.mrf.mxu0
      %v3547 = vadd.f32 0.0, %v3546
      %v3548 = vpop.f32.mrf.mxu0
      %v3549 = vpop.f32.mrf.mxu0
      %v3550 = vadd.f32 0.0, %v3549
      %v3551 = vpop.f32.mrf.mxu0
      %3552 = vmatprep.mubr.bf16.mxu0 0
      %3553 = vmatmul.mubr.bf16.gmra.mxu0 %v3434
      %v3554 = vpop.f32.mrf.mxu0
      %v3555 = vadd.f32 0.0, %v3554
      %v3556 = vpop.f32.mrf.mxu0
      %v3557 = vpop.f32.mrf.mxu0
      %v3558 = vadd.f32 0.0, %v3557
      %v3559 = vpop.f32.mrf.mxu0
      %3560 = vmatprep.mubr.bf16.mxu0 0
      %3561 = vmatmul.mubr.bf16.gmra.mxu0 %v3437
      %v3562 = vpop.f32.mrf.mxu0
      %v3563 = vadd.f32 0.0, %v3562
      %v3564 = vpop.f32.mrf.mxu0
      %v3565 = vpop.f32.mrf.mxu0
      %v3566 = vadd.f32 0.0, %v3565
      %v3567 = vpop.f32.mrf.mxu0
      %3568 = vmatprep.mubr.bf16.mxu0 0
      %3569 = vmatmul.mubr.bf16.gmra.mxu0 %v3440
      %v3570 = vpop.f32.mrf.mxu0
      %v3571 = vadd.f32 0.0, %v3570
      %v3572 = vpop.f32.mrf.mxu0
      %v3573 = vpop.f32.mrf.mxu0
      %v3574 = vadd.f32 0.0, %v3573
      %v3575 = vpop.f32.mrf.mxu0
      %3576 = vmatprep.mubr.bf16.mxu0 0
      %3577 = vmatmul.mubr.bf16.gmra.mxu0 %v3443
      %v3578 = vpop.f32.mrf.mxu0
      %v3579 = vadd.f32 0.0, %v3578
      %v3580 = vpop.f32.mrf.mxu0
      %v3581 = vpop.f32.mrf.mxu0
      %v3582 = vadd.f32 0.0, %v3581
      %v3583 = vpop.f32.mrf.mxu0
      %3584 = vmatprep.mubr.bf16.mxu0 0
      %3585 = vmatmul.mubr.bf16.gmra.mxu0 %v3446
      %v3586 = vpop.f32.mrf.mxu0
      %v3587 = vadd.f32 0.0, %v3586
      %v3588 = vpop.f32.mrf.mxu0
      %v3589 = vpop.f32.mrf.mxu0
      %v3590 = vadd.f32 0.0, %v3589
      %v3591 = vpop.f32.mrf.mxu0
      %3592 = vmatprep.mubr.bf16.mxu0 0
      %3593 = vmatmul.mubr.bf16.gmra.mxu0 %v3449
      %v3594 = vpop.f32.mrf.mxu0
      %v3595 = vadd.f32 0.0, %v3594
      %v3596 = vpop.f32.mrf.mxu0
      %v3597 = vpop.f32.mrf.mxu0
      %v3598 = vadd.f32 0.0, %v3597
      %v3599 = vpop.f32.mrf.mxu0
      %3600 = vmatprep.mubr.bf16.mxu0 0
      %3601 = vmatmul.mubr.bf16.gmra.mxu0 %v3452
      %v3602 = vpop.f32.mrf.mxu0
      %v3603 = vadd.f32 0.0, %v3602
      %v3604 = vpop.f32.mrf.mxu0
      %v3605 = vpop.f32.mrf.mxu0
      %v3606 = vadd.f32 0.0, %v3605
      %v3607 = vpop.f32.mrf.mxu0
      %3608 = vmatprep.mubr.bf16.mxu0 0
      %3609 = vmatmul.mubr.bf16.gmra.mxu0 %v3455
      %v3610 = vpop.f32.mrf.mxu0
      %v3611 = vadd.f32 0.0, %v3610
      %v3612 = vpop.f32.mrf.mxu0
      %v3613 = vpop.f32.mrf.mxu0
      %v3614 = vadd.f32 0.0, %v3613
      %v3615 = vpop.f32.mrf.mxu0
      %3616 = vmatprep.mubr.bf16.mxu0 0
      %3617 = vmatmul.mubr.bf16.gmra.mxu0 %v3458
      %v3618 = vpop.f32.mrf.mxu0
      %v3619 = vadd.f32 0.0, %v3618
      %v3620 = vpop.f32.mrf.mxu0
      %v3621 = vpop.f32.mrf.mxu0
      %v3622 = vadd.f32 0.0, %v3621
      %v3623 = vpop.f32.mrf.mxu0
      %3624 = vmatprep.mubr.bf16.mxu0 0
      %3625 = vmatmul.mubr.bf16.gmra.mxu0 %v3461
      %v3626 = vpop.f32.mrf.mxu0
      %v3627 = vadd.f32 0.0, %v3626
      %v3628 = vpop.f32.mrf.mxu0
      %v3629 = vpop.f32.mrf.mxu0
      %v3630 = vadd.f32 0.0, %v3629
      %v3631 = vpop.f32.mrf.mxu0
      %3632 = vmatprep.mubr.bf16.mxu0 0
      %3633 = vmatmul.mubr.bf16.gmra.mxu0 %v3464
      %v3634 = vpop.f32.mrf.mxu0
      %v3635 = vadd.f32 0.0, %v3634
      %v3636 = vpop.f32.mrf.mxu0
      %v3637 = vpop.f32.mrf.mxu0
      %v3638 = vadd.f32 0.0, %v3637
      %v3639 = vpop.f32.mrf.mxu0
      %3640 = vmatprep.mubr.bf16.mxu0 0
      %3641 = vmatmul.mubr.bf16.gmra.mxu0 %v3467
      %v3642 = vpop.f32.mrf.mxu0
      %v3643 = vadd.f32 0.0, %v3642
      %v3644 = vpop.f32.mrf.mxu0
      %v3645 = vpop.f32.mrf.mxu0
      %v3646 = vadd.f32 0.0, %v3645
      %v3647 = vpop.f32.mrf.mxu0
      %3648 = vdwg.mxu0
      %v3649 = vadd.f32 %v2838, %v3507
      %v3650 = vadd.f32 %v2839, %v3510
      %v3651 = vadd.f32 %v2840, %v3515
      %v3652 = vadd.f32 %v2841, %v3518
      %v3653 = vadd.f32 %v2842, %v3523
      %v3654 = vadd.f32 %v2843, %v3526
      %v3655 = vadd.f32 %v2844, %v3531
      %v3656 = vadd.f32 %v2845, %v3534
      %v3657 = vadd.f32 %v2846, %v3539
      %v3658 = vadd.f32 %v2847, %v3542
      %v3659 = vadd.f32 %v2848, %v3547
      %v3660 = vadd.f32 %v2849, %v3550
      %v3661 = vadd.f32 %v2850, %v3555
      %v3662 = vadd.f32 %v2851, %v3558
      %v3663 = vadd.f32 %v2852, %v3563
      %v3664 = vadd.f32 %v2853, %v3566
      %v3665 = vadd.f32 %v2854, %v3571
      %v3666 = vadd.f32 %v2855, %v3574
      %v3667 = vadd.f32 %v2856, %v3579
      %v3668 = vadd.f32 %v2857, %v3582
      %v3669 = vadd.f32 %v2858, %v3587
      %v3670 = vadd.f32 %v2859, %v3590
      %v3671 = vadd.f32 %v2860, %v3595
      %v3672 = vadd.f32 %v2861, %v3598
      %v3673 = vadd.f32 %v2862, %v3603
      %v3674 = vadd.f32 %v2863, %v3606
      %v3675 = vadd.f32 %v2864, %v3611
      %v3676 = vadd.f32 %v2865, %v3614
      %v3677 = vadd.f32 %v2866, %v3619
      %v3678 = vadd.f32 %v2867, %v3622
      %v3679 = vadd.f32 %v2868, %v3627
      %v3680 = vadd.f32 %v2869, %v3630
      %v3681 = vadd.f32 %v2870, %v3635
      %v3682 = vadd.f32 %v2871, %v3638
      %v3683 = vadd.f32 %v2872, %v3643
      %v3684 = vadd.f32 %v2873, %v3646
      %v3685 = vld [vmem:[%s2472] sm:$0xe]
      %v3686 = vld [vmem:[%s2472 + $0xc] sm:$0xe]
      %v3687 = vld [vmem:[%s2472 + $0x18] sm:$0xe]
      %v3688 = vld [vmem:[%s2472 + $0x24] sm:$0xe]
      %v3689 = vld [vmem:[%s2472 + $0x30] sm:$0xe]
      %v3690 = vld [vmem:[%s2472 + $0x3c] sm:$0xe]
      %v3691 = vld [vmem:[%s2472 + $0x48] sm:$0xe]
      %v3692 = vld [vmem:[%s2472 + $0x54] sm:$0xe]
      %v3693 = vld [vmem:[%s2472 + $0x60] sm:$0xe]
      %v3694 = vld [vmem:[%s2472 + $0x6c] sm:$0xe]
      %v3695 = vld [vmem:[%s2472 + $0x78] sm:$0xe]
      %v3696 = vld [vmem:[%s2472 + $0x84] sm:$0xe]
      %v3697 = vld [vmem:[%s2472 + $0x90] sm:$0xe]
      %v3698 = vld [vmem:[%s2472 + $0x9c] sm:$0xe]
      %v3699 = vld [vmem:[%s2472 + $0xa8] sm:$0xe]
      %v3700 = vld [vmem:[%s2472 + $0xb4] sm:$0xe]
      %v3701 = vld [vmem:[%s2472 + $0xc0] sm:$0xe]
      %v3702 = vld [vmem:[%s2472 + $0xcc] sm:$0xe]
      %v3757 = vrot.slane %v3685, 5
      %v3758 = vrot.slane %v3757, 4
      %v3759 = vrot.slane %v2875, 5
      %v3760 = vsel %vm2020, %v3758, %v3759
      %v3761 = vrot.slane %v3759, 4
      %v3762 = vrot.slane %v2876, 5
      %v3763 = vsel %vm2020, %v3761, %v3762
      %v3764 = vrot.slane %v3686, 5
      %v3765 = vrot.slane %v3764, 4
      %v3766 = vrot.slane %v2878, 5
      %v3767 = vsel %vm2020, %v3765, %v3766
      %v3768 = vrot.slane %v3766, 4
      %v3769 = vrot.slane %v2879, 5
      %v3770 = vsel %vm2020, %v3768, %v3769
      %v3771 = vrot.slane %v3687, 5
      %v3772 = vrot.slane %v3771, 4
      %v3773 = vrot.slane %v2881, 5
      %v3774 = vsel %vm2020, %v3772, %v3773
      %v3775 = vrot.slane %v3773, 4
      %v3776 = vrot.slane %v2882, 5
      %v3777 = vsel %vm2020, %v3775, %v3776
      %v3778 = vrot.slane %v3688, 5
      %v3779 = vrot.slane %v3778, 4
      %v3780 = vrot.slane %v2884, 5
      %v3781 = vsel %vm2020, %v3779, %v3780
      %v3782 = vrot.slane %v3780, 4
      %v3783 = vrot.slane %v2885, 5
      %v3784 = vsel %vm2020, %v3782, %v3783
      %v3785 = vrot.slane %v3689, 5
      %v3786 = vrot.slane %v3785, 4
      %v3787 = vrot.slane %v2887, 5
      %v3788 = vsel %vm2020, %v3786, %v3787
      %v3789 = vrot.slane %v3787, 4
      %v3790 = vrot.slane %v2888, 5
      %v3791 = vsel %vm2020, %v3789, %v3790
      %v3792 = vrot.slane %v3690, 5
      %v3793 = vrot.slane %v3792, 4
      %v3794 = vrot.slane %v2890, 5
      %v3795 = vsel %vm2020, %v3793, %v3794
      %v3796 = vrot.slane %v3794, 4
      %v3797 = vrot.slane %v2891, 5
      %v3798 = vsel %vm2020, %v3796, %v3797
      %v3799 = vrot.slane %v3691, 5
      %v3800 = vrot.slane %v3799, 4
      %v3801 = vrot.slane %v2893, 5
      %v3802 = vsel %vm2020, %v3800, %v3801
      %v3803 = vrot.slane %v3801, 4
      %v3804 = vrot.slane %v2894, 5
      %v3805 = vsel %vm2020, %v3803, %v3804
      %v3806 = vrot.slane %v3692, 5
      %v3807 = vrot.slane %v3806, 4
      %v3808 = vrot.slane %v2896, 5
      %v3809 = vsel %vm2020, %v3807, %v3808
      %v3810 = vrot.slane %v3808, 4
      %v3811 = vrot.slane %v2897, 5
      %v3812 = vsel %vm2020, %v3810, %v3811
      %v3813 = vrot.slane %v3693, 5
      %v3814 = vrot.slane %v3813, 4
      %v3815 = vrot.slane %v2899, 5
      %v3816 = vsel %vm2020, %v3814, %v3815
      %v3817 = vrot.slane %v3815, 4
      %v3818 = vrot.slane %v2900, 5
      %v3819 = vsel %vm2020, %v3817, %v3818
      %v3820 = vrot.slane %v3694, 5
      %v3821 = vrot.slane %v3820, 4
      %v3822 = vrot.slane %v2902, 5
      %v3823 = vsel %vm2020, %v3821, %v3822
      %v3824 = vrot.slane %v3822, 4
      %v3825 = vrot.slane %v2903, 5
      %v3826 = vsel %vm2020, %v3824, %v3825
      %v3827 = vrot.slane %v3695, 5
      %v3828 = vrot.slane %v3827, 4
      %v3829 = vrot.slane %v2905, 5
      %v3830 = vsel %vm2020, %v3828, %v3829
      %v3831 = vrot.slane %v3829, 4
      %v3832 = vrot.slane %v2906, 5
      %v3833 = vsel %vm2020, %v3831, %v3832
      %v3834 = vrot.slane %v3696, 5
      %v3835 = vrot.slane %v3834, 4
      %v3836 = vrot.slane %v2908, 5
      %v3837 = vsel %vm2020, %v3835, %v3836
      %v3838 = vrot.slane %v3836, 4
      %v3839 = vrot.slane %v2909, 5
      %v3840 = vsel %vm2020, %v3838, %v3839
      %v3841 = vrot.slane %v3697, 5
      %v3842 = vrot.slane %v3841, 4
      %v3843 = vrot.slane %v2911, 5
      %v3844 = vsel %vm2020, %v3842, %v3843
      %v3845 = vrot.slane %v3843, 4
      %v3846 = vrot.slane %v2912, 5
      %v3847 = vsel %vm2020, %v3845, %v3846
      %v3848 = vrot.slane %v3698, 5
      %v3849 = vrot.slane %v3848, 4
      %v3850 = vrot.slane %v2914, 5
      %v3851 = vsel %vm2020, %v3849, %v3850
      %v3852 = vrot.slane %v3850, 4
      %v3853 = vrot.slane %v2915, 5
      %v3854 = vsel %vm2020, %v3852, %v3853
      %v3855 = vrot.slane %v3699, 5
      %v3856 = vrot.slane %v3855, 4
      %v3857 = vrot.slane %v2917, 5
      %v3858 = vsel %vm2020, %v3856, %v3857
      %v3859 = vrot.slane %v3857, 4
      %v3860 = vrot.slane %v2918, 5
      %v3861 = vsel %vm2020, %v3859, %v3860
      %v3862 = vrot.slane %v3700, 5
      %v3863 = vrot.slane %v3862, 4
      %v3864 = vrot.slane %v2920, 5
      %v3865 = vsel %vm2020, %v3863, %v3864
      %v3866 = vrot.slane %v3864, 4
      %v3867 = vrot.slane %v2921, 5
      %v3868 = vsel %vm2020, %v3866, %v3867
      %v3869 = vrot.slane %v3701, 5
      %v3870 = vrot.slane %v3869, 4
      %v3871 = vrot.slane %v2923, 5
      %v3872 = vsel %vm2020, %v3870, %v3871
      %v3873 = vrot.slane %v3871, 4
      %v3874 = vrot.slane %v2924, 5
      %v3875 = vsel %vm2020, %v3873, %v3874
      %v3876 = vrot.slane %v3702, 5
      %v3877 = vrot.slane %v3876, 4
      %v3878 = vrot.slane %v2926, 5
      %v3879 = vsel %vm2020, %v3877, %v3878
      %v3880 = vrot.slane %v3878, 4
      %v3881 = vrot.slane %v2927, 5
      %v3882 = vsel %vm2020, %v3880, %v3881
      %v3883 = vld [vmem:[%s1 + $0x8] sm:$0xc]
      %v3884 = vunpack.c.l.b16 %v3760
      %v3885 = vunpack.c.l.b16 %v3763
      %v3886 = vunpack.c.l.b16 %v3767
      %v3887 = vunpack.c.l.b16 %v3770
      %v3888 = vunpack.c.l.b16 %v3774
      %v3889 = vunpack.c.l.b16 %v3777
      %v3890 = vunpack.c.l.b16 %v3781
      %v3891 = vunpack.c.l.b16 %v3784
      %v3892 = vunpack.c.l.b16 %v3788
      %v3893 = vunpack.c.l.b16 %v3791
      %v3894 = vunpack.c.l.b16 %v3795
      %v3895 = vunpack.c.l.b16 %v3798
      %v3896 = vunpack.c.l.b16 %v3802
      %v3897 = vunpack.c.l.b16 %v3805
      %v3898 = vunpack.c.l.b16 %v3809
      %v3899 = vunpack.c.l.b16 %v3812
      %v3900 = vunpack.c.l.b16 %v3816
      %v3901 = vunpack.c.l.b16 %v3819
      %v3902 = vunpack.c.l.b16 %v3823
      %v3903 = vunpack.c.l.b16 %v3826
      %v3904 = vunpack.c.l.b16 %v3830
      %v3905 = vunpack.c.l.b16 %v3833
      %v3906 = vunpack.c.l.b16 %v3837
      %v3907 = vunpack.c.l.b16 %v3840
      %v3908 = vunpack.c.l.b16 %v3844
      %v3909 = vunpack.c.l.b16 %v3847
      %v3910 = vunpack.c.l.b16 %v3851
      %v3911 = vunpack.c.l.b16 %v3854
      %v3912 = vunpack.c.l.b16 %v3858
      %v3913 = vunpack.c.l.b16 %v3861
      %v3914 = vunpack.c.l.b16 %v3865
      %v3915 = vunpack.c.l.b16 %v3868
      %v3916 = vunpack.c.l.b16 %v3872
      %v3917 = vunpack.c.l.b16 %v3875
      %v3918 = vunpack.c.l.b16 %v3879
      %v3919 = vunpack.c.l.b16 %v3882
      %v3920 = vpack.c.b16 %v3885, %v3884
      %v3921 = vpack.c.b16 %v3887, %v3886
      %v3922 = vpack.c.b16 %v3889, %v3888
      %v3923 = vpack.c.b16 %v3891, %v3890
      %v3924 = vpack.c.b16 %v3893, %v3892
      %v3925 = vpack.c.b16 %v3895, %v3894
      %v3926 = vpack.c.b16 %v3897, %v3896
      %v3927 = vpack.c.b16 %v3899, %v3898
      %v3928 = vpack.c.b16 %v3901, %v3900
      %v3929 = vpack.c.b16 %v3903, %v3902
      %v3930 = vpack.c.b16 %v3905, %v3904
      %v3931 = vpack.c.b16 %v3907, %v3906
      %v3932 = vpack.c.b16 %v3909, %v3908
      %v3933 = vpack.c.b16 %v3911, %v3910
      %v3934 = vpack.c.b16 %v3913, %v3912
      %v3935 = vpack.c.b16 %v3915, %v3914
      %v3936 = vpack.c.b16 %v3917, %v3916
      %v3937 = vpack.c.b16 %v3919, %v3918
      %v3939 = vunpack.c.l.b16 %v3883
      %v3940 = vpack.c.b16 %v3939, %v3939
      %v3941 = vrot.slane %v3940, 2
      %v3943 = vsel %vm1404, %v3920, 0
      %v3946 = vsel %vm1404, %v3921, 0
      %v3949 = vsel %vm1404, %v3922, 0
      %v3952 = vsel %vm1404, %v3923, 0
      %v3955 = vsel %vm1404, %v3924, 0
      %v3958 = vsel %vm1404, %v3925, 0
      %v3961 = vsel %vm1404, %v3926, 0
      %v3964 = vsel %vm1404, %v3927, 0
      %v3967 = vsel %vm1404, %v3928, 0
      %v3970 = vsel %vm1404, %v3929, 0
      %v3973 = vsel %vm1404, %v3930, 0
      %v3976 = vsel %vm1404, %v3931, 0
      %v3979 = vsel %vm1404, %v3932, 0
      %v3982 = vsel %vm1404, %v3933, 0
      %v3985 = vsel %vm1404, %v3934, 0
      %v3988 = vsel %vm1404, %v3935, 0
      %v3991 = vsel %vm1404, %v3936, 0
      %v3994 = vsel %vm1404, %v3937, 0
      %v3997 = vsel %vm1459, %v3941, 0
      %3999 = vmatprep.subr.bf16.mxu0 0
      %4000 = vmatpush1.bf16.msra.mxu0 0
      %4001 = vmatprep.subr.bf16.mxu0 0
      %4002 = vmatpush1.bf16.msra.mxu0 0
      %4003 = vmatprep.subr.bf16.mxu0 0
      %4004 = vmatpush1.bf16.msra.mxu0 0
      %4005 = vmatprep.subr.bf16.mxu0 0
      %4006 = vmatpush1.bf16.msra.mxu0 0
      %4007 = vmatprep.subr.bf16.mxu0 0
      %4008 = vmatpush1.bf16.msra.mxu0 0
      %4009 = vmatprep.subr.bf16.mxu0 0
      %4010 = vmatpush1.bf16.msra.mxu0 0
      %4011 = vmatprep.subr.bf16.mxu0 0
      %4012 = vmatpush1.bf16.msra.mxu0 0
      %4013 = vmatprep.subr.bf16.mxu0 0
      %4014 = vmatpush1.bf16.msra.mxu0 %v3997
      %4015 = vmatprep.subr.bf16.mxu0 0
      %4016 = vmatpush2.bf16.msra.mxu0 0
      %4017 = vmatprep.subr.bf16.mxu0 0
      %4018 = vmatpush2.bf16.msra.mxu0 0
      %4019 = vmatprep.subr.bf16.mxu0 0
      %4020 = vmatpush2.bf16.msra.mxu0 0
      %4021 = vmatprep.subr.bf16.mxu0 0
      %4022 = vmatpush2.bf16.msra.mxu0 0
      %4023 = vmatprep.subr.bf16.mxu0 0
      %4024 = vmatpush2.bf16.msra.mxu0 0
      %4025 = vmatprep.subr.bf16.mxu0 0
      %4026 = vmatpush2.bf16.msra.mxu0 0
      %4027 = vmatprep.subr.bf16.mxu0 0
      %4028 = vmatpush2.bf16.msra.mxu0 0
      %4029 = vmatprep.subr.bf16.mxu0 0
      %4030 = vmatpush2.bf16.msra.mxu0 0
      %4031 = vmatprep.mubr.bf16.mxu0 0
      %4032 = vmatmul.mubr.bf16.gmra.mxu0 %v3943
      %v4033 = vpop.f32.mrf.mxu0
      %v4034 = vadd.f32 0.0, %v4033
      %v4035 = vpop.f32.mrf.mxu0
      %v4036 = vpop.f32.mrf.mxu0
      %v4037 = vadd.f32 0.0, %v4036
      %v4038 = vpop.f32.mrf.mxu0
      %4039 = vmatprep.mubr.bf16.mxu0 0
      %4040 = vmatmul.mubr.bf16.gmra.mxu0 %v3946
      %v4041 = vpop.f32.mrf.mxu0
      %v4042 = vadd.f32 0.0, %v4041
      %v4043 = vpop.f32.mrf.mxu0
      %v4044 = vpop.f32.mrf.mxu0
      %v4045 = vadd.f32 0.0, %v4044
      %v4046 = vpop.f32.mrf.mxu0
      %4047 = vmatprep.mubr.bf16.mxu0 0
      %4048 = vmatmul.mubr.bf16.gmra.mxu0 %v3949
      %v4049 = vpop.f32.mrf.mxu0
      %v4050 = vadd.f32 0.0, %v4049
      %v4051 = vpop.f32.mrf.mxu0
      %v4052 = vpop.f32.mrf.mxu0
      %v4053 = vadd.f32 0.0, %v4052
      %v4054 = vpop.f32.mrf.mxu0
      %4055 = vmatprep.mubr.bf16.mxu0 0
      %4056 = vmatmul.mubr.bf16.gmra.mxu0 %v3952
      %v4057 = vpop.f32.mrf.mxu0
      %v4058 = vadd.f32 0.0, %v4057
      %v4059 = vpop.f32.mrf.mxu0
      %v4060 = vpop.f32.mrf.mxu0
      %v4061 = vadd.f32 0.0, %v4060
      %v4062 = vpop.f32.mrf.mxu0
      %4063 = vmatprep.mubr.bf16.mxu0 0
      %4064 = vmatmul.mubr.bf16.gmra.mxu0 %v3955
      %v4065 = vpop.f32.mrf.mxu0
      %v4066 = vadd.f32 0.0, %v4065
      %v4067 = vpop.f32.mrf.mxu0
      %v4068 = vpop.f32.mrf.mxu0
      %v4069 = vadd.f32 0.0, %v4068
      %v4070 = vpop.f32.mrf.mxu0
      %4071 = vmatprep.mubr.bf16.mxu0 0
      %4072 = vmatmul.mubr.bf16.gmra.mxu0 %v3958
      %v4073 = vpop.f32.mrf.mxu0
      %v4074 = vadd.f32 0.0, %v4073
      %v4075 = vpop.f32.mrf.mxu0
      %v4076 = vpop.f32.mrf.mxu0
      %v4077 = vadd.f32 0.0, %v4076
      %v4078 = vpop.f32.mrf.mxu0
      %4079 = vmatprep.mubr.bf16.mxu0 0
      %4080 = vmatmul.mubr.bf16.gmra.mxu0 %v3961
      %v4081 = vpop.f32.mrf.mxu0
      %v4082 = vadd.f32 0.0, %v4081
      %v4083 = vpop.f32.mrf.mxu0
      %v4084 = vpop.f32.mrf.mxu0
      %v4085 = vadd.f32 0.0, %v4084
      %v4086 = vpop.f32.mrf.mxu0
      %4087 = vmatprep.mubr.bf16.mxu0 0
      %4088 = vmatmul.mubr.bf16.gmra.mxu0 %v3964
      %v4089 = vpop.f32.mrf.mxu0
      %v4090 = vadd.f32 0.0, %v4089
      %v4091 = vpop.f32.mrf.mxu0
      %v4092 = vpop.f32.mrf.mxu0
      %v4093 = vadd.f32 0.0, %v4092
      %v4094 = vpop.f32.mrf.mxu0
      %4095 = vmatprep.mubr.bf16.mxu0 0
      %4096 = vmatmul.mubr.bf16.gmra.mxu0 %v3967
      %v4097 = vpop.f32.mrf.mxu0
      %v4098 = vadd.f32 0.0, %v4097
      %v4099 = vpop.f32.mrf.mxu0
      %v4100 = vpop.f32.mrf.mxu0
      %v4101 = vadd.f32 0.0, %v4100
      %v4102 = vpop.f32.mrf.mxu0
      %4103 = vmatprep.mubr.bf16.mxu0 0
      %4104 = vmatmul.mubr.bf16.gmra.mxu0 %v3970
      %v4105 = vpop.f32.mrf.mxu0
      %v4106 = vadd.f32 0.0, %v4105
      %v4107 = vpop.f32.mrf.mxu0
      %v4108 = vpop.f32.mrf.mxu0
      %v4109 = vadd.f32 0.0, %v4108
      %v4110 = vpop.f32.mrf.mxu0
      %4111 = vmatprep.mubr.bf16.mxu0 0
      %4112 = vmatmul.mubr.bf16.gmra.mxu0 %v3973
      %v4113 = vpop.f32.mrf.mxu0
      %v4114 = vadd.f32 0.0, %v4113
      %v4115 = vpop.f32.mrf.mxu0
      %v4116 = vpop.f32.mrf.mxu0
      %v4117 = vadd.f32 0.0, %v4116
      %v4118 = vpop.f32.mrf.mxu0
      %4119 = vmatprep.mubr.bf16.mxu0 0
      %4120 = vmatmul.mubr.bf16.gmra.mxu0 %v3976
      %v4121 = vpop.f32.mrf.mxu0
      %v4122 = vadd.f32 0.0, %v4121
      %v4123 = vpop.f32.mrf.mxu0
      %v4124 = vpop.f32.mrf.mxu0
      %v4125 = vadd.f32 0.0, %v4124
      %v4126 = vpop.f32.mrf.mxu0
      %4127 = vmatprep.mubr.bf16.mxu0 0
      %4128 = vmatmul.mubr.bf16.gmra.mxu0 %v3979
      %v4129 = vpop.f32.mrf.mxu0
      %v4130 = vadd.f32 0.0, %v4129
      %v4131 = vpop.f32.mrf.mxu0
      %v4132 = vpop.f32.mrf.mxu0
      %v4133 = vadd.f32 0.0, %v4132
      %v4134 = vpop.f32.mrf.mxu0
      %4135 = vmatprep.mubr.bf16.mxu0 0
      %4136 = vmatmul.mubr.bf16.gmra.mxu0 %v3982
      %v4137 = vpop.f32.mrf.mxu0
      %v4138 = vadd.f32 0.0, %v4137
      %v4139 = vpop.f32.mrf.mxu0
      %v4140 = vpop.f32.mrf.mxu0
      %v4141 = vadd.f32 0.0, %v4140
      %v4142 = vpop.f32.mrf.mxu0
      %4143 = vmatprep.mubr.bf16.mxu0 0
      %4144 = vmatmul.mubr.bf16.gmra.mxu0 %v3985
      %v4145 = vpop.f32.mrf.mxu0
      %v4146 = vadd.f32 0.0, %v4145
      %v4147 = vpop.f32.mrf.mxu0
      %v4148 = vpop.f32.mrf.mxu0
      %v4149 = vadd.f32 0.0, %v4148
      %v4150 = vpop.f32.mrf.mxu0
      %4151 = vmatprep.mubr.bf16.mxu0 0
      %4152 = vmatmul.mubr.bf16.gmra.mxu0 %v3988
      %v4153 = vpop.f32.mrf.mxu0
      %v4154 = vadd.f32 0.0, %v4153
      %v4155 = vpop.f32.mrf.mxu0
      %v4156 = vpop.f32.mrf.mxu0
      %v4157 = vadd.f32 0.0, %v4156
      %v4158 = vpop.f32.mrf.mxu0
      %4159 = vmatprep.mubr.bf16.mxu0 0
      %4160 = vmatmul.mubr.bf16.gmra.mxu0 %v3991
      %v4161 = vpop.f32.mrf.mxu0
      %v4162 = vadd.f32 0.0, %v4161
      %v4163 = vpop.f32.mrf.mxu0
      %v4164 = vpop.f32.mrf.mxu0
      %v4165 = vadd.f32 0.0, %v4164
      %v4166 = vpop.f32.mrf.mxu0
      %4167 = vmatprep.mubr.bf16.mxu0 0
      %4168 = vmatmul.mubr.bf16.gmra.mxu0 %v3994
      %v4169 = vpop.f32.mrf.mxu0
      %v4170 = vadd.f32 0.0, %v4169
      %v4171 = vpop.f32.mrf.mxu0
      %v4172 = vpop.f32.mrf.mxu0
      %v4173 = vadd.f32 0.0, %v4172
      %v4174 = vpop.f32.mrf.mxu0
      %4175 = vdwg.mxu0
      %v4176 = vadd.f32 %v3649, %v4034
      %v4177 = vadd.f32 %v3650, %v4037
      %v4178 = vadd.f32 %v3651, %v4042
      %v4179 = vadd.f32 %v3652, %v4045
      %v4180 = vadd.f32 %v3653, %v4050
      %v4181 = vadd.f32 %v3654, %v4053
      %v4182 = vadd.f32 %v3655, %v4058
      %v4183 = vadd.f32 %v3656, %v4061
      %v4184 = vadd.f32 %v3657, %v4066
      %v4185 = vadd.f32 %v3658, %v4069
      %v4186 = vadd.f32 %v3659, %v4074
      %v4187 = vadd.f32 %v3660, %v4077
      %v4188 = vadd.f32 %v3661, %v4082
      %v4189 = vadd.f32 %v3662, %v4085
      %v4190 = vadd.f32 %v3663, %v4090
      %v4191 = vadd.f32 %v3664, %v4093
      %v4192 = vadd.f32 %v3665, %v4098
      %v4193 = vadd.f32 %v3666, %v4101
      %v4194 = vadd.f32 %v3667, %v4106
      %v4195 = vadd.f32 %v3668, %v4109
      %v4196 = vadd.f32 %v3669, %v4114
      %v4197 = vadd.f32 %v3670, %v4117
      %v4198 = vadd.f32 %v3671, %v4122
      %v4199 = vadd.f32 %v3672, %v4125
      %v4200 = vadd.f32 %v3673, %v4130
      %v4201 = vadd.f32 %v3674, %v4133
      %v4202 = vadd.f32 %v3675, %v4138
      %v4203 = vadd.f32 %v3676, %v4141
      %v4204 = vadd.f32 %v3677, %v4146
      %v4205 = vadd.f32 %v3678, %v4149
      %v4206 = vadd.f32 %v3679, %v4154
      %v4207 = vadd.f32 %v3680, %v4157
      %v4208 = vadd.f32 %v3681, %v4162
      %v4209 = vadd.f32 %v3682, %v4165
      %v4210 = vadd.f32 %v3683, %v4170
      %v4211 = vadd.f32 %v3684, %v4173
      %v4212 = vld [vmem:[%s657] sm:$0xf]
      %v4213 = vld [vmem:[%s657 + $0x4] sm:$0xf]
      %v4214 = vld [vmem:[%s657 + $0xc] sm:$0xf]
      %v4215 = vld [vmem:[%s657 + $0x10] sm:$0xf]
      %v4216 = vld [vmem:[%s657 + $0x18] sm:$0xf]
      %v4217 = vld [vmem:[%s657 + $0x1c] sm:$0xf]
      %v4218 = vld [vmem:[%s657 + $0x24] sm:$0xf]
      %v4219 = vld [vmem:[%s657 + $0x28] sm:$0xf]
      %v4220 = vld [vmem:[%s657 + $0x30] sm:$0xf]
      %v4221 = vld [vmem:[%s657 + $0x34] sm:$0xf]
      %v4222 = vld [vmem:[%s657 + $0x3c] sm:$0xf]
      %v4223 = vld [vmem:[%s657 + $0x40] sm:$0xf]
      %v4224 = vld [vmem:[%s657 + $0x48] sm:$0xf]
      %v4225 = vld [vmem:[%s657 + $0x4c] sm:$0xf]
      %v4226 = vld [vmem:[%s657 + $0x54] sm:$0xf]
      %v4227 = vld [vmem:[%s657 + $0x58] sm:$0xf]
      %v4228 = vld [vmem:[%s657 + $0x60] sm:$0xf]
      %v4229 = vld [vmem:[%s657 + $0x64] sm:$0xf]
      %v4230 = vld [vmem:[%s657 + $0x6c] sm:$0xf]
      %v4231 = vld [vmem:[%s657 + $0x70] sm:$0xf]
      %v4232 = vld [vmem:[%s657 + $0x78] sm:$0xf]
      %v4233 = vld [vmem:[%s657 + $0x7c] sm:$0xf]
      %v4234 = vld [vmem:[%s657 + $0x84] sm:$0xf]
      %v4235 = vld [vmem:[%s657 + $0x88] sm:$0xf]
      %v4236 = vld [vmem:[%s657 + $0x90] sm:$0xf]
      %v4237 = vld [vmem:[%s657 + $0x94] sm:$0xf]
      %v4238 = vld [vmem:[%s657 + $0x9c] sm:$0xf]
      %v4239 = vld [vmem:[%s657 + $0xa0] sm:$0xf]
      %v4240 = vld [vmem:[%s657 + $0xa8] sm:$0xf]
      %v4241 = vld [vmem:[%s657 + $0xac] sm:$0xf]
      %v4242 = vld [vmem:[%s657 + $0xb4] sm:$0xf]
      %v4243 = vld [vmem:[%s657 + $0xb8] sm:$0xf]
      %v4244 = vld [vmem:[%s657 + $0xc0] sm:$0xf]
      %v4245 = vld [vmem:[%s657 + $0xc4] sm:$0xf]
      %v4246 = vld [vmem:[%s657 + $0xcc] sm:$0xf]
      %v4247 = vld [vmem:[%s657 + $0xd0] sm:$0xf]
      %v4248 = vld [vmem:[%s1 + $0xc] sm:$0x3]
      %v4285 = vunpack.c.l.b16 %v4212
      %v4286 = vunpack.c.l.b16 %v4213
      %v4287 = vunpack.c.l.b16 %v4214
      %v4288 = vunpack.c.l.b16 %v4215
      %v4289 = vunpack.c.l.b16 %v4216
      %v4290 = vunpack.c.l.b16 %v4217
      %v4291 = vunpack.c.l.b16 %v4218
      %v4292 = vunpack.c.l.b16 %v4219
      %v4293 = vunpack.c.l.b16 %v4220
      %v4294 = vunpack.c.l.b16 %v4221
      %v4295 = vunpack.c.l.b16 %v4222
      %v4296 = vunpack.c.l.b16 %v4223
      %v4297 = vunpack.c.l.b16 %v4224
      %v4298 = vunpack.c.l.b16 %v4225
      %v4299 = vunpack.c.l.b16 %v4226
      %v4300 = vunpack.c.l.b16 %v4227
      %v4301 = vunpack.c.l.b16 %v4228
      %v4302 = vunpack.c.l.b16 %v4229
      %v4303 = vunpack.c.l.b16 %v4230
      %v4304 = vunpack.c.l.b16 %v4231
      %v4305 = vunpack.c.l.b16 %v4232
      %v4306 = vunpack.c.l.b16 %v4233
      %v4307 = vunpack.c.l.b16 %v4234
      %v4308 = vunpack.c.l.b16 %v4235
      %v4309 = vunpack.c.l.b16 %v4236
      %v4310 = vunpack.c.l.b16 %v4237
      %v4311 = vunpack.c.l.b16 %v4238
      %v4312 = vunpack.c.l.b16 %v4239
      %v4313 = vunpack.c.l.b16 %v4240
      %v4314 = vunpack.c.l.b16 %v4241
      %v4315 = vunpack.c.l.b16 %v4242
      %v4316 = vunpack.c.l.b16 %v4243
      %v4317 = vunpack.c.l.b16 %v4244
      %v4318 = vunpack.c.l.b16 %v4245
      %v4319 = vunpack.c.l.b16 %v4246
      %v4320 = vunpack.c.l.b16 %v4247
      %v4321 = vpack.c.b16 %v4286, %v4285
      %v4322 = vpack.c.b16 %v4288, %v4287
      %v4323 = vpack.c.b16 %v4290, %v4289
      %v4324 = vpack.c.b16 %v4292, %v4291
      %v4325 = vpack.c.b16 %v4294, %v4293
      %v4326 = vpack.c.b16 %v4296, %v4295
      %v4327 = vpack.c.b16 %v4298, %v4297
      %v4328 = vpack.c.b16 %v4300, %v4299
      %v4329 = vpack.c.b16 %v4302, %v4301
      %v4330 = vpack.c.b16 %v4304, %v4303
      %v4331 = vpack.c.b16 %v4306, %v4305
      %v4332 = vpack.c.b16 %v4308, %v4307
      %v4333 = vpack.c.b16 %v4310, %v4309
      %v4334 = vpack.c.b16 %v4312, %v4311
      %v4335 = vpack.c.b16 %v4314, %v4313
      %v4336 = vpack.c.b16 %v4316, %v4315
      %v4337 = vpack.c.b16 %v4318, %v4317
      %v4338 = vpack.c.b16 %v4320, %v4319
      %v4340 = vsel %vm1404, %v4321, 0
      %v4343 = vsel %vm1404, %v4322, 0
      %v4346 = vsel %vm1404, %v4323, 0
      %v4349 = vsel %vm1404, %v4324, 0
      %v4352 = vsel %vm1404, %v4325, 0
      %v4355 = vsel %vm1404, %v4326, 0
      %v4358 = vsel %vm1404, %v4327, 0
      %v4361 = vsel %vm1404, %v4328, 0
      %v4364 = vsel %vm1404, %v4329, 0
      %v4367 = vsel %vm1404, %v4330, 0
      %v4370 = vsel %vm1404, %v4331, 0
      %v4373 = vsel %vm1404, %v4332, 0
      %v4376 = vsel %vm1404, %v4333, 0
      %v4379 = vsel %vm1404, %v4334, 0
      %v4382 = vsel %vm1404, %v4335, 0
      %v4385 = vsel %vm1404, %v4336, 0
      %v4388 = vsel %vm1404, %v4337, 0
      %v4391 = vsel %vm1404, %v4338, 0
      %v4394 = vsel %vm1459, %v4248, 0
      %4396 = vmatprep.subr.bf16.mxu0 0
      %4397 = vmatpush1.bf16.msra.mxu0 0
      %4398 = vmatprep.subr.bf16.mxu0 0
      %4399 = vmatpush1.bf16.msra.mxu0 0
      %4400 = vmatprep.subr.bf16.mxu0 0
      %4401 = vmatpush1.bf16.msra.mxu0 0
      %4402 = vmatprep.subr.bf16.mxu0 0
      %4403 = vmatpush1.bf16.msra.mxu0 0
      %4404 = vmatprep.subr.bf16.mxu0 0
      %4405 = vmatpush1.bf16.msra.mxu0 0
      %4406 = vmatprep.subr.bf16.mxu0 0
      %4407 = vmatpush1.bf16.msra.mxu0 0
      %4408 = vmatprep.subr.bf16.mxu0 0
      %4409 = vmatpush1.bf16.msra.mxu0 0
      %4410 = vmatprep.subr.bf16.mxu0 0
      %4411 = vmatpush1.bf16.msra.mxu0 %v4394
      %4412 = vmatprep.subr.bf16.mxu0 0
      %4413 = vmatpush2.bf16.msra.mxu0 0
      %4414 = vmatprep.subr.bf16.mxu0 0
      %4415 = vmatpush2.bf16.msra.mxu0 0
      %4416 = vmatprep.subr.bf16.mxu0 0
      %4417 = vmatpush2.bf16.msra.mxu0 0
      %4418 = vmatprep.subr.bf16.mxu0 0
      %4419 = vmatpush2.bf16.msra.mxu0 0
      %4420 = vmatprep.subr.bf16.mxu0 0
      %4421 = vmatpush2.bf16.msra.mxu0 0
      %4422 = vmatprep.subr.bf16.mxu0 0
      %4423 = vmatpush2.bf16.msra.mxu0 0
      %4424 = vmatprep.subr.bf16.mxu0 0
      %4425 = vmatpush2.bf16.msra.mxu0 0
      %4426 = vmatprep.subr.bf16.mxu0 0
      %4427 = vmatpush2.bf16.msra.mxu0 0
      %4428 = vmatprep.mubr.bf16.mxu0 0
      %4429 = vmatmul.mubr.bf16.gmra.mxu0 %v4340
      %v4430 = vpop.f32.mrf.mxu0
      %v4431 = vadd.f32 0.0, %v4430
      %v4432 = vpop.f32.mrf.mxu0
      %v4433 = vpop.f32.mrf.mxu0
      %v4434 = vadd.f32 0.0, %v4433
      %v4435 = vpop.f32.mrf.mxu0
      %4436 = vmatprep.mubr.bf16.mxu0 0
      %4437 = vmatmul.mubr.bf16.gmra.mxu0 %v4343
      %v4438 = vpop.f32.mrf.mxu0
      %v4439 = vadd.f32 0.0, %v4438
      %v4440 = vpop.f32.mrf.mxu0
      %v4441 = vpop.f32.mrf.mxu0
      %v4442 = vadd.f32 0.0, %v4441
      %v4443 = vpop.f32.mrf.mxu0
      %4444 = vmatprep.mubr.bf16.mxu0 0
      %4445 = vmatmul.mubr.bf16.gmra.mxu0 %v4346
      %v4446 = vpop.f32.mrf.mxu0
      %v4447 = vadd.f32 0.0, %v4446
      %v4448 = vpop.f32.mrf.mxu0
      %v4449 = vpop.f32.mrf.mxu0
      %v4450 = vadd.f32 0.0, %v4449
      %v4451 = vpop.f32.mrf.mxu0
      %4452 = vmatprep.mubr.bf16.mxu0 0
      %4453 = vmatmul.mubr.bf16.gmra.mxu0 %v4349
      %v4454 = vpop.f32.mrf.mxu0
      %v4455 = vadd.f32 0.0, %v4454
      %v4456 = vpop.f32.mrf.mxu0
      %v4457 = vpop.f32.mrf.mxu0
      %v4458 = vadd.f32 0.0, %v4457
      %v4459 = vpop.f32.mrf.mxu0
      %4460 = vmatprep.mubr.bf16.mxu0 0
      %4461 = vmatmul.mubr.bf16.gmra.mxu0 %v4352
      %v4462 = vpop.f32.mrf.mxu0
      %v4463 = vadd.f32 0.0, %v4462
      %v4464 = vpop.f32.mrf.mxu0
      %v4465 = vpop.f32.mrf.mxu0
      %v4466 = vadd.f32 0.0, %v4465
      %v4467 = vpop.f32.mrf.mxu0
      %4468 = vmatprep.mubr.bf16.mxu0 0
      %4469 = vmatmul.mubr.bf16.gmra.mxu0 %v4355
      %v4470 = vpop.f32.mrf.mxu0
      %v4471 = vadd.f32 0.0, %v4470
      %v4472 = vpop.f32.mrf.mxu0
      %v4473 = vpop.f32.mrf.mxu0
      %v4474 = vadd.f32 0.0, %v4473
      %v4475 = vpop.f32.mrf.mxu0
      %4476 = vmatprep.mubr.bf16.mxu0 0
      %4477 = vmatmul.mubr.bf16.gmra.mxu0 %v4358
      %v4478 = vpop.f32.mrf.mxu0
      %v4479 = vadd.f32 0.0, %v4478
      %v4480 = vpop.f32.mrf.mxu0
      %v4481 = vpop.f32.mrf.mxu0
      %v4482 = vadd.f32 0.0, %v4481
      %v4483 = vpop.f32.mrf.mxu0
      %4484 = vmatprep.mubr.bf16.mxu0 0
      %4485 = vmatmul.mubr.bf16.gmra.mxu0 %v4361
      %v4486 = vpop.f32.mrf.mxu0
      %v4487 = vadd.f32 0.0, %v4486
      %v4488 = vpop.f32.mrf.mxu0
      %v4489 = vpop.f32.mrf.mxu0
      %v4490 = vadd.f32 0.0, %v4489
      %v4491 = vpop.f32.mrf.mxu0
      %4492 = vmatprep.mubr.bf16.mxu0 0
      %4493 = vmatmul.mubr.bf16.gmra.mxu0 %v4364
      %v4494 = vpop.f32.mrf.mxu0
      %v4495 = vadd.f32 0.0, %v4494
      %v4496 = vpop.f32.mrf.mxu0
      %v4497 = vpop.f32.mrf.mxu0
      %v4498 = vadd.f32 0.0, %v4497
      %v4499 = vpop.f32.mrf.mxu0
      %4500 = vmatprep.mubr.bf16.mxu0 0
      %4501 = vmatmul.mubr.bf16.gmra.mxu0 %v4367
      %v4502 = vpop.f32.mrf.mxu0
      %v4503 = vadd.f32 0.0, %v4502
      %v4504 = vpop.f32.mrf.mxu0
      %v4505 = vpop.f32.mrf.mxu0
      %v4506 = vadd.f32 0.0, %v4505
      %v4507 = vpop.f32.mrf.mxu0
      %4508 = vmatprep.mubr.bf16.mxu0 0
      %4509 = vmatmul.mubr.bf16.gmra.mxu0 %v4370
      %v4510 = vpop.f32.mrf.mxu0
      %v4511 = vadd.f32 0.0, %v4510
      %v4512 = vpop.f32.mrf.mxu0
      %v4513 = vpop.f32.mrf.mxu0
      %v4514 = vadd.f32 0.0, %v4513
      %v4515 = vpop.f32.mrf.mxu0
      %4516 = vmatprep.mubr.bf16.mxu0 0
      %4517 = vmatmul.mubr.bf16.gmra.mxu0 %v4373
      %v4518 = vpop.f32.mrf.mxu0
      %v4519 = vadd.f32 0.0, %v4518
      %v4520 = vpop.f32.mrf.mxu0
      %v4521 = vpop.f32.mrf.mxu0
      %v4522 = vadd.f32 0.0, %v4521
      %v4523 = vpop.f32.mrf.mxu0
      %4524 = vmatprep.mubr.bf16.mxu0 0
      %4525 = vmatmul.mubr.bf16.gmra.mxu0 %v4376
      %v4526 = vpop.f32.mrf.mxu0
      %v4527 = vadd.f32 0.0, %v4526
      %v4528 = vpop.f32.mrf.mxu0
      %v4529 = vpop.f32.mrf.mxu0
      %v4530 = vadd.f32 0.0, %v4529
      %v4531 = vpop.f32.mrf.mxu0
      %4532 = vmatprep.mubr.bf16.mxu0 0
      %4533 = vmatmul.mubr.bf16.gmra.mxu0 %v4379
      %v4534 = vpop.f32.mrf.mxu0
      %v4535 = vadd.f32 0.0, %v4534
      %v4536 = vpop.f32.mrf.mxu0
      %v4537 = vpop.f32.mrf.mxu0
      %v4538 = vadd.f32 0.0, %v4537
      %v4539 = vpop.f32.mrf.mxu0
      %4540 = vmatprep.mubr.bf16.mxu0 0
      %4541 = vmatmul.mubr.bf16.gmra.mxu0 %v4382
      %v4542 = vpop.f32.mrf.mxu0
      %v4543 = vadd.f32 0.0, %v4542
      %v4544 = vpop.f32.mrf.mxu0
      %v4545 = vpop.f32.mrf.mxu0
      %v4546 = vadd.f32 0.0, %v4545
      %v4547 = vpop.f32.mrf.mxu0
      %4548 = vmatprep.mubr.bf16.mxu0 0
      %4549 = vmatmul.mubr.bf16.gmra.mxu0 %v4385
      %v4550 = vpop.f32.mrf.mxu0
      %v4551 = vadd.f32 0.0, %v4550
      %v4552 = vpop.f32.mrf.mxu0
      %v4553 = vpop.f32.mrf.mxu0
      %v4554 = vadd.f32 0.0, %v4553
      %v4555 = vpop.f32.mrf.mxu0
      %4556 = vmatprep.mubr.bf16.mxu0 0
      %4557 = vmatmul.mubr.bf16.gmra.mxu0 %v4388
      %v4558 = vpop.f32.mrf.mxu0
      %v4559 = vadd.f32 0.0, %v4558
      %v4560 = vpop.f32.mrf.mxu0
      %v4561 = vpop.f32.mrf.mxu0
      %v4562 = vadd.f32 0.0, %v4561
      %v4563 = vpop.f32.mrf.mxu0
      %4564 = vmatprep.mubr.bf16.mxu0 0
      %4565 = vmatmul.mubr.bf16.gmra.mxu0 %v4391
      %v4566 = vpop.f32.mrf.mxu0
      %v4567 = vadd.f32 0.0, %v4566
      %v4568 = vpop.f32.mrf.mxu0
      %v4569 = vpop.f32.mrf.mxu0
      %v4570 = vadd.f32 0.0, %v4569
      %v4571 = vpop.f32.mrf.mxu0
      %4572 = vdwg.mxu0
      %v4573 = vadd.f32 %v4176, %v4431
      %v4574 = vadd.f32 %v4177, %v4434
      %v4575 = vadd.f32 %v4178, %v4439
      %v4576 = vadd.f32 %v4179, %v4442
      %v4577 = vadd.f32 %v4180, %v4447
      %v4578 = vadd.f32 %v4181, %v4450
      %v4579 = vadd.f32 %v4182, %v4455
      %v4580 = vadd.f32 %v4183, %v4458
      %v4581 = vadd.f32 %v4184, %v4463
      %v4582 = vadd.f32 %v4185, %v4466
      %v4583 = vadd.f32 %v4186, %v4471
      %v4584 = vadd.f32 %v4187, %v4474
      %v4585 = vadd.f32 %v4188, %v4479
      %v4586 = vadd.f32 %v4189, %v4482
      %v4587 = vadd.f32 %v4190, %v4487
      %v4588 = vadd.f32 %v4191, %v4490
      %v4589 = vadd.f32 %v4192, %v4495
      %v4590 = vadd.f32 %v4193, %v4498
      %v4591 = vadd.f32 %v4194, %v4503
      %v4592 = vadd.f32 %v4195, %v4506
      %v4593 = vadd.f32 %v4196, %v4511
      %v4594 = vadd.f32 %v4197, %v4514
      %v4595 = vadd.f32 %v4198, %v4519
      %v4596 = vadd.f32 %v4199, %v4522
      %v4597 = vadd.f32 %v4200, %v4527
      %v4598 = vadd.f32 %v4201, %v4530
      %v4599 = vadd.f32 %v4202, %v4535
      %v4600 = vadd.f32 %v4203, %v4538
      %v4601 = vadd.f32 %v4204, %v4543
      %v4602 = vadd.f32 %v4205, %v4546
      %v4603 = vadd.f32 %v4206, %v4551
      %v4604 = vadd.f32 %v4207, %v4554
      %v4605 = vadd.f32 %v4208, %v4559
      %v4606 = vadd.f32 %v4209, %v4562
      %v4607 = vadd.f32 %v4210, %v4567
      %v4608 = vadd.f32 %v4211, %v4570
      %v4609 = vld [vmem:[%s657] sm:$0xf]
      %v4610 = vld [vmem:[%s657 + $0x4] sm:$0xf]
      %v4611 = vld [vmem:[%s657 + $0x8] sm:$0x1]
      %v4612 = vld [vmem:[%s657 + $0xc] sm:$0xf]
      %v4613 = vld [vmem:[%s657 + $0x10] sm:$0xf]
      %v4614 = vld [vmem:[%s657 + $0x14] sm:$0x1]
      %v4615 = vld [vmem:[%s657 + $0x18] sm:$0xf]
      %v4616 = vld [vmem:[%s657 + $0x1c] sm:$0xf]
      %v4617 = vld [vmem:[%s657 + $0x20] sm:$0x1]
      %v4618 = vld [vmem:[%s657 + $0x24] sm:$0xf]
      %v4619 = vld [vmem:[%s657 + $0x28] sm:$0xf]
      %v4620 = vld [vmem:[%s657 + $0x2c] sm:$0x1]
      %v4621 = vld [vmem:[%s657 + $0x30] sm:$0xf]
      %v4622 = vld [vmem:[%s657 + $0x34] sm:$0xf]
      %v4623 = vld [vmem:[%s657 + $0x38] sm:$0x1]
      %v4624 = vld [vmem:[%s657 + $0x3c] sm:$0xf]
      %v4625 = vld [vmem:[%s657 + $0x40] sm:$0xf]
      %v4626 = vld [vmem:[%s657 + $0x44] sm:$0x1]
      %v4627 = vld [vmem:[%s657 + $0x48] sm:$0xf]
      %v4628 = vld [vmem:[%s657 + $0x4c] sm:$0xf]
      %v4629 = vld [vmem:[%s657 + $0x50] sm:$0x1]
      %v4630 = vld [vmem:[%s657 + $0x54] sm:$0xf]
      %v4631 = vld [vmem:[%s657 + $0x58] sm:$0xf]
      %v4632 = vld [vmem:[%s657 + $0x5c] sm:$0x1]
      %v4633 = vld [vmem:[%s657 + $0x60] sm:$0xf]
      %v4634 = vld [vmem:[%s657 + $0x64] sm:$0xf]
      %v4635 = vld [vmem:[%s657 + $0x68] sm:$0x1]
      %v4636 = vld [vmem:[%s657 + $0x6c] sm:$0xf]
      %v4637 = vld [vmem:[%s657 + $0x70] sm:$0xf]
      %v4638 = vld [vmem:[%s657 + $0x74] sm:$0x1]
      %v4639 = vld [vmem:[%s657 + $0x78] sm:$0xf]
      %v4640 = vld [vmem:[%s657 + $0x7c] sm:$0xf]
      %v4641 = vld [vmem:[%s657 + $0x80] sm:$0x1]
      %v4642 = vld [vmem:[%s657 + $0x84] sm:$0xf]
      %v4643 = vld [vmem:[%s657 + $0x88] sm:$0xf]
      %v4644 = vld [vmem:[%s657 + $0x8c] sm:$0x1]
      %v4645 = vld [vmem:[%s657 + $0x90] sm:$0xf]
      %v4646 = vld [vmem:[%s657 + $0x94] sm:$0xf]
      %v4647 = vld [vmem:[%s657 + $0x98] sm:$0x1]
      %v4648 = vld [vmem:[%s657 + $0x9c] sm:$0xf]
      %v4649 = vld [vmem:[%s657 + $0xa0] sm:$0xf]
      %v4650 = vld [vmem:[%s657 + $0xa4] sm:$0x1]
      %v4651 = vld [vmem:[%s657 + $0xa8] sm:$0xf]
      %v4652 = vld [vmem:[%s657 + $0xac] sm:$0xf]
      %v4653 = vld [vmem:[%s657 + $0xb0] sm:$0x1]
      %v4654 = vld [vmem:[%s657 + $0xb4] sm:$0xf]
      %v4655 = vld [vmem:[%s657 + $0xb8] sm:$0xf]
      %v4656 = vld [vmem:[%s657 + $0xbc] sm:$0x1]
      %v4657 = vld [vmem:[%s657 + $0xc0] sm:$0xf]
      %v4658 = vld [vmem:[%s657 + $0xc4] sm:$0xf]
      %v4659 = vld [vmem:[%s657 + $0xc8] sm:$0x1]
      %v4660 = vld [vmem:[%s657 + $0xcc] sm:$0xf]
      %v4661 = vld [vmem:[%s657 + $0xd0] sm:$0xf]
      %v4662 = vld [vmem:[%s657 + $0xd4] sm:$0x1]
      %v4664 = vshrl.u32 %v4609, 16
      %v4666 = vrot.slane %v4664, 4
      %v4667 = vshll.u32 %v4609, 16
      %v4669 = vrot.slane %v4667, 5
      %v4670 = vor.u32 %v4666, %v4669
      %v4671 = vrot.slane %v4670, 4
      %v4673 = vshll.u32 %v4610, 16
      %v4675 = vrot.slane %v4673, 5
      %v4676 = vsel %vm912, %v4671, %v4675
      %v4677 = vshrl.u32 %v4610, 16
      %v4679 = vrot.slane %v4677, 4
      %v4680 = vor.u32 %v4679, %v4675
      %v4681 = vrot.slane %v4680, 4
      %v4683 = vshll.u32 %v4611, 16
      %v4685 = vrot.slane %v4683, 5
      %v4686 = vsel %vm912, %v4681, %v4685
      %v4688 = vshrl.u32 %v4612, 16
      %v4690 = vrot.slane %v4688, 4
      %v4691 = vshll.u32 %v4612, 16
      %v4693 = vrot.slane %v4691, 5
      %v4694 = vor.u32 %v4690, %v4693
      %v4695 = vrot.slane %v4694, 4
      %v4697 = vshll.u32 %v4613, 16
      %v4699 = vrot.slane %v4697, 5
      %v4700 = vsel %vm912, %v4695, %v4699
      %v4701 = vshrl.u32 %v4613, 16
      %v4703 = vrot.slane %v4701, 4
      %v4704 = vor.u32 %v4703, %v4699
      %v4705 = vrot.slane %v4704, 4
      %v4707 = vshll.u32 %v4614, 16
      %v4709 = vrot.slane %v4707, 5
      %v4710 = vsel %vm912, %v4705, %v4709
      %v4712 = vshrl.u32 %v4615, 16
      %v4714 = vrot.slane %v4712, 4
      %v4715 = vshll.u32 %v4615, 16
      %v4717 = vrot.slane %v4715, 5
      %v4718 = vor.u32 %v4714, %v4717
      %v4719 = vrot.slane %v4718, 4
      %v4721 = vshll.u32 %v4616, 16
      %v4723 = vrot.slane %v4721, 5
      %v4724 = vsel %vm912, %v4719, %v4723
      %v4725 = vshrl.u32 %v4616, 16
      %v4727 = vrot.slane %v4725, 4
      %v4728 = vor.u32 %v4727, %v4723
      %v4729 = vrot.slane %v4728, 4
      %v4731 = vshll.u32 %v4617, 16
      %v4733 = vrot.slane %v4731, 5
      %v4734 = vsel %vm912, %v4729, %v4733
      %v4736 = vshrl.u32 %v4618, 16
      %v4738 = vrot.slane %v4736, 4
      %v4739 = vshll.u32 %v4618, 16
      %v4741 = vrot.slane %v4739, 5
      %v4742 = vor.u32 %v4738, %v4741
      %v4743 = vrot.slane %v4742, 4
      %v4745 = vshll.u32 %v4619, 16
      %v4747 = vrot.slane %v4745, 5
      %v4748 = vsel %vm912, %v4743, %v4747
      %v4749 = vshrl.u32 %v4619, 16
      %v4751 = vrot.slane %v4749, 4
      %v4752 = vor.u32 %v4751, %v4747
      %v4753 = vrot.slane %v4752, 4
      %v4755 = vshll.u32 %v4620, 16
      %v4757 = vrot.slane %v4755, 5
      %v4758 = vsel %vm912, %v4753, %v4757
      %v4760 = vshrl.u32 %v4621, 16
      %v4762 = vrot.slane %v4760, 4
      %v4763 = vshll.u32 %v4621, 16
      %v4765 = vrot.slane %v4763, 5
      %v4766 = vor.u32 %v4762, %v4765
      %v4767 = vrot.slane %v4766, 4
      %v4769 = vshll.u32 %v4622, 16
      %v4771 = vrot.slane %v4769, 5
      %v4772 = vsel %vm912, %v4767, %v4771
      %v4773 = vshrl.u32 %v4622, 16
      %v4775 = vrot.slane %v4773, 4
      %v4776 = vor.u32 %v4775, %v4771
      %v4777 = vrot.slane %v4776, 4
      %v4779 = vshll.u32 %v4623, 16
      %v4781 = vrot.slane %v4779, 5
      %v4782 = vsel %vm912, %v4777, %v4781
      %v4784 = vshrl.u32 %v4624, 16
      %v4786 = vrot.slane %v4784, 4
      %v4787 = vshll.u32 %v4624, 16
      %v4789 = vrot.slane %v4787, 5
      %v4790 = vor.u32 %v4786, %v4789
      %v4791 = vrot.slane %v4790, 4
      %v4793 = vshll.u32 %v4625, 16
      %v4795 = vrot.slane %v4793, 5
      %v4796 = vsel %vm912, %v4791, %v4795
      %v4797 = vshrl.u32 %v4625, 16
      %v4799 = vrot.slane %v4797, 4
      %v4800 = vor.u32 %v4799, %v4795
      %v4801 = vrot.slane %v4800, 4
      %v4803 = vshll.u32 %v4626, 16
      %v4805 = vrot.slane %v4803, 5
      %v4806 = vsel %vm912, %v4801, %v4805
      %v4808 = vshrl.u32 %v4627, 16
      %v4810 = vrot.slane %v4808, 4
      %v4811 = vshll.u32 %v4627, 16
      %v4813 = vrot.slane %v4811, 5
      %v4814 = vor.u32 %v4810, %v4813
      %v4815 = vrot.slane %v4814, 4
      %v4817 = vshll.u32 %v4628, 16
      %v4819 = vrot.slane %v4817, 5
      %v4820 = vsel %vm912, %v4815, %v4819
      %v4821 = vshrl.u32 %v4628, 16
      %v4823 = vrot.slane %v4821, 4
      %v4824 = vor.u32 %v4823, %v4819
      %v4825 = vrot.slane %v4824, 4
      %v4827 = vshll.u32 %v4629, 16
      %v4829 = vrot.slane %v4827, 5
      %v4830 = vsel %vm912, %v4825, %v4829
      %v4832 = vshrl.u32 %v4630, 16
      %v4834 = vrot.slane %v4832, 4
      %v4835 = vshll.u32 %v4630, 16
      %v4837 = vrot.slane %v4835, 5
      %v4838 = vor.u32 %v4834, %v4837
      %v4839 = vrot.slane %v4838, 4
      %v4841 = vshll.u32 %v4631, 16
      %v4843 = vrot.slane %v4841, 5
      %v4844 = vsel %vm912, %v4839, %v4843
      %v4845 = vshrl.u32 %v4631, 16
      %v4847 = vrot.slane %v4845, 4
      %v4848 = vor.u32 %v4847, %v4843
      %v4849 = vrot.slane %v4848, 4
      %v4851 = vshll.u32 %v4632, 16
      %v4853 = vrot.slane %v4851, 5
      %v4854 = vsel %vm912, %v4849, %v4853
      %v4856 = vshrl.u32 %v4633, 16
      %v4858 = vrot.slane %v4856, 4
      %v4859 = vshll.u32 %v4633, 16
      %v4861 = vrot.slane %v4859, 5
      %v4862 = vor.u32 %v4858, %v4861
      %v4863 = vrot.slane %v4862, 4
      %v4865 = vshll.u32 %v4634, 16
      %v4867 = vrot.slane %v4865, 5
      %v4868 = vsel %vm912, %v4863, %v4867
      %v4869 = vshrl.u32 %v4634, 16
      %v4871 = vrot.slane %v4869, 4
      %v4872 = vor.u32 %v4871, %v4867
      %v4873 = vrot.slane %v4872, 4
      %v4875 = vshll.u32 %v4635, 16
      %v4877 = vrot.slane %v4875, 5
      %v4878 = vsel %vm912, %v4873, %v4877
      %v4880 = vshrl.u32 %v4636, 16
      %v4882 = vrot.slane %v4880, 4
      %v4883 = vshll.u32 %v4636, 16
      %v4885 = vrot.slane %v4883, 5
      %v4886 = vor.u32 %v4882, %v4885
      %v4887 = vrot.slane %v4886, 4
      %v4889 = vshll.u32 %v4637, 16
      %v4891 = vrot.slane %v4889, 5
      %v4892 = vsel %vm912, %v4887, %v4891
      %v4893 = vshrl.u32 %v4637, 16
      %v4895 = vrot.slane %v4893, 4
      %v4896 = vor.u32 %v4895, %v4891
      %v4897 = vrot.slane %v4896, 4
      %v4899 = vshll.u32 %v4638, 16
      %v4901 = vrot.slane %v4899, 5
      %v4902 = vsel %vm912, %v4897, %v4901
      %v4904 = vshrl.u32 %v4639, 16
      %v4906 = vrot.slane %v4904, 4
      %v4907 = vshll.u32 %v4639, 16
      %v4909 = vrot.slane %v4907, 5
      %v4910 = vor.u32 %v4906, %v4909
      %v4911 = vrot.slane %v4910, 4
      %v4913 = vshll.u32 %v4640, 16
      %v4915 = vrot.slane %v4913, 5
      %v4916 = vsel %vm912, %v4911, %v4915
      %v4917 = vshrl.u32 %v4640, 16
      %v4919 = vrot.slane %v4917, 4
      %v4920 = vor.u32 %v4919, %v4915
      %v4921 = vrot.slane %v4920, 4
      %v4923 = vshll.u32 %v4641, 16
      %v4925 = vrot.slane %v4923, 5
      %v4926 = vsel %vm912, %v4921, %v4925
      %v4928 = vshrl.u32 %v4642, 16
      %v4930 = vrot.slane %v4928, 4
      %v4931 = vshll.u32 %v4642, 16
      %v4933 = vrot.slane %v4931, 5
      %v4934 = vor.u32 %v4930, %v4933
      %v4935 = vrot.slane %v4934, 4
      %v4937 = vshll.u32 %v4643, 16
      %v4939 = vrot.slane %v4937, 5
      %v4940 = vsel %vm912, %v4935, %v4939
      %v4941 = vshrl.u32 %v4643, 16
      %v4943 = vrot.slane %v4941, 4
      %v4944 = vor.u32 %v4943, %v4939
      %v4945 = vrot.slane %v4944, 4
      %v4947 = vshll.u32 %v4644, 16
      %v4949 = vrot.slane %v4947, 5
      %v4950 = vsel %vm912, %v4945, %v4949
      %v4952 = vshrl.u32 %v4645, 16
      %v4954 = vrot.slane %v4952, 4
      %v4955 = vshll.u32 %v4645, 16
      %v4957 = vrot.slane %v4955, 5
      %v4958 = vor.u32 %v4954, %v4957
      %v4959 = vrot.slane %v4958, 4
      %v4961 = vshll.u32 %v4646, 16
      %v4963 = vrot.slane %v4961, 5
      %v4964 = vsel %vm912, %v4959, %v4963
      %v4965 = vshrl.u32 %v4646, 16
      %v4967 = vrot.slane %v4965, 4
      %v4968 = vor.u32 %v4967, %v4963
      %v4969 = vrot.slane %v4968, 4
      %v4971 = vshll.u32 %v4647, 16
      %v4973 = vrot.slane %v4971, 5
      %v4974 = vsel %vm912, %v4969, %v4973
      %v4976 = vshrl.u32 %v4648, 16
      %v4978 = vrot.slane %v4976, 4
      %v4979 = vshll.u32 %v4648, 16
      %v4981 = vrot.slane %v4979, 5
      %v4982 = vor.u32 %v4978, %v4981
      %v4983 = vrot.slane %v4982, 4
      %v4985 = vshll.u32 %v4649, 16
      %v4987 = vrot.slane %v4985, 5
      %v4988 = vsel %vm912, %v4983, %v4987
      %v4989 = vshrl.u32 %v4649, 16
      %v4991 = vrot.slane %v4989, 4
      %v4992 = vor.u32 %v4991, %v4987
      %v4993 = vrot.slane %v4992, 4
      %v4995 = vshll.u32 %v4650, 16
      %v4997 = vrot.slane %v4995, 5
      %v4998 = vsel %vm912, %v4993, %v4997
      %v5000 = vshrl.u32 %v4651, 16
      %v5002 = vrot.slane %v5000, 4
      %v5003 = vshll.u32 %v4651, 16
      %v5005 = vrot.slane %v5003, 5
      %v5006 = vor.u32 %v5002, %v5005
      %v5007 = vrot.slane %v5006, 4
      %v5009 = vshll.u32 %v4652, 16
      %v5011 = vrot.slane %v5009, 5
      %v5012 = vsel %vm912, %v5007, %v5011
      %v5013 = vshrl.u32 %v4652, 16
      %v5015 = vrot.slane %v5013, 4
      %v5016 = vor.u32 %v5015, %v5011
      %v5017 = vrot.slane %v5016, 4
      %v5019 = vshll.u32 %v4653, 16
      %v5021 = vrot.slane %v5019, 5
      %v5022 = vsel %vm912, %v5017, %v5021
      %v5024 = vshrl.u32 %v4654, 16
      %v5026 = vrot.slane %v5024, 4
      %v5027 = vshll.u32 %v4654, 16
      %v5029 = vrot.slane %v5027, 5
      %v5030 = vor.u32 %v5026, %v5029
      %v5031 = vrot.slane %v5030, 4
      %v5033 = vshll.u32 %v4655, 16
      %v5035 = vrot.slane %v5033, 5
      %v5036 = vsel %vm912, %v5031, %v5035
      %v5037 = vshrl.u32 %v4655, 16
      %v5039 = vrot.slane %v5037, 4
      %v5040 = vor.u32 %v5039, %v5035
      %v5041 = vrot.slane %v5040, 4
      %v5043 = vshll.u32 %v4656, 16
      %v5045 = vrot.slane %v5043, 5
      %v5046 = vsel %vm912, %v5041, %v5045
      %v5048 = vshrl.u32 %v4657, 16
      %v5050 = vrot.slane %v5048, 4
      %v5051 = vshll.u32 %v4657, 16
      %v5053 = vrot.slane %v5051, 5
      %v5054 = vor.u32 %v5050, %v5053
      %v5055 = vrot.slane %v5054, 4
      %v5057 = vshll.u32 %v4658, 16
      %v5059 = vrot.slane %v5057, 5
      %v5060 = vsel %vm912, %v5055, %v5059
      %v5061 = vshrl.u32 %v4658, 16
      %v5063 = vrot.slane %v5061, 4
      %v5064 = vor.u32 %v5063, %v5059
      %v5065 = vrot.slane %v5064, 4
      %v5067 = vshll.u32 %v4659, 16
      %v5069 = vrot.slane %v5067, 5
      %v5070 = vsel %vm912, %v5065, %v5069
      %v5072 = vshrl.u32 %v4660, 16
      %v5074 = vrot.slane %v5072, 4
      %v5075 = vshll.u32 %v4660, 16
      %v5077 = vrot.slane %v5075, 5
      %v5078 = vor.u32 %v5074, %v5077
      %v5079 = vrot.slane %v5078, 4
      %v5081 = vshll.u32 %v4661, 16
      %v5083 = vrot.slane %v5081, 5
      %v5084 = vsel %vm912, %v5079, %v5083
      %v5085 = vshrl.u32 %v4661, 16
      %v5087 = vrot.slane %v5085, 4
      %v5088 = vor.u32 %v5087, %v5083
      %v5089 = vrot.slane %v5088, 4
      %v5091 = vshll.u32 %v4662, 16
      %v5093 = vrot.slane %v5091, 5
      %v5094 = vsel %vm912, %v5089, %v5093
      %v5095 = vld [vmem:[%s1 + $0xc] sm:$0xc]
      %v5096 = vunpack.c.l.b16 %v4676
      %v5097 = vunpack.c.l.b16 %v4686
      %v5098 = vunpack.c.l.b16 %v4700
      %v5099 = vunpack.c.l.b16 %v4710
      %v5100 = vunpack.c.l.b16 %v4724
      %v5101 = vunpack.c.l.b16 %v4734
      %v5102 = vunpack.c.l.b16 %v4748
      %v5103 = vunpack.c.l.b16 %v4758
      %v5104 = vunpack.c.l.b16 %v4772
      %v5105 = vunpack.c.l.b16 %v4782
      %v5106 = vunpack.c.l.b16 %v4796
      %v5107 = vunpack.c.l.b16 %v4806
      %v5108 = vunpack.c.l.b16 %v4820
      %v5109 = vunpack.c.l.b16 %v4830
      %v5110 = vunpack.c.l.b16 %v4844
      %v5111 = vunpack.c.l.b16 %v4854
      %v5112 = vunpack.c.l.b16 %v4868
      %v5113 = vunpack.c.l.b16 %v4878
      %v5114 = vunpack.c.l.b16 %v4892
      %v5115 = vunpack.c.l.b16 %v4902
      %v5116 = vunpack.c.l.b16 %v4916
      %v5117 = vunpack.c.l.b16 %v4926
      %v5118 = vunpack.c.l.b16 %v4940
      %v5119 = vunpack.c.l.b16 %v4950
      %v5120 = vunpack.c.l.b16 %v4964
      %v5121 = vunpack.c.l.b16 %v4974
      %v5122 = vunpack.c.l.b16 %v4988
      %v5123 = vunpack.c.l.b16 %v4998
      %v5124 = vunpack.c.l.b16 %v5012
      %v5125 = vunpack.c.l.b16 %v5022
      %v5126 = vunpack.c.l.b16 %v5036
      %v5127 = vunpack.c.l.b16 %v5046
      %v5128 = vunpack.c.l.b16 %v5060
      %v5129 = vunpack.c.l.b16 %v5070
      %v5130 = vunpack.c.l.b16 %v5084
      %v5131 = vunpack.c.l.b16 %v5094
      %v5132 = vpack.c.b16 %v5097, %v5096
      %v5133 = vpack.c.b16 %v5099, %v5098
      %v5134 = vpack.c.b16 %v5101, %v5100
      %v5135 = vpack.c.b16 %v5103, %v5102
      %v5136 = vpack.c.b16 %v5105, %v5104
      %v5137 = vpack.c.b16 %v5107, %v5106
      %v5138 = vpack.c.b16 %v5109, %v5108
      %v5139 = vpack.c.b16 %v5111, %v5110
      %v5140 = vpack.c.b16 %v5113, %v5112
      %v5141 = vpack.c.b16 %v5115, %v5114
      %v5142 = vpack.c.b16 %v5117, %v5116
      %v5143 = vpack.c.b16 %v5119, %v5118
      %v5144 = vpack.c.b16 %v5121, %v5120
      %v5145 = vpack.c.b16 %v5123, %v5122
      %v5146 = vpack.c.b16 %v5125, %v5124
      %v5147 = vpack.c.b16 %v5127, %v5126
      %v5148 = vpack.c.b16 %v5129, %v5128
      %v5149 = vpack.c.b16 %v5131, %v5130
      %v5151 = vunpack.c.l.b16 %v5095
      %v5152 = vpack.c.b16 %v5151, %v5151
      %v5153 = vrot.slane %v5152, 2
      %v5155 = vsel %vm1404, %v5132, 0
      %v5158 = vsel %vm1404, %v5133, 0
      %v5161 = vsel %vm1404, %v5134, 0
      %v5164 = vsel %vm1404, %v5135, 0
      %v5167 = vsel %vm1404, %v5136, 0
      %v5170 = vsel %vm1404, %v5137, 0
      %v5173 = vsel %vm1404, %v5138, 0
      %v5176 = vsel %vm1404, %v5139, 0
      %v5179 = vsel %vm1404, %v5140, 0
      %v5182 = vsel %vm1404, %v5141, 0
      %v5185 = vsel %vm1404, %v5142, 0
      %v5188 = vsel %vm1404, %v5143, 0
      %v5191 = vsel %vm1404, %v5144, 0
      %v5194 = vsel %vm1404, %v5145, 0
      %v5197 = vsel %vm1404, %v5146, 0
      %v5200 = vsel %vm1404, %v5147, 0
      %v5203 = vsel %vm1404, %v5148, 0
      %v5206 = vsel %vm1404, %v5149, 0
      %v5209 = vsel %vm1459, %v5153, 0
      %5211 = vmatprep.subr.bf16.mxu0 0
      %5212 = vmatpush1.bf16.msra.mxu0 0
      %5213 = vmatprep.subr.bf16.mxu0 0
      %5214 = vmatpush1.bf16.msra.mxu0 0
      %5215 = vmatprep.subr.bf16.mxu0 0
      %5216 = vmatpush1.bf16.msra.mxu0 0
      %5217 = vmatprep.subr.bf16.mxu0 0
      %5218 = vmatpush1.bf16.msra.mxu0 0
      %5219 = vmatprep.subr.bf16.mxu0 0
      %5220 = vmatpush1.bf16.msra.mxu0 0
      %5221 = vmatprep.subr.bf16.mxu0 0
      %5222 = vmatpush1.bf16.msra.mxu0 0
      %5223 = vmatprep.subr.bf16.mxu0 0
      %5224 = vmatpush1.bf16.msra.mxu0 0
      %5225 = vmatprep.subr.bf16.mxu0 0
      %5226 = vmatpush1.bf16.msra.mxu0 %v5209
      %5227 = vmatprep.subr.bf16.mxu0 0
      %5228 = vmatpush2.bf16.msra.mxu0 0
      %5229 = vmatprep.subr.bf16.mxu0 0
      %5230 = vmatpush2.bf16.msra.mxu0 0
      %5231 = vmatprep.subr.bf16.mxu0 0
      %5232 = vmatpush2.bf16.msra.mxu0 0
      %5233 = vmatprep.subr.bf16.mxu0 0
      %5234 = vmatpush2.bf16.msra.mxu0 0
      %5235 = vmatprep.subr.bf16.mxu0 0
      %5236 = vmatpush2.bf16.msra.mxu0 0
      %5237 = vmatprep.subr.bf16.mxu0 0
      %5238 = vmatpush2.bf16.msra.mxu0 0
      %5239 = vmatprep.subr.bf16.mxu0 0
      %5240 = vmatpush2.bf16.msra.mxu0 0
      %5241 = vmatprep.subr.bf16.mxu0 0
      %5242 = vmatpush2.bf16.msra.mxu0 0
      %5243 = vmatprep.mubr.bf16.mxu0 0
      %5244 = vmatmul.mubr.bf16.gmra.mxu0 %v5155
      %v5245 = vpop.f32.mrf.mxu0
      %v5246 = vadd.f32 0.0, %v5245
      %v5247 = vpop.f32.mrf.mxu0
      %v5248 = vpop.f32.mrf.mxu0
      %v5249 = vadd.f32 0.0, %v5248
      %v5250 = vpop.f32.mrf.mxu0
      %5251 = vmatprep.mubr.bf16.mxu0 0
      %5252 = vmatmul.mubr.bf16.gmra.mxu0 %v5158
      %v5253 = vpop.f32.mrf.mxu0
      %v5254 = vadd.f32 0.0, %v5253
      %v5255 = vpop.f32.mrf.mxu0
      %v5256 = vpop.f32.mrf.mxu0
      %v5257 = vadd.f32 0.0, %v5256
      %v5258 = vpop.f32.mrf.mxu0
      %5259 = vmatprep.mubr.bf16.mxu0 0
      %5260 = vmatmul.mubr.bf16.gmra.mxu0 %v5161
      %v5261 = vpop.f32.mrf.mxu0
      %v5262 = vadd.f32 0.0, %v5261
      %v5263 = vpop.f32.mrf.mxu0
      %v5264 = vpop.f32.mrf.mxu0
      %v5265 = vadd.f32 0.0, %v5264
      %v5266 = vpop.f32.mrf.mxu0
      %5267 = vmatprep.mubr.bf16.mxu0 0
      %5268 = vmatmul.mubr.bf16.gmra.mxu0 %v5164
      %v5269 = vpop.f32.mrf.mxu0
      %v5270 = vadd.f32 0.0, %v5269
      %v5271 = vpop.f32.mrf.mxu0
      %v5272 = vpop.f32.mrf.mxu0
      %v5273 = vadd.f32 0.0, %v5272
      %v5274 = vpop.f32.mrf.mxu0
      %5275 = vmatprep.mubr.bf16.mxu0 0
      %5276 = vmatmul.mubr.bf16.gmra.mxu0 %v5167
      %v5277 = vpop.f32.mrf.mxu0
      %v5278 = vadd.f32 0.0, %v5277
      %v5279 = vpop.f32.mrf.mxu0
      %v5280 = vpop.f32.mrf.mxu0
      %v5281 = vadd.f32 0.0, %v5280
      %v5282 = vpop.f32.mrf.mxu0
      %5283 = vmatprep.mubr.bf16.mxu0 0
      %5284 = vmatmul.mubr.bf16.gmra.mxu0 %v5170
      %v5285 = vpop.f32.mrf.mxu0
      %v5286 = vadd.f32 0.0, %v5285
      %v5287 = vpop.f32.mrf.mxu0
      %v5288 = vpop.f32.mrf.mxu0
      %v5289 = vadd.f32 0.0, %v5288
      %v5290 = vpop.f32.mrf.mxu0
      %5291 = vmatprep.mubr.bf16.mxu0 0
      %5292 = vmatmul.mubr.bf16.gmra.mxu0 %v5173
      %v5293 = vpop.f32.mrf.mxu0
      %v5294 = vadd.f32 0.0, %v5293
      %v5295 = vpop.f32.mrf.mxu0
      %v5296 = vpop.f32.mrf.mxu0
      %v5297 = vadd.f32 0.0, %v5296
      %v5298 = vpop.f32.mrf.mxu0
      %5299 = vmatprep.mubr.bf16.mxu0 0
      %5300 = vmatmul.mubr.bf16.gmra.mxu0 %v5176
      %v5301 = vpop.f32.mrf.mxu0
      %v5302 = vadd.f32 0.0, %v5301
      %v5303 = vpop.f32.mrf.mxu0
      %v5304 = vpop.f32.mrf.mxu0
      %v5305 = vadd.f32 0.0, %v5304
      %v5306 = vpop.f32.mrf.mxu0
      %5307 = vmatprep.mubr.bf16.mxu0 0
      %5308 = vmatmul.mubr.bf16.gmra.mxu0 %v5179
      %v5309 = vpop.f32.mrf.mxu0
      %v5310 = vadd.f32 0.0, %v5309
      %v5311 = vpop.f32.mrf.mxu0
      %v5312 = vpop.f32.mrf.mxu0
      %v5313 = vadd.f32 0.0, %v5312
      %v5314 = vpop.f32.mrf.mxu0
      %5315 = vmatprep.mubr.bf16.mxu0 0
      %5316 = vmatmul.mubr.bf16.gmra.mxu0 %v5182
      %v5317 = vpop.f32.mrf.mxu0
      %v5318 = vadd.f32 0.0, %v5317
      %v5319 = vpop.f32.mrf.mxu0
      %v5320 = vpop.f32.mrf.mxu0
      %v5321 = vadd.f32 0.0, %v5320
      %v5322 = vpop.f32.mrf.mxu0
      %5323 = vmatprep.mubr.bf16.mxu0 0
      %5324 = vmatmul.mubr.bf16.gmra.mxu0 %v5185
      %v5325 = vpop.f32.mrf.mxu0
      %v5326 = vadd.f32 0.0, %v5325
      %v5327 = vpop.f32.mrf.mxu0
      %v5328 = vpop.f32.mrf.mxu0
      %v5329 = vadd.f32 0.0, %v5328
      %v5330 = vpop.f32.mrf.mxu0
      %5331 = vmatprep.mubr.bf16.mxu0 0
      %5332 = vmatmul.mubr.bf16.gmra.mxu0 %v5188
      %v5333 = vpop.f32.mrf.mxu0
      %v5334 = vadd.f32 0.0, %v5333
      %v5335 = vpop.f32.mrf.mxu0
      %v5336 = vpop.f32.mrf.mxu0
      %v5337 = vadd.f32 0.0, %v5336
      %v5338 = vpop.f32.mrf.mxu0
      %5339 = vmatprep.mubr.bf16.mxu0 0
      %5340 = vmatmul.mubr.bf16.gmra.mxu0 %v5191
      %v5341 = vpop.f32.mrf.mxu0
      %v5342 = vadd.f32 0.0, %v5341
      %v5343 = vpop.f32.mrf.mxu0
      %v5344 = vpop.f32.mrf.mxu0
      %v5345 = vadd.f32 0.0, %v5344
      %v5346 = vpop.f32.mrf.mxu0
      %5347 = vmatprep.mubr.bf16.mxu0 0
      %5348 = vmatmul.mubr.bf16.gmra.mxu0 %v5194
      %v5349 = vpop.f32.mrf.mxu0
      %v5350 = vadd.f32 0.0, %v5349
      %v5351 = vpop.f32.mrf.mxu0
      %v5352 = vpop.f32.mrf.mxu0
      %v5353 = vadd.f32 0.0, %v5352
      %v5354 = vpop.f32.mrf.mxu0
      %5355 = vmatprep.mubr.bf16.mxu0 0
      %5356 = vmatmul.mubr.bf16.gmra.mxu0 %v5197
      %v5357 = vpop.f32.mrf.mxu0
      %v5358 = vadd.f32 0.0, %v5357
      %v5359 = vpop.f32.mrf.mxu0
      %v5360 = vpop.f32.mrf.mxu0
      %v5361 = vadd.f32 0.0, %v5360
      %v5362 = vpop.f32.mrf.mxu0
      %5363 = vmatprep.mubr.bf16.mxu0 0
      %5364 = vmatmul.mubr.bf16.gmra.mxu0 %v5200
      %v5365 = vpop.f32.mrf.mxu0
      %v5366 = vadd.f32 0.0, %v5365
      %v5367 = vpop.f32.mrf.mxu0
      %v5368 = vpop.f32.mrf.mxu0
      %v5369 = vadd.f32 0.0, %v5368
      %v5370 = vpop.f32.mrf.mxu0
      %5371 = vmatprep.mubr.bf16.mxu0 0
      %5372 = vmatmul.mubr.bf16.gmra.mxu0 %v5203
      %v5373 = vpop.f32.mrf.mxu0
      %v5374 = vadd.f32 0.0, %v5373
      %v5375 = vpop.f32.mrf.mxu0
      %v5376 = vpop.f32.mrf.mxu0
      %v5377 = vadd.f32 0.0, %v5376
      %v5378 = vpop.f32.mrf.mxu0
      %5379 = vmatprep.mubr.bf16.mxu0 0
      %5380 = vmatmul.mubr.bf16.gmra.mxu0 %v5206
      %v5381 = vpop.f32.mrf.mxu0
      %v5382 = vadd.f32 0.0, %v5381
      %v5383 = vpop.f32.mrf.mxu0
      %v5384 = vpop.f32.mrf.mxu0
      %v5385 = vadd.f32 0.0, %v5384
      %v5386 = vpop.f32.mrf.mxu0
      %5387 = vdwg.mxu0
      %v5388 = vadd.f32 %v4573, %v5246
      %v5389 = vadd.f32 %v4574, %v5249
      %v5390 = vadd.f32 %v4575, %v5254
      %v5391 = vadd.f32 %v4576, %v5257
      %v5392 = vadd.f32 %v4577, %v5262
      %v5393 = vadd.f32 %v4578, %v5265
      %v5394 = vadd.f32 %v4579, %v5270
      %v5395 = vadd.f32 %v4580, %v5273
      %v5396 = vadd.f32 %v4581, %v5278
      %v5397 = vadd.f32 %v4582, %v5281
      %v5398 = vadd.f32 %v4583, %v5286
      %v5399 = vadd.f32 %v4584, %v5289
      %v5400 = vadd.f32 %v4585, %v5294
      %v5401 = vadd.f32 %v4586, %v5297
      %v5402 = vadd.f32 %v4587, %v5302
      %v5403 = vadd.f32 %v4588, %v5305
      %v5404 = vadd.f32 %v4589, %v5310
      %v5405 = vadd.f32 %v4590, %v5313
      %v5406 = vadd.f32 %v4591, %v5318
      %v5407 = vadd.f32 %v4592, %v5321
      %v5408 = vadd.f32 %v4593, %v5326
      %v5409 = vadd.f32 %v4594, %v5329
      %v5410 = vadd.f32 %v4595, %v5334
      %v5411 = vadd.f32 %v4596, %v5337
      %v5412 = vadd.f32 %v4597, %v5342
      %v5413 = vadd.f32 %v4598, %v5345
      %v5414 = vadd.f32 %v4599, %v5350
      %v5415 = vadd.f32 %v4600, %v5353
      %v5416 = vadd.f32 %v4601, %v5358
      %v5417 = vadd.f32 %v4602, %v5361
      %v5418 = vadd.f32 %v4603, %v5366
      %v5419 = vadd.f32 %v4604, %v5369
      %v5420 = vadd.f32 %v4605, %v5374
      %v5421 = vadd.f32 %v4606, %v5377
      %v5422 = vadd.f32 %v4607, %v5382
      %v5423 = vadd.f32 %v4608, %v5385
      %v5424 = vld [vmem:[%s657] sm:$0xe]
      %v5425 = vld [vmem:[%s657 + $0xc] sm:$0xe]
      %v5426 = vld [vmem:[%s657 + $0x18] sm:$0xe]
      %v5427 = vld [vmem:[%s657 + $0x24] sm:$0xe]
      %v5428 = vld [vmem:[%s657 + $0x30] sm:$0xe]
      %v5429 = vld [vmem:[%s657 + $0x3c] sm:$0xe]
      %v5430 = vld [vmem:[%s657 + $0x48] sm:$0xe]
      %v5431 = vld [vmem:[%s657 + $0x54] sm:$0xe]
      %v5432 = vld [vmem:[%s657 + $0x60] sm:$0xe]
      %v5433 = vld [vmem:[%s657 + $0x6c] sm:$0xe]
      %v5434 = vld [vmem:[%s657 + $0x78] sm:$0xe]
      %v5435 = vld [vmem:[%s657 + $0x84] sm:$0xe]
      %v5436 = vld [vmem:[%s657 + $0x90] sm:$0xe]
      %v5437 = vld [vmem:[%s657 + $0x9c] sm:$0xe]
      %v5438 = vld [vmem:[%s657 + $0xa8] sm:$0xe]
      %v5439 = vld [vmem:[%s657 + $0xb4] sm:$0xe]
      %v5440 = vld [vmem:[%s657 + $0xc0] sm:$0xe]
      %v5441 = vld [vmem:[%s657 + $0xcc] sm:$0xe]
      %v5496 = vrot.slane %v5424, 5
      %v5497 = vrot.slane %v5496, 4
      %v5498 = vrot.slane %v4610, 5
      %v5499 = vsel %vm2020, %v5497, %v5498
      %v5500 = vrot.slane %v5498, 4
      %v5501 = vrot.slane %v4611, 5
      %v5502 = vsel %vm2020, %v5500, %v5501
      %v5503 = vrot.slane %v5425, 5
      %v5504 = vrot.slane %v5503, 4
      %v5505 = vrot.slane %v4613, 5
      %v5506 = vsel %vm2020, %v5504, %v5505
      %v5507 = vrot.slane %v5505, 4
      %v5508 = vrot.slane %v4614, 5
      %v5509 = vsel %vm2020, %v5507, %v5508
      %v5510 = vrot.slane %v5426, 5
      %v5511 = vrot.slane %v5510, 4
      %v5512 = vrot.slane %v4616, 5
      %v5513 = vsel %vm2020, %v5511, %v5512
      %v5514 = vrot.slane %v5512, 4
      %v5515 = vrot.slane %v4617, 5
      %v5516 = vsel %vm2020, %v5514, %v5515
      %v5517 = vrot.slane %v5427, 5
      %v5518 = vrot.slane %v5517, 4
      %v5519 = vrot.slane %v4619, 5
      %v5520 = vsel %vm2020, %v5518, %v5519
      %v5521 = vrot.slane %v5519, 4
      %v5522 = vrot.slane %v4620, 5
      %v5523 = vsel %vm2020, %v5521, %v5522
      %v5524 = vrot.slane %v5428, 5
      %v5525 = vrot.slane %v5524, 4
      %v5526 = vrot.slane %v4622, 5
      %v5527 = vsel %vm2020, %v5525, %v5526
      %v5528 = vrot.slane %v5526, 4
      %v5529 = vrot.slane %v4623, 5
      %v5530 = vsel %vm2020, %v5528, %v5529
      %v5531 = vrot.slane %v5429, 5
      %v5532 = vrot.slane %v5531, 4
      %v5533 = vrot.slane %v4625, 5
      %v5534 = vsel %vm2020, %v5532, %v5533
      %v5535 = vrot.slane %v5533, 4
      %v5536 = vrot.slane %v4626, 5
      %v5537 = vsel %vm2020, %v5535, %v5536
      %v5538 = vrot.slane %v5430, 5
      %v5539 = vrot.slane %v5538, 4
      %v5540 = vrot.slane %v4628, 5
      %v5541 = vsel %vm2020, %v5539, %v5540
      %v5542 = vrot.slane %v5540, 4
      %v5543 = vrot.slane %v4629, 5
      %v5544 = vsel %vm2020, %v5542, %v5543
      %v5545 = vrot.slane %v5431, 5
      %v5546 = vrot.slane %v5545, 4
      %v5547 = vrot.slane %v4631, 5
      %v5548 = vsel %vm2020, %v5546, %v5547
      %v5549 = vrot.slane %v5547, 4
      %v5550 = vrot.slane %v4632, 5
      %v5551 = vsel %vm2020, %v5549, %v5550
      %v5552 = vrot.slane %v5432, 5
      %v5553 = vrot.slane %v5552, 4
      %v5554 = vrot.slane %v4634, 5
      %v5555 = vsel %vm2020, %v5553, %v5554
      %v5556 = vrot.slane %v5554, 4
      %v5557 = vrot.slane %v4635, 5
      %v5558 = vsel %vm2020, %v5556, %v5557
      %v5559 = vrot.slane %v5433, 5
      %v5560 = vrot.slane %v5559, 4
      %v5561 = vrot.slane %v4637, 5
      %v5562 = vsel %vm2020, %v5560, %v5561
      %v5563 = vrot.slane %v5561, 4
      %v5564 = vrot.slane %v4638, 5
      %v5565 = vsel %vm2020, %v5563, %v5564
      %v5566 = vrot.slane %v5434, 5
      %v5567 = vrot.slane %v5566, 4
      %v5568 = vrot.slane %v4640, 5
      %v5569 = vsel %vm2020, %v5567, %v5568
      %v5570 = vrot.slane %v5568, 4
      %v5571 = vrot.slane %v4641, 5
      %v5572 = vsel %vm2020, %v5570, %v5571
      %v5573 = vrot.slane %v5435, 5
      %v5574 = vrot.slane %v5573, 4
      %v5575 = vrot.slane %v4643, 5
      %v5576 = vsel %vm2020, %v5574, %v5575
      %v5577 = vrot.slane %v5575, 4
      %v5578 = vrot.slane %v4644, 5
      %v5579 = vsel %vm2020, %v5577, %v5578
      %v5580 = vrot.slane %v5436, 5
      %v5581 = vrot.slane %v5580, 4
      %v5582 = vrot.slane %v4646, 5
      %v5583 = vsel %vm2020, %v5581, %v5582
      %v5584 = vrot.slane %v5582, 4
      %v5585 = vrot.slane %v4647, 5
      %v5586 = vsel %vm2020, %v5584, %v5585
      %v5587 = vrot.slane %v5437, 5
      %v5588 = vrot.slane %v5587, 4
      %v5589 = vrot.slane %v4649, 5
      %v5590 = vsel %vm2020, %v5588, %v5589
      %v5591 = vrot.slane %v5589, 4
      %v5592 = vrot.slane %v4650, 5
      %v5593 = vsel %vm2020, %v5591, %v5592
      %v5594 = vrot.slane %v5438, 5
      %v5595 = vrot.slane %v5594, 4
      %v5596 = vrot.slane %v4652, 5
      %v5597 = vsel %vm2020, %v5595, %v5596
      %v5598 = vrot.slane %v5596, 4
      %v5599 = vrot.slane %v4653, 5
      %v5600 = vsel %vm2020, %v5598, %v5599
      %v5601 = vrot.slane %v5439, 5
      %v5602 = vrot.slane %v5601, 4
      %v5603 = vrot.slane %v4655, 5
      %v5604 = vsel %vm2020, %v5602, %v5603
      %v5605 = vrot.slane %v5603, 4
      %v5606 = vrot.slane %v4656, 5
      %v5607 = vsel %vm2020, %v5605, %v5606
      %v5608 = vrot.slane %v5440, 5
      %v5609 = vrot.slane %v5608, 4
      %v5610 = vrot.slane %v4658, 5
      %v5611 = vsel %vm2020, %v5609, %v5610
      %v5612 = vrot.slane %v5610, 4
      %v5613 = vrot.slane %v4659, 5
      %v5614 = vsel %vm2020, %v5612, %v5613
      %v5615 = vrot.slane %v5441, 5
      %v5616 = vrot.slane %v5615, 4
      %v5617 = vrot.slane %v4661, 5
      %v5618 = vsel %vm2020, %v5616, %v5617
      %v5619 = vrot.slane %v5617, 4
      %v5620 = vrot.slane %v4662, 5
      %v5621 = vsel %vm2020, %v5619, %v5620
      %v5622 = vld [vmem:[%s1 + $0x10] sm:$0x3]
      %v5623 = vunpack.c.l.b16 %v5499
      %v5624 = vunpack.c.l.b16 %v5502
      %v5625 = vunpack.c.l.b16 %v5506
      %v5626 = vunpack.c.l.b16 %v5509
      %v5627 = vunpack.c.l.b16 %v5513
      %v5628 = vunpack.c.l.b16 %v5516
      %v5629 = vunpack.c.l.b16 %v5520
      %v5630 = vunpack.c.l.b16 %v5523
      %v5631 = vunpack.c.l.b16 %v5527
      %v5632 = vunpack.c.l.b16 %v5530
      %v5633 = vunpack.c.l.b16 %v5534
      %v5634 = vunpack.c.l.b16 %v5537
      %v5635 = vunpack.c.l.b16 %v5541
      %v5636 = vunpack.c.l.b16 %v5544
      %v5637 = vunpack.c.l.b16 %v5548
      %v5638 = vunpack.c.l.b16 %v5551
      %v5639 = vunpack.c.l.b16 %v5555
      %v5640 = vunpack.c.l.b16 %v5558
      %v5641 = vunpack.c.l.b16 %v5562
      %v5642 = vunpack.c.l.b16 %v5565
      %v5643 = vunpack.c.l.b16 %v5569
      %v5644 = vunpack.c.l.b16 %v5572
      %v5645 = vunpack.c.l.b16 %v5576
      %v5646 = vunpack.c.l.b16 %v5579
      %v5647 = vunpack.c.l.b16 %v5583
      %v5648 = vunpack.c.l.b16 %v5586
      %v5649 = vunpack.c.l.b16 %v5590
      %v5650 = vunpack.c.l.b16 %v5593
      %v5651 = vunpack.c.l.b16 %v5597
      %v5652 = vunpack.c.l.b16 %v5600
      %v5653 = vunpack.c.l.b16 %v5604
      %v5654 = vunpack.c.l.b16 %v5607
      %v5655 = vunpack.c.l.b16 %v5611
      %v5656 = vunpack.c.l.b16 %v5614
      %v5657 = vunpack.c.l.b16 %v5618
      %v5658 = vunpack.c.l.b16 %v5621
      %v5659 = vpack.c.b16 %v5624, %v5623
      %v5660 = vpack.c.b16 %v5626, %v5625
      %v5661 = vpack.c.b16 %v5628, %v5627
      %v5662 = vpack.c.b16 %v5630, %v5629
      %v5663 = vpack.c.b16 %v5632, %v5631
      %v5664 = vpack.c.b16 %v5634, %v5633
      %v5665 = vpack.c.b16 %v5636, %v5635
      %v5666 = vpack.c.b16 %v5638, %v5637
      %v5667 = vpack.c.b16 %v5640, %v5639
      %v5668 = vpack.c.b16 %v5642, %v5641
      %v5669 = vpack.c.b16 %v5644, %v5643
      %v5670 = vpack.c.b16 %v5646, %v5645
      %v5671 = vpack.c.b16 %v5648, %v5647
      %v5672 = vpack.c.b16 %v5650, %v5649
      %v5673 = vpack.c.b16 %v5652, %v5651
      %v5674 = vpack.c.b16 %v5654, %v5653
      %v5675 = vpack.c.b16 %v5656, %v5655
      %v5676 = vpack.c.b16 %v5658, %v5657
      %v5678 = vsel %vm1404, %v5659, 0
      %v5681 = vsel %vm1404, %v5660, 0
      %v5684 = vsel %vm1404, %v5661, 0
      %v5687 = vsel %vm1404, %v5662, 0
      %v5690 = vsel %vm1404, %v5663, 0
      %v5693 = vsel %vm1404, %v5664, 0
      %v5696 = vsel %vm1404, %v5665, 0
      %v5699 = vsel %vm1404, %v5666, 0
      %v5702 = vsel %vm1404, %v5667, 0
      %v5705 = vsel %vm1404, %v5668, 0
      %v5708 = vsel %vm1404, %v5669, 0
      %v5711 = vsel %vm1404, %v5670, 0
      %v5714 = vsel %vm1404, %v5671, 0
      %v5717 = vsel %vm1404, %v5672, 0
      %v5720 = vsel %vm1404, %v5673, 0
      %v5723 = vsel %vm1404, %v5674, 0
      %v5726 = vsel %vm1404, %v5675, 0
      %v5729 = vsel %vm1404, %v5676, 0
      %v5732 = vsel %vm1459, %v5622, 0
      %5734 = vmatprep.subr.bf16.mxu0 0
      %5735 = vmatpush1.bf16.msra.mxu0 0
      %5736 = vmatprep.subr.bf16.mxu0 0
      %5737 = vmatpush1.bf16.msra.mxu0 0
      %5738 = vmatprep.subr.bf16.mxu0 0
      %5739 = vmatpush1.bf16.msra.mxu0 0
      %5740 = vmatprep.subr.bf16.mxu0 0
      %5741 = vmatpush1.bf16.msra.mxu0 0
      %5742 = vmatprep.subr.bf16.mxu0 0
      %5743 = vmatpush1.bf16.msra.mxu0 0
      %5744 = vmatprep.subr.bf16.mxu0 0
      %5745 = vmatpush1.bf16.msra.mxu0 0
      %5746 = vmatprep.subr.bf16.mxu0 0
      %5747 = vmatpush1.bf16.msra.mxu0 0
      %5748 = vmatprep.subr.bf16.mxu0 0
      %5749 = vmatpush1.bf16.msra.mxu0 %v5732
      %5750 = vmatprep.subr.bf16.mxu0 0
      %5751 = vmatpush2.bf16.msra.mxu0 0
      %5752 = vmatprep.subr.bf16.mxu0 0
      %5753 = vmatpush2.bf16.msra.mxu0 0
      %5754 = vmatprep.subr.bf16.mxu0 0
      %5755 = vmatpush2.bf16.msra.mxu0 0
      %5756 = vmatprep.subr.bf16.mxu0 0
      %5757 = vmatpush2.bf16.msra.mxu0 0
      %5758 = vmatprep.subr.bf16.mxu0 0
      %5759 = vmatpush2.bf16.msra.mxu0 0
      %5760 = vmatprep.subr.bf16.mxu0 0
      %5761 = vmatpush2.bf16.msra.mxu0 0
      %5762 = vmatprep.subr.bf16.mxu0 0
      %5763 = vmatpush2.bf16.msra.mxu0 0
      %5764 = vmatprep.subr.bf16.mxu0 0
      %5765 = vmatpush2.bf16.msra.mxu0 0
      %5766 = vmatprep.mubr.bf16.mxu0 0
      %5767 = vmatmul.mubr.bf16.gmra.mxu0 %v5678
      %v5768 = vpop.f32.mrf.mxu0
      %v5769 = vadd.f32 0.0, %v5768
      %v5770 = vpop.f32.mrf.mxu0
      %v5771 = vpop.f32.mrf.mxu0
      %v5772 = vadd.f32 0.0, %v5771
      %v5773 = vpop.f32.mrf.mxu0
      %5774 = vmatprep.mubr.bf16.mxu0 0
      %5775 = vmatmul.mubr.bf16.gmra.mxu0 %v5681
      %v5776 = vpop.f32.mrf.mxu0
      %v5777 = vadd.f32 0.0, %v5776
      %v5778 = vpop.f32.mrf.mxu0
      %v5779 = vpop.f32.mrf.mxu0
      %v5780 = vadd.f32 0.0, %v5779
      %v5781 = vpop.f32.mrf.mxu0
      %5782 = vmatprep.mubr.bf16.mxu0 0
      %5783 = vmatmul.mubr.bf16.gmra.mxu0 %v5684
      %v5784 = vpop.f32.mrf.mxu0
      %v5785 = vadd.f32 0.0, %v5784
      %v5786 = vpop.f32.mrf.mxu0
      %v5787 = vpop.f32.mrf.mxu0
      %v5788 = vadd.f32 0.0, %v5787
      %v5789 = vpop.f32.mrf.mxu0
      %5790 = vmatprep.mubr.bf16.mxu0 0
      %5791 = vmatmul.mubr.bf16.gmra.mxu0 %v5687
      %v5792 = vpop.f32.mrf.mxu0
      %v5793 = vadd.f32 0.0, %v5792
      %v5794 = vpop.f32.mrf.mxu0
      %v5795 = vpop.f32.mrf.mxu0
      %v5796 = vadd.f32 0.0, %v5795
      %v5797 = vpop.f32.mrf.mxu0
      %5798 = vmatprep.mubr.bf16.mxu0 0
      %5799 = vmatmul.mubr.bf16.gmra.mxu0 %v5690
      %v5800 = vpop.f32.mrf.mxu0
      %v5801 = vadd.f32 0.0, %v5800
      %v5802 = vpop.f32.mrf.mxu0
      %v5803 = vpop.f32.mrf.mxu0
      %v5804 = vadd.f32 0.0, %v5803
      %v5805 = vpop.f32.mrf.mxu0
      %5806 = vmatprep.mubr.bf16.mxu0 0
      %5807 = vmatmul.mubr.bf16.gmra.mxu0 %v5693
      %v5808 = vpop.f32.mrf.mxu0
      %v5809 = vadd.f32 0.0, %v5808
      %v5810 = vpop.f32.mrf.mxu0
      %v5811 = vpop.f32.mrf.mxu0
      %v5812 = vadd.f32 0.0, %v5811
      %v5813 = vpop.f32.mrf.mxu0
      %5814 = vmatprep.mubr.bf16.mxu0 0
      %5815 = vmatmul.mubr.bf16.gmra.mxu0 %v5696
      %v5816 = vpop.f32.mrf.mxu0
      %v5817 = vadd.f32 0.0, %v5816
      %v5818 = vpop.f32.mrf.mxu0
      %v5819 = vpop.f32.mrf.mxu0
      %v5820 = vadd.f32 0.0, %v5819
      %v5821 = vpop.f32.mrf.mxu0
      %5822 = vmatprep.mubr.bf16.mxu0 0
      %5823 = vmatmul.mubr.bf16.gmra.mxu0 %v5699
      %v5824 = vpop.f32.mrf.mxu0
      %v5825 = vadd.f32 0.0, %v5824
      %v5826 = vpop.f32.mrf.mxu0
      %v5827 = vpop.f32.mrf.mxu0
      %v5828 = vadd.f32 0.0, %v5827
      %v5829 = vpop.f32.mrf.mxu0
      %5830 = vmatprep.mubr.bf16.mxu0 0
      %5831 = vmatmul.mubr.bf16.gmra.mxu0 %v5702
      %v5832 = vpop.f32.mrf.mxu0
      %v5833 = vadd.f32 0.0, %v5832
      %v5834 = vpop.f32.mrf.mxu0
      %v5835 = vpop.f32.mrf.mxu0
      %v5836 = vadd.f32 0.0, %v5835
      %v5837 = vpop.f32.mrf.mxu0
      %5838 = vmatprep.mubr.bf16.mxu0 0
      %5839 = vmatmul.mubr.bf16.gmra.mxu0 %v5705
      %v5840 = vpop.f32.mrf.mxu0
      %v5841 = vadd.f32 0.0, %v5840
      %v5842 = vpop.f32.mrf.mxu0
      %v5843 = vpop.f32.mrf.mxu0
      %v5844 = vadd.f32 0.0, %v5843
      %v5845 = vpop.f32.mrf.mxu0
      %5846 = vmatprep.mubr.bf16.mxu0 0
      %5847 = vmatmul.mubr.bf16.gmra.mxu0 %v5708
      %v5848 = vpop.f32.mrf.mxu0
      %v5849 = vadd.f32 0.0, %v5848
      %v5850 = vpop.f32.mrf.mxu0
      %v5851 = vpop.f32.mrf.mxu0
      %v5852 = vadd.f32 0.0, %v5851
      %v5853 = vpop.f32.mrf.mxu0
      %5854 = vmatprep.mubr.bf16.mxu0 0
      %5855 = vmatmul.mubr.bf16.gmra.mxu0 %v5711
      %v5856 = vpop.f32.mrf.mxu0
      %v5857 = vadd.f32 0.0, %v5856
      %v5858 = vpop.f32.mrf.mxu0
      %v5859 = vpop.f32.mrf.mxu0
      %v5860 = vadd.f32 0.0, %v5859
      %v5861 = vpop.f32.mrf.mxu0
      %5862 = vmatprep.mubr.bf16.mxu0 0
      %5863 = vmatmul.mubr.bf16.gmra.mxu0 %v5714
      %v5864 = vpop.f32.mrf.mxu0
      %v5865 = vadd.f32 0.0, %v5864
      %v5866 = vpop.f32.mrf.mxu0
      %v5867 = vpop.f32.mrf.mxu0
      %v5868 = vadd.f32 0.0, %v5867
      %v5869 = vpop.f32.mrf.mxu0
      %5870 = vmatprep.mubr.bf16.mxu0 0
      %5871 = vmatmul.mubr.bf16.gmra.mxu0 %v5717
      %v5872 = vpop.f32.mrf.mxu0
      %v5873 = vadd.f32 0.0, %v5872
      %v5874 = vpop.f32.mrf.mxu0
      %v5875 = vpop.f32.mrf.mxu0
      %v5876 = vadd.f32 0.0, %v5875
      %v5877 = vpop.f32.mrf.mxu0
      %5878 = vmatprep.mubr.bf16.mxu0 0
      %5879 = vmatmul.mubr.bf16.gmra.mxu0 %v5720
      %v5880 = vpop.f32.mrf.mxu0
      %v5881 = vadd.f32 0.0, %v5880
      %v5882 = vpop.f32.mrf.mxu0
      %v5883 = vpop.f32.mrf.mxu0
      %v5884 = vadd.f32 0.0, %v5883
      %v5885 = vpop.f32.mrf.mxu0
      %5886 = vmatprep.mubr.bf16.mxu0 0
      %5887 = vmatmul.mubr.bf16.gmra.mxu0 %v5723
      %v5888 = vpop.f32.mrf.mxu0
      %v5889 = vadd.f32 0.0, %v5888
      %v5890 = vpop.f32.mrf.mxu0
      %v5891 = vpop.f32.mrf.mxu0
      %v5892 = vadd.f32 0.0, %v5891
      %v5893 = vpop.f32.mrf.mxu0
      %5894 = vmatprep.mubr.bf16.mxu0 0
      %5895 = vmatmul.mubr.bf16.gmra.mxu0 %v5726
      %v5896 = vpop.f32.mrf.mxu0
      %v5897 = vadd.f32 0.0, %v5896
      %v5898 = vpop.f32.mrf.mxu0
      %v5899 = vpop.f32.mrf.mxu0
      %v5900 = vadd.f32 0.0, %v5899
      %v5901 = vpop.f32.mrf.mxu0
      %5902 = vmatprep.mubr.bf16.mxu0 0
      %5903 = vmatmul.mubr.bf16.gmra.mxu0 %v5729
      %v5904 = vpop.f32.mrf.mxu0
      %v5905 = vadd.f32 0.0, %v5904
      %v5906 = vpop.f32.mrf.mxu0
      %v5907 = vpop.f32.mrf.mxu0
      %v5908 = vadd.f32 0.0, %v5907
      %v5909 = vpop.f32.mrf.mxu0
      %5910 = vdwg.mxu0
      %v5911 = vadd.f32 %v5388, %v5769
      %v5912 = vadd.f32 %v5389, %v5772
      %v5913 = vadd.f32 %v5390, %v5777
      %v5914 = vadd.f32 %v5391, %v5780
      %v5915 = vadd.f32 %v5392, %v5785
      %v5916 = vadd.f32 %v5393, %v5788
      %v5917 = vadd.f32 %v5394, %v5793
      %v5918 = vadd.f32 %v5395, %v5796
      %v5919 = vadd.f32 %v5396, %v5801
      %v5920 = vadd.f32 %v5397, %v5804
      %v5921 = vadd.f32 %v5398, %v5809
      %v5922 = vadd.f32 %v5399, %v5812
      %v5923 = vadd.f32 %v5400, %v5817
      %v5924 = vadd.f32 %v5401, %v5820
      %v5925 = vadd.f32 %v5402, %v5825
      %v5926 = vadd.f32 %v5403, %v5828
      %v5927 = vadd.f32 %v5404, %v5833
      %v5928 = vadd.f32 %v5405, %v5836
      %v5929 = vadd.f32 %v5406, %v5841
      %v5930 = vadd.f32 %v5407, %v5844
      %v5931 = vadd.f32 %v5408, %v5849
      %v5932 = vadd.f32 %v5409, %v5852
      %v5933 = vadd.f32 %v5410, %v5857
      %v5934 = vadd.f32 %v5411, %v5860
      %v5935 = vadd.f32 %v5412, %v5865
      %v5936 = vadd.f32 %v5413, %v5868
      %v5937 = vadd.f32 %v5414, %v5873
      %v5938 = vadd.f32 %v5415, %v5876
      %v5939 = vadd.f32 %v5416, %v5881
      %v5940 = vadd.f32 %v5417, %v5884
      %v5941 = vadd.f32 %v5418, %v5889
      %v5942 = vadd.f32 %v5419, %v5892
      %v5943 = vadd.f32 %v5420, %v5897
      %v5944 = vadd.f32 %v5421, %v5900
      %v5945 = vadd.f32 %v5422, %v5905
      %v5946 = vadd.f32 %v5423, %v5908
      %v5947 = vld [vmem:[%s3] sm:$0x1]
      %v5949 = vlaneseq
      %v5950 = vshrl.u32 %v5949, 7
      %v5951 = vsub.s32 0, %v5950
      %v5952 = vrot.slane %v5947, %v5951
      %v5954 = vadd.f32 %v5911, %v5952
      %v5955 = vadd.f32 %v5912, %v5952
      %v5956 = vadd.f32 %v5913, %v5952
      %v5957 = vadd.f32 %v5914, %v5952
      %v5958 = vadd.f32 %v5915, %v5952
      %v5959 = vadd.f32 %v5916, %v5952
      %v5960 = vadd.f32 %v5917, %v5952
      %v5961 = vadd.f32 %v5918, %v5952
      %v5962 = vadd.f32 %v5919, %v5952
      %v5963 = vadd.f32 %v5920, %v5952
      %v5964 = vadd.f32 %v5921, %v5952
      %v5965 = vadd.f32 %v5922, %v5952
      %v5966 = vadd.f32 %v5923, %v5952
      %v5967 = vadd.f32 %v5924, %v5952
      %v5968 = vadd.f32 %v5925, %v5952
      %v5969 = vadd.f32 %v5926, %v5952
      %v5970 = vadd.f32 %v5927, %v5952
      %v5971 = vadd.f32 %v5928, %v5952
      %v5972 = vadd.f32 %v5929, %v5952
      %v5973 = vadd.f32 %v5930, %v5952
      %v5974 = vadd.f32 %v5931, %v5952
      %v5975 = vadd.f32 %v5932, %v5952
      %v5976 = vadd.f32 %v5933, %v5952
      %v5977 = vadd.f32 %v5934, %v5952
      %v5978 = vadd.f32 %v5935, %v5952
      %v5979 = vadd.f32 %v5936, %v5952
      %v5980 = vadd.f32 %v5937, %v5952
      %v5981 = vadd.f32 %v5938, %v5952
      %v5982 = vadd.f32 %v5939, %v5952
      %v5983 = vadd.f32 %v5940, %v5952
      %v5984 = vadd.f32 %v5941, %v5952
      %v5985 = vadd.f32 %v5942, %v5952
      %v5986 = vadd.f32 %v5943, %v5952
      %v5987 = vadd.f32 %v5944, %v5952
      %v5988 = vadd.f32 %v5945, %v5952
      %v5989 = vadd.f32 %v5946, %v5952
      %v5990 = vmax.f32 %v5954, 0.0
      %v5991 = vmax.f32 %v5955, 0.0
      %v5992 = vmax.f32 %v5956, 0.0
      %v5993 = vmax.f32 %v5957, 0.0
      %v5994 = vmax.f32 %v5958, 0.0
      %v5995 = vmax.f32 %v5959, 0.0
      %v5996 = vmax.f32 %v5960, 0.0
      %v5997 = vmax.f32 %v5961, 0.0
      %v5998 = vmax.f32 %v5962, 0.0
      %v5999 = vmax.f32 %v5963, 0.0
      %v6000 = vmax.f32 %v5964, 0.0
      %v6001 = vmax.f32 %v5965, 0.0
      %v6002 = vmax.f32 %v5966, 0.0
      %v6003 = vmax.f32 %v5967, 0.0
      %v6004 = vmax.f32 %v5968, 0.0
      %v6005 = vmax.f32 %v5969, 0.0
      %v6006 = vmax.f32 %v5970, 0.0
      %v6007 = vmax.f32 %v5971, 0.0
      %v6008 = vmax.f32 %v5972, 0.0
      %v6009 = vmax.f32 %v5973, 0.0
      %v6010 = vmax.f32 %v5974, 0.0
      %v6011 = vmax.f32 %v5975, 0.0
      %v6012 = vmax.f32 %v5976, 0.0
      %v6013 = vmax.f32 %v5977, 0.0
      %v6014 = vmax.f32 %v5978, 0.0
      %v6015 = vmax.f32 %v5979, 0.0
      %v6016 = vmax.f32 %v5980, 0.0
      %v6017 = vmax.f32 %v5981, 0.0
      %v6018 = vmax.f32 %v5982, 0.0
      %v6019 = vmax.f32 %v5983, 0.0
      %v6020 = vmax.f32 %v5984, 0.0
      %v6021 = vmax.f32 %v5985, 0.0
      %v6022 = vmax.f32 %v5986, 0.0
      %v6023 = vmax.f32 %v5987, 0.0
      %v6024 = vmax.f32 %v5988, 0.0
      %v6025 = vmax.f32 %v5989, 0.0
      %v6026 = vpack.c.bf16 %v5991, %v5990
      %v6027 = vpack.c.bf16 %v5993, %v5992
      %v6028 = vpack.c.bf16 %v5995, %v5994
      %v6029 = vpack.c.bf16 %v5997, %v5996
      %v6030 = vpack.c.bf16 %v5999, %v5998
      %v6031 = vpack.c.bf16 %v6001, %v6000
      %v6032 = vpack.c.bf16 %v6003, %v6002
      %v6033 = vpack.c.bf16 %v6005, %v6004
      %v6034 = vpack.c.bf16 %v6007, %v6006
      %v6035 = vpack.c.bf16 %v6009, %v6008
      %v6036 = vpack.c.bf16 %v6011, %v6010
      %v6037 = vpack.c.bf16 %v6013, %v6012
      %v6038 = vpack.c.bf16 %v6015, %v6014
      %v6039 = vpack.c.bf16 %v6017, %v6016
      %v6040 = vpack.c.bf16 %v6019, %v6018
      %v6041 = vpack.c.bf16 %v6021, %v6020
      %v6042 = vpack.c.bf16 %v6023, %v6022
      %v6043 = vpack.c.bf16 %v6025, %v6024
      %v6045 = vshrl.u32 %v6026, 16
      %v6047 = vrot.slane %v6045, 7
      %v6048 = vshll.u32 %v6026, 16
      %v6050 = vor.u32 %v6047, %v6048
      %v6052 = vshrl.u32 %v6027, 16
      %v6054 = vrot.slane %v6052, 7
      %v6055 = vshll.u32 %v6027, 16
      %v6057 = vor.u32 %v6054, %v6055
      %v6059 = vshrl.u32 %v6028, 16
      %v6061 = vrot.slane %v6059, 7
      %v6062 = vshll.u32 %v6028, 16
      %v6064 = vor.u32 %v6061, %v6062
      %v6066 = vshrl.u32 %v6029, 16
      %v6068 = vrot.slane %v6066, 7
      %v6069 = vshll.u32 %v6029, 16
      %v6071 = vor.u32 %v6068, %v6069
      %v6073 = vshrl.u32 %v6030, 16
      %v6075 = vrot.slane %v6073, 7
      %v6076 = vshll.u32 %v6030, 16
      %v6078 = vor.u32 %v6075, %v6076
      %v6080 = vshrl.u32 %v6031, 16
      %v6082 = vrot.slane %v6080, 7
      %v6083 = vshll.u32 %v6031, 16
      %v6085 = vor.u32 %v6082, %v6083
      %v6087 = vshrl.u32 %v6032, 16
      %v6089 = vrot.slane %v6087, 7
      %v6090 = vshll.u32 %v6032, 16
      %v6092 = vor.u32 %v6089, %v6090
      %v6094 = vshrl.u32 %v6033, 16
      %v6096 = vrot.slane %v6094, 7
      %v6097 = vshll.u32 %v6033, 16
      %v6099 = vor.u32 %v6096, %v6097
      %v6101 = vshrl.u32 %v6034, 16
      %v6103 = vrot.slane %v6101, 7
      %v6104 = vshll.u32 %v6034, 16
      %v6106 = vor.u32 %v6103, %v6104
      %v6108 = vshrl.u32 %v6035, 16
      %v6110 = vrot.slane %v6108, 7
      %v6111 = vshll.u32 %v6035, 16
      %v6113 = vor.u32 %v6110, %v6111
      %v6115 = vshrl.u32 %v6036, 16
      %v6117 = vrot.slane %v6115, 7
      %v6118 = vshll.u32 %v6036, 16
      %v6120 = vor.u32 %v6117, %v6118
      %v6122 = vshrl.u32 %v6037, 16
      %v6124 = vrot.slane %v6122, 7
      %v6125 = vshll.u32 %v6037, 16
      %v6127 = vor.u32 %v6124, %v6125
      %v6129 = vshrl.u32 %v6038, 16
      %v6131 = vrot.slane %v6129, 7
      %v6132 = vshll.u32 %v6038, 16
      %v6134 = vor.u32 %v6131, %v6132
      %v6136 = vshrl.u32 %v6039, 16
      %v6138 = vrot.slane %v6136, 7
      %v6139 = vshll.u32 %v6039, 16
      %v6141 = vor.u32 %v6138, %v6139
      %v6143 = vshrl.u32 %v6040, 16
      %v6145 = vrot.slane %v6143, 7
      %v6146 = vshll.u32 %v6040, 16
      %v6148 = vor.u32 %v6145, %v6146
      %v6150 = vshrl.u32 %v6041, 16
      %v6152 = vrot.slane %v6150, 7
      %v6153 = vshll.u32 %v6041, 16
      %v6155 = vor.u32 %v6152, %v6153
      %v6157 = vshrl.u32 %v6042, 16
      %v6159 = vrot.slane %v6157, 7
      %v6160 = vshll.u32 %v6042, 16
      %v6162 = vor.u32 %v6159, %v6160
      %v6164 = vshrl.u32 %v6043, 16
      %v6166 = vrot.slane %v6164, 7
      %v6167 = vshll.u32 %v6043, 16
      %v6169 = vor.u32 %v6166, %v6167
      %v6206 = vsel %vm448, 0, %v6050
      %v6207 = vsel %vm448, 0, %v6057
      %v6208 = vsel %vm448, 0, %v6064
      %v6209 = vsel %vm448, 0, %v6071
      %v6210 = vsel %vm448, 0, %v6078
      %v6211 = vsel %vm448, 0, %v6085
      %v6212 = vsel %vm448, 0, %v6092
      %v6213 = vsel %vm448, 0, %v6099
      %v6214 = vsel %vm448, 0, %v6106
      %v6215 = vsel %vm448, 0, %v6113
      %v6216 = vsel %vm448, 0, %v6120
      %v6217 = vsel %vm448, 0, %v6127
      %v6218 = vsel %vm448, 0, %v6134
      %v6219 = vsel %vm448, 0, %v6141
      %v6220 = vsel %vm448, 0, %v6148
      %v6221 = vsel %vm448, 0, %v6155
      %v6222 = vsel %vm448, 0, %v6162
      %v6223 = vsel %vm448, 0, %v6169
      %v6224 = vsel %vm448, %v6047, 0
      %v6225 = vsel %vm448, %v6054, 0
      %v6226 = vsel %vm448, %v6061, 0
      %v6227 = vsel %vm448, %v6068, 0
      %v6228 = vsel %vm448, %v6075, 0
      %v6229 = vsel %vm448, %v6082, 0
      %v6230 = vsel %vm448, %v6089, 0
      %v6231 = vsel %vm448, %v6096, 0
      %v6232 = vsel %vm448, %v6103, 0
      %v6233 = vsel %vm448, %v6110, 0
      %v6234 = vsel %vm448, %v6117, 0
      %v6235 = vsel %vm448, %v6124, 0
      %v6236 = vsel %vm448, %v6131, 0
      %v6237 = vsel %vm448, %v6138, 0
      %v6238 = vsel %vm448, %v6145, 0
      %v6239 = vsel %vm448, %v6152, 0
      %v6240 = vsel %vm448, %v6159, 0
      %v6241 = vsel %vm448, %v6166, 0
      %v6278 = vunpack.c.l.b16 %v6206
      %v6279 = vunpack.c.h.b16 %v6206
      %v6280 = vunpack.c.l.b16 %v6224
      %v6281 = vunpack.c.l.b16 %v6207
      %v6282 = vunpack.c.h.b16 %v6207
      %v6283 = vunpack.c.l.b16 %v6225
      %v6284 = vunpack.c.l.b16 %v6208
      %v6285 = vunpack.c.h.b16 %v6208
      %v6286 = vunpack.c.l.b16 %v6226
      %v6287 = vunpack.c.l.b16 %v6209
      %v6288 = vunpack.c.h.b16 %v6209
      %v6289 = vunpack.c.l.b16 %v6227
      %v6290 = vunpack.c.l.b16 %v6210
      %v6291 = vunpack.c.h.b16 %v6210
      %v6292 = vunpack.c.l.b16 %v6228
      %v6293 = vunpack.c.l.b16 %v6211
      %v6294 = vunpack.c.h.b16 %v6211
      %v6295 = vunpack.c.l.b16 %v6229
      %v6296 = vunpack.c.l.b16 %v6212
      %v6297 = vunpack.c.h.b16 %v6212
      %v6298 = vunpack.c.l.b16 %v6230
      %v6299 = vunpack.c.l.b16 %v6213
      %v6300 = vunpack.c.h.b16 %v6213
      %v6301 = vunpack.c.l.b16 %v6231
      %v6302 = vunpack.c.l.b16 %v6214
      %v6303 = vunpack.c.h.b16 %v6214
      %v6304 = vunpack.c.l.b16 %v6232
      %v6305 = vunpack.c.l.b16 %v6215
      %v6306 = vunpack.c.h.b16 %v6215
      %v6307 = vunpack.c.l.b16 %v6233
      %v6308 = vunpack.c.l.b16 %v6216
      %v6309 = vunpack.c.h.b16 %v6216
      %v6310 = vunpack.c.l.b16 %v6234
      %v6311 = vunpack.c.l.b16 %v6217
      %v6312 = vunpack.c.h.b16 %v6217
      %v6313 = vunpack.c.l.b16 %v6235
      %v6314 = vunpack.c.l.b16 %v6218
      %v6315 = vunpack.c.h.b16 %v6218
      %v6316 = vunpack.c.l.b16 %v6236
      %v6317 = vunpack.c.l.b16 %v6219
      %v6318 = vunpack.c.h.b16 %v6219
      %v6319 = vunpack.c.l.b16 %v6237
      %v6320 = vunpack.c.l.b16 %v6220
      %v6321 = vunpack.c.h.b16 %v6220
      %v6322 = vunpack.c.l.b16 %v6238
      %v6323 = vunpack.c.l.b16 %v6221
      %v6324 = vunpack.c.h.b16 %v6221
      %v6325 = vunpack.c.l.b16 %v6239
      %v6326 = vunpack.c.l.b16 %v6222
      %v6327 = vunpack.c.h.b16 %v6222
      %v6328 = vunpack.c.l.b16 %v6240
      %v6329 = vunpack.c.l.b16 %v6223
      %v6330 = vunpack.c.h.b16 %v6223
      %v6331 = vunpack.c.l.b16 %v6241
      %v6332 = vpack.c.b16 %v6278, %v6278
      %v6333 = vpack.c.b16 %v6279, %v6279
      %v6334 = vpack.c.b16 %v6280, %v6280
      %v6335 = vpack.c.b16 %v6281, %v6281
      %v6336 = vpack.c.b16 %v6282, %v6282
      %v6337 = vpack.c.b16 %v6283, %v6283
      %v6338 = vpack.c.b16 %v6284, %v6284
      %v6339 = vpack.c.b16 %v6285, %v6285
      %v6340 = vpack.c.b16 %v6286, %v6286
      %v6341 = vpack.c.b16 %v6287, %v6287
      %v6342 = vpack.c.b16 %v6288, %v6288
      %v6343 = vpack.c.b16 %v6289, %v6289
      %v6344 = vpack.c.b16 %v6290, %v6290
      %v6345 = vpack.c.b16 %v6291, %v6291
      %v6346 = vpack.c.b16 %v6292, %v6292
      %v6347 = vpack.c.b16 %v6293, %v6293
      %v6348 = vpack.c.b16 %v6294, %v6294
      %v6349 = vpack.c.b16 %v6295, %v6295
      %v6350 = vpack.c.b16 %v6296, %v6296
      %v6351 = vpack.c.b16 %v6297, %v6297
      %v6352 = vpack.c.b16 %v6298, %v6298
      %v6353 = vpack.c.b16 %v6299, %v6299
      %v6354 = vpack.c.b16 %v6300, %v6300
      %v6355 = vpack.c.b16 %v6301, %v6301
      %v6356 = vpack.c.b16 %v6302, %v6302
      %v6357 = vpack.c.b16 %v6303, %v6303
      %v6358 = vpack.c.b16 %v6304, %v6304
      %v6359 = vpack.c.b16 %v6305, %v6305
      %v6360 = vpack.c.b16 %v6306, %v6306
      %v6361 = vpack.c.b16 %v6307, %v6307
      %v6362 = vpack.c.b16 %v6308, %v6308
      %v6363 = vpack.c.b16 %v6309, %v6309
      %v6364 = vpack.c.b16 %v6310, %v6310
      %v6365 = vpack.c.b16 %v6311, %v6311
      %v6366 = vpack.c.b16 %v6312, %v6312
      %v6367 = vpack.c.b16 %v6313, %v6313
      %v6368 = vpack.c.b16 %v6314, %v6314
      %v6369 = vpack.c.b16 %v6315, %v6315
      %v6370 = vpack.c.b16 %v6316, %v6316
      %v6371 = vpack.c.b16 %v6317, %v6317
      %v6372 = vpack.c.b16 %v6318, %v6318
      %v6373 = vpack.c.b16 %v6319, %v6319
      %v6374 = vpack.c.b16 %v6320, %v6320
      %v6375 = vpack.c.b16 %v6321, %v6321
      %v6376 = vpack.c.b16 %v6322, %v6322
      %v6377 = vpack.c.b16 %v6323, %v6323
      %v6378 = vpack.c.b16 %v6324, %v6324
      %v6379 = vpack.c.b16 %v6325, %v6325
      %v6380 = vpack.c.b16 %v6326, %v6326
      %v6381 = vpack.c.b16 %v6327, %v6327
      %v6382 = vpack.c.b16 %v6328, %v6328
      %v6383 = vpack.c.b16 %v6329, %v6329
      %v6384 = vpack.c.b16 %v6330, %v6330
      %v6385 = vpack.c.b16 %v6331, %v6331
      %6440 = vst.msk [vmem:[#allocation2] sm:$0xf] %vm658, %v6332
      %6441 = vst.msk [vmem:[#allocation2 + $0x4] sm:$0xf] %vm658, %v6333
      %6442 = vst.msk [vmem:[#allocation2 + $0x8] sm:$0x1] %vm661, %v6334
      %6443 = vst.msk [vmem:[#allocation2 + $0xc] sm:$0xf] %vm658, %v6335
      %6444 = vst.msk [vmem:[#allocation2 + $0x10] sm:$0xf] %vm658, %v6336
      %6445 = vst.msk [vmem:[#allocation2 + $0x14] sm:$0x1] %vm661, %v6337
      %6446 = vst.msk [vmem:[#allocation2 + $0x18] sm:$0xf] %vm658, %v6338
      %6447 = vst.msk [vmem:[#allocation2 + $0x1c] sm:$0xf] %vm658, %v6339
      %6448 = vst.msk [vmem:[#allocation2 + $0x20] sm:$0x1] %vm661, %v6340
      %6449 = vst.msk [vmem:[#allocation2 + $0x24] sm:$0xf] %vm658, %v6341
      %6450 = vst.msk [vmem:[#allocation2 + $0x28] sm:$0xf] %vm658, %v6342
      %6451 = vst.msk [vmem:[#allocation2 + $0x2c] sm:$0x1] %vm661, %v6343
      %6452 = vst.msk [vmem:[#allocation2 + $0x30] sm:$0xf] %vm658, %v6344
      %6453 = vst.msk [vmem:[#allocation2 + $0x34] sm:$0xf] %vm658, %v6345
      %6454 = vst.msk [vmem:[#allocation2 + $0x38] sm:$0x1] %vm661, %v6346
      %6455 = vst.msk [vmem:[#allocation2 + $0x3c] sm:$0xf] %vm658, %v6347
      %6456 = vst.msk [vmem:[#allocation2 + $0x40] sm:$0xf] %vm658, %v6348
      %6457 = vst.msk [vmem:[#allocation2 + $0x44] sm:$0x1] %vm661, %v6349
      %6458 = vst.msk [vmem:[#allocation2 + $0x48] sm:$0xf] %vm658, %v6350
      %6459 = vst.msk [vmem:[#allocation2 + $0x4c] sm:$0xf] %vm658, %v6351
      %6460 = vst.msk [vmem:[#allocation2 + $0x50] sm:$0x1] %vm661, %v6352
      %6461 = vst.msk [vmem:[#allocation2 + $0x54] sm:$0xf] %vm658, %v6353
      %6462 = vst.msk [vmem:[#allocation2 + $0x58] sm:$0xf] %vm658, %v6354
      %6463 = vst.msk [vmem:[#allocation2 + $0x5c] sm:$0x1] %vm661, %v6355
      %6464 = vst.msk [vmem:[#allocation2 + $0x60] sm:$0xf] %vm658, %v6356
      %6465 = vst.msk [vmem:[#allocation2 + $0x64] sm:$0xf] %vm658, %v6357
      %6466 = vst.msk [vmem:[#allocation2 + $0x68] sm:$0x1] %vm661, %v6358
      %6467 = vst.msk [vmem:[#allocation2 + $0x6c] sm:$0xf] %vm658, %v6359
      %6468 = vst.msk [vmem:[#allocation2 + $0x70] sm:$0xf] %vm658, %v6360
      %6469 = vst.msk [vmem:[#allocation2 + $0x74] sm:$0x1] %vm661, %v6361
      %6470 = vst.msk [vmem:[#allocation2 + $0x78] sm:$0xf] %vm658, %v6362
      %6471 = vst.msk [vmem:[#allocation2 + $0x7c] sm:$0xf] %vm658, %v6363
      %6472 = vst.msk [vmem:[#allocation2 + $0x80] sm:$0x1] %vm661, %v6364
      %6473 = vst.msk [vmem:[#allocation2 + $0x84] sm:$0xf] %vm658, %v6365
      %6474 = vst.msk [vmem:[#allocation2 + $0x88] sm:$0xf] %vm658, %v6366
      %6475 = vst.msk [vmem:[#allocation2 + $0x8c] sm:$0x1] %vm661, %v6367
      %6476 = vst.msk [vmem:[#allocation2 + $0x90] sm:$0xf] %vm658, %v6368
      %6477 = vst.msk [vmem:[#allocation2 + $0x94] sm:$0xf] %vm658, %v6369
      %6478 = vst.msk [vmem:[#allocation2 + $0x98] sm:$0x1] %vm661, %v6370
      %6479 = vst.msk [vmem:[#allocation2 + $0x9c] sm:$0xf] %vm658, %v6371
      %6480 = vst.msk [vmem:[#allocation2 + $0xa0] sm:$0xf] %vm658, %v6372
      %6481 = vst.msk [vmem:[#allocation2 + $0xa4] sm:$0x1] %vm661, %v6373
      %6482 = vst.msk [vmem:[#allocation2 + $0xa8] sm:$0xf] %vm658, %v6374
      %6483 = vst.msk [vmem:[#allocation2 + $0xac] sm:$0xf] %vm658, %v6375
      %6484 = vst.msk [vmem:[#allocation2 + $0xb0] sm:$0x1] %vm661, %v6376
      %6485 = vst.msk [vmem:[#allocation2 + $0xb4] sm:$0xf] %vm658, %v6377
      %6486 = vst.msk [vmem:[#allocation2 + $0xb8] sm:$0xf] %vm658, %v6378
      %6487 = vst.msk [vmem:[#allocation2 + $0xbc] sm:$0x1] %vm661, %v6379
      %6488 = vst.msk [vmem:[#allocation2 + $0xc0] sm:$0xf] %vm658, %v6380
      %6489 = vst.msk [vmem:[#allocation2 + $0xc4] sm:$0xf] %vm658, %v6381
      %6490 = vst.msk [vmem:[#allocation2 + $0xc8] sm:$0x1] %vm661, %v6382
      %6491 = vst.msk [vmem:[#allocation2 + $0xcc] sm:$0xf] %vm658, %v6383
      %6492 = vst.msk [vmem:[#allocation2 + $0xd0] sm:$0xf] %vm658, %v6384
      %6493 = vst.msk [vmem:[#allocation2 + $0xd4] sm:$0x1] %vm661, %v6385
      // Predicated region
      $region57: #{tpu_custom_call.1} parent=39 // pred_check
        %p6494 = pneg %p708
      $region58: #{tpu_custom_call.1} parent=39 // pred_check_branch
        %6496 = sbr.rel (%p6494) target = $region60
      $region59: #{tpu_custom_call.1} parent=39 // pred_region
        %6497 = vst.msk [vmem:[#allocation2] sm:$0xf] %vm658, 0
        %6498 = vst.msk [vmem:[#allocation2 + $0x4] sm:$0xf] %vm658, 0
        %6499 = vst.msk [vmem:[#allocation2 + $0x8] sm:$0x1] %vm661, 0
        %s6500 = scalar_lea.vmem [#allocation2], 204
        %6501 = vst.msk [vmem:[%s6500] sm:$0xf] %vm658, 0
        %6502 = vst.msk [vmem:[%s6500 + $0x4] sm:$0xf] %vm658, 0
        %6503 = vst.msk [vmem:[%s6500 + $0x8] sm:$0x1] %vm661, 0
      $region60: #{tpu_custom_call.1} parent=39 // pred_fallthru
        _
      %v6504 = vld [vmem:[#allocation2] sm:$0xf]
      %v6505 = vld [vmem:[#allocation2 + $0x4] sm:$0xf]
      %v6506 = vld [vmem:[#allocation2 + $0xc] sm:$0xf]
      %v6507 = vld [vmem:[#allocation2 + $0x10] sm:$0xf]
      %v6508 = vld [vmem:[#allocation2 + $0x18] sm:$0xf]
      %v6509 = vld [vmem:[#allocation2 + $0x1c] sm:$0xf]
      %v6510 = vld [vmem:[#allocation2 + $0x24] sm:$0xf]
      %v6511 = vld [vmem:[#allocation2 + $0x28] sm:$0xf]
      %v6512 = vld [vmem:[#allocation2 + $0x30] sm:$0xf]
      %v6513 = vld [vmem:[#allocation2 + $0x34] sm:$0xf]
      %v6514 = vld [vmem:[#allocation2 + $0x3c] sm:$0xf]
      %v6515 = vld [vmem:[#allocation2 + $0x40] sm:$0xf]
      %v6516 = vld [vmem:[#allocation2 + $0x48] sm:$0xf]
      %v6517 = vld [vmem:[#allocation2 + $0x4c] sm:$0xf]
      %v6518 = vld [vmem:[#allocation2 + $0x54] sm:$0xf]
      %v6519 = vld [vmem:[#allocation2 + $0x58] sm:$0xf]
      %v6520 = vld [vmem:[#allocation2 + $0x60] sm:$0xf]
      %v6521 = vld [vmem:[#allocation2 + $0x64] sm:$0xf]
      %v6522 = vld [vmem:[#allocation2 + $0x6c] sm:$0xf]
      %v6523 = vld [vmem:[#allocation2 + $0x70] sm:$0xf]
      %v6524 = vld [vmem:[#allocation2 + $0x78] sm:$0xf]
      %v6525 = vld [vmem:[#allocation2 + $0x7c] sm:$0xf]
      %v6526 = vld [vmem:[#allocation2 + $0x84] sm:$0xf]
      %v6527 = vld [vmem:[#allocation2 + $0x88] sm:$0xf]
      %v6528 = vld [vmem:[#allocation2 + $0x90] sm:$0xf]
      %v6529 = vld [vmem:[#allocation2 + $0x94] sm:$0xf]
      %v6530 = vld [vmem:[#allocation2 + $0x9c] sm:$0xf]
      %v6531 = vld [vmem:[#allocation2 + $0xa0] sm:$0xf]
      %v6532 = vld [vmem:[#allocation2 + $0xa8] sm:$0xf]
      %v6533 = vld [vmem:[#allocation2 + $0xac] sm:$0xf]
      %v6534 = vld [vmem:[#allocation2 + $0xb4] sm:$0xf]
      %v6535 = vld [vmem:[#allocation2 + $0xb8] sm:$0xf]
      %v6536 = vld [vmem:[%s2] sm:$0x3]
      %v6537 = vld [vmem:[#allocation2 + $0x8] sm:$0x1]
      %v6538 = vld [vmem:[#allocation2 + $0x14] sm:$0x1]
      %v6539 = vld [vmem:[#allocation2 + $0x20] sm:$0x1]
      %v6540 = vld [vmem:[#allocation2 + $0x2c] sm:$0x1]
      %v6541 = vld [vmem:[#allocation2 + $0x38] sm:$0x1]
      %v6542 = vld [vmem:[#allocation2 + $0x44] sm:$0x1]
      %v6543 = vld [vmem:[#allocation2 + $0x50] sm:$0x1]
      %v6544 = vld [vmem:[#allocation2 + $0x5c] sm:$0x1]
      %v6545 = vld [vmem:[#allocation2 + $0x68] sm:$0x1]
      %v6546 = vld [vmem:[#allocation2 + $0x74] sm:$0x1]
      %v6547 = vld [vmem:[#allocation2 + $0x80] sm:$0x1]
      %v6548 = vld [vmem:[#allocation2 + $0x8c] sm:$0x1]
      %v6549 = vld [vmem:[#allocation2 + $0x98] sm:$0x1]
      %v6550 = vld [vmem:[#allocation2 + $0xa4] sm:$0x1]
      %v6551 = vld [vmem:[#allocation2 + $0xb0] sm:$0x1]
      %v6552 = vld [vmem:[#allocation2 + $0xbc] sm:$0x1]
      %v6554 = vshrl.u32 %v6504, 16
      %v6556 = vrot.slane %v6554, 4
      %v6557 = vshll.u32 %v6504, 16
      %v6559 = vrot.slane %v6557, 5
      %v6560 = vor.u32 %v6556, %v6559
      %v6561 = vrot.slane %v6560, 4
      %v6563 = vshll.u32 %v6505, 16
      %v6565 = vrot.slane %v6563, 5
      %v6566 = vsel %vm912, %v6561, %v6565
      %v6567 = vshrl.u32 %v6505, 16
      %v6569 = vrot.slane %v6567, 4
      %v6570 = vor.u32 %v6569, %v6565
      %v6571 = vrot.slane %v6570, 4
      %v6573 = vshll.u32 %v6537, 16
      %v6575 = vrot.slane %v6573, 5
      %v6576 = vsel %vm912, %v6571, %v6575
      %v6578 = vshrl.u32 %v6506, 16
      %v6580 = vrot.slane %v6578, 4
      %v6581 = vshll.u32 %v6506, 16
      %v6583 = vrot.slane %v6581, 5
      %v6584 = vor.u32 %v6580, %v6583
      %v6585 = vrot.slane %v6584, 4
      %v6587 = vshll.u32 %v6507, 16
      %v6589 = vrot.slane %v6587, 5
      %v6590 = vsel %vm912, %v6585, %v6589
      %v6591 = vshrl.u32 %v6507, 16
      %v6593 = vrot.slane %v6591, 4
      %v6594 = vor.u32 %v6593, %v6589
      %v6595 = vrot.slane %v6594, 4
      %v6597 = vshll.u32 %v6538, 16
      %v6599 = vrot.slane %v6597, 5
      %v6600 = vsel %vm912, %v6595, %v6599
      %v6602 = vshrl.u32 %v6508, 16
      %v6604 = vrot.slane %v6602, 4
      %v6605 = vshll.u32 %v6508, 16
      %v6607 = vrot.slane %v6605, 5
      %v6608 = vor.u32 %v6604, %v6607
      %v6609 = vrot.slane %v6608, 4
      %v6611 = vshll.u32 %v6509, 16
      %v6613 = vrot.slane %v6611, 5
      %v6614 = vsel %vm912, %v6609, %v6613
      %v6615 = vshrl.u32 %v6509, 16
      %v6617 = vrot.slane %v6615, 4
      %v6618 = vor.u32 %v6617, %v6613
      %v6619 = vrot.slane %v6618, 4
      %v6621 = vshll.u32 %v6539, 16
      %v6623 = vrot.slane %v6621, 5
      %v6624 = vsel %vm912, %v6619, %v6623
      %v6626 = vshrl.u32 %v6510, 16
      %v6628 = vrot.slane %v6626, 4
      %v6629 = vshll.u32 %v6510, 16
      %v6631 = vrot.slane %v6629, 5
      %v6632 = vor.u32 %v6628, %v6631
      %v6633 = vrot.slane %v6632, 4
      %v6635 = vshll.u32 %v6511, 16
      %v6637 = vrot.slane %v6635, 5
      %v6638 = vsel %vm912, %v6633, %v6637
      %v6639 = vshrl.u32 %v6511, 16
      %v6641 = vrot.slane %v6639, 4
      %v6642 = vor.u32 %v6641, %v6637
      %v6643 = vrot.slane %v6642, 4
      %v6645 = vshll.u32 %v6540, 16
      %v6647 = vrot.slane %v6645, 5
      %v6648 = vsel %vm912, %v6643, %v6647
      %v6650 = vshrl.u32 %v6512, 16
      %v6652 = vrot.slane %v6650, 4
      %v6653 = vshll.u32 %v6512, 16
      %v6655 = vrot.slane %v6653, 5
      %v6656 = vor.u32 %v6652, %v6655
      %v6657 = vrot.slane %v6656, 4
      %v6659 = vshll.u32 %v6513, 16
      %v6661 = vrot.slane %v6659, 5
      %v6662 = vsel %vm912, %v6657, %v6661
      %v6663 = vshrl.u32 %v6513, 16
      %v6665 = vrot.slane %v6663, 4
      %v6666 = vor.u32 %v6665, %v6661
      %v6667 = vrot.slane %v6666, 4
      %v6669 = vshll.u32 %v6541, 16
      %v6671 = vrot.slane %v6669, 5
      %v6672 = vsel %vm912, %v6667, %v6671
      %v6674 = vshrl.u32 %v6514, 16
      %v6676 = vrot.slane %v6674, 4
      %v6677 = vshll.u32 %v6514, 16
      %v6679 = vrot.slane %v6677, 5
      %v6680 = vor.u32 %v6676, %v6679
      %v6681 = vrot.slane %v6680, 4
      %v6683 = vshll.u32 %v6515, 16
      %v6685 = vrot.slane %v6683, 5
      %v6686 = vsel %vm912, %v6681, %v6685
      %v6687 = vshrl.u32 %v6515, 16
      %v6689 = vrot.slane %v6687, 4
      %v6690 = vor.u32 %v6689, %v6685
      %v6691 = vrot.slane %v6690, 4
      %v6693 = vshll.u32 %v6542, 16
      %v6695 = vrot.slane %v6693, 5
      %v6696 = vsel %vm912, %v6691, %v6695
      %v6698 = vshrl.u32 %v6516, 16
      %v6700 = vrot.slane %v6698, 4
      %v6701 = vshll.u32 %v6516, 16
      %v6703 = vrot.slane %v6701, 5
      %v6704 = vor.u32 %v6700, %v6703
      %v6705 = vrot.slane %v6704, 4
      %v6707 = vshll.u32 %v6517, 16
      %v6709 = vrot.slane %v6707, 5
      %v6710 = vsel %vm912, %v6705, %v6709
      %v6711 = vshrl.u32 %v6517, 16
      %v6713 = vrot.slane %v6711, 4
      %v6714 = vor.u32 %v6713, %v6709
      %v6715 = vrot.slane %v6714, 4
      %v6717 = vshll.u32 %v6543, 16
      %v6719 = vrot.slane %v6717, 5
      %v6720 = vsel %vm912, %v6715, %v6719
      %v6722 = vshrl.u32 %v6518, 16
      %v6724 = vrot.slane %v6722, 4
      %v6725 = vshll.u32 %v6518, 16
      %v6727 = vrot.slane %v6725, 5
      %v6728 = vor.u32 %v6724, %v6727
      %v6729 = vrot.slane %v6728, 4
      %v6731 = vshll.u32 %v6519, 16
      %v6733 = vrot.slane %v6731, 5
      %v6734 = vsel %vm912, %v6729, %v6733
      %v6735 = vshrl.u32 %v6519, 16
      %v6737 = vrot.slane %v6735, 4
      %v6738 = vor.u32 %v6737, %v6733
      %v6739 = vrot.slane %v6738, 4
      %v6741 = vshll.u32 %v6544, 16
      %v6743 = vrot.slane %v6741, 5
      %v6744 = vsel %vm912, %v6739, %v6743
      %v6746 = vshrl.u32 %v6520, 16
      %v6748 = vrot.slane %v6746, 4
      %v6749 = vshll.u32 %v6520, 16
      %v6751 = vrot.slane %v6749, 5
      %v6752 = vor.u32 %v6748, %v6751
      %v6753 = vrot.slane %v6752, 4
      %v6755 = vshll.u32 %v6521, 16
      %v6757 = vrot.slane %v6755, 5
      %v6758 = vsel %vm912, %v6753, %v6757
      %v6759 = vshrl.u32 %v6521, 16
      %v6761 = vrot.slane %v6759, 4
      %v6762 = vor.u32 %v6761, %v6757
      %v6763 = vrot.slane %v6762, 4
      %v6765 = vshll.u32 %v6545, 16
      %v6767 = vrot.slane %v6765, 5
      %v6768 = vsel %vm912, %v6763, %v6767
      %v6770 = vshrl.u32 %v6522, 16
      %v6772 = vrot.slane %v6770, 4
      %v6773 = vshll.u32 %v6522, 16
      %v6775 = vrot.slane %v6773, 5
      %v6776 = vor.u32 %v6772, %v6775
      %v6777 = vrot.slane %v6776, 4
      %v6779 = vshll.u32 %v6523, 16
      %v6781 = vrot.slane %v6779, 5
      %v6782 = vsel %vm912, %v6777, %v6781
      %v6783 = vshrl.u32 %v6523, 16
      %v6785 = vrot.slane %v6783, 4
      %v6786 = vor.u32 %v6785, %v6781
      %v6787 = vrot.slane %v6786, 4
      %v6789 = vshll.u32 %v6546, 16
      %v6791 = vrot.slane %v6789, 5
      %v6792 = vsel %vm912, %v6787, %v6791
      %v6794 = vshrl.u32 %v6524, 16
      %v6796 = vrot.slane %v6794, 4
      %v6797 = vshll.u32 %v6524, 16
      %v6799 = vrot.slane %v6797, 5
      %v6800 = vor.u32 %v6796, %v6799
      %v6801 = vrot.slane %v6800, 4
      %v6803 = vshll.u32 %v6525, 16
      %v6805 = vrot.slane %v6803, 5
      %v6806 = vsel %vm912, %v6801, %v6805
      %v6807 = vshrl.u32 %v6525, 16
      %v6809 = vrot.slane %v6807, 4
      %v6810 = vor.u32 %v6809, %v6805
      %v6811 = vrot.slane %v6810, 4
      %v6813 = vshll.u32 %v6547, 16
      %v6815 = vrot.slane %v6813, 5
      %v6816 = vsel %vm912, %v6811, %v6815
      %v6818 = vshrl.u32 %v6526, 16
      %v6820 = vrot.slane %v6818, 4
      %v6821 = vshll.u32 %v6526, 16
      %v6823 = vrot.slane %v6821, 5
      %v6824 = vor.u32 %v6820, %v6823
      %v6825 = vrot.slane %v6824, 4
      %v6827 = vshll.u32 %v6527, 16
      %v6829 = vrot.slane %v6827, 5
      %v6830 = vsel %vm912, %v6825, %v6829
      %v6831 = vshrl.u32 %v6527, 16
      %v6833 = vrot.slane %v6831, 4
      %v6834 = vor.u32 %v6833, %v6829
      %v6835 = vrot.slane %v6834, 4
      %v6837 = vshll.u32 %v6548, 16
      %v6839 = vrot.slane %v6837, 5
      %v6840 = vsel %vm912, %v6835, %v6839
      %v6842 = vshrl.u32 %v6528, 16
      %v6844 = vrot.slane %v6842, 4
      %v6845 = vshll.u32 %v6528, 16
      %v6847 = vrot.slane %v6845, 5
      %v6848 = vor.u32 %v6844, %v6847
      %v6849 = vrot.slane %v6848, 4
      %v6851 = vshll.u32 %v6529, 16
      %v6853 = vrot.slane %v6851, 5
      %v6854 = vsel %vm912, %v6849, %v6853
      %v6855 = vshrl.u32 %v6529, 16
      %v6857 = vrot.slane %v6855, 4
      %v6858 = vor.u32 %v6857, %v6853
      %v6859 = vrot.slane %v6858, 4
      %v6861 = vshll.u32 %v6549, 16
      %v6863 = vrot.slane %v6861, 5
      %v6864 = vsel %vm912, %v6859, %v6863
      %v6866 = vshrl.u32 %v6530, 16
      %v6868 = vrot.slane %v6866, 4
      %v6869 = vshll.u32 %v6530, 16
      %v6871 = vrot.slane %v6869, 5
      %v6872 = vor.u32 %v6868, %v6871
      %v6873 = vrot.slane %v6872, 4
      %v6875 = vshll.u32 %v6531, 16
      %v6877 = vrot.slane %v6875, 5
      %v6878 = vsel %vm912, %v6873, %v6877
      %v6879 = vshrl.u32 %v6531, 16
      %v6881 = vrot.slane %v6879, 4
      %v6882 = vor.u32 %v6881, %v6877
      %v6883 = vrot.slane %v6882, 4
      %v6885 = vshll.u32 %v6550, 16
      %v6887 = vrot.slane %v6885, 5
      %v6888 = vsel %vm912, %v6883, %v6887
      %v6890 = vshrl.u32 %v6532, 16
      %v6892 = vrot.slane %v6890, 4
      %v6893 = vshll.u32 %v6532, 16
      %v6895 = vrot.slane %v6893, 5
      %v6896 = vor.u32 %v6892, %v6895
      %v6897 = vrot.slane %v6896, 4
      %v6899 = vshll.u32 %v6533, 16
      %v6901 = vrot.slane %v6899, 5
      %v6902 = vsel %vm912, %v6897, %v6901
      %v6903 = vshrl.u32 %v6533, 16
      %v6905 = vrot.slane %v6903, 4
      %v6906 = vor.u32 %v6905, %v6901
      %v6907 = vrot.slane %v6906, 4
      %v6909 = vshll.u32 %v6551, 16
      %v6911 = vrot.slane %v6909, 5
      %v6912 = vsel %vm912, %v6907, %v6911
      %v6914 = vshrl.u32 %v6534, 16
      %v6916 = vrot.slane %v6914, 4
      %v6917 = vshll.u32 %v6534, 16
      %v6919 = vrot.slane %v6917, 5
      %v6920 = vor.u32 %v6916, %v6919
      %v6921 = vrot.slane %v6920, 4
      %v6923 = vshll.u32 %v6535, 16
      %v6925 = vrot.slane %v6923, 5
      %v6926 = vsel %vm912, %v6921, %v6925
      %v6927 = vshrl.u32 %v6535, 16
      %v6929 = vrot.slane %v6927, 4
      %v6930 = vor.u32 %v6929, %v6925
      %v6931 = vrot.slane %v6930, 4
      %v6933 = vshll.u32 %v6552, 16
      %v6935 = vrot.slane %v6933, 5
      %v6936 = vsel %vm912, %v6931, %v6935
      %v6937 = vld [vmem:[%s2] sm:$0xc]
      %v6938 = vunpack.c.l.b16 %v6566
      %v6939 = vunpack.c.l.b16 %v6576
      %v6940 = vunpack.c.l.b16 %v6590
      %v6941 = vunpack.c.l.b16 %v6600
      %v6942 = vunpack.c.l.b16 %v6614
      %v6943 = vunpack.c.l.b16 %v6624
      %v6944 = vunpack.c.l.b16 %v6638
      %v6945 = vunpack.c.l.b16 %v6648
      %v6946 = vunpack.c.l.b16 %v6662
      %v6947 = vunpack.c.l.b16 %v6672
      %v6948 = vunpack.c.l.b16 %v6686
      %v6949 = vunpack.c.l.b16 %v6696
      %v6950 = vunpack.c.l.b16 %v6710
      %v6951 = vunpack.c.l.b16 %v6720
      %v6952 = vunpack.c.l.b16 %v6734
      %v6953 = vunpack.c.l.b16 %v6744
      %v6954 = vunpack.c.l.b16 %v6758
      %v6955 = vunpack.c.l.b16 %v6768
      %v6956 = vunpack.c.l.b16 %v6782
      %v6957 = vunpack.c.l.b16 %v6792
      %v6958 = vunpack.c.l.b16 %v6806
      %v6959 = vunpack.c.l.b16 %v6816
      %v6960 = vunpack.c.l.b16 %v6830
      %v6961 = vunpack.c.l.b16 %v6840
      %v6962 = vunpack.c.l.b16 %v6854
      %v6963 = vunpack.c.l.b16 %v6864
      %v6964 = vunpack.c.l.b16 %v6878
      %v6965 = vunpack.c.l.b16 %v6888
      %v6966 = vunpack.c.l.b16 %v6902
      %v6967 = vunpack.c.l.b16 %v6912
      %v6968 = vunpack.c.l.b16 %v6926
      %v6969 = vunpack.c.l.b16 %v6936
      %v6970 = vpack.c.b16 %v6939, %v6938
      %v6971 = vpack.c.b16 %v6941, %v6940
      %v6972 = vpack.c.b16 %v6943, %v6942
      %v6973 = vpack.c.b16 %v6945, %v6944
      %v6974 = vpack.c.b16 %v6947, %v6946
      %v6975 = vpack.c.b16 %v6949, %v6948
      %v6976 = vpack.c.b16 %v6951, %v6950
      %v6977 = vpack.c.b16 %v6953, %v6952
      %v6978 = vpack.c.b16 %v6955, %v6954
      %v6979 = vpack.c.b16 %v6957, %v6956
      %v6980 = vpack.c.b16 %v6959, %v6958
      %v6981 = vpack.c.b16 %v6961, %v6960
      %v6982 = vpack.c.b16 %v6963, %v6962
      %v6983 = vpack.c.b16 %v6965, %v6964
      %v6984 = vpack.c.b16 %v6967, %v6966
      %v6985 = vpack.c.b16 %v6969, %v6968
      %v6987 = vunpack.c.l.b16 %v6937
      %v6988 = vpack.c.b16 %v6987, %v6987
      %v6989 = vrot.slane %v6988, 2
      %v6991 = vsel %vm1404, %v6970, 0
      %v6994 = vsel %vm1404, %v6971, 0
      %v6997 = vsel %vm1404, %v6972, 0
      %v7000 = vsel %vm1404, %v6973, 0
      %v7003 = vsel %vm1404, %v6974, 0
      %v7006 = vsel %vm1404, %v6975, 0
      %v7009 = vsel %vm1404, %v6976, 0
      %v7012 = vsel %vm1404, %v6977, 0
      %v7015 = vsel %vm1404, %v6978, 0
      %v7018 = vsel %vm1404, %v6979, 0
      %v7021 = vsel %vm1404, %v6980, 0
      %v7024 = vsel %vm1404, %v6981, 0
      %v7027 = vsel %vm1404, %v6982, 0
      %v7030 = vsel %vm1404, %v6983, 0
      %v7033 = vsel %vm1404, %v6984, 0
      %v7036 = vsel %vm1404, %v6985, 0
      %v7039 = vsel %vm1459, %v6989, 0
      %7041 = vmatprep.subr.bf16.mxu0 0
      %7042 = vmatpush1.bf16.msra.mxu0 0
      %7043 = vmatprep.subr.bf16.mxu0 0
      %7044 = vmatpush1.bf16.msra.mxu0 0
      %7045 = vmatprep.subr.bf16.mxu0 0
      %7046 = vmatpush1.bf16.msra.mxu0 0
      %7047 = vmatprep.subr.bf16.mxu0 0
      %7048 = vmatpush1.bf16.msra.mxu0 0
      %7049 = vmatprep.subr.bf16.mxu0 0
      %7050 = vmatpush1.bf16.msra.mxu0 0
      %7051 = vmatprep.subr.bf16.mxu0 0
      %7052 = vmatpush1.bf16.msra.mxu0 0
      %7053 = vmatprep.subr.bf16.mxu0 0
      %7054 = vmatpush1.bf16.msra.mxu0 0
      %7055 = vmatprep.subr.bf16.mxu0 0
      %7056 = vmatpush1.bf16.msra.mxu0 %v7039
      %7057 = vmatprep.subr.bf16.mxu0 0
      %7058 = vmatpush2.bf16.msra.mxu0 0
      %7059 = vmatprep.subr.bf16.mxu0 0
      %7060 = vmatpush2.bf16.msra.mxu0 0
      %7061 = vmatprep.subr.bf16.mxu0 0
      %7062 = vmatpush2.bf16.msra.mxu0 0
      %7063 = vmatprep.subr.bf16.mxu0 0
      %7064 = vmatpush2.bf16.msra.mxu0 0
      %7065 = vmatprep.subr.bf16.mxu0 0
      %7066 = vmatpush2.bf16.msra.mxu0 0
      %7067 = vmatprep.subr.bf16.mxu0 0
      %7068 = vmatpush2.bf16.msra.mxu0 0
      %7069 = vmatprep.subr.bf16.mxu0 0
      %7070 = vmatpush2.bf16.msra.mxu0 0
      %7071 = vmatprep.subr.bf16.mxu0 0
      %7072 = vmatpush2.bf16.msra.mxu0 0
      %7073 = vmatprep.mubr.bf16.mxu0 0
      %7074 = vmatmul.mubr.bf16.gmra.mxu0 %v6991
      %v7075 = vpop.f32.mrf.mxu0
      %v7076 = vadd.f32 0.0, %v7075
      %v7077 = vpop.f32.mrf.mxu0
      %v7078 = vpop.f32.mrf.mxu0
      %v7079 = vadd.f32 0.0, %v7078
      %v7080 = vpop.f32.mrf.mxu0
      %7081 = vmatprep.mubr.bf16.mxu0 0
      %7082 = vmatmul.mubr.bf16.gmra.mxu0 %v6994
      %v7083 = vpop.f32.mrf.mxu0
      %v7084 = vadd.f32 0.0, %v7083
      %v7085 = vpop.f32.mrf.mxu0
      %v7086 = vpop.f32.mrf.mxu0
      %v7087 = vadd.f32 0.0, %v7086
      %v7088 = vpop.f32.mrf.mxu0
      %7089 = vmatprep.mubr.bf16.mxu0 0
      %7090 = vmatmul.mubr.bf16.gmra.mxu0 %v6997
      %v7091 = vpop.f32.mrf.mxu0
      %v7092 = vadd.f32 0.0, %v7091
      %v7093 = vpop.f32.mrf.mxu0
      %v7094 = vpop.f32.mrf.mxu0
      %v7095 = vadd.f32 0.0, %v7094
      %v7096 = vpop.f32.mrf.mxu0
      %7097 = vmatprep.mubr.bf16.mxu0 0
      %7098 = vmatmul.mubr.bf16.gmra.mxu0 %v7000
      %v7099 = vpop.f32.mrf.mxu0
      %v7100 = vadd.f32 0.0, %v7099
      %v7101 = vpop.f32.mrf.mxu0
      %v7102 = vpop.f32.mrf.mxu0
      %v7103 = vadd.f32 0.0, %v7102
      %v7104 = vpop.f32.mrf.mxu0
      %7105 = vmatprep.mubr.bf16.mxu0 0
      %7106 = vmatmul.mubr.bf16.gmra.mxu0 %v7003
      %v7107 = vpop.f32.mrf.mxu0
      %v7108 = vadd.f32 0.0, %v7107
      %v7109 = vpop.f32.mrf.mxu0
      %v7110 = vpop.f32.mrf.mxu0
      %v7111 = vadd.f32 0.0, %v7110
      %v7112 = vpop.f32.mrf.mxu0
      %7113 = vmatprep.mubr.bf16.mxu0 0
      %7114 = vmatmul.mubr.bf16.gmra.mxu0 %v7006
      %v7115 = vpop.f32.mrf.mxu0
      %v7116 = vadd.f32 0.0, %v7115
      %v7117 = vpop.f32.mrf.mxu0
      %v7118 = vpop.f32.mrf.mxu0
      %v7119 = vadd.f32 0.0, %v7118
      %v7120 = vpop.f32.mrf.mxu0
      %7121 = vmatprep.mubr.bf16.mxu0 0
      %7122 = vmatmul.mubr.bf16.gmra.mxu0 %v7009
      %v7123 = vpop.f32.mrf.mxu0
      %v7124 = vadd.f32 0.0, %v7123
      %v7125 = vpop.f32.mrf.mxu0
      %v7126 = vpop.f32.mrf.mxu0
      %v7127 = vadd.f32 0.0, %v7126
      %v7128 = vpop.f32.mrf.mxu0
      %7129 = vmatprep.mubr.bf16.mxu0 0
      %7130 = vmatmul.mubr.bf16.gmra.mxu0 %v7012
      %v7131 = vpop.f32.mrf.mxu0
      %v7132 = vadd.f32 0.0, %v7131
      %v7133 = vpop.f32.mrf.mxu0
      %v7134 = vpop.f32.mrf.mxu0
      %v7135 = vadd.f32 0.0, %v7134
      %v7136 = vpop.f32.mrf.mxu0
      %7137 = vmatprep.mubr.bf16.mxu0 0
      %7138 = vmatmul.mubr.bf16.gmra.mxu0 %v7015
      %v7139 = vpop.f32.mrf.mxu0
      %v7140 = vadd.f32 0.0, %v7139
      %v7141 = vpop.f32.mrf.mxu0
      %v7142 = vpop.f32.mrf.mxu0
      %v7143 = vadd.f32 0.0, %v7142
      %v7144 = vpop.f32.mrf.mxu0
      %7145 = vmatprep.mubr.bf16.mxu0 0
      %7146 = vmatmul.mubr.bf16.gmra.mxu0 %v7018
      %v7147 = vpop.f32.mrf.mxu0
      %v7148 = vadd.f32 0.0, %v7147
      %v7149 = vpop.f32.mrf.mxu0
      %v7150 = vpop.f32.mrf.mxu0
      %v7151 = vadd.f32 0.0, %v7150
      %v7152 = vpop.f32.mrf.mxu0
      %7153 = vmatprep.mubr.bf16.mxu0 0
      %7154 = vmatmul.mubr.bf16.gmra.mxu0 %v7021
      %v7155 = vpop.f32.mrf.mxu0
      %v7156 = vadd.f32 0.0, %v7155
      %v7157 = vpop.f32.mrf.mxu0
      %v7158 = vpop.f32.mrf.mxu0
      %v7159 = vadd.f32 0.0, %v7158
      %v7160 = vpop.f32.mrf.mxu0
      %7161 = vmatprep.mubr.bf16.mxu0 0
      %7162 = vmatmul.mubr.bf16.gmra.mxu0 %v7024
      %v7163 = vpop.f32.mrf.mxu0
      %v7164 = vadd.f32 0.0, %v7163
      %v7165 = vpop.f32.mrf.mxu0
      %v7166 = vpop.f32.mrf.mxu0
      %v7167 = vadd.f32 0.0, %v7166
      %v7168 = vpop.f32.mrf.mxu0
      %7169 = vmatprep.mubr.bf16.mxu0 0
      %7170 = vmatmul.mubr.bf16.gmra.mxu0 %v7027
      %v7171 = vpop.f32.mrf.mxu0
      %v7172 = vadd.f32 0.0, %v7171
      %v7173 = vpop.f32.mrf.mxu0
      %v7174 = vpop.f32.mrf.mxu0
      %v7175 = vadd.f32 0.0, %v7174
      %v7176 = vpop.f32.mrf.mxu0
      %7177 = vmatprep.mubr.bf16.mxu0 0
      %7178 = vmatmul.mubr.bf16.gmra.mxu0 %v7030
      %v7179 = vpop.f32.mrf.mxu0
      %v7180 = vadd.f32 0.0, %v7179
      %v7181 = vpop.f32.mrf.mxu0
      %v7182 = vpop.f32.mrf.mxu0
      %v7183 = vadd.f32 0.0, %v7182
      %v7184 = vpop.f32.mrf.mxu0
      %7185 = vmatprep.mubr.bf16.mxu0 0
      %7186 = vmatmul.mubr.bf16.gmra.mxu0 %v7033
      %v7187 = vpop.f32.mrf.mxu0
      %v7188 = vadd.f32 0.0, %v7187
      %v7189 = vpop.f32.mrf.mxu0
      %v7190 = vpop.f32.mrf.mxu0
      %v7191 = vadd.f32 0.0, %v7190
      %v7192 = vpop.f32.mrf.mxu0
      %7193 = vmatprep.mubr.bf16.mxu0 0
      %7194 = vmatmul.mubr.bf16.gmra.mxu0 %v7036
      %v7195 = vpop.f32.mrf.mxu0
      %v7196 = vadd.f32 0.0, %v7195
      %v7197 = vpop.f32.mrf.mxu0
      %v7198 = vpop.f32.mrf.mxu0
      %v7199 = vadd.f32 0.0, %v7198
      %v7200 = vpop.f32.mrf.mxu0
      %7201 = vdwg.mxu0
      %v7234 = vunpack.c.l.b16 %v6504
      %v7235 = vunpack.c.l.b16 %v6505
      %v7236 = vunpack.c.l.b16 %v6506
      %v7237 = vunpack.c.l.b16 %v6507
      %v7238 = vunpack.c.l.b16 %v6508
      %v7239 = vunpack.c.l.b16 %v6509
      %v7240 = vunpack.c.l.b16 %v6510
      %v7241 = vunpack.c.l.b16 %v6511
      %v7242 = vunpack.c.l.b16 %v6512
      %v7243 = vunpack.c.l.b16 %v6513
      %v7244 = vunpack.c.l.b16 %v6514
      %v7245 = vunpack.c.l.b16 %v6515
      %v7246 = vunpack.c.l.b16 %v6516
      %v7247 = vunpack.c.l.b16 %v6517
      %v7248 = vunpack.c.l.b16 %v6518
      %v7249 = vunpack.c.l.b16 %v6519
      %v7250 = vunpack.c.l.b16 %v6520
      %v7251 = vunpack.c.l.b16 %v6521
      %v7252 = vunpack.c.l.b16 %v6522
      %v7253 = vunpack.c.l.b16 %v6523
      %v7254 = vunpack.c.l.b16 %v6524
      %v7255 = vunpack.c.l.b16 %v6525
      %v7256 = vunpack.c.l.b16 %v6526
      %v7257 = vunpack.c.l.b16 %v6527
      %v7258 = vunpack.c.l.b16 %v6528
      %v7259 = vunpack.c.l.b16 %v6529
      %v7260 = vunpack.c.l.b16 %v6530
      %v7261 = vunpack.c.l.b16 %v6531
      %v7262 = vunpack.c.l.b16 %v6532
      %v7263 = vunpack.c.l.b16 %v6533
      %v7264 = vunpack.c.l.b16 %v6534
      %v7265 = vunpack.c.l.b16 %v6535
      %v7266 = vpack.c.b16 %v7235, %v7234
      %v7267 = vpack.c.b16 %v7237, %v7236
      %v7268 = vpack.c.b16 %v7239, %v7238
      %v7269 = vpack.c.b16 %v7241, %v7240
      %v7270 = vpack.c.b16 %v7243, %v7242
      %v7271 = vpack.c.b16 %v7245, %v7244
      %v7272 = vpack.c.b16 %v7247, %v7246
      %v7273 = vpack.c.b16 %v7249, %v7248
      %v7274 = vpack.c.b16 %v7251, %v7250
      %v7275 = vpack.c.b16 %v7253, %v7252
      %v7276 = vpack.c.b16 %v7255, %v7254
      %v7277 = vpack.c.b16 %v7257, %v7256
      %v7278 = vpack.c.b16 %v7259, %v7258
      %v7279 = vpack.c.b16 %v7261, %v7260
      %v7280 = vpack.c.b16 %v7263, %v7262
      %v7281 = vpack.c.b16 %v7265, %v7264
      %v7283 = vsel %vm1404, %v7266, 0
      %v7286 = vsel %vm1404, %v7267, 0
      %v7289 = vsel %vm1404, %v7268, 0
      %v7292 = vsel %vm1404, %v7269, 0
      %v7295 = vsel %vm1404, %v7270, 0
      %v7298 = vsel %vm1404, %v7271, 0
      %v7301 = vsel %vm1404, %v7272, 0
      %v7304 = vsel %vm1404, %v7273, 0
      %v7307 = vsel %vm1404, %v7274, 0
      %v7310 = vsel %vm1404, %v7275, 0
      %v7313 = vsel %vm1404, %v7276, 0
      %v7316 = vsel %vm1404, %v7277, 0
      %v7319 = vsel %vm1404, %v7278, 0
      %v7322 = vsel %vm1404, %v7279, 0
      %v7325 = vsel %vm1404, %v7280, 0
      %v7328 = vsel %vm1404, %v7281, 0
      %v7331 = vsel %vm1459, %v6536, 0
      %7333 = vmatprep.subr.bf16.mxu0 0
      %7334 = vmatpush1.bf16.msra.mxu0 0
      %7335 = vmatprep.subr.bf16.mxu0 0
      %7336 = vmatpush1.bf16.msra.mxu0 0
      %7337 = vmatprep.subr.bf16.mxu0 0
      %7338 = vmatpush1.bf16.msra.mxu0 0
      %7339 = vmatprep.subr.bf16.mxu0 0
      %7340 = vmatpush1.bf16.msra.mxu0 0
      %7341 = vmatprep.subr.bf16.mxu0 0
      %7342 = vmatpush1.bf16.msra.mxu0 0
      %7343 = vmatprep.subr.bf16.mxu0 0
      %7344 = vmatpush1.bf16.msra.mxu0 0
      %7345 = vmatprep.subr.bf16.mxu0 0
      %7346 = vmatpush1.bf16.msra.mxu0 0
      %7347 = vmatprep.subr.bf16.mxu0 0
      %7348 = vmatpush1.bf16.msra.mxu0 %v7331
      %7349 = vmatprep.subr.bf16.mxu0 0
      %7350 = vmatpush2.bf16.msra.mxu0 0
      %7351 = vmatprep.subr.bf16.mxu0 0
      %7352 = vmatpush2.bf16.msra.mxu0 0
      %7353 = vmatprep.subr.bf16.mxu0 0
      %7354 = vmatpush2.bf16.msra.mxu0 0
      %7355 = vmatprep.subr.bf16.mxu0 0
      %7356 = vmatpush2.bf16.msra.mxu0 0
      %7357 = vmatprep.subr.bf16.mxu0 0
      %7358 = vmatpush2.bf16.msra.mxu0 0
      %7359 = vmatprep.subr.bf16.mxu0 0
      %7360 = vmatpush2.bf16.msra.mxu0 0
      %7361 = vmatprep.subr.bf16.mxu0 0
      %7362 = vmatpush2.bf16.msra.mxu0 0
      %7363 = vmatprep.subr.bf16.mxu0 0
      %7364 = vmatpush2.bf16.msra.mxu0 0
      %7365 = vmatprep.mubr.bf16.mxu0 0
      %7366 = vmatmul.mubr.bf16.gmra.mxu0 %v7283
      %v7367 = vpop.f32.mrf.mxu0
      %v7368 = vadd.f32 %v7076, %v7367
      %v7369 = vpop.f32.mrf.mxu0
      %v7370 = vpop.f32.mrf.mxu0
      %v7371 = vadd.f32 %v7079, %v7370
      %v7372 = vpop.f32.mrf.mxu0
      %7373 = vmatprep.mubr.bf16.mxu0 0
      %7374 = vmatmul.mubr.bf16.gmra.mxu0 %v7286
      %v7375 = vpop.f32.mrf.mxu0
      %v7376 = vadd.f32 %v7084, %v7375
      %v7377 = vpop.f32.mrf.mxu0
      %v7378 = vpop.f32.mrf.mxu0
      %v7379 = vadd.f32 %v7087, %v7378
      %v7380 = vpop.f32.mrf.mxu0
      %7381 = vmatprep.mubr.bf16.mxu0 0
      %7382 = vmatmul.mubr.bf16.gmra.mxu0 %v7289
      %v7383 = vpop.f32.mrf.mxu0
      %v7384 = vadd.f32 %v7092, %v7383
      %v7385 = vpop.f32.mrf.mxu0
      %v7386 = vpop.f32.mrf.mxu0
      %v7387 = vadd.f32 %v7095, %v7386
      %v7388 = vpop.f32.mrf.mxu0
      %7389 = vmatprep.mubr.bf16.mxu0 0
      %7390 = vmatmul.mubr.bf16.gmra.mxu0 %v7292
      %v7391 = vpop.f32.mrf.mxu0
      %v7392 = vadd.f32 %v7100, %v7391
      %v7393 = vpop.f32.mrf.mxu0
      %v7394 = vpop.f32.mrf.mxu0
      %v7395 = vadd.f32 %v7103, %v7394
      %v7396 = vpop.f32.mrf.mxu0
      %7397 = vmatprep.mubr.bf16.mxu0 0
      %7398 = vmatmul.mubr.bf16.gmra.mxu0 %v7295
      %v7399 = vpop.f32.mrf.mxu0
      %v7400 = vadd.f32 %v7108, %v7399
      %v7401 = vpop.f32.mrf.mxu0
      %v7402 = vpop.f32.mrf.mxu0
      %v7403 = vadd.f32 %v7111, %v7402
      %v7404 = vpop.f32.mrf.mxu0
      %7405 = vmatprep.mubr.bf16.mxu0 0
      %7406 = vmatmul.mubr.bf16.gmra.mxu0 %v7298
      %v7407 = vpop.f32.mrf.mxu0
      %v7408 = vadd.f32 %v7116, %v7407
      %v7409 = vpop.f32.mrf.mxu0
      %v7410 = vpop.f32.mrf.mxu0
      %v7411 = vadd.f32 %v7119, %v7410
      %v7412 = vpop.f32.mrf.mxu0
      %7413 = vmatprep.mubr.bf16.mxu0 0
      %7414 = vmatmul.mubr.bf16.gmra.mxu0 %v7301
      %v7415 = vpop.f32.mrf.mxu0
      %v7416 = vadd.f32 %v7124, %v7415
      %v7417 = vpop.f32.mrf.mxu0
      %v7418 = vpop.f32.mrf.mxu0
      %v7419 = vadd.f32 %v7127, %v7418
      %v7420 = vpop.f32.mrf.mxu0
      %7421 = vmatprep.mubr.bf16.mxu0 0
      %7422 = vmatmul.mubr.bf16.gmra.mxu0 %v7304
      %v7423 = vpop.f32.mrf.mxu0
      %v7424 = vadd.f32 %v7132, %v7423
      %v7425 = vpop.f32.mrf.mxu0
      %v7426 = vpop.f32.mrf.mxu0
      %v7427 = vadd.f32 %v7135, %v7426
      %v7428 = vpop.f32.mrf.mxu0
      %7429 = vmatprep.mubr.bf16.mxu0 0
      %7430 = vmatmul.mubr.bf16.gmra.mxu0 %v7307
      %v7431 = vpop.f32.mrf.mxu0
      %v7432 = vadd.f32 %v7140, %v7431
      %v7433 = vpop.f32.mrf.mxu0
      %v7434 = vpop.f32.mrf.mxu0
      %v7435 = vadd.f32 %v7143, %v7434
      %v7436 = vpop.f32.mrf.mxu0
      %7437 = vmatprep.mubr.bf16.mxu0 0
      %7438 = vmatmul.mubr.bf16.gmra.mxu0 %v7310
      %v7439 = vpop.f32.mrf.mxu0
      %v7440 = vadd.f32 %v7148, %v7439
      %v7441 = vpop.f32.mrf.mxu0
      %v7442 = vpop.f32.mrf.mxu0
      %v7443 = vadd.f32 %v7151, %v7442
      %v7444 = vpop.f32.mrf.mxu0
      %7445 = vmatprep.mubr.bf16.mxu0 0
      %7446 = vmatmul.mubr.bf16.gmra.mxu0 %v7313
      %v7447 = vpop.f32.mrf.mxu0
      %v7448 = vadd.f32 %v7156, %v7447
      %v7449 = vpop.f32.mrf.mxu0
      %v7450 = vpop.f32.mrf.mxu0
      %v7451 = vadd.f32 %v7159, %v7450
      %v7452 = vpop.f32.mrf.mxu0
      %7453 = vmatprep.mubr.bf16.mxu0 0
      %7454 = vmatmul.mubr.bf16.gmra.mxu0 %v7316
      %v7455 = vpop.f32.mrf.mxu0
      %v7456 = vadd.f32 %v7164, %v7455
      %v7457 = vpop.f32.mrf.mxu0
      %v7458 = vpop.f32.mrf.mxu0
      %v7459 = vadd.f32 %v7167, %v7458
      %v7460 = vpop.f32.mrf.mxu0
      %7461 = vmatprep.mubr.bf16.mxu0 0
      %7462 = vmatmul.mubr.bf16.gmra.mxu0 %v7319
      %v7463 = vpop.f32.mrf.mxu0
      %v7464 = vadd.f32 %v7172, %v7463
      %v7465 = vpop.f32.mrf.mxu0
      %v7466 = vpop.f32.mrf.mxu0
      %v7467 = vadd.f32 %v7175, %v7466
      %v7468 = vpop.f32.mrf.mxu0
      %7469 = vmatprep.mubr.bf16.mxu0 0
      %7470 = vmatmul.mubr.bf16.gmra.mxu0 %v7322
      %v7471 = vpop.f32.mrf.mxu0
      %v7472 = vadd.f32 %v7180, %v7471
      %v7473 = vpop.f32.mrf.mxu0
      %v7474 = vpop.f32.mrf.mxu0
      %v7475 = vadd.f32 %v7183, %v7474
      %v7476 = vpop.f32.mrf.mxu0
      %7477 = vmatprep.mubr.bf16.mxu0 0
      %7478 = vmatmul.mubr.bf16.gmra.mxu0 %v7325
      %v7479 = vpop.f32.mrf.mxu0
      %v7480 = vadd.f32 %v7188, %v7479
      %v7481 = vpop.f32.mrf.mxu0
      %v7482 = vpop.f32.mrf.mxu0
      %v7483 = vadd.f32 %v7191, %v7482
      %v7484 = vpop.f32.mrf.mxu0
      %7485 = vmatprep.mubr.bf16.mxu0 0
      %7486 = vmatmul.mubr.bf16.gmra.mxu0 %v7328
      %v7487 = vpop.f32.mrf.mxu0
      %v7488 = vadd.f32 %v7196, %v7487
      %v7489 = vpop.f32.mrf.mxu0
      %v7490 = vpop.f32.mrf.mxu0
      %v7491 = vadd.f32 %v7199, %v7490
      %v7492 = vpop.f32.mrf.mxu0
      %7493 = vdwg.mxu0
      %v7494 = vld [vmem:[#allocation2] sm:$0xe]
      %v7495 = vld [vmem:[#allocation2 + $0xc] sm:$0xe]
      %v7496 = vld [vmem:[#allocation2 + $0x18] sm:$0xe]
      %v7497 = vld [vmem:[#allocation2 + $0x24] sm:$0xe]
      %v7498 = vld [vmem:[#allocation2 + $0x30] sm:$0xe]
      %v7499 = vld [vmem:[#allocation2 + $0x3c] sm:$0xe]
      %v7500 = vld [vmem:[#allocation2 + $0x48] sm:$0xe]
      %v7501 = vld [vmem:[#allocation2 + $0x54] sm:$0xe]
      %v7502 = vld [vmem:[#allocation2 + $0x60] sm:$0xe]
      %v7503 = vld [vmem:[#allocation2 + $0x6c] sm:$0xe]
      %v7504 = vld [vmem:[#allocation2 + $0x78] sm:$0xe]
      %v7505 = vld [vmem:[#allocation2 + $0x84] sm:$0xe]
      %v7506 = vld [vmem:[#allocation2 + $0x90] sm:$0xe]
      %v7507 = vld [vmem:[#allocation2 + $0x9c] sm:$0xe]
      %v7508 = vld [vmem:[#allocation2 + $0xa8] sm:$0xe]
      %v7509 = vld [vmem:[#allocation2 + $0xb4] sm:$0xe]
      %v7542 = vrot.slane %v7494, 5
      %v7543 = vrot.slane %v7542, 4
      %v7544 = vrot.slane %v6505, 5
      %v7545 = vsel %vm2020, %v7543, %v7544
      %v7546 = vrot.slane %v7544, 4
      %v7547 = vrot.slane %v6537, 5
      %v7548 = vsel %vm2020, %v7546, %v7547
      %v7549 = vrot.slane %v7495, 5
      %v7550 = vrot.slane %v7549, 4
      %v7551 = vrot.slane %v6507, 5
      %v7552 = vsel %vm2020, %v7550, %v7551
      %v7553 = vrot.slane %v7551, 4
      %v7554 = vrot.slane %v6538, 5
      %v7555 = vsel %vm2020, %v7553, %v7554
      %v7556 = vrot.slane %v7496, 5
      %v7557 = vrot.slane %v7556, 4
      %v7558 = vrot.slane %v6509, 5
      %v7559 = vsel %vm2020, %v7557, %v7558
      %v7560 = vrot.slane %v7558, 4
      %v7561 = vrot.slane %v6539, 5
      %v7562 = vsel %vm2020, %v7560, %v7561
      %v7563 = vrot.slane %v7497, 5
      %v7564 = vrot.slane %v7563, 4
      %v7565 = vrot.slane %v6511, 5
      %v7566 = vsel %vm2020, %v7564, %v7565
      %v7567 = vrot.slane %v7565, 4
      %v7568 = vrot.slane %v6540, 5
      %v7569 = vsel %vm2020, %v7567, %v7568
      %v7570 = vrot.slane %v7498, 5
      %v7571 = vrot.slane %v7570, 4
      %v7572 = vrot.slane %v6513, 5
      %v7573 = vsel %vm2020, %v7571, %v7572
      %v7574 = vrot.slane %v7572, 4
      %v7575 = vrot.slane %v6541, 5
      %v7576 = vsel %vm2020, %v7574, %v7575
      %v7577 = vrot.slane %v7499, 5
      %v7578 = vrot.slane %v7577, 4
      %v7579 = vrot.slane %v6515, 5
      %v7580 = vsel %vm2020, %v7578, %v7579
      %v7581 = vrot.slane %v7579, 4
      %v7582 = vrot.slane %v6542, 5
      %v7583 = vsel %vm2020, %v7581, %v7582
      %v7584 = vrot.slane %v7500, 5
      %v7585 = vrot.slane %v7584, 4
      %v7586 = vrot.slane %v6517, 5
      %v7587 = vsel %vm2020, %v7585, %v7586
      %v7588 = vrot.slane %v7586, 4
      %v7589 = vrot.slane %v6543, 5
      %v7590 = vsel %vm2020, %v7588, %v7589
      %v7591 = vrot.slane %v7501, 5
      %v7592 = vrot.slane %v7591, 4
      %v7593 = vrot.slane %v6519, 5
      %v7594 = vsel %vm2020, %v7592, %v7593
      %v7595 = vrot.slane %v7593, 4
      %v7596 = vrot.slane %v6544, 5
      %v7597 = vsel %vm2020, %v7595, %v7596
      %v7598 = vrot.slane %v7502, 5
      %v7599 = vrot.slane %v7598, 4
      %v7600 = vrot.slane %v6521, 5
      %v7601 = vsel %vm2020, %v7599, %v7600
      %v7602 = vrot.slane %v7600, 4
      %v7603 = vrot.slane %v6545, 5
      %v7604 = vsel %vm2020, %v7602, %v7603
      %v7605 = vrot.slane %v7503, 5
      %v7606 = vrot.slane %v7605, 4
      %v7607 = vrot.slane %v6523, 5
      %v7608 = vsel %vm2020, %v7606, %v7607
      %v7609 = vrot.slane %v7607, 4
      %v7610 = vrot.slane %v6546, 5
      %v7611 = vsel %vm2020, %v7609, %v7610
      %v7612 = vrot.slane %v7504, 5
      %v7613 = vrot.slane %v7612, 4
      %v7614 = vrot.slane %v6525, 5
      %v7615 = vsel %vm2020, %v7613, %v7614
      %v7616 = vrot.slane %v7614, 4
      %v7617 = vrot.slane %v6547, 5
      %v7618 = vsel %vm2020, %v7616, %v7617
      %v7619 = vrot.slane %v7505, 5
      %v7620 = vrot.slane %v7619, 4
      %v7621 = vrot.slane %v6527, 5
      %v7622 = vsel %vm2020, %v7620, %v7621
      %v7623 = vrot.slane %v7621, 4
      %v7624 = vrot.slane %v6548, 5
      %v7625 = vsel %vm2020, %v7623, %v7624
      %v7626 = vrot.slane %v7506, 5
      %v7627 = vrot.slane %v7626, 4
      %v7628 = vrot.slane %v6529, 5
      %v7629 = vsel %vm2020, %v7627, %v7628
      %v7630 = vrot.slane %v7628, 4
      %v7631 = vrot.slane %v6549, 5
      %v7632 = vsel %vm2020, %v7630, %v7631
      %v7633 = vrot.slane %v7507, 5
      %v7634 = vrot.slane %v7633, 4
      %v7635 = vrot.slane %v6531, 5
      %v7636 = vsel %vm2020, %v7634, %v7635
      %v7637 = vrot.slane %v7635, 4
      %v7638 = vrot.slane %v6550, 5
      %v7639 = vsel %vm2020, %v7637, %v7638
      %v7640 = vrot.slane %v7508, 5
      %v7641 = vrot.slane %v7640, 4
      %v7642 = vrot.slane %v6533, 5
      %v7643 = vsel %vm2020, %v7641, %v7642
      %v7644 = vrot.slane %v7642, 4
      %v7645 = vrot.slane %v6551, 5
      %v7646 = vsel %vm2020, %v7644, %v7645
      %v7647 = vrot.slane %v7509, 5
      %v7648 = vrot.slane %v7647, 4
      %v7649 = vrot.slane %v6535, 5
      %v7650 = vsel %vm2020, %v7648, %v7649
      %v7651 = vrot.slane %v7649, 4
      %v7652 = vrot.slane %v6552, 5
      %v7653 = vsel %vm2020, %v7651, %v7652
      %v7654 = vld [vmem:[%s2 + $0x4] sm:$0x3]
      %v7655 = vunpack.c.l.b16 %v7545
      %v7656 = vunpack.c.l.b16 %v7548
      %v7657 = vunpack.c.l.b16 %v7552
      %v7658 = vunpack.c.l.b16 %v7555
      %v7659 = vunpack.c.l.b16 %v7559
      %v7660 = vunpack.c.l.b16 %v7562
      %v7661 = vunpack.c.l.b16 %v7566
      %v7662 = vunpack.c.l.b16 %v7569
      %v7663 = vunpack.c.l.b16 %v7573
      %v7664 = vunpack.c.l.b16 %v7576
      %v7665 = vunpack.c.l.b16 %v7580
      %v7666 = vunpack.c.l.b16 %v7583
      %v7667 = vunpack.c.l.b16 %v7587
      %v7668 = vunpack.c.l.b16 %v7590
      %v7669 = vunpack.c.l.b16 %v7594
      %v7670 = vunpack.c.l.b16 %v7597
      %v7671 = vunpack.c.l.b16 %v7601
      %v7672 = vunpack.c.l.b16 %v7604
      %v7673 = vunpack.c.l.b16 %v7608
      %v7674 = vunpack.c.l.b16 %v7611
      %v7675 = vunpack.c.l.b16 %v7615
      %v7676 = vunpack.c.l.b16 %v7618
      %v7677 = vunpack.c.l.b16 %v7622
      %v7678 = vunpack.c.l.b16 %v7625
      %v7679 = vunpack.c.l.b16 %v7629
      %v7680 = vunpack.c.l.b16 %v7632
      %v7681 = vunpack.c.l.b16 %v7636
      %v7682 = vunpack.c.l.b16 %v7639
      %v7683 = vunpack.c.l.b16 %v7643
      %v7684 = vunpack.c.l.b16 %v7646
      %v7685 = vunpack.c.l.b16 %v7650
      %v7686 = vunpack.c.l.b16 %v7653
      %v7687 = vpack.c.b16 %v7656, %v7655
      %v7688 = vpack.c.b16 %v7658, %v7657
      %v7689 = vpack.c.b16 %v7660, %v7659
      %v7690 = vpack.c.b16 %v7662, %v7661
      %v7691 = vpack.c.b16 %v7664, %v7663
      %v7692 = vpack.c.b16 %v7666, %v7665
      %v7693 = vpack.c.b16 %v7668, %v7667
      %v7694 = vpack.c.b16 %v7670, %v7669
      %v7695 = vpack.c.b16 %v7672, %v7671
      %v7696 = vpack.c.b16 %v7674, %v7673
      %v7697 = vpack.c.b16 %v7676, %v7675
      %v7698 = vpack.c.b16 %v7678, %v7677
      %v7699 = vpack.c.b16 %v7680, %v7679
      %v7700 = vpack.c.b16 %v7682, %v7681
      %v7701 = vpack.c.b16 %v7684, %v7683
      %v7702 = vpack.c.b16 %v7686, %v7685
      %v7704 = vsel %vm1404, %v7687, 0
      %v7707 = vsel %vm1404, %v7688, 0
      %v7710 = vsel %vm1404, %v7689, 0
      %v7713 = vsel %vm1404, %v7690, 0
      %v7716 = vsel %vm1404, %v7691, 0
      %v7719 = vsel %vm1404, %v7692, 0
      %v7722 = vsel %vm1404, %v7693, 0
      %v7725 = vsel %vm1404, %v7694, 0
      %v7728 = vsel %vm1404, %v7695, 0
      %v7731 = vsel %vm1404, %v7696, 0
      %v7734 = vsel %vm1404, %v7697, 0
      %v7737 = vsel %vm1404, %v7698, 0
      %v7740 = vsel %vm1404, %v7699, 0
      %v7743 = vsel %vm1404, %v7700, 0
      %v7746 = vsel %vm1404, %v7701, 0
      %v7749 = vsel %vm1404, %v7702, 0
      %v7752 = vsel %vm1459, %v7654, 0
      %7754 = vmatprep.subr.bf16.mxu0 0
      %7755 = vmatpush1.bf16.msra.mxu0 0
      %7756 = vmatprep.subr.bf16.mxu0 0
      %7757 = vmatpush1.bf16.msra.mxu0 0
      %7758 = vmatprep.subr.bf16.mxu0 0
      %7759 = vmatpush1.bf16.msra.mxu0 0
      %7760 = vmatprep.subr.bf16.mxu0 0
      %7761 = vmatpush1.bf16.msra.mxu0 0
      %7762 = vmatprep.subr.bf16.mxu0 0
      %7763 = vmatpush1.bf16.msra.mxu0 0
      %7764 = vmatprep.subr.bf16.mxu0 0
      %7765 = vmatpush1.bf16.msra.mxu0 0
      %7766 = vmatprep.subr.bf16.mxu0 0
      %7767 = vmatpush1.bf16.msra.mxu0 0
      %7768 = vmatprep.subr.bf16.mxu0 0
      %7769 = vmatpush1.bf16.msra.mxu0 %v7752
      %7770 = vmatprep.subr.bf16.mxu0 0
      %7771 = vmatpush2.bf16.msra.mxu0 0
      %7772 = vmatprep.subr.bf16.mxu0 0
      %7773 = vmatpush2.bf16.msra.mxu0 0
      %7774 = vmatprep.subr.bf16.mxu0 0
      %7775 = vmatpush2.bf16.msra.mxu0 0
      %7776 = vmatprep.subr.bf16.mxu0 0
      %7777 = vmatpush2.bf16.msra.mxu0 0
      %7778 = vmatprep.subr.bf16.mxu0 0
      %7779 = vmatpush2.bf16.msra.mxu0 0
      %7780 = vmatprep.subr.bf16.mxu0 0
      %7781 = vmatpush2.bf16.msra.mxu0 0
      %7782 = vmatprep.subr.bf16.mxu0 0
      %7783 = vmatpush2.bf16.msra.mxu0 0
      %7784 = vmatprep.subr.bf16.mxu0 0
      %7785 = vmatpush2.bf16.msra.mxu0 0
      %7786 = vmatprep.mubr.bf16.mxu0 0
      %7787 = vmatmul.mubr.bf16.gmra.mxu0 %v7704
      %v7788 = vpop.f32.mrf.mxu0
      %v7789 = vadd.f32 0.0, %v7788
      %v7790 = vpop.f32.mrf.mxu0
      %v7791 = vpop.f32.mrf.mxu0
      %v7792 = vadd.f32 0.0, %v7791
      %v7793 = vpop.f32.mrf.mxu0
      %7794 = vmatprep.mubr.bf16.mxu0 0
      %7795 = vmatmul.mubr.bf16.gmra.mxu0 %v7707
      %v7796 = vpop.f32.mrf.mxu0
      %v7797 = vadd.f32 0.0, %v7796
      %v7798 = vpop.f32.mrf.mxu0
      %v7799 = vpop.f32.mrf.mxu0
      %v7800 = vadd.f32 0.0, %v7799
      %v7801 = vpop.f32.mrf.mxu0
      %7802 = vmatprep.mubr.bf16.mxu0 0
      %7803 = vmatmul.mubr.bf16.gmra.mxu0 %v7710
      %v7804 = vpop.f32.mrf.mxu0
      %v7805 = vadd.f32 0.0, %v7804
      %v7806 = vpop.f32.mrf.mxu0
      %v7807 = vpop.f32.mrf.mxu0
      %v7808 = vadd.f32 0.0, %v7807
      %v7809 = vpop.f32.mrf.mxu0
      %7810 = vmatprep.mubr.bf16.mxu0 0
      %7811 = vmatmul.mubr.bf16.gmra.mxu0 %v7713
      %v7812 = vpop.f32.mrf.mxu0
      %v7813 = vadd.f32 0.0, %v7812
      %v7814 = vpop.f32.mrf.mxu0
      %v7815 = vpop.f32.mrf.mxu0
      %v7816 = vadd.f32 0.0, %v7815
      %v7817 = vpop.f32.mrf.mxu0
      %7818 = vmatprep.mubr.bf16.mxu0 0
      %7819 = vmatmul.mubr.bf16.gmra.mxu0 %v7716
      %v7820 = vpop.f32.mrf.mxu0
      %v7821 = vadd.f32 0.0, %v7820
      %v7822 = vpop.f32.mrf.mxu0
      %v7823 = vpop.f32.mrf.mxu0
      %v7824 = vadd.f32 0.0, %v7823
      %v7825 = vpop.f32.mrf.mxu0
      %7826 = vmatprep.mubr.bf16.mxu0 0
      %7827 = vmatmul.mubr.bf16.gmra.mxu0 %v7719
      %v7828 = vpop.f32.mrf.mxu0
      %v7829 = vadd.f32 0.0, %v7828
      %v7830 = vpop.f32.mrf.mxu0
      %v7831 = vpop.f32.mrf.mxu0
      %v7832 = vadd.f32 0.0, %v7831
      %v7833 = vpop.f32.mrf.mxu0
      %7834 = vmatprep.mubr.bf16.mxu0 0
      %7835 = vmatmul.mubr.bf16.gmra.mxu0 %v7722
      %v7836 = vpop.f32.mrf.mxu0
      %v7837 = vadd.f32 0.0, %v7836
      %v7838 = vpop.f32.mrf.mxu0
      %v7839 = vpop.f32.mrf.mxu0
      %v7840 = vadd.f32 0.0, %v7839
      %v7841 = vpop.f32.mrf.mxu0
      %7842 = vmatprep.mubr.bf16.mxu0 0
      %7843 = vmatmul.mubr.bf16.gmra.mxu0 %v7725
      %v7844 = vpop.f32.mrf.mxu0
      %v7845 = vadd.f32 0.0, %v7844
      %v7846 = vpop.f32.mrf.mxu0
      %v7847 = vpop.f32.mrf.mxu0
      %v7848 = vadd.f32 0.0, %v7847
      %v7849 = vpop.f32.mrf.mxu0
      %7850 = vmatprep.mubr.bf16.mxu0 0
      %7851 = vmatmul.mubr.bf16.gmra.mxu0 %v7728
      %v7852 = vpop.f32.mrf.mxu0
      %v7853 = vadd.f32 0.0, %v7852
      %v7854 = vpop.f32.mrf.mxu0
      %v7855 = vpop.f32.mrf.mxu0
      %v7856 = vadd.f32 0.0, %v7855
      %v7857 = vpop.f32.mrf.mxu0
      %7858 = vmatprep.mubr.bf16.mxu0 0
      %7859 = vmatmul.mubr.bf16.gmra.mxu0 %v7731
      %v7860 = vpop.f32.mrf.mxu0
      %v7861 = vadd.f32 0.0, %v7860
      %v7862 = vpop.f32.mrf.mxu0
      %v7863 = vpop.f32.mrf.mxu0
      %v7864 = vadd.f32 0.0, %v7863
      %v7865 = vpop.f32.mrf.mxu0
      %7866 = vmatprep.mubr.bf16.mxu0 0
      %7867 = vmatmul.mubr.bf16.gmra.mxu0 %v7734
      %v7868 = vpop.f32.mrf.mxu0
      %v7869 = vadd.f32 0.0, %v7868
      %v7870 = vpop.f32.mrf.mxu0
      %v7871 = vpop.f32.mrf.mxu0
      %v7872 = vadd.f32 0.0, %v7871
      %v7873 = vpop.f32.mrf.mxu0
      %7874 = vmatprep.mubr.bf16.mxu0 0
      %7875 = vmatmul.mubr.bf16.gmra.mxu0 %v7737
      %v7876 = vpop.f32.mrf.mxu0
      %v7877 = vadd.f32 0.0, %v7876
      %v7878 = vpop.f32.mrf.mxu0
      %v7879 = vpop.f32.mrf.mxu0
      %v7880 = vadd.f32 0.0, %v7879
      %v7881 = vpop.f32.mrf.mxu0
      %7882 = vmatprep.mubr.bf16.mxu0 0
      %7883 = vmatmul.mubr.bf16.gmra.mxu0 %v7740
      %v7884 = vpop.f32.mrf.mxu0
      %v7885 = vadd.f32 0.0, %v7884
      %v7886 = vpop.f32.mrf.mxu0
      %v7887 = vpop.f32.mrf.mxu0
      %v7888 = vadd.f32 0.0, %v7887
      %v7889 = vpop.f32.mrf.mxu0
      %7890 = vmatprep.mubr.bf16.mxu0 0
      %7891 = vmatmul.mubr.bf16.gmra.mxu0 %v7743
      %v7892 = vpop.f32.mrf.mxu0
      %v7893 = vadd.f32 0.0, %v7892
      %v7894 = vpop.f32.mrf.mxu0
      %v7895 = vpop.f32.mrf.mxu0
      %v7896 = vadd.f32 0.0, %v7895
      %v7897 = vpop.f32.mrf.mxu0
      %7898 = vmatprep.mubr.bf16.mxu0 0
      %7899 = vmatmul.mubr.bf16.gmra.mxu0 %v7746
      %v7900 = vpop.f32.mrf.mxu0
      %v7901 = vadd.f32 0.0, %v7900
      %v7902 = vpop.f32.mrf.mxu0
      %v7903 = vpop.f32.mrf.mxu0
      %v7904 = vadd.f32 0.0, %v7903
      %v7905 = vpop.f32.mrf.mxu0
      %7906 = vmatprep.mubr.bf16.mxu0 0
      %7907 = vmatmul.mubr.bf16.gmra.mxu0 %v7749
      %v7908 = vpop.f32.mrf.mxu0
      %v7909 = vadd.f32 0.0, %v7908
      %v7910 = vpop.f32.mrf.mxu0
      %v7911 = vpop.f32.mrf.mxu0
      %v7912 = vadd.f32 0.0, %v7911
      %v7913 = vpop.f32.mrf.mxu0
      %7914 = vdwg.mxu0
      %v7915 = vadd.f32 %v7368, %v7789
      %v7916 = vadd.f32 %v7371, %v7792
      %v7917 = vadd.f32 %v7376, %v7797
      %v7918 = vadd.f32 %v7379, %v7800
      %v7919 = vadd.f32 %v7384, %v7805
      %v7920 = vadd.f32 %v7387, %v7808
      %v7921 = vadd.f32 %v7392, %v7813
      %v7922 = vadd.f32 %v7395, %v7816
      %v7923 = vadd.f32 %v7400, %v7821
      %v7924 = vadd.f32 %v7403, %v7824
      %v7925 = vadd.f32 %v7408, %v7829
      %v7926 = vadd.f32 %v7411, %v7832
      %v7927 = vadd.f32 %v7416, %v7837
      %v7928 = vadd.f32 %v7419, %v7840
      %v7929 = vadd.f32 %v7424, %v7845
      %v7930 = vadd.f32 %v7427, %v7848
      %v7931 = vadd.f32 %v7432, %v7853
      %v7932 = vadd.f32 %v7435, %v7856
      %v7933 = vadd.f32 %v7440, %v7861
      %v7934 = vadd.f32 %v7443, %v7864
      %v7935 = vadd.f32 %v7448, %v7869
      %v7936 = vadd.f32 %v7451, %v7872
      %v7937 = vadd.f32 %v7456, %v7877
      %v7938 = vadd.f32 %v7459, %v7880
      %v7939 = vadd.f32 %v7464, %v7885
      %v7940 = vadd.f32 %v7467, %v7888
      %v7941 = vadd.f32 %v7472, %v7893
      %v7942 = vadd.f32 %v7475, %v7896
      %v7943 = vadd.f32 %v7480, %v7901
      %v7944 = vadd.f32 %v7483, %v7904
      %v7945 = vadd.f32 %v7488, %v7909
      %v7946 = vadd.f32 %v7491, %v7912
      %v7947 = vld [vmem:[%s2472] sm:$0xf]
      %v7948 = vld [vmem:[%s2472 + $0x4] sm:$0xf]
      %v7949 = vld [vmem:[%s2472 + $0xc] sm:$0xf]
      %v7950 = vld [vmem:[%s2472 + $0x10] sm:$0xf]
      %v7951 = vld [vmem:[%s2472 + $0x18] sm:$0xf]
      %v7952 = vld [vmem:[%s2472 + $0x1c] sm:$0xf]
      %v7953 = vld [vmem:[%s2472 + $0x24] sm:$0xf]
      %v7954 = vld [vmem:[%s2472 + $0x28] sm:$0xf]
      %v7955 = vld [vmem:[%s2472 + $0x30] sm:$0xf]
      %v7956 = vld [vmem:[%s2472 + $0x34] sm:$0xf]
      %v7957 = vld [vmem:[%s2472 + $0x3c] sm:$0xf]
      %v7958 = vld [vmem:[%s2472 + $0x40] sm:$0xf]
      %v7959 = vld [vmem:[%s2472 + $0x48] sm:$0xf]
      %v7960 = vld [vmem:[%s2472 + $0x4c] sm:$0xf]
      %v7961 = vld [vmem:[%s2472 + $0x54] sm:$0xf]
      %v7962 = vld [vmem:[%s2472 + $0x58] sm:$0xf]
      %v7963 = vld [vmem:[%s2472 + $0x60] sm:$0xf]
      %v7964 = vld [vmem:[%s2472 + $0x64] sm:$0xf]
      %v7965 = vld [vmem:[%s2472 + $0x6c] sm:$0xf]
      %v7966 = vld [vmem:[%s2472 + $0x70] sm:$0xf]
      %v7967 = vld [vmem:[%s2472 + $0x78] sm:$0xf]
      %v7968 = vld [vmem:[%s2472 + $0x7c] sm:$0xf]
      %v7969 = vld [vmem:[%s2472 + $0x84] sm:$0xf]
      %v7970 = vld [vmem:[%s2472 + $0x88] sm:$0xf]
      %v7971 = vld [vmem:[%s2472 + $0x90] sm:$0xf]
      %v7972 = vld [vmem:[%s2472 + $0x94] sm:$0xf]
      %v7973 = vld [vmem:[%s2472 + $0x9c] sm:$0xf]
      %v7974 = vld [vmem:[%s2472 + $0xa0] sm:$0xf]
      %v7975 = vld [vmem:[%s2472 + $0xa8] sm:$0xf]
      %v7976 = vld [vmem:[%s2472 + $0xac] sm:$0xf]
      %v7977 = vld [vmem:[%s2472 + $0xb4] sm:$0xf]
      %v7978 = vld [vmem:[%s2472 + $0xb8] sm:$0xf]
      %v7979 = vld [vmem:[%s2 + $0x4] sm:$0xc]
      %v8012 = vunpack.c.l.b16 %v7947
      %v8013 = vunpack.c.l.b16 %v7948
      %v8014 = vunpack.c.l.b16 %v7949
      %v8015 = vunpack.c.l.b16 %v7950
      %v8016 = vunpack.c.l.b16 %v7951
      %v8017 = vunpack.c.l.b16 %v7952
      %v8018 = vunpack.c.l.b16 %v7953
      %v8019 = vunpack.c.l.b16 %v7954
      %v8020 = vunpack.c.l.b16 %v7955
      %v8021 = vunpack.c.l.b16 %v7956
      %v8022 = vunpack.c.l.b16 %v7957
      %v8023 = vunpack.c.l.b16 %v7958
      %v8024 = vunpack.c.l.b16 %v7959
      %v8025 = vunpack.c.l.b16 %v7960
      %v8026 = vunpack.c.l.b16 %v7961
      %v8027 = vunpack.c.l.b16 %v7962
      %v8028 = vunpack.c.l.b16 %v7963
      %v8029 = vunpack.c.l.b16 %v7964
      %v8030 = vunpack.c.l.b16 %v7965
      %v8031 = vunpack.c.l.b16 %v7966
      %v8032 = vunpack.c.l.b16 %v7967
      %v8033 = vunpack.c.l.b16 %v7968
      %v8034 = vunpack.c.l.b16 %v7969
      %v8035 = vunpack.c.l.b16 %v7970
      %v8036 = vunpack.c.l.b16 %v7971
      %v8037 = vunpack.c.l.b16 %v7972
      %v8038 = vunpack.c.l.b16 %v7973
      %v8039 = vunpack.c.l.b16 %v7974
      %v8040 = vunpack.c.l.b16 %v7975
      %v8041 = vunpack.c.l.b16 %v7976
      %v8042 = vunpack.c.l.b16 %v7977
      %v8043 = vunpack.c.l.b16 %v7978
      %v8044 = vpack.c.b16 %v8013, %v8012
      %v8045 = vpack.c.b16 %v8015, %v8014
      %v8046 = vpack.c.b16 %v8017, %v8016
      %v8047 = vpack.c.b16 %v8019, %v8018
      %v8048 = vpack.c.b16 %v8021, %v8020
      %v8049 = vpack.c.b16 %v8023, %v8022
      %v8050 = vpack.c.b16 %v8025, %v8024
      %v8051 = vpack.c.b16 %v8027, %v8026
      %v8052 = vpack.c.b16 %v8029, %v8028
      %v8053 = vpack.c.b16 %v8031, %v8030
      %v8054 = vpack.c.b16 %v8033, %v8032
      %v8055 = vpack.c.b16 %v8035, %v8034
      %v8056 = vpack.c.b16 %v8037, %v8036
      %v8057 = vpack.c.b16 %v8039, %v8038
      %v8058 = vpack.c.b16 %v8041, %v8040
      %v8059 = vpack.c.b16 %v8043, %v8042
      %v8061 = vunpack.c.l.b16 %v7979
      %v8062 = vpack.c.b16 %v8061, %v8061
      %v8063 = vrot.slane %v8062, 2
      %v8065 = vsel %vm1404, %v8044, 0
      %v8068 = vsel %vm1404, %v8045, 0
      %v8071 = vsel %vm1404, %v8046, 0
      %v8074 = vsel %vm1404, %v8047, 0
      %v8077 = vsel %vm1404, %v8048, 0
      %v8080 = vsel %vm1404, %v8049, 0
      %v8083 = vsel %vm1404, %v8050, 0
      %v8086 = vsel %vm1404, %v8051, 0
      %v8089 = vsel %vm1404, %v8052, 0
      %v8092 = vsel %vm1404, %v8053, 0
      %v8095 = vsel %vm1404, %v8054, 0
      %v8098 = vsel %vm1404, %v8055, 0
      %v8101 = vsel %vm1404, %v8056, 0
      %v8104 = vsel %vm1404, %v8057, 0
      %v8107 = vsel %vm1404, %v8058, 0
      %v8110 = vsel %vm1404, %v8059, 0
      %v8113 = vsel %vm1459, %v8063, 0
      %8115 = vmatprep.subr.bf16.mxu0 0
      %8116 = vmatpush1.bf16.msra.mxu0 0
      %8117 = vmatprep.subr.bf16.mxu0 0
      %8118 = vmatpush1.bf16.msra.mxu0 0
      %8119 = vmatprep.subr.bf16.mxu0 0
      %8120 = vmatpush1.bf16.msra.mxu0 0
      %8121 = vmatprep.subr.bf16.mxu0 0
      %8122 = vmatpush1.bf16.msra.mxu0 0
      %8123 = vmatprep.subr.bf16.mxu0 0
      %8124 = vmatpush1.bf16.msra.mxu0 0
      %8125 = vmatprep.subr.bf16.mxu0 0
      %8126 = vmatpush1.bf16.msra.mxu0 0
      %8127 = vmatprep.subr.bf16.mxu0 0
      %8128 = vmatpush1.bf16.msra.mxu0 0
      %8129 = vmatprep.subr.bf16.mxu0 0
      %8130 = vmatpush1.bf16.msra.mxu0 %v8113
      %8131 = vmatprep.subr.bf16.mxu0 0
      %8132 = vmatpush2.bf16.msra.mxu0 0
      %8133 = vmatprep.subr.bf16.mxu0 0
      %8134 = vmatpush2.bf16.msra.mxu0 0
      %8135 = vmatprep.subr.bf16.mxu0 0
      %8136 = vmatpush2.bf16.msra.mxu0 0
      %8137 = vmatprep.subr.bf16.mxu0 0
      %8138 = vmatpush2.bf16.msra.mxu0 0
      %8139 = vmatprep.subr.bf16.mxu0 0
      %8140 = vmatpush2.bf16.msra.mxu0 0
      %8141 = vmatprep.subr.bf16.mxu0 0
      %8142 = vmatpush2.bf16.msra.mxu0 0
      %8143 = vmatprep.subr.bf16.mxu0 0
      %8144 = vmatpush2.bf16.msra.mxu0 0
      %8145 = vmatprep.subr.bf16.mxu0 0
      %8146 = vmatpush2.bf16.msra.mxu0 0
      %8147 = vmatprep.mubr.bf16.mxu0 0
      %8148 = vmatmul.mubr.bf16.gmra.mxu0 %v8065
      %v8149 = vpop.f32.mrf.mxu0
      %v8150 = vadd.f32 0.0, %v8149
      %v8151 = vpop.f32.mrf.mxu0
      %v8152 = vpop.f32.mrf.mxu0
      %v8153 = vadd.f32 0.0, %v8152
      %v8154 = vpop.f32.mrf.mxu0
      %8155 = vmatprep.mubr.bf16.mxu0 0
      %8156 = vmatmul.mubr.bf16.gmra.mxu0 %v8068
      %v8157 = vpop.f32.mrf.mxu0
      %v8158 = vadd.f32 0.0, %v8157
      %v8159 = vpop.f32.mrf.mxu0
      %v8160 = vpop.f32.mrf.mxu0
      %v8161 = vadd.f32 0.0, %v8160
      %v8162 = vpop.f32.mrf.mxu0
      %8163 = vmatprep.mubr.bf16.mxu0 0
      %8164 = vmatmul.mubr.bf16.gmra.mxu0 %v8071
      %v8165 = vpop.f32.mrf.mxu0
      %v8166 = vadd.f32 0.0, %v8165
      %v8167 = vpop.f32.mrf.mxu0
      %v8168 = vpop.f32.mrf.mxu0
      %v8169 = vadd.f32 0.0, %v8168
      %v8170 = vpop.f32.mrf.mxu0
      %8171 = vmatprep.mubr.bf16.mxu0 0
      %8172 = vmatmul.mubr.bf16.gmra.mxu0 %v8074
      %v8173 = vpop.f32.mrf.mxu0
      %v8174 = vadd.f32 0.0, %v8173
      %v8175 = vpop.f32.mrf.mxu0
      %v8176 = vpop.f32.mrf.mxu0
      %v8177 = vadd.f32 0.0, %v8176
      %v8178 = vpop.f32.mrf.mxu0
      %8179 = vmatprep.mubr.bf16.mxu0 0
      %8180 = vmatmul.mubr.bf16.gmra.mxu0 %v8077
      %v8181 = vpop.f32.mrf.mxu0
      %v8182 = vadd.f32 0.0, %v8181
      %v8183 = vpop.f32.mrf.mxu0
      %v8184 = vpop.f32.mrf.mxu0
      %v8185 = vadd.f32 0.0, %v8184
      %v8186 = vpop.f32.mrf.mxu0
      %8187 = vmatprep.mubr.bf16.mxu0 0
      %8188 = vmatmul.mubr.bf16.gmra.mxu0 %v8080
      %v8189 = vpop.f32.mrf.mxu0
      %v8190 = vadd.f32 0.0, %v8189
      %v8191 = vpop.f32.mrf.mxu0
      %v8192 = vpop.f32.mrf.mxu0
      %v8193 = vadd.f32 0.0, %v8192
      %v8194 = vpop.f32.mrf.mxu0
      %8195 = vmatprep.mubr.bf16.mxu0 0
      %8196 = vmatmul.mubr.bf16.gmra.mxu0 %v8083
      %v8197 = vpop.f32.mrf.mxu0
      %v8198 = vadd.f32 0.0, %v8197
      %v8199 = vpop.f32.mrf.mxu0
      %v8200 = vpop.f32.mrf.mxu0
      %v8201 = vadd.f32 0.0, %v8200
      %v8202 = vpop.f32.mrf.mxu0
      %8203 = vmatprep.mubr.bf16.mxu0 0
      %8204 = vmatmul.mubr.bf16.gmra.mxu0 %v8086
      %v8205 = vpop.f32.mrf.mxu0
      %v8206 = vadd.f32 0.0, %v8205
      %v8207 = vpop.f32.mrf.mxu0
      %v8208 = vpop.f32.mrf.mxu0
      %v8209 = vadd.f32 0.0, %v8208
      %v8210 = vpop.f32.mrf.mxu0
      %8211 = vmatprep.mubr.bf16.mxu0 0
      %8212 = vmatmul.mubr.bf16.gmra.mxu0 %v8089
      %v8213 = vpop.f32.mrf.mxu0
      %v8214 = vadd.f32 0.0, %v8213
      %v8215 = vpop.f32.mrf.mxu0
      %v8216 = vpop.f32.mrf.mxu0
      %v8217 = vadd.f32 0.0, %v8216
      %v8218 = vpop.f32.mrf.mxu0
      %8219 = vmatprep.mubr.bf16.mxu0 0
      %8220 = vmatmul.mubr.bf16.gmra.mxu0 %v8092
      %v8221 = vpop.f32.mrf.mxu0
      %v8222 = vadd.f32 0.0, %v8221
      %v8223 = vpop.f32.mrf.mxu0
      %v8224 = vpop.f32.mrf.mxu0
      %v8225 = vadd.f32 0.0, %v8224
      %v8226 = vpop.f32.mrf.mxu0
      %8227 = vmatprep.mubr.bf16.mxu0 0
      %8228 = vmatmul.mubr.bf16.gmra.mxu0 %v8095
      %v8229 = vpop.f32.mrf.mxu0
      %v8230 = vadd.f32 0.0, %v8229
      %v8231 = vpop.f32.mrf.mxu0
      %v8232 = vpop.f32.mrf.mxu0
      %v8233 = vadd.f32 0.0, %v8232
      %v8234 = vpop.f32.mrf.mxu0
      %8235 = vmatprep.mubr.bf16.mxu0 0
      %8236 = vmatmul.mubr.bf16.gmra.mxu0 %v8098
      %v8237 = vpop.f32.mrf.mxu0
      %v8238 = vadd.f32 0.0, %v8237
      %v8239 = vpop.f32.mrf.mxu0
      %v8240 = vpop.f32.mrf.mxu0
      %v8241 = vadd.f32 0.0, %v8240
      %v8242 = vpop.f32.mrf.mxu0
      %8243 = vmatprep.mubr.bf16.mxu0 0
      %8244 = vmatmul.mubr.bf16.gmra.mxu0 %v8101
      %v8245 = vpop.f32.mrf.mxu0
      %v8246 = vadd.f32 0.0, %v8245
      %v8247 = vpop.f32.mrf.mxu0
      %v8248 = vpop.f32.mrf.mxu0
      %v8249 = vadd.f32 0.0, %v8248
      %v8250 = vpop.f32.mrf.mxu0
      %8251 = vmatprep.mubr.bf16.mxu0 0
      %8252 = vmatmul.mubr.bf16.gmra.mxu0 %v8104
      %v8253 = vpop.f32.mrf.mxu0
      %v8254 = vadd.f32 0.0, %v8253
      %v8255 = vpop.f32.mrf.mxu0
      %v8256 = vpop.f32.mrf.mxu0
      %v8257 = vadd.f32 0.0, %v8256
      %v8258 = vpop.f32.mrf.mxu0
      %8259 = vmatprep.mubr.bf16.mxu0 0
      %8260 = vmatmul.mubr.bf16.gmra.mxu0 %v8107
      %v8261 = vpop.f32.mrf.mxu0
      %v8262 = vadd.f32 0.0, %v8261
      %v8263 = vpop.f32.mrf.mxu0
      %v8264 = vpop.f32.mrf.mxu0
      %v8265 = vadd.f32 0.0, %v8264
      %v8266 = vpop.f32.mrf.mxu0
      %8267 = vmatprep.mubr.bf16.mxu0 0
      %8268 = vmatmul.mubr.bf16.gmra.mxu0 %v8110
      %v8269 = vpop.f32.mrf.mxu0
      %v8270 = vadd.f32 0.0, %v8269
      %v8271 = vpop.f32.mrf.mxu0
      %v8272 = vpop.f32.mrf.mxu0
      %v8273 = vadd.f32 0.0, %v8272
      %v8274 = vpop.f32.mrf.mxu0
      %8275 = vdwg.mxu0
      %v8276 = vadd.f32 %v7915, %v8150
      %v8277 = vadd.f32 %v7916, %v8153
      %v8278 = vadd.f32 %v7917, %v8158
      %v8279 = vadd.f32 %v7918, %v8161
      %v8280 = vadd.f32 %v7919, %v8166
      %v8281 = vadd.f32 %v7920, %v8169
      %v8282 = vadd.f32 %v7921, %v8174
      %v8283 = vadd.f32 %v7922, %v8177
      %v8284 = vadd.f32 %v7923, %v8182
      %v8285 = vadd.f32 %v7924, %v8185
      %v8286 = vadd.f32 %v7925, %v8190
      %v8287 = vadd.f32 %v7926, %v8193
      %v8288 = vadd.f32 %v7927, %v8198
      %v8289 = vadd.f32 %v7928, %v8201
      %v8290 = vadd.f32 %v7929, %v8206
      %v8291 = vadd.f32 %v7930, %v8209
      %v8292 = vadd.f32 %v7931, %v8214
      %v8293 = vadd.f32 %v7932, %v8217
      %v8294 = vadd.f32 %v7933, %v8222
      %v8295 = vadd.f32 %v7934, %v8225
      %v8296 = vadd.f32 %v7935, %v8230
      %v8297 = vadd.f32 %v7936, %v8233
      %v8298 = vadd.f32 %v7937, %v8238
      %v8299 = vadd.f32 %v7938, %v8241
      %v8300 = vadd.f32 %v7939, %v8246
      %v8301 = vadd.f32 %v7940, %v8249
      %v8302 = vadd.f32 %v7941, %v8254
      %v8303 = vadd.f32 %v7942, %v8257
      %v8304 = vadd.f32 %v7943, %v8262
      %v8305 = vadd.f32 %v7944, %v8265
      %v8306 = vadd.f32 %v7945, %v8270
      %v8307 = vadd.f32 %v7946, %v8273
      %v8308 = vld [vmem:[%s2472] sm:$0xf]
      %v8309 = vld [vmem:[%s2472 + $0x4] sm:$0xf]
      %v8310 = vld [vmem:[%s2472 + $0x8] sm:$0x1]
      %v8311 = vld [vmem:[%s2472 + $0xc] sm:$0xf]
      %v8312 = vld [vmem:[%s2472 + $0x10] sm:$0xf]
      %v8313 = vld [vmem:[%s2472 + $0x14] sm:$0x1]
      %v8314 = vld [vmem:[%s2472 + $0x18] sm:$0xf]
      %v8315 = vld [vmem:[%s2472 + $0x1c] sm:$0xf]
      %v8316 = vld [vmem:[%s2472 + $0x20] sm:$0x1]
      %v8317 = vld [vmem:[%s2472 + $0x24] sm:$0xf]
      %v8318 = vld [vmem:[%s2472 + $0x28] sm:$0xf]
      %v8319 = vld [vmem:[%s2472 + $0x2c] sm:$0x1]
      %v8320 = vld [vmem:[%s2472 + $0x30] sm:$0xf]
      %v8321 = vld [vmem:[%s2472 + $0x34] sm:$0xf]
      %v8322 = vld [vmem:[%s2472 + $0x38] sm:$0x1]
      %v8323 = vld [vmem:[%s2472 + $0x3c] sm:$0xf]
      %v8324 = vld [vmem:[%s2472 + $0x40] sm:$0xf]
      %v8325 = vld [vmem:[%s2472 + $0x44] sm:$0x1]
      %v8326 = vld [vmem:[%s2472 + $0x48] sm:$0xf]
      %v8327 = vld [vmem:[%s2472 + $0x4c] sm:$0xf]
      %v8328 = vld [vmem:[%s2472 + $0x50] sm:$0x1]
      %v8329 = vld [vmem:[%s2472 + $0x54] sm:$0xf]
      %v8330 = vld [vmem:[%s2472 + $0x58] sm:$0xf]
      %v8331 = vld [vmem:[%s2472 + $0x5c] sm:$0x1]
      %v8332 = vld [vmem:[%s2472 + $0x60] sm:$0xf]
      %v8333 = vld [vmem:[%s2472 + $0x64] sm:$0xf]
      %v8334 = vld [vmem:[%s2472 + $0x68] sm:$0x1]
      %v8335 = vld [vmem:[%s2472 + $0x6c] sm:$0xf]
      %v8336 = vld [vmem:[%s2472 + $0x70] sm:$0xf]
      %v8337 = vld [vmem:[%s2472 + $0x74] sm:$0x1]
      %v8338 = vld [vmem:[%s2472 + $0x78] sm:$0xf]
      %v8339 = vld [vmem:[%s2472 + $0x7c] sm:$0xf]
      %v8340 = vld [vmem:[%s2472 + $0x80] sm:$0x1]
      %v8341 = vld [vmem:[%s2472 + $0x84] sm:$0xf]
      %v8342 = vld [vmem:[%s2472 + $0x88] sm:$0xf]
      %v8343 = vld [vmem:[%s2472 + $0x8c] sm:$0x1]
      %v8344 = vld [vmem:[%s2472 + $0x90] sm:$0xf]
      %v8345 = vld [vmem:[%s2472 + $0x94] sm:$0xf]
      %v8346 = vld [vmem:[%s2472 + $0x98] sm:$0x1]
      %v8347 = vld [vmem:[%s2472 + $0x9c] sm:$0xf]
      %v8348 = vld [vmem:[%s2472 + $0xa0] sm:$0xf]
      %v8349 = vld [vmem:[%s2472 + $0xa4] sm:$0x1]
      %v8350 = vld [vmem:[%s2472 + $0xa8] sm:$0xf]
      %v8351 = vld [vmem:[%s2472 + $0xac] sm:$0xf]
      %v8352 = vld [vmem:[%s2472 + $0xb0] sm:$0x1]
      %v8353 = vld [vmem:[%s2472 + $0xb4] sm:$0xf]
      %v8354 = vld [vmem:[%s2472 + $0xb8] sm:$0xf]
      %v8355 = vld [vmem:[%s2472 + $0xbc] sm:$0x1]
      %v8357 = vshrl.u32 %v8308, 16
      %v8359 = vrot.slane %v8357, 4
      %v8360 = vshll.u32 %v8308, 16
      %v8362 = vrot.slane %v8360, 5
      %v8363 = vor.u32 %v8359, %v8362
      %v8364 = vrot.slane %v8363, 4
      %v8366 = vshll.u32 %v8309, 16
      %v8368 = vrot.slane %v8366, 5
      %v8369 = vsel %vm912, %v8364, %v8368
      %v8370 = vshrl.u32 %v8309, 16
      %v8372 = vrot.slane %v8370, 4
      %v8373 = vor.u32 %v8372, %v8368
      %v8374 = vrot.slane %v8373, 4
      %v8376 = vshll.u32 %v8310, 16
      %v8378 = vrot.slane %v8376, 5
      %v8379 = vsel %vm912, %v8374, %v8378
      %v8381 = vshrl.u32 %v8311, 16
      %v8383 = vrot.slane %v8381, 4
      %v8384 = vshll.u32 %v8311, 16
      %v8386 = vrot.slane %v8384, 5
      %v8387 = vor.u32 %v8383, %v8386
      %v8388 = vrot.slane %v8387, 4
      %v8390 = vshll.u32 %v8312, 16
      %v8392 = vrot.slane %v8390, 5
      %v8393 = vsel %vm912, %v8388, %v8392
      %v8394 = vshrl.u32 %v8312, 16
      %v8396 = vrot.slane %v8394, 4
      %v8397 = vor.u32 %v8396, %v8392
      %v8398 = vrot.slane %v8397, 4
      %v8400 = vshll.u32 %v8313, 16
      %v8402 = vrot.slane %v8400, 5
      %v8403 = vsel %vm912, %v8398, %v8402
      %v8405 = vshrl.u32 %v8314, 16
      %v8407 = vrot.slane %v8405, 4
      %v8408 = vshll.u32 %v8314, 16
      %v8410 = vrot.slane %v8408, 5
      %v8411 = vor.u32 %v8407, %v8410
      %v8412 = vrot.slane %v8411, 4
      %v8414 = vshll.u32 %v8315, 16
      %v8416 = vrot.slane %v8414, 5
      %v8417 = vsel %vm912, %v8412, %v8416
      %v8418 = vshrl.u32 %v8315, 16
      %v8420 = vrot.slane %v8418, 4
      %v8421 = vor.u32 %v8420, %v8416
      %v8422 = vrot.slane %v8421, 4
      %v8424 = vshll.u32 %v8316, 16
      %v8426 = vrot.slane %v8424, 5
      %v8427 = vsel %vm912, %v8422, %v8426
      %v8429 = vshrl.u32 %v8317, 16
      %v8431 = vrot.slane %v8429, 4
      %v8432 = vshll.u32 %v8317, 16
      %v8434 = vrot.slane %v8432, 5
      %v8435 = vor.u32 %v8431, %v8434
      %v8436 = vrot.slane %v8435, 4
      %v8438 = vshll.u32 %v8318, 16
      %v8440 = vrot.slane %v8438, 5
      %v8441 = vsel %vm912, %v8436, %v8440
      %v8442 = vshrl.u32 %v8318, 16
      %v8444 = vrot.slane %v8442, 4
      %v8445 = vor.u32 %v8444, %v8440
      %v8446 = vrot.slane %v8445, 4
      %v8448 = vshll.u32 %v8319, 16
      %v8450 = vrot.slane %v8448, 5
      %v8451 = vsel %vm912, %v8446, %v8450
      %v8453 = vshrl.u32 %v8320, 16
      %v8455 = vrot.slane %v8453, 4
      %v8456 = vshll.u32 %v8320, 16
      %v8458 = vrot.slane %v8456, 5
      %v8459 = vor.u32 %v8455, %v8458
      %v8460 = vrot.slane %v8459, 4
      %v8462 = vshll.u32 %v8321, 16
      %v8464 = vrot.slane %v8462, 5
      %v8465 = vsel %vm912, %v8460, %v8464
      %v8466 = vshrl.u32 %v8321, 16
      %v8468 = vrot.slane %v8466, 4
      %v8469 = vor.u32 %v8468, %v8464
      %v8470 = vrot.slane %v8469, 4
      %v8472 = vshll.u32 %v8322, 16
      %v8474 = vrot.slane %v8472, 5
      %v8475 = vsel %vm912, %v8470, %v8474
      %v8477 = vshrl.u32 %v8323, 16
      %v8479 = vrot.slane %v8477, 4
      %v8480 = vshll.u32 %v8323, 16
      %v8482 = vrot.slane %v8480, 5
      %v8483 = vor.u32 %v8479, %v8482
      %v8484 = vrot.slane %v8483, 4
      %v8486 = vshll.u32 %v8324, 16
      %v8488 = vrot.slane %v8486, 5
      %v8489 = vsel %vm912, %v8484, %v8488
      %v8490 = vshrl.u32 %v8324, 16
      %v8492 = vrot.slane %v8490, 4
      %v8493 = vor.u32 %v8492, %v8488
      %v8494 = vrot.slane %v8493, 4
      %v8496 = vshll.u32 %v8325, 16
      %v8498 = vrot.slane %v8496, 5
      %v8499 = vsel %vm912, %v8494, %v8498
      %v8501 = vshrl.u32 %v8326, 16
      %v8503 = vrot.slane %v8501, 4
      %v8504 = vshll.u32 %v8326, 16
      %v8506 = vrot.slane %v8504, 5
      %v8507 = vor.u32 %v8503, %v8506
      %v8508 = vrot.slane %v8507, 4
      %v8510 = vshll.u32 %v8327, 16
      %v8512 = vrot.slane %v8510, 5
      %v8513 = vsel %vm912, %v8508, %v8512
      %v8514 = vshrl.u32 %v8327, 16
      %v8516 = vrot.slane %v8514, 4
      %v8517 = vor.u32 %v8516, %v8512
      %v8518 = vrot.slane %v8517, 4
      %v8520 = vshll.u32 %v8328, 16
      %v8522 = vrot.slane %v8520, 5
      %v8523 = vsel %vm912, %v8518, %v8522
      %v8525 = vshrl.u32 %v8329, 16
      %v8527 = vrot.slane %v8525, 4
      %v8528 = vshll.u32 %v8329, 16
      %v8530 = vrot.slane %v8528, 5
      %v8531 = vor.u32 %v8527, %v8530
      %v8532 = vrot.slane %v8531, 4
      %v8534 = vshll.u32 %v8330, 16
      %v8536 = vrot.slane %v8534, 5
      %v8537 = vsel %vm912, %v8532, %v8536
      %v8538 = vshrl.u32 %v8330, 16
      %v8540 = vrot.slane %v8538, 4
      %v8541 = vor.u32 %v8540, %v8536
      %v8542 = vrot.slane %v8541, 4
      %v8544 = vshll.u32 %v8331, 16
      %v8546 = vrot.slane %v8544, 5
      %v8547 = vsel %vm912, %v8542, %v8546
      %v8549 = vshrl.u32 %v8332, 16
      %v8551 = vrot.slane %v8549, 4
      %v8552 = vshll.u32 %v8332, 16
      %v8554 = vrot.slane %v8552, 5
      %v8555 = vor.u32 %v8551, %v8554
      %v8556 = vrot.slane %v8555, 4
      %v8558 = vshll.u32 %v8333, 16
      %v8560 = vrot.slane %v8558, 5
      %v8561 = vsel %vm912, %v8556, %v8560
      %v8562 = vshrl.u32 %v8333, 16
      %v8564 = vrot.slane %v8562, 4
      %v8565 = vor.u32 %v8564, %v8560
      %v8566 = vrot.slane %v8565, 4
      %v8568 = vshll.u32 %v8334, 16
      %v8570 = vrot.slane %v8568, 5
      %v8571 = vsel %vm912, %v8566, %v8570
      %v8573 = vshrl.u32 %v8335, 16
      %v8575 = vrot.slane %v8573, 4
      %v8576 = vshll.u32 %v8335, 16
      %v8578 = vrot.slane %v8576, 5
      %v8579 = vor.u32 %v8575, %v8578
      %v8580 = vrot.slane %v8579, 4
      %v8582 = vshll.u32 %v8336, 16
      %v8584 = vrot.slane %v8582, 5
      %v8585 = vsel %vm912, %v8580, %v8584
      %v8586 = vshrl.u32 %v8336, 16
      %v8588 = vrot.slane %v8586, 4
      %v8589 = vor.u32 %v8588, %v8584
      %v8590 = vrot.slane %v8589, 4
      %v8592 = vshll.u32 %v8337, 16
      %v8594 = vrot.slane %v8592, 5
      %v8595 = vsel %vm912, %v8590, %v8594
      %v8597 = vshrl.u32 %v8338, 16
      %v8599 = vrot.slane %v8597, 4
      %v8600 = vshll.u32 %v8338, 16
      %v8602 = vrot.slane %v8600, 5
      %v8603 = vor.u32 %v8599, %v8602
      %v8604 = vrot.slane %v8603, 4
      %v8606 = vshll.u32 %v8339, 16
      %v8608 = vrot.slane %v8606, 5
      %v8609 = vsel %vm912, %v8604, %v8608
      %v8610 = vshrl.u32 %v8339, 16
      %v8612 = vrot.slane %v8610, 4
      %v8613 = vor.u32 %v8612, %v8608
      %v8614 = vrot.slane %v8613, 4
      %v8616 = vshll.u32 %v8340, 16
      %v8618 = vrot.slane %v8616, 5
      %v8619 = vsel %vm912, %v8614, %v8618
      %v8621 = vshrl.u32 %v8341, 16
      %v8623 = vrot.slane %v8621, 4
      %v8624 = vshll.u32 %v8341, 16
      %v8626 = vrot.slane %v8624, 5
      %v8627 = vor.u32 %v8623, %v8626
      %v8628 = vrot.slane %v8627, 4
      %v8630 = vshll.u32 %v8342, 16
      %v8632 = vrot.slane %v8630, 5
      %v8633 = vsel %vm912, %v8628, %v8632
      %v8634 = vshrl.u32 %v8342, 16
      %v8636 = vrot.slane %v8634, 4
      %v8637 = vor.u32 %v8636, %v8632
      %v8638 = vrot.slane %v8637, 4
      %v8640 = vshll.u32 %v8343, 16
      %v8642 = vrot.slane %v8640, 5
      %v8643 = vsel %vm912, %v8638, %v8642
      %v8645 = vshrl.u32 %v8344, 16
      %v8647 = vrot.slane %v8645, 4
      %v8648 = vshll.u32 %v8344, 16
      %v8650 = vrot.slane %v8648, 5
      %v8651 = vor.u32 %v8647, %v8650
      %v8652 = vrot.slane %v8651, 4
      %v8654 = vshll.u32 %v8345, 16
      %v8656 = vrot.slane %v8654, 5
      %v8657 = vsel %vm912, %v8652, %v8656
      %v8658 = vshrl.u32 %v8345, 16
      %v8660 = vrot.slane %v8658, 4
      %v8661 = vor.u32 %v8660, %v8656
      %v8662 = vrot.slane %v8661, 4
      %v8664 = vshll.u32 %v8346, 16
      %v8666 = vrot.slane %v8664, 5
      %v8667 = vsel %vm912, %v8662, %v8666
      %v8669 = vshrl.u32 %v8347, 16
      %v8671 = vrot.slane %v8669, 4
      %v8672 = vshll.u32 %v8347, 16
      %v8674 = vrot.slane %v8672, 5
      %v8675 = vor.u32 %v8671, %v8674
      %v8676 = vrot.slane %v8675, 4
      %v8678 = vshll.u32 %v8348, 16
      %v8680 = vrot.slane %v8678, 5
      %v8681 = vsel %vm912, %v8676, %v8680
      %v8682 = vshrl.u32 %v8348, 16
      %v8684 = vrot.slane %v8682, 4
      %v8685 = vor.u32 %v8684, %v8680
      %v8686 = vrot.slane %v8685, 4
      %v8688 = vshll.u32 %v8349, 16
      %v8690 = vrot.slane %v8688, 5
      %v8691 = vsel %vm912, %v8686, %v8690
      %v8693 = vshrl.u32 %v8350, 16
      %v8695 = vrot.slane %v8693, 4
      %v8696 = vshll.u32 %v8350, 16
      %v8698 = vrot.slane %v8696, 5
      %v8699 = vor.u32 %v8695, %v8698
      %v8700 = vrot.slane %v8699, 4
      %v8702 = vshll.u32 %v8351, 16
      %v8704 = vrot.slane %v8702, 5
      %v8705 = vsel %vm912, %v8700, %v8704
      %v8706 = vshrl.u32 %v8351, 16
      %v8708 = vrot.slane %v8706, 4
      %v8709 = vor.u32 %v8708, %v8704
      %v8710 = vrot.slane %v8709, 4
      %v8712 = vshll.u32 %v8352, 16
      %v8714 = vrot.slane %v8712, 5
      %v8715 = vsel %vm912, %v8710, %v8714
      %v8717 = vshrl.u32 %v8353, 16
      %v8719 = vrot.slane %v8717, 4
      %v8720 = vshll.u32 %v8353, 16
      %v8722 = vrot.slane %v8720, 5
      %v8723 = vor.u32 %v8719, %v8722
      %v8724 = vrot.slane %v8723, 4
      %v8726 = vshll.u32 %v8354, 16
      %v8728 = vrot.slane %v8726, 5
      %v8729 = vsel %vm912, %v8724, %v8728
      %v8730 = vshrl.u32 %v8354, 16
      %v8732 = vrot.slane %v8730, 4
      %v8733 = vor.u32 %v8732, %v8728
      %v8734 = vrot.slane %v8733, 4
      %v8736 = vshll.u32 %v8355, 16
      %v8738 = vrot.slane %v8736, 5
      %v8739 = vsel %vm912, %v8734, %v8738
      %v8740 = vld [vmem:[%s2 + $0x8] sm:$0x3]
      %v8741 = vunpack.c.l.b16 %v8369
      %v8742 = vunpack.c.l.b16 %v8379
      %v8743 = vunpack.c.l.b16 %v8393
      %v8744 = vunpack.c.l.b16 %v8403
      %v8745 = vunpack.c.l.b16 %v8417
      %v8746 = vunpack.c.l.b16 %v8427
      %v8747 = vunpack.c.l.b16 %v8441
      %v8748 = vunpack.c.l.b16 %v8451
      %v8749 = vunpack.c.l.b16 %v8465
      %v8750 = vunpack.c.l.b16 %v8475
      %v8751 = vunpack.c.l.b16 %v8489
      %v8752 = vunpack.c.l.b16 %v8499
      %v8753 = vunpack.c.l.b16 %v8513
      %v8754 = vunpack.c.l.b16 %v8523
      %v8755 = vunpack.c.l.b16 %v8537
      %v8756 = vunpack.c.l.b16 %v8547
      %v8757 = vunpack.c.l.b16 %v8561
      %v8758 = vunpack.c.l.b16 %v8571
      %v8759 = vunpack.c.l.b16 %v8585
      %v8760 = vunpack.c.l.b16 %v8595
      %v8761 = vunpack.c.l.b16 %v8609
      %v8762 = vunpack.c.l.b16 %v8619
      %v8763 = vunpack.c.l.b16 %v8633
      %v8764 = vunpack.c.l.b16 %v8643
      %v8765 = vunpack.c.l.b16 %v8657
      %v8766 = vunpack.c.l.b16 %v8667
      %v8767 = vunpack.c.l.b16 %v8681
      %v8768 = vunpack.c.l.b16 %v8691
      %v8769 = vunpack.c.l.b16 %v8705
      %v8770 = vunpack.c.l.b16 %v8715
      %v8771 = vunpack.c.l.b16 %v8729
      %v8772 = vunpack.c.l.b16 %v8739
      %v8773 = vpack.c.b16 %v8742, %v8741
      %v8774 = vpack.c.b16 %v8744, %v8743
      %v8775 = vpack.c.b16 %v8746, %v8745
      %v8776 = vpack.c.b16 %v8748, %v8747
      %v8777 = vpack.c.b16 %v8750, %v8749
      %v8778 = vpack.c.b16 %v8752, %v8751
      %v8779 = vpack.c.b16 %v8754, %v8753
      %v8780 = vpack.c.b16 %v8756, %v8755
      %v8781 = vpack.c.b16 %v8758, %v8757
      %v8782 = vpack.c.b16 %v8760, %v8759
      %v8783 = vpack.c.b16 %v8762, %v8761
      %v8784 = vpack.c.b16 %v8764, %v8763
      %v8785 = vpack.c.b16 %v8766, %v8765
      %v8786 = vpack.c.b16 %v8768, %v8767
      %v8787 = vpack.c.b16 %v8770, %v8769
      %v8788 = vpack.c.b16 %v8772, %v8771
      %v8790 = vsel %vm1404, %v8773, 0
      %v8793 = vsel %vm1404, %v8774, 0
      %v8796 = vsel %vm1404, %v8775, 0
      %v8799 = vsel %vm1404, %v8776, 0
      %v8802 = vsel %vm1404, %v8777, 0
      %v8805 = vsel %vm1404, %v8778, 0
      %v8808 = vsel %vm1404, %v8779, 0
      %v8811 = vsel %vm1404, %v8780, 0
      %v8814 = vsel %vm1404, %v8781, 0
      %v8817 = vsel %vm1404, %v8782, 0
      %v8820 = vsel %vm1404, %v8783, 0
      %v8823 = vsel %vm1404, %v8784, 0
      %v8826 = vsel %vm1404, %v8785, 0
      %v8829 = vsel %vm1404, %v8786, 0
      %v8832 = vsel %vm1404, %v8787, 0
      %v8835 = vsel %vm1404, %v8788, 0
      %v8838 = vsel %vm1459, %v8740, 0
      %8840 = vmatprep.subr.bf16.mxu0 0
      %8841 = vmatpush1.bf16.msra.mxu0 0
      %8842 = vmatprep.subr.bf16.mxu0 0
      %8843 = vmatpush1.bf16.msra.mxu0 0
      %8844 = vmatprep.subr.bf16.mxu0 0
      %8845 = vmatpush1.bf16.msra.mxu0 0
      %8846 = vmatprep.subr.bf16.mxu0 0
      %8847 = vmatpush1.bf16.msra.mxu0 0
      %8848 = vmatprep.subr.bf16.mxu0 0
      %8849 = vmatpush1.bf16.msra.mxu0 0
      %8850 = vmatprep.subr.bf16.mxu0 0
      %8851 = vmatpush1.bf16.msra.mxu0 0
      %8852 = vmatprep.subr.bf16.mxu0 0
      %8853 = vmatpush1.bf16.msra.mxu0 0
      %8854 = vmatprep.subr.bf16.mxu0 0
      %8855 = vmatpush1.bf16.msra.mxu0 %v8838
      %8856 = vmatprep.subr.bf16.mxu0 0
      %8857 = vmatpush2.bf16.msra.mxu0 0
      %8858 = vmatprep.subr.bf16.mxu0 0
      %8859 = vmatpush2.bf16.msra.mxu0 0
      %8860 = vmatprep.subr.bf16.mxu0 0
      %8861 = vmatpush2.bf16.msra.mxu0 0
      %8862 = vmatprep.subr.bf16.mxu0 0
      %8863 = vmatpush2.bf16.msra.mxu0 0
      %8864 = vmatprep.subr.bf16.mxu0 0
      %8865 = vmatpush2.bf16.msra.mxu0 0
      %8866 = vmatprep.subr.bf16.mxu0 0
      %8867 = vmatpush2.bf16.msra.mxu0 0
      %8868 = vmatprep.subr.bf16.mxu0 0
      %8869 = vmatpush2.bf16.msra.mxu0 0
      %8870 = vmatprep.subr.bf16.mxu0 0
      %8871 = vmatpush2.bf16.msra.mxu0 0
      %8872 = vmatprep.mubr.bf16.mxu0 0
      %8873 = vmatmul.mubr.bf16.gmra.mxu0 %v8790
      %v8874 = vpop.f32.mrf.mxu0
      %v8875 = vadd.f32 0.0, %v8874
      %v8876 = vpop.f32.mrf.mxu0
      %v8877 = vpop.f32.mrf.mxu0
      %v8878 = vadd.f32 0.0, %v8877
      %v8879 = vpop.f32.mrf.mxu0
      %8880 = vmatprep.mubr.bf16.mxu0 0
      %8881 = vmatmul.mubr.bf16.gmra.mxu0 %v8793
      %v8882 = vpop.f32.mrf.mxu0
      %v8883 = vadd.f32 0.0, %v8882
      %v8884 = vpop.f32.mrf.mxu0
      %v8885 = vpop.f32.mrf.mxu0
      %v8886 = vadd.f32 0.0, %v8885
      %v8887 = vpop.f32.mrf.mxu0
      %8888 = vmatprep.mubr.bf16.mxu0 0
      %8889 = vmatmul.mubr.bf16.gmra.mxu0 %v8796
      %v8890 = vpop.f32.mrf.mxu0
      %v8891 = vadd.f32 0.0, %v8890
      %v8892 = vpop.f32.mrf.mxu0
      %v8893 = vpop.f32.mrf.mxu0
      %v8894 = vadd.f32 0.0, %v8893
      %v8895 = vpop.f32.mrf.mxu0
      %8896 = vmatprep.mubr.bf16.mxu0 0
      %8897 = vmatmul.mubr.bf16.gmra.mxu0 %v8799
      %v8898 = vpop.f32.mrf.mxu0
      %v8899 = vadd.f32 0.0, %v8898
      %v8900 = vpop.f32.mrf.mxu0
      %v8901 = vpop.f32.mrf.mxu0
      %v8902 = vadd.f32 0.0, %v8901
      %v8903 = vpop.f32.mrf.mxu0
      %8904 = vmatprep.mubr.bf16.mxu0 0
      %8905 = vmatmul.mubr.bf16.gmra.mxu0 %v8802
      %v8906 = vpop.f32.mrf.mxu0
      %v8907 = vadd.f32 0.0, %v8906
      %v8908 = vpop.f32.mrf.mxu0
      %v8909 = vpop.f32.mrf.mxu0
      %v8910 = vadd.f32 0.0, %v8909
      %v8911 = vpop.f32.mrf.mxu0
      %8912 = vmatprep.mubr.bf16.mxu0 0
      %8913 = vmatmul.mubr.bf16.gmra.mxu0 %v8805
      %v8914 = vpop.f32.mrf.mxu0
      %v8915 = vadd.f32 0.0, %v8914
      %v8916 = vpop.f32.mrf.mxu0
      %v8917 = vpop.f32.mrf.mxu0
      %v8918 = vadd.f32 0.0, %v8917
      %v8919 = vpop.f32.mrf.mxu0
      %8920 = vmatprep.mubr.bf16.mxu0 0
      %8921 = vmatmul.mubr.bf16.gmra.mxu0 %v8808
      %v8922 = vpop.f32.mrf.mxu0
      %v8923 = vadd.f32 0.0, %v8922
      %v8924 = vpop.f32.mrf.mxu0
      %v8925 = vpop.f32.mrf.mxu0
      %v8926 = vadd.f32 0.0, %v8925
      %v8927 = vpop.f32.mrf.mxu0
      %8928 = vmatprep.mubr.bf16.mxu0 0
      %8929 = vmatmul.mubr.bf16.gmra.mxu0 %v8811
      %v8930 = vpop.f32.mrf.mxu0
      %v8931 = vadd.f32 0.0, %v8930
      %v8932 = vpop.f32.mrf.mxu0
      %v8933 = vpop.f32.mrf.mxu0
      %v8934 = vadd.f32 0.0, %v8933
      %v8935 = vpop.f32.mrf.mxu0
      %8936 = vmatprep.mubr.bf16.mxu0 0
      %8937 = vmatmul.mubr.bf16.gmra.mxu0 %v8814
      %v8938 = vpop.f32.mrf.mxu0
      %v8939 = vadd.f32 0.0, %v8938
      %v8940 = vpop.f32.mrf.mxu0
      %v8941 = vpop.f32.mrf.mxu0
      %v8942 = vadd.f32 0.0, %v8941
      %v8943 = vpop.f32.mrf.mxu0
      %8944 = vmatprep.mubr.bf16.mxu0 0
      %8945 = vmatmul.mubr.bf16.gmra.mxu0 %v8817
      %v8946 = vpop.f32.mrf.mxu0
      %v8947 = vadd.f32 0.0, %v8946
      %v8948 = vpop.f32.mrf.mxu0
      %v8949 = vpop.f32.mrf.mxu0
      %v8950 = vadd.f32 0.0, %v8949
      %v8951 = vpop.f32.mrf.mxu0
      %8952 = vmatprep.mubr.bf16.mxu0 0
      %8953 = vmatmul.mubr.bf16.gmra.mxu0 %v8820
      %v8954 = vpop.f32.mrf.mxu0
      %v8955 = vadd.f32 0.0, %v8954
      %v8956 = vpop.f32.mrf.mxu0
      %v8957 = vpop.f32.mrf.mxu0
      %v8958 = vadd.f32 0.0, %v8957
      %v8959 = vpop.f32.mrf.mxu0
      %8960 = vmatprep.mubr.bf16.mxu0 0
      %8961 = vmatmul.mubr.bf16.gmra.mxu0 %v8823
      %v8962 = vpop.f32.mrf.mxu0
      %v8963 = vadd.f32 0.0, %v8962
      %v8964 = vpop.f32.mrf.mxu0
      %v8965 = vpop.f32.mrf.mxu0
      %v8966 = vadd.f32 0.0, %v8965
      %v8967 = vpop.f32.mrf.mxu0
      %8968 = vmatprep.mubr.bf16.mxu0 0
      %8969 = vmatmul.mubr.bf16.gmra.mxu0 %v8826
      %v8970 = vpop.f32.mrf.mxu0
      %v8971 = vadd.f32 0.0, %v8970
      %v8972 = vpop.f32.mrf.mxu0
      %v8973 = vpop.f32.mrf.mxu0
      %v8974 = vadd.f32 0.0, %v8973
      %v8975 = vpop.f32.mrf.mxu0
      %8976 = vmatprep.mubr.bf16.mxu0 0
      %8977 = vmatmul.mubr.bf16.gmra.mxu0 %v8829
      %v8978 = vpop.f32.mrf.mxu0
      %v8979 = vadd.f32 0.0, %v8978
      %v8980 = vpop.f32.mrf.mxu0
      %v8981 = vpop.f32.mrf.mxu0
      %v8982 = vadd.f32 0.0, %v8981
      %v8983 = vpop.f32.mrf.mxu0
      %8984 = vmatprep.mubr.bf16.mxu0 0
      %8985 = vmatmul.mubr.bf16.gmra.mxu0 %v8832
      %v8986 = vpop.f32.mrf.mxu0
      %v8987 = vadd.f32 0.0, %v8986
      %v8988 = vpop.f32.mrf.mxu0
      %v8989 = vpop.f32.mrf.mxu0
      %v8990 = vadd.f32 0.0, %v8989
      %v8991 = vpop.f32.mrf.mxu0
      %8992 = vmatprep.mubr.bf16.mxu0 0
      %8993 = vmatmul.mubr.bf16.gmra.mxu0 %v8835
      %v8994 = vpop.f32.mrf.mxu0
      %v8995 = vadd.f32 0.0, %v8994
      %v8996 = vpop.f32.mrf.mxu0
      %v8997 = vpop.f32.mrf.mxu0
      %v8998 = vadd.f32 0.0, %v8997
      %v8999 = vpop.f32.mrf.mxu0
      %9000 = vdwg.mxu0
      %v9001 = vadd.f32 %v8276, %v8875
      %v9002 = vadd.f32 %v8277, %v8878
      %v9003 = vadd.f32 %v8278, %v8883
      %v9004 = vadd.f32 %v8279, %v8886
      %v9005 = vadd.f32 %v8280, %v8891
      %v9006 = vadd.f32 %v8281, %v8894
      %v9007 = vadd.f32 %v8282, %v8899
      %v9008 = vadd.f32 %v8283, %v8902
      %v9009 = vadd.f32 %v8284, %v8907
      %v9010 = vadd.f32 %v8285, %v8910
      %v9011 = vadd.f32 %v8286, %v8915
      %v9012 = vadd.f32 %v8287, %v8918
      %v9013 = vadd.f32 %v8288, %v8923
      %v9014 = vadd.f32 %v8289, %v8926
      %v9015 = vadd.f32 %v8290, %v8931
      %v9016 = vadd.f32 %v8291, %v8934
      %v9017 = vadd.f32 %v8292, %v8939
      %v9018 = vadd.f32 %v8293, %v8942
      %v9019 = vadd.f32 %v8294, %v8947
      %v9020 = vadd.f32 %v8295, %v8950
      %v9021 = vadd.f32 %v8296, %v8955
      %v9022 = vadd.f32 %v8297, %v8958
      %v9023 = vadd.f32 %v8298, %v8963
      %v9024 = vadd.f32 %v8299, %v8966
      %v9025 = vadd.f32 %v8300, %v8971
      %v9026 = vadd.f32 %v8301, %v8974
      %v9027 = vadd.f32 %v8302, %v8979
      %v9028 = vadd.f32 %v8303, %v8982
      %v9029 = vadd.f32 %v8304, %v8987
      %v9030 = vadd.f32 %v8305, %v8990
      %v9031 = vadd.f32 %v8306, %v8995
      %v9032 = vadd.f32 %v8307, %v8998
      %v9033 = vld [vmem:[%s2472] sm:$0xe]
      %v9034 = vld [vmem:[%s2472 + $0xc] sm:$0xe]
      %v9035 = vld [vmem:[%s2472 + $0x18] sm:$0xe]
      %v9036 = vld [vmem:[%s2472 + $0x24] sm:$0xe]
      %v9037 = vld [vmem:[%s2472 + $0x30] sm:$0xe]
      %v9038 = vld [vmem:[%s2472 + $0x3c] sm:$0xe]
      %v9039 = vld [vmem:[%s2472 + $0x48] sm:$0xe]
      %v9040 = vld [vmem:[%s2472 + $0x54] sm:$0xe]
      %v9041 = vld [vmem:[%s2472 + $0x60] sm:$0xe]
      %v9042 = vld [vmem:[%s2472 + $0x6c] sm:$0xe]
      %v9043 = vld [vmem:[%s2472 + $0x78] sm:$0xe]
      %v9044 = vld [vmem:[%s2472 + $0x84] sm:$0xe]
      %v9045 = vld [vmem:[%s2472 + $0x90] sm:$0xe]
      %v9046 = vld [vmem:[%s2472 + $0x9c] sm:$0xe]
      %v9047 = vld [vmem:[%s2472 + $0xa8] sm:$0xe]
      %v9048 = vld [vmem:[%s2472 + $0xb4] sm:$0xe]
      %v9097 = vrot.slane %v9033, 5
      %v9098 = vrot.slane %v9097, 4
      %v9099 = vrot.slane %v8309, 5
      %v9100 = vsel %vm2020, %v9098, %v9099
      %v9101 = vrot.slane %v9099, 4
      %v9102 = vrot.slane %v8310, 5
      %v9103 = vsel %vm2020, %v9101, %v9102
      %v9104 = vrot.slane %v9034, 5
      %v9105 = vrot.slane %v9104, 4
      %v9106 = vrot.slane %v8312, 5
      %v9107 = vsel %vm2020, %v9105, %v9106
      %v9108 = vrot.slane %v9106, 4
      %v9109 = vrot.slane %v8313, 5
      %v9110 = vsel %vm2020, %v9108, %v9109
      %v9111 = vrot.slane %v9035, 5
      %v9112 = vrot.slane %v9111, 4
      %v9113 = vrot.slane %v8315, 5
      %v9114 = vsel %vm2020, %v9112, %v9113
      %v9115 = vrot.slane %v9113, 4
      %v9116 = vrot.slane %v8316, 5
      %v9117 = vsel %vm2020, %v9115, %v9116
      %v9118 = vrot.slane %v9036, 5
      %v9119 = vrot.slane %v9118, 4
      %v9120 = vrot.slane %v8318, 5
      %v9121 = vsel %vm2020, %v9119, %v9120
      %v9122 = vrot.slane %v9120, 4
      %v9123 = vrot.slane %v8319, 5
      %v9124 = vsel %vm2020, %v9122, %v9123
      %v9125 = vrot.slane %v9037, 5
      %v9126 = vrot.slane %v9125, 4
      %v9127 = vrot.slane %v8321, 5
      %v9128 = vsel %vm2020, %v9126, %v9127
      %v9129 = vrot.slane %v9127, 4
      %v9130 = vrot.slane %v8322, 5
      %v9131 = vsel %vm2020, %v9129, %v9130
      %v9132 = vrot.slane %v9038, 5
      %v9133 = vrot.slane %v9132, 4
      %v9134 = vrot.slane %v8324, 5
      %v9135 = vsel %vm2020, %v9133, %v9134
      %v9136 = vrot.slane %v9134, 4
      %v9137 = vrot.slane %v8325, 5
      %v9138 = vsel %vm2020, %v9136, %v9137
      %v9139 = vrot.slane %v9039, 5
      %v9140 = vrot.slane %v9139, 4
      %v9141 = vrot.slane %v8327, 5
      %v9142 = vsel %vm2020, %v9140, %v9141
      %v9143 = vrot.slane %v9141, 4
      %v9144 = vrot.slane %v8328, 5
      %v9145 = vsel %vm2020, %v9143, %v9144
      %v9146 = vrot.slane %v9040, 5
      %v9147 = vrot.slane %v9146, 4
      %v9148 = vrot.slane %v8330, 5
      %v9149 = vsel %vm2020, %v9147, %v9148
      %v9150 = vrot.slane %v9148, 4
      %v9151 = vrot.slane %v8331, 5
      %v9152 = vsel %vm2020, %v9150, %v9151
      %v9153 = vrot.slane %v9041, 5
      %v9154 = vrot.slane %v9153, 4
      %v9155 = vrot.slane %v8333, 5
      %v9156 = vsel %vm2020, %v9154, %v9155
      %v9157 = vrot.slane %v9155, 4
      %v9158 = vrot.slane %v8334, 5
      %v9159 = vsel %vm2020, %v9157, %v9158
      %v9160 = vrot.slane %v9042, 5
      %v9161 = vrot.slane %v9160, 4
      %v9162 = vrot.slane %v8336, 5
      %v9163 = vsel %vm2020, %v9161, %v9162
      %v9164 = vrot.slane %v9162, 4
      %v9165 = vrot.slane %v8337, 5
      %v9166 = vsel %vm2020, %v9164, %v9165
      %v9167 = vrot.slane %v9043, 5
      %v9168 = vrot.slane %v9167, 4
      %v9169 = vrot.slane %v8339, 5
      %v9170 = vsel %vm2020, %v9168, %v9169
      %v9171 = vrot.slane %v9169, 4
      %v9172 = vrot.slane %v8340, 5
      %v9173 = vsel %vm2020, %v9171, %v9172
      %v9174 = vrot.slane %v9044, 5
      %v9175 = vrot.slane %v9174, 4
      %v9176 = vrot.slane %v8342, 5
      %v9177 = vsel %vm2020, %v9175, %v9176
      %v9178 = vrot.slane %v9176, 4
      %v9179 = vrot.slane %v8343, 5
      %v9180 = vsel %vm2020, %v9178, %v9179
      %v9181 = vrot.slane %v9045, 5
      %v9182 = vrot.slane %v9181, 4
      %v9183 = vrot.slane %v8345, 5
      %v9184 = vsel %vm2020, %v9182, %v9183
      %v9185 = vrot.slane %v9183, 4
      %v9186 = vrot.slane %v8346, 5
      %v9187 = vsel %vm2020, %v9185, %v9186
      %v9188 = vrot.slane %v9046, 5
      %v9189 = vrot.slane %v9188, 4
      %v9190 = vrot.slane %v8348, 5
      %v9191 = vsel %vm2020, %v9189, %v9190
      %v9192 = vrot.slane %v9190, 4
      %v9193 = vrot.slane %v8349, 5
      %v9194 = vsel %vm2020, %v9192, %v9193
      %v9195 = vrot.slane %v9047, 5
      %v9196 = vrot.slane %v9195, 4
      %v9197 = vrot.slane %v8351, 5
      %v9198 = vsel %vm2020, %v9196, %v9197
      %v9199 = vrot.slane %v9197, 4
      %v9200 = vrot.slane %v8352, 5
      %v9201 = vsel %vm2020, %v9199, %v9200
      %v9202 = vrot.slane %v9048, 5
      %v9203 = vrot.slane %v9202, 4
      %v9204 = vrot.slane %v8354, 5
      %v9205 = vsel %vm2020, %v9203, %v9204
      %v9206 = vrot.slane %v9204, 4
      %v9207 = vrot.slane %v8355, 5
      %v9208 = vsel %vm2020, %v9206, %v9207
      %v9209 = vld [vmem:[%s2 + $0x8] sm:$0xc]
      %v9210 = vunpack.c.l.b16 %v9100
      %v9211 = vunpack.c.l.b16 %v9103
      %v9212 = vunpack.c.l.b16 %v9107
      %v9213 = vunpack.c.l.b16 %v9110
      %v9214 = vunpack.c.l.b16 %v9114
      %v9215 = vunpack.c.l.b16 %v9117
      %v9216 = vunpack.c.l.b16 %v9121
      %v9217 = vunpack.c.l.b16 %v9124
      %v9218 = vunpack.c.l.b16 %v9128
      %v9219 = vunpack.c.l.b16 %v9131
      %v9220 = vunpack.c.l.b16 %v9135
      %v9221 = vunpack.c.l.b16 %v9138
      %v9222 = vunpack.c.l.b16 %v9142
      %v9223 = vunpack.c.l.b16 %v9145
      %v9224 = vunpack.c.l.b16 %v9149
      %v9225 = vunpack.c.l.b16 %v9152
      %v9226 = vunpack.c.l.b16 %v9156
      %v9227 = vunpack.c.l.b16 %v9159
      %v9228 = vunpack.c.l.b16 %v9163
      %v9229 = vunpack.c.l.b16 %v9166
      %v9230 = vunpack.c.l.b16 %v9170
      %v9231 = vunpack.c.l.b16 %v9173
      %v9232 = vunpack.c.l.b16 %v9177
      %v9233 = vunpack.c.l.b16 %v9180
      %v9234 = vunpack.c.l.b16 %v9184
      %v9235 = vunpack.c.l.b16 %v9187
      %v9236 = vunpack.c.l.b16 %v9191
      %v9237 = vunpack.c.l.b16 %v9194
      %v9238 = vunpack.c.l.b16 %v9198
      %v9239 = vunpack.c.l.b16 %v9201
      %v9240 = vunpack.c.l.b16 %v9205
      %v9241 = vunpack.c.l.b16 %v9208
      %v9242 = vpack.c.b16 %v9211, %v9210
      %v9243 = vpack.c.b16 %v9213, %v9212
      %v9244 = vpack.c.b16 %v9215, %v9214
      %v9245 = vpack.c.b16 %v9217, %v9216
      %v9246 = vpack.c.b16 %v9219, %v9218
      %v9247 = vpack.c.b16 %v9221, %v9220
      %v9248 = vpack.c.b16 %v9223, %v9222
      %v9249 = vpack.c.b16 %v9225, %v9224
      %v9250 = vpack.c.b16 %v9227, %v9226
      %v9251 = vpack.c.b16 %v9229, %v9228
      %v9252 = vpack.c.b16 %v9231, %v9230
      %v9253 = vpack.c.b16 %v9233, %v9232
      %v9254 = vpack.c.b16 %v9235, %v9234
      %v9255 = vpack.c.b16 %v9237, %v9236
      %v9256 = vpack.c.b16 %v9239, %v9238
      %v9257 = vpack.c.b16 %v9241, %v9240
      %v9259 = vunpack.c.l.b16 %v9209
      %v9260 = vpack.c.b16 %v9259, %v9259
      %v9261 = vrot.slane %v9260, 2
      %v9263 = vsel %vm1404, %v9242, 0
      %v9266 = vsel %vm1404, %v9243, 0
      %v9269 = vsel %vm1404, %v9244, 0
      %v9272 = vsel %vm1404, %v9245, 0
      %v9275 = vsel %vm1404, %v9246, 0
      %v9278 = vsel %vm1404, %v9247, 0
      %v9281 = vsel %vm1404, %v9248, 0
      %v9284 = vsel %vm1404, %v9249, 0
      %v9287 = vsel %vm1404, %v9250, 0
      %v9290 = vsel %vm1404, %v9251, 0
      %v9293 = vsel %vm1404, %v9252, 0
      %v9296 = vsel %vm1404, %v9253, 0
      %v9299 = vsel %vm1404, %v9254, 0
      %v9302 = vsel %vm1404, %v9255, 0
      %v9305 = vsel %vm1404, %v9256, 0
      %v9308 = vsel %vm1404, %v9257, 0
      %v9311 = vsel %vm1459, %v9261, 0
      %9313 = vmatprep.subr.bf16.mxu0 0
      %9314 = vmatpush1.bf16.msra.mxu0 0
      %9315 = vmatprep.subr.bf16.mxu0 0
      %9316 = vmatpush1.bf16.msra.mxu0 0
      %9317 = vmatprep.subr.bf16.mxu0 0
      %9318 = vmatpush1.bf16.msra.mxu0 0
      %9319 = vmatprep.subr.bf16.mxu0 0
      %9320 = vmatpush1.bf16.msra.mxu0 0
      %9321 = vmatprep.subr.bf16.mxu0 0
      %9322 = vmatpush1.bf16.msra.mxu0 0
      %9323 = vmatprep.subr.bf16.mxu0 0
      %9324 = vmatpush1.bf16.msra.mxu0 0
      %9325 = vmatprep.subr.bf16.mxu0 0
      %9326 = vmatpush1.bf16.msra.mxu0 0
      %9327 = vmatprep.subr.bf16.mxu0 0
      %9328 = vmatpush1.bf16.msra.mxu0 %v9311
      %9329 = vmatprep.subr.bf16.mxu0 0
      %9330 = vmatpush2.bf16.msra.mxu0 0
      %9331 = vmatprep.subr.bf16.mxu0 0
      %9332 = vmatpush2.bf16.msra.mxu0 0
      %9333 = vmatprep.subr.bf16.mxu0 0
      %9334 = vmatpush2.bf16.msra.mxu0 0
      %9335 = vmatprep.subr.bf16.mxu0 0
      %9336 = vmatpush2.bf16.msra.mxu0 0
      %9337 = vmatprep.subr.bf16.mxu0 0
      %9338 = vmatpush2.bf16.msra.mxu0 0
      %9339 = vmatprep.subr.bf16.mxu0 0
      %9340 = vmatpush2.bf16.msra.mxu0 0
      %9341 = vmatprep.subr.bf16.mxu0 0
      %9342 = vmatpush2.bf16.msra.mxu0 0
      %9343 = vmatprep.subr.bf16.mxu0 0
      %9344 = vmatpush2.bf16.msra.mxu0 0
      %9345 = vmatprep.mubr.bf16.mxu0 0
      %9346 = vmatmul.mubr.bf16.gmra.mxu0 %v9263
      %v9347 = vpop.f32.mrf.mxu0
      %v9348 = vadd.f32 0.0, %v9347
      %v9349 = vpop.f32.mrf.mxu0
      %v9350 = vpop.f32.mrf.mxu0
      %v9351 = vadd.f32 0.0, %v9350
      %v9352 = vpop.f32.mrf.mxu0
      %9353 = vmatprep.mubr.bf16.mxu0 0
      %9354 = vmatmul.mubr.bf16.gmra.mxu0 %v9266
      %v9355 = vpop.f32.mrf.mxu0
      %v9356 = vadd.f32 0.0, %v9355
      %v9357 = vpop.f32.mrf.mxu0
      %v9358 = vpop.f32.mrf.mxu0
      %v9359 = vadd.f32 0.0, %v9358
      %v9360 = vpop.f32.mrf.mxu0
      %9361 = vmatprep.mubr.bf16.mxu0 0
      %9362 = vmatmul.mubr.bf16.gmra.mxu0 %v9269
      %v9363 = vpop.f32.mrf.mxu0
      %v9364 = vadd.f32 0.0, %v9363
      %v9365 = vpop.f32.mrf.mxu0
      %v9366 = vpop.f32.mrf.mxu0
      %v9367 = vadd.f32 0.0, %v9366
      %v9368 = vpop.f32.mrf.mxu0
      %9369 = vmatprep.mubr.bf16.mxu0 0
      %9370 = vmatmul.mubr.bf16.gmra.mxu0 %v9272
      %v9371 = vpop.f32.mrf.mxu0
      %v9372 = vadd.f32 0.0, %v9371
      %v9373 = vpop.f32.mrf.mxu0
      %v9374 = vpop.f32.mrf.mxu0
      %v9375 = vadd.f32 0.0, %v9374
      %v9376 = vpop.f32.mrf.mxu0
      %9377 = vmatprep.mubr.bf16.mxu0 0
      %9378 = vmatmul.mubr.bf16.gmra.mxu0 %v9275
      %v9379 = vpop.f32.mrf.mxu0
      %v9380 = vadd.f32 0.0, %v9379
      %v9381 = vpop.f32.mrf.mxu0
      %v9382 = vpop.f32.mrf.mxu0
      %v9383 = vadd.f32 0.0, %v9382
      %v9384 = vpop.f32.mrf.mxu0
      %9385 = vmatprep.mubr.bf16.mxu0 0
      %9386 = vmatmul.mubr.bf16.gmra.mxu0 %v9278
      %v9387 = vpop.f32.mrf.mxu0
      %v9388 = vadd.f32 0.0, %v9387
      %v9389 = vpop.f32.mrf.mxu0
      %v9390 = vpop.f32.mrf.mxu0
      %v9391 = vadd.f32 0.0, %v9390
      %v9392 = vpop.f32.mrf.mxu0
      %9393 = vmatprep.mubr.bf16.mxu0 0
      %9394 = vmatmul.mubr.bf16.gmra.mxu0 %v9281
      %v9395 = vpop.f32.mrf.mxu0
      %v9396 = vadd.f32 0.0, %v9395
      %v9397 = vpop.f32.mrf.mxu0
      %v9398 = vpop.f32.mrf.mxu0
      %v9399 = vadd.f32 0.0, %v9398
      %v9400 = vpop.f32.mrf.mxu0
      %9401 = vmatprep.mubr.bf16.mxu0 0
      %9402 = vmatmul.mubr.bf16.gmra.mxu0 %v9284
      %v9403 = vpop.f32.mrf.mxu0
      %v9404 = vadd.f32 0.0, %v9403
      %v9405 = vpop.f32.mrf.mxu0
      %v9406 = vpop.f32.mrf.mxu0
      %v9407 = vadd.f32 0.0, %v9406
      %v9408 = vpop.f32.mrf.mxu0
      %9409 = vmatprep.mubr.bf16.mxu0 0
      %9410 = vmatmul.mubr.bf16.gmra.mxu0 %v9287
      %v9411 = vpop.f32.mrf.mxu0
      %v9412 = vadd.f32 0.0, %v9411
      %v9413 = vpop.f32.mrf.mxu0
      %v9414 = vpop.f32.mrf.mxu0
      %v9415 = vadd.f32 0.0, %v9414
      %v9416 = vpop.f32.mrf.mxu0
      %9417 = vmatprep.mubr.bf16.mxu0 0
      %9418 = vmatmul.mubr.bf16.gmra.mxu0 %v9290
      %v9419 = vpop.f32.mrf.mxu0
      %v9420 = vadd.f32 0.0, %v9419
      %v9421 = vpop.f32.mrf.mxu0
      %v9422 = vpop.f32.mrf.mxu0
      %v9423 = vadd.f32 0.0, %v9422
      %v9424 = vpop.f32.mrf.mxu0
      %9425 = vmatprep.mubr.bf16.mxu0 0
      %9426 = vmatmul.mubr.bf16.gmra.mxu0 %v9293
      %v9427 = vpop.f32.mrf.mxu0
      %v9428 = vadd.f32 0.0, %v9427
      %v9429 = vpop.f32.mrf.mxu0
      %v9430 = vpop.f32.mrf.mxu0
      %v9431 = vadd.f32 0.0, %v9430
      %v9432 = vpop.f32.mrf.mxu0
      %9433 = vmatprep.mubr.bf16.mxu0 0
      %9434 = vmatmul.mubr.bf16.gmra.mxu0 %v9296
      %v9435 = vpop.f32.mrf.mxu0
      %v9436 = vadd.f32 0.0, %v9435
      %v9437 = vpop.f32.mrf.mxu0
      %v9438 = vpop.f32.mrf.mxu0
      %v9439 = vadd.f32 0.0, %v9438
      %v9440 = vpop.f32.mrf.mxu0
      %9441 = vmatprep.mubr.bf16.mxu0 0
      %9442 = vmatmul.mubr.bf16.gmra.mxu0 %v9299
      %v9443 = vpop.f32.mrf.mxu0
      %v9444 = vadd.f32 0.0, %v9443
      %v9445 = vpop.f32.mrf.mxu0
      %v9446 = vpop.f32.mrf.mxu0
      %v9447 = vadd.f32 0.0, %v9446
      %v9448 = vpop.f32.mrf.mxu0
      %9449 = vmatprep.mubr.bf16.mxu0 0
      %9450 = vmatmul.mubr.bf16.gmra.mxu0 %v9302
      %v9451 = vpop.f32.mrf.mxu0
      %v9452 = vadd.f32 0.0, %v9451
      %v9453 = vpop.f32.mrf.mxu0
      %v9454 = vpop.f32.mrf.mxu0
      %v9455 = vadd.f32 0.0, %v9454
      %v9456 = vpop.f32.mrf.mxu0
      %9457 = vmatprep.mubr.bf16.mxu0 0
      %9458 = vmatmul.mubr.bf16.gmra.mxu0 %v9305
      %v9459 = vpop.f32.mrf.mxu0
      %v9460 = vadd.f32 0.0, %v9459
      %v9461 = vpop.f32.mrf.mxu0
      %v9462 = vpop.f32.mrf.mxu0
      %v9463 = vadd.f32 0.0, %v9462
      %v9464 = vpop.f32.mrf.mxu0
      %9465 = vmatprep.mubr.bf16.mxu0 0
      %9466 = vmatmul.mubr.bf16.gmra.mxu0 %v9308
      %v9467 = vpop.f32.mrf.mxu0
      %v9468 = vadd.f32 0.0, %v9467
      %v9469 = vpop.f32.mrf.mxu0
      %v9470 = vpop.f32.mrf.mxu0
      %v9471 = vadd.f32 0.0, %v9470
      %v9472 = vpop.f32.mrf.mxu0
      %9473 = vdwg.mxu0
      %v9474 = vadd.f32 %v9001, %v9348
      %v9475 = vadd.f32 %v9002, %v9351
      %v9476 = vadd.f32 %v9003, %v9356
      %v9477 = vadd.f32 %v9004, %v9359
      %v9478 = vadd.f32 %v9005, %v9364
      %v9479 = vadd.f32 %v9006, %v9367
      %v9480 = vadd.f32 %v9007, %v9372
      %v9481 = vadd.f32 %v9008, %v9375
      %v9482 = vadd.f32 %v9009, %v9380
      %v9483 = vadd.f32 %v9010, %v9383
      %v9484 = vadd.f32 %v9011, %v9388
      %v9485 = vadd.f32 %v9012, %v9391
      %v9486 = vadd.f32 %v9013, %v9396
      %v9487 = vadd.f32 %v9014, %v9399
      %v9488 = vadd.f32 %v9015, %v9404
      %v9489 = vadd.f32 %v9016, %v9407
      %v9490 = vadd.f32 %v9017, %v9412
      %v9491 = vadd.f32 %v9018, %v9415
      %v9492 = vadd.f32 %v9019, %v9420
      %v9493 = vadd.f32 %v9020, %v9423
      %v9494 = vadd.f32 %v9021, %v9428
      %v9495 = vadd.f32 %v9022, %v9431
      %v9496 = vadd.f32 %v9023, %v9436
      %v9497 = vadd.f32 %v9024, %v9439
      %v9498 = vadd.f32 %v9025, %v9444
      %v9499 = vadd.f32 %v9026, %v9447
      %v9500 = vadd.f32 %v9027, %v9452
      %v9501 = vadd.f32 %v9028, %v9455
      %v9502 = vadd.f32 %v9029, %v9460
      %v9503 = vadd.f32 %v9030, %v9463
      %v9504 = vadd.f32 %v9031, %v9468
      %v9505 = vadd.f32 %v9032, %v9471
      %v9506 = vld [vmem:[%s657] sm:$0xf]
      %v9507 = vld [vmem:[%s657 + $0x4] sm:$0xf]
      %v9508 = vld [vmem:[%s657 + $0xc] sm:$0xf]
      %v9509 = vld [vmem:[%s657 + $0x10] sm:$0xf]
      %v9510 = vld [vmem:[%s657 + $0x18] sm:$0xf]
      %v9511 = vld [vmem:[%s657 + $0x1c] sm:$0xf]
      %v9512 = vld [vmem:[%s657 + $0x24] sm:$0xf]
      %v9513 = vld [vmem:[%s657 + $0x28] sm:$0xf]
      %v9514 = vld [vmem:[%s657 + $0x30] sm:$0xf]
      %v9515 = vld [vmem:[%s657 + $0x34] sm:$0xf]
      %v9516 = vld [vmem:[%s657 + $0x3c] sm:$0xf]
      %v9517 = vld [vmem:[%s657 + $0x40] sm:$0xf]
      %v9518 = vld [vmem:[%s657 + $0x48] sm:$0xf]
      %v9519 = vld [vmem:[%s657 + $0x4c] sm:$0xf]
      %v9520 = vld [vmem:[%s657 + $0x54] sm:$0xf]
      %v9521 = vld [vmem:[%s657 + $0x58] sm:$0xf]
      %v9522 = vld [vmem:[%s657 + $0x60] sm:$0xf]
      %v9523 = vld [vmem:[%s657 + $0x64] sm:$0xf]
      %v9524 = vld [vmem:[%s657 + $0x6c] sm:$0xf]
      %v9525 = vld [vmem:[%s657 + $0x70] sm:$0xf]
      %v9526 = vld [vmem:[%s657 + $0x78] sm:$0xf]
      %v9527 = vld [vmem:[%s657 + $0x7c] sm:$0xf]
      %v9528 = vld [vmem:[%s657 + $0x84] sm:$0xf]
      %v9529 = vld [vmem:[%s657 + $0x88] sm:$0xf]
      %v9530 = vld [vmem:[%s657 + $0x90] sm:$0xf]
      %v9531 = vld [vmem:[%s657 + $0x94] sm:$0xf]
      %v9532 = vld [vmem:[%s657 + $0x9c] sm:$0xf]
      %v9533 = vld [vmem:[%s657 + $0xa0] sm:$0xf]
      %v9534 = vld [vmem:[%s657 + $0xa8] sm:$0xf]
      %v9535 = vld [vmem:[%s657 + $0xac] sm:$0xf]
      %v9536 = vld [vmem:[%s657 + $0xb4] sm:$0xf]
      %v9537 = vld [vmem:[%s657 + $0xb8] sm:$0xf]
      %v9538 = vld [vmem:[%s2 + $0xc] sm:$0x3]
      %v9571 = vunpack.c.l.b16 %v9506
      %v9572 = vunpack.c.l.b16 %v9507
      %v9573 = vunpack.c.l.b16 %v9508
      %v9574 = vunpack.c.l.b16 %v9509
      %v9575 = vunpack.c.l.b16 %v9510
      %v9576 = vunpack.c.l.b16 %v9511
      %v9577 = vunpack.c.l.b16 %v9512
      %v9578 = vunpack.c.l.b16 %v9513
      %v9579 = vunpack.c.l.b16 %v9514
      %v9580 = vunpack.c.l.b16 %v9515
      %v9581 = vunpack.c.l.b16 %v9516
      %v9582 = vunpack.c.l.b16 %v9517
      %v9583 = vunpack.c.l.b16 %v9518
      %v9584 = vunpack.c.l.b16 %v9519
      %v9585 = vunpack.c.l.b16 %v9520
      %v9586 = vunpack.c.l.b16 %v9521
      %v9587 = vunpack.c.l.b16 %v9522
      %v9588 = vunpack.c.l.b16 %v9523
      %v9589 = vunpack.c.l.b16 %v9524
      %v9590 = vunpack.c.l.b16 %v9525
      %v9591 = vunpack.c.l.b16 %v9526
      %v9592 = vunpack.c.l.b16 %v9527
      %v9593 = vunpack.c.l.b16 %v9528
      %v9594 = vunpack.c.l.b16 %v9529
      %v9595 = vunpack.c.l.b16 %v9530
      %v9596 = vunpack.c.l.b16 %v9531
      %v9597 = vunpack.c.l.b16 %v9532
      %v9598 = vunpack.c.l.b16 %v9533
      %v9599 = vunpack.c.l.b16 %v9534
      %v9600 = vunpack.c.l.b16 %v9535
      %v9601 = vunpack.c.l.b16 %v9536
      %v9602 = vunpack.c.l.b16 %v9537
      %v9603 = vpack.c.b16 %v9572, %v9571
      %v9604 = vpack.c.b16 %v9574, %v9573
      %v9605 = vpack.c.b16 %v9576, %v9575
      %v9606 = vpack.c.b16 %v9578, %v9577
      %v9607 = vpack.c.b16 %v9580, %v9579
      %v9608 = vpack.c.b16 %v9582, %v9581
      %v9609 = vpack.c.b16 %v9584, %v9583
      %v9610 = vpack.c.b16 %v9586, %v9585
      %v9611 = vpack.c.b16 %v9588, %v9587
      %v9612 = vpack.c.b16 %v9590, %v9589
      %v9613 = vpack.c.b16 %v9592, %v9591
      %v9614 = vpack.c.b16 %v9594, %v9593
      %v9615 = vpack.c.b16 %v9596, %v9595
      %v9616 = vpack.c.b16 %v9598, %v9597
      %v9617 = vpack.c.b16 %v9600, %v9599
      %v9618 = vpack.c.b16 %v9602, %v9601
      %v9620 = vsel %vm1404, %v9603, 0
      %v9623 = vsel %vm1404, %v9604, 0
      %v9626 = vsel %vm1404, %v9605, 0
      %v9629 = vsel %vm1404, %v9606, 0
      %v9632 = vsel %vm1404, %v9607, 0
      %v9635 = vsel %vm1404, %v9608, 0
      %v9638 = vsel %vm1404, %v9609, 0
      %v9641 = vsel %vm1404, %v9610, 0
      %v9644 = vsel %vm1404, %v9611, 0
      %v9647 = vsel %vm1404, %v9612, 0
      %v9650 = vsel %vm1404, %v9613, 0
      %v9653 = vsel %vm1404, %v9614, 0
      %v9656 = vsel %vm1404, %v9615, 0
      %v9659 = vsel %vm1404, %v9616, 0
      %v9662 = vsel %vm1404, %v9617, 0
      %v9665 = vsel %vm1404, %v9618, 0
      %v9668 = vsel %vm1459, %v9538, 0
      %9670 = vmatprep.subr.bf16.mxu0 0
      %9671 = vmatpush1.bf16.msra.mxu0 0
      %9672 = vmatprep.subr.bf16.mxu0 0
      %9673 = vmatpush1.bf16.msra.mxu0 0
      %9674 = vmatprep.subr.bf16.mxu0 0
      %9675 = vmatpush1.bf16.msra.mxu0 0
      %9676 = vmatprep.subr.bf16.mxu0 0
      %9677 = vmatpush1.bf16.msra.mxu0 0
      %9678 = vmatprep.subr.bf16.mxu0 0
      %9679 = vmatpush1.bf16.msra.mxu0 0
      %9680 = vmatprep.subr.bf16.mxu0 0
      %9681 = vmatpush1.bf16.msra.mxu0 0
      %9682 = vmatprep.subr.bf16.mxu0 0
      %9683 = vmatpush1.bf16.msra.mxu0 0
      %9684 = vmatprep.subr.bf16.mxu0 0
      %9685 = vmatpush1.bf16.msra.mxu0 %v9668
      %9686 = vmatprep.subr.bf16.mxu0 0
      %9687 = vmatpush2.bf16.msra.mxu0 0
      %9688 = vmatprep.subr.bf16.mxu0 0
      %9689 = vmatpush2.bf16.msra.mxu0 0
      %9690 = vmatprep.subr.bf16.mxu0 0
      %9691 = vmatpush2.bf16.msra.mxu0 0
      %9692 = vmatprep.subr.bf16.mxu0 0
      %9693 = vmatpush2.bf16.msra.mxu0 0
      %9694 = vmatprep.subr.bf16.mxu0 0
      %9695 = vmatpush2.bf16.msra.mxu0 0
      %9696 = vmatprep.subr.bf16.mxu0 0
      %9697 = vmatpush2.bf16.msra.mxu0 0
      %9698 = vmatprep.subr.bf16.mxu0 0
      %9699 = vmatpush2.bf16.msra.mxu0 0
      %9700 = vmatprep.subr.bf16.mxu0 0
      %9701 = vmatpush2.bf16.msra.mxu0 0
      %9702 = vmatprep.mubr.bf16.mxu0 0
      %9703 = vmatmul.mubr.bf16.gmra.mxu0 %v9620
      %v9704 = vpop.f32.mrf.mxu0
      %v9705 = vadd.f32 0.0, %v9704
      %v9706 = vpop.f32.mrf.mxu0
      %v9707 = vpop.f32.mrf.mxu0
      %v9708 = vadd.f32 0.0, %v9707
      %v9709 = vpop.f32.mrf.mxu0
      %9710 = vmatprep.mubr.bf16.mxu0 0
      %9711 = vmatmul.mubr.bf16.gmra.mxu0 %v9623
      %v9712 = vpop.f32.mrf.mxu0
      %v9713 = vadd.f32 0.0, %v9712
      %v9714 = vpop.f32.mrf.mxu0
      %v9715 = vpop.f32.mrf.mxu0
      %v9716 = vadd.f32 0.0, %v9715
      %v9717 = vpop.f32.mrf.mxu0
      %9718 = vmatprep.mubr.bf16.mxu0 0
      %9719 = vmatmul.mubr.bf16.gmra.mxu0 %v9626
      %v9720 = vpop.f32.mrf.mxu0
      %v9721 = vadd.f32 0.0, %v9720
      %v9722 = vpop.f32.mrf.mxu0
      %v9723 = vpop.f32.mrf.mxu0
      %v9724 = vadd.f32 0.0, %v9723
      %v9725 = vpop.f32.mrf.mxu0
      %9726 = vmatprep.mubr.bf16.mxu0 0
      %9727 = vmatmul.mubr.bf16.gmra.mxu0 %v9629
      %v9728 = vpop.f32.mrf.mxu0
      %v9729 = vadd.f32 0.0, %v9728
      %v9730 = vpop.f32.mrf.mxu0
      %v9731 = vpop.f32.mrf.mxu0
      %v9732 = vadd.f32 0.0, %v9731
      %v9733 = vpop.f32.mrf.mxu0
      %9734 = vmatprep.mubr.bf16.mxu0 0
      %9735 = vmatmul.mubr.bf16.gmra.mxu0 %v9632
      %v9736 = vpop.f32.mrf.mxu0
      %v9737 = vadd.f32 0.0, %v9736
      %v9738 = vpop.f32.mrf.mxu0
      %v9739 = vpop.f32.mrf.mxu0
      %v9740 = vadd.f32 0.0, %v9739
      %v9741 = vpop.f32.mrf.mxu0
      %9742 = vmatprep.mubr.bf16.mxu0 0
      %9743 = vmatmul.mubr.bf16.gmra.mxu0 %v9635
      %v9744 = vpop.f32.mrf.mxu0
      %v9745 = vadd.f32 0.0, %v9744
      %v9746 = vpop.f32.mrf.mxu0
      %v9747 = vpop.f32.mrf.mxu0
      %v9748 = vadd.f32 0.0, %v9747
      %v9749 = vpop.f32.mrf.mxu0
      %9750 = vmatprep.mubr.bf16.mxu0 0
      %9751 = vmatmul.mubr.bf16.gmra.mxu0 %v9638
      %v9752 = vpop.f32.mrf.mxu0
      %v9753 = vadd.f32 0.0, %v9752
      %v9754 = vpop.f32.mrf.mxu0
      %v9755 = vpop.f32.mrf.mxu0
      %v9756 = vadd.f32 0.0, %v9755
      %v9757 = vpop.f32.mrf.mxu0
      %9758 = vmatprep.mubr.bf16.mxu0 0
      %9759 = vmatmul.mubr.bf16.gmra.mxu0 %v9641
      %v9760 = vpop.f32.mrf.mxu0
      %v9761 = vadd.f32 0.0, %v9760
      %v9762 = vpop.f32.mrf.mxu0
      %v9763 = vpop.f32.mrf.mxu0
      %v9764 = vadd.f32 0.0, %v9763
      %v9765 = vpop.f32.mrf.mxu0
      %9766 = vmatprep.mubr.bf16.mxu0 0
      %9767 = vmatmul.mubr.bf16.gmra.mxu0 %v9644
      %v9768 = vpop.f32.mrf.mxu0
      %v9769 = vadd.f32 0.0, %v9768
      %v9770 = vpop.f32.mrf.mxu0
      %v9771 = vpop.f32.mrf.mxu0
      %v9772 = vadd.f32 0.0, %v9771
      %v9773 = vpop.f32.mrf.mxu0
      %9774 = vmatprep.mubr.bf16.mxu0 0
      %9775 = vmatmul.mubr.bf16.gmra.mxu0 %v9647
      %v9776 = vpop.f32.mrf.mxu0
      %v9777 = vadd.f32 0.0, %v9776
      %v9778 = vpop.f32.mrf.mxu0
      %v9779 = vpop.f32.mrf.mxu0
      %v9780 = vadd.f32 0.0, %v9779
      %v9781 = vpop.f32.mrf.mxu0
      %9782 = vmatprep.mubr.bf16.mxu0 0
      %9783 = vmatmul.mubr.bf16.gmra.mxu0 %v9650
      %v9784 = vpop.f32.mrf.mxu0
      %v9785 = vadd.f32 0.0, %v9784
      %v9786 = vpop.f32.mrf.mxu0
      %v9787 = vpop.f32.mrf.mxu0
      %v9788 = vadd.f32 0.0, %v9787
      %v9789 = vpop.f32.mrf.mxu0
      %9790 = vmatprep.mubr.bf16.mxu0 0
      %9791 = vmatmul.mubr.bf16.gmra.mxu0 %v9653
      %v9792 = vpop.f32.mrf.mxu0
      %v9793 = vadd.f32 0.0, %v9792
      %v9794 = vpop.f32.mrf.mxu0
      %v9795 = vpop.f32.mrf.mxu0
      %v9796 = vadd.f32 0.0, %v9795
      %v9797 = vpop.f32.mrf.mxu0
      %9798 = vmatprep.mubr.bf16.mxu0 0
      %9799 = vmatmul.mubr.bf16.gmra.mxu0 %v9656
      %v9800 = vpop.f32.mrf.mxu0
      %v9801 = vadd.f32 0.0, %v9800
      %v9802 = vpop.f32.mrf.mxu0
      %v9803 = vpop.f32.mrf.mxu0
      %v9804 = vadd.f32 0.0, %v9803
      %v9805 = vpop.f32.mrf.mxu0
      %9806 = vmatprep.mubr.bf16.mxu0 0
      %9807 = vmatmul.mubr.bf16.gmra.mxu0 %v9659
      %v9808 = vpop.f32.mrf.mxu0
      %v9809 = vadd.f32 0.0, %v9808
      %v9810 = vpop.f32.mrf.mxu0
      %v9811 = vpop.f32.mrf.mxu0
      %v9812 = vadd.f32 0.0, %v9811
      %v9813 = vpop.f32.mrf.mxu0
      %9814 = vmatprep.mubr.bf16.mxu0 0
      %9815 = vmatmul.mubr.bf16.gmra.mxu0 %v9662
      %v9816 = vpop.f32.mrf.mxu0
      %v9817 = vadd.f32 0.0, %v9816
      %v9818 = vpop.f32.mrf.mxu0
      %v9819 = vpop.f32.mrf.mxu0
      %v9820 = vadd.f32 0.0, %v9819
      %v9821 = vpop.f32.mrf.mxu0
      %9822 = vmatprep.mubr.bf16.mxu0 0
      %9823 = vmatmul.mubr.bf16.gmra.mxu0 %v9665
      %v9824 = vpop.f32.mrf.mxu0
      %v9825 = vadd.f32 0.0, %v9824
      %v9826 = vpop.f32.mrf.mxu0
      %v9827 = vpop.f32.mrf.mxu0
      %v9828 = vadd.f32 0.0, %v9827
      %v9829 = vpop.f32.mrf.mxu0
      %9830 = vdwg.mxu0
      %v9831 = vadd.f32 %v9474, %v9705
      %v9832 = vadd.f32 %v9475, %v9708
      %v9833 = vadd.f32 %v9476, %v9713
      %v9834 = vadd.f32 %v9477, %v9716
      %v9835 = vadd.f32 %v9478, %v9721
      %v9836 = vadd.f32 %v9479, %v9724
      %v9837 = vadd.f32 %v9480, %v9729
      %v9838 = vadd.f32 %v9481, %v9732
      %v9839 = vadd.f32 %v9482, %v9737
      %v9840 = vadd.f32 %v9483, %v9740
      %v9841 = vadd.f32 %v9484, %v9745
      %v9842 = vadd.f32 %v9485, %v9748
      %v9843 = vadd.f32 %v9486, %v9753
      %v9844 = vadd.f32 %v9487, %v9756
      %v9845 = vadd.f32 %v9488, %v9761
      %v9846 = vadd.f32 %v9489, %v9764
      %v9847 = vadd.f32 %v9490, %v9769
      %v9848 = vadd.f32 %v9491, %v9772
      %v9849 = vadd.f32 %v9492, %v9777
      %v9850 = vadd.f32 %v9493, %v9780
      %v9851 = vadd.f32 %v9494, %v9785
      %v9852 = vadd.f32 %v9495, %v9788
      %v9853 = vadd.f32 %v9496, %v9793
      %v9854 = vadd.f32 %v9497, %v9796
      %v9855 = vadd.f32 %v9498, %v9801
      %v9856 = vadd.f32 %v9499, %v9804
      %v9857 = vadd.f32 %v9500, %v9809
      %v9858 = vadd.f32 %v9501, %v9812
      %v9859 = vadd.f32 %v9502, %v9817
      %v9860 = vadd.f32 %v9503, %v9820
      %v9861 = vadd.f32 %v9504, %v9825
      %v9862 = vadd.f32 %v9505, %v9828
      %v9863 = vld [vmem:[%s657] sm:$0xf]
      %v9864 = vld [vmem:[%s657 + $0x4] sm:$0xf]
      %v9865 = vld [vmem:[%s657 + $0x8] sm:$0x1]
      %v9866 = vld [vmem:[%s657 + $0xc] sm:$0xf]
      %v9867 = vld [vmem:[%s657 + $0x10] sm:$0xf]
      %v9868 = vld [vmem:[%s657 + $0x14] sm:$0x1]
      %v9869 = vld [vmem:[%s657 + $0x18] sm:$0xf]
      %v9870 = vld [vmem:[%s657 + $0x1c] sm:$0xf]
      %v9871 = vld [vmem:[%s657 + $0x20] sm:$0x1]
      %v9872 = vld [vmem:[%s657 + $0x24] sm:$0xf]
      %v9873 = vld [vmem:[%s657 + $0x28] sm:$0xf]
      %v9874 = vld [vmem:[%s657 + $0x2c] sm:$0x1]
      %v9875 = vld [vmem:[%s657 + $0x30] sm:$0xf]
      %v9876 = vld [vmem:[%s657 + $0x34] sm:$0xf]
      %v9877 = vld [vmem:[%s657 + $0x38] sm:$0x1]
      %v9878 = vld [vmem:[%s657 + $0x3c] sm:$0xf]
      %v9879 = vld [vmem:[%s657 + $0x40] sm:$0xf]
      %v9880 = vld [vmem:[%s657 + $0x44] sm:$0x1]
      %v9881 = vld [vmem:[%s657 + $0x48] sm:$0xf]
      %v9882 = vld [vmem:[%s657 + $0x4c] sm:$0xf]
      %v9883 = vld [vmem:[%s657 + $0x50] sm:$0x1]
      %v9884 = vld [vmem:[%s657 + $0x54] sm:$0xf]
      %v9885 = vld [vmem:[%s657 + $0x58] sm:$0xf]
      %v9886 = vld [vmem:[%s657 + $0x5c] sm:$0x1]
      %v9887 = vld [vmem:[%s657 + $0x60] sm:$0xf]
      %v9888 = vld [vmem:[%s657 + $0x64] sm:$0xf]
      %v9889 = vld [vmem:[%s657 + $0x68] sm:$0x1]
      %v9890 = vld [vmem:[%s657 + $0x6c] sm:$0xf]
      %v9891 = vld [vmem:[%s657 + $0x70] sm:$0xf]
      %v9892 = vld [vmem:[%s657 + $0x74] sm:$0x1]
      %v9893 = vld [vmem:[%s657 + $0x78] sm:$0xf]
      %v9894 = vld [vmem:[%s657 + $0x7c] sm:$0xf]
      %v9895 = vld [vmem:[%s657 + $0x80] sm:$0x1]
      %v9896 = vld [vmem:[%s657 + $0x84] sm:$0xf]
      %v9897 = vld [vmem:[%s657 + $0x88] sm:$0xf]
      %v9898 = vld [vmem:[%s657 + $0x8c] sm:$0x1]
      %v9899 = vld [vmem:[%s657 + $0x90] sm:$0xf]
      %v9900 = vld [vmem:[%s657 + $0x94] sm:$0xf]
      %v9901 = vld [vmem:[%s657 + $0x98] sm:$0x1]
      %v9902 = vld [vmem:[%s657 + $0x9c] sm:$0xf]
      %v9903 = vld [vmem:[%s657 + $0xa0] sm:$0xf]
      %v9904 = vld [vmem:[%s657 + $0xa4] sm:$0x1]
      %v9905 = vld [vmem:[%s657 + $0xa8] sm:$0xf]
      %v9906 = vld [vmem:[%s657 + $0xac] sm:$0xf]
      %v9907 = vld [vmem:[%s657 + $0xb0] sm:$0x1]
      %v9908 = vld [vmem:[%s657 + $0xb4] sm:$0xf]
      %v9909 = vld [vmem:[%s657 + $0xb8] sm:$0xf]
      %v9910 = vld [vmem:[%s657 + $0xbc] sm:$0x1]
      %v9912 = vshrl.u32 %v9863, 16
      %v9914 = vrot.slane %v9912, 4
      %v9915 = vshll.u32 %v9863, 16
      %v9917 = vrot.slane %v9915, 5
      %v9918 = vor.u32 %v9914, %v9917
      %v9919 = vrot.slane %v9918, 4
      %v9921 = vshll.u32 %v9864, 16
      %v9923 = vrot.slane %v9921, 5
      %v9924 = vsel %vm912, %v9919, %v9923
      %v9925 = vshrl.u32 %v9864, 16
      %v9927 = vrot.slane %v9925, 4
      %v9928 = vor.u32 %v9927, %v9923
      %v9929 = vrot.slane %v9928, 4
      %v9931 = vshll.u32 %v9865, 16
      %v9933 = vrot.slane %v9931, 5
      %v9934 = vsel %vm912, %v9929, %v9933
      %v9936 = vshrl.u32 %v9866, 16
      %v9938 = vrot.slane %v9936, 4
      %v9939 = vshll.u32 %v9866, 16
      %v9941 = vrot.slane %v9939, 5
      %v9942 = vor.u32 %v9938, %v9941
      %v9943 = vrot.slane %v9942, 4
      %v9945 = vshll.u32 %v9867, 16
      %v9947 = vrot.slane %v9945, 5
      %v9948 = vsel %vm912, %v9943, %v9947
      %v9949 = vshrl.u32 %v9867, 16
      %v9951 = vrot.slane %v9949, 4
      %v9952 = vor.u32 %v9951, %v9947
      %v9953 = vrot.slane %v9952, 4
      %v9955 = vshll.u32 %v9868, 16
      %v9957 = vrot.slane %v9955, 5
      %v9958 = vsel %vm912, %v9953, %v9957
      %v9960 = vshrl.u32 %v9869, 16
      %v9962 = vrot.slane %v9960, 4
      %v9963 = vshll.u32 %v9869, 16
      %v9965 = vrot.slane %v9963, 5
      %v9966 = vor.u32 %v9962, %v9965
      %v9967 = vrot.slane %v9966, 4
      %v9969 = vshll.u32 %v9870, 16
      %v9971 = vrot.slane %v9969, 5
      %v9972 = vsel %vm912, %v9967, %v9971
      %v9973 = vshrl.u32 %v9870, 16
      %v9975 = vrot.slane %v9973, 4
      %v9976 = vor.u32 %v9975, %v9971
      %v9977 = vrot.slane %v9976, 4
      %v9979 = vshll.u32 %v9871, 16
      %v9981 = vrot.slane %v9979, 5
      %v9982 = vsel %vm912, %v9977, %v9981
      %v9984 = vshrl.u32 %v9872, 16
      %v9986 = vrot.slane %v9984, 4
      %v9987 = vshll.u32 %v9872, 16
      %v9989 = vrot.slane %v9987, 5
      %v9990 = vor.u32 %v9986, %v9989
      %v9991 = vrot.slane %v9990, 4
      %v9993 = vshll.u32 %v9873, 16
      %v9995 = vrot.slane %v9993, 5
      %v9996 = vsel %vm912, %v9991, %v9995
      %v9997 = vshrl.u32 %v9873, 16
      %v9999 = vrot.slane %v9997, 4
      %v10000 = vor.u32 %v9999, %v9995
      %v10001 = vrot.slane %v10000, 4
      %v10003 = vshll.u32 %v9874, 16
      %v10005 = vrot.slane %v10003, 5
      %v10006 = vsel %vm912, %v10001, %v10005
      %v10008 = vshrl.u32 %v9875, 16
      %v10010 = vrot.slane %v10008, 4
      %v10011 = vshll.u32 %v9875, 16
      %v10013 = vrot.slane %v10011, 5
      %v10014 = vor.u32 %v10010, %v10013
      %v10015 = vrot.slane %v10014, 4
      %v10017 = vshll.u32 %v9876, 16
      %v10019 = vrot.slane %v10017, 5
      %v10020 = vsel %vm912, %v10015, %v10019
      %v10021 = vshrl.u32 %v9876, 16
      %v10023 = vrot.slane %v10021, 4
      %v10024 = vor.u32 %v10023, %v10019
      %v10025 = vrot.slane %v10024, 4
      %v10027 = vshll.u32 %v9877, 16
      %v10029 = vrot.slane %v10027, 5
      %v10030 = vsel %vm912, %v10025, %v10029
      %v10032 = vshrl.u32 %v9878, 16
      %v10034 = vrot.slane %v10032, 4
      %v10035 = vshll.u32 %v9878, 16
      %v10037 = vrot.slane %v10035, 5
      %v10038 = vor.u32 %v10034, %v10037
      %v10039 = vrot.slane %v10038, 4
      %v10041 = vshll.u32 %v9879, 16
      %v10043 = vrot.slane %v10041, 5
      %v10044 = vsel %vm912, %v10039, %v10043
      %v10045 = vshrl.u32 %v9879, 16
      %v10047 = vrot.slane %v10045, 4
      %v10048 = vor.u32 %v10047, %v10043
      %v10049 = vrot.slane %v10048, 4
      %v10051 = vshll.u32 %v9880, 16
      %v10053 = vrot.slane %v10051, 5
      %v10054 = vsel %vm912, %v10049, %v10053
      %v10056 = vshrl.u32 %v9881, 16
      %v10058 = vrot.slane %v10056, 4
      %v10059 = vshll.u32 %v9881, 16
      %v10061 = vrot.slane %v10059, 5
      %v10062 = vor.u32 %v10058, %v10061
      %v10063 = vrot.slane %v10062, 4
      %v10065 = vshll.u32 %v9882, 16
      %v10067 = vrot.slane %v10065, 5
      %v10068 = vsel %vm912, %v10063, %v10067
      %v10069 = vshrl.u32 %v9882, 16
      %v10071 = vrot.slane %v10069, 4
      %v10072 = vor.u32 %v10071, %v10067
      %v10073 = vrot.slane %v10072, 4
      %v10075 = vshll.u32 %v9883, 16
      %v10077 = vrot.slane %v10075, 5
      %v10078 = vsel %vm912, %v10073, %v10077
      %v10080 = vshrl.u32 %v9884, 16
      %v10082 = vrot.slane %v10080, 4
      %v10083 = vshll.u32 %v9884, 16
      %v10085 = vrot.slane %v10083, 5
      %v10086 = vor.u32 %v10082, %v10085
      %v10087 = vrot.slane %v10086, 4
      %v10089 = vshll.u32 %v9885, 16
      %v10091 = vrot.slane %v10089, 5
      %v10092 = vsel %vm912, %v10087, %v10091
      %v10093 = vshrl.u32 %v9885, 16
      %v10095 = vrot.slane %v10093, 4
      %v10096 = vor.u32 %v10095, %v10091
      %v10097 = vrot.slane %v10096, 4
      %v10099 = vshll.u32 %v9886, 16
      %v10101 = vrot.slane %v10099, 5
      %v10102 = vsel %vm912, %v10097, %v10101
      %v10104 = vshrl.u32 %v9887, 16
      %v10106 = vrot.slane %v10104, 4
      %v10107 = vshll.u32 %v9887, 16
      %v10109 = vrot.slane %v10107, 5
      %v10110 = vor.u32 %v10106, %v10109
      %v10111 = vrot.slane %v10110, 4
      %v10113 = vshll.u32 %v9888, 16
      %v10115 = vrot.slane %v10113, 5
      %v10116 = vsel %vm912, %v10111, %v10115
      %v10117 = vshrl.u32 %v9888, 16
      %v10119 = vrot.slane %v10117, 4
      %v10120 = vor.u32 %v10119, %v10115
      %v10121 = vrot.slane %v10120, 4
      %v10123 = vshll.u32 %v9889, 16
      %v10125 = vrot.slane %v10123, 5
      %v10126 = vsel %vm912, %v10121, %v10125
      %v10128 = vshrl.u32 %v9890, 16
      %v10130 = vrot.slane %v10128, 4
      %v10131 = vshll.u32 %v9890, 16
      %v10133 = vrot.slane %v10131, 5
      %v10134 = vor.u32 %v10130, %v10133
      %v10135 = vrot.slane %v10134, 4
      %v10137 = vshll.u32 %v9891, 16
      %v10139 = vrot.slane %v10137, 5
      %v10140 = vsel %vm912, %v10135, %v10139
      %v10141 = vshrl.u32 %v9891, 16
      %v10143 = vrot.slane %v10141, 4
      %v10144 = vor.u32 %v10143, %v10139
      %v10145 = vrot.slane %v10144, 4
      %v10147 = vshll.u32 %v9892, 16
      %v10149 = vrot.slane %v10147, 5
      %v10150 = vsel %vm912, %v10145, %v10149
      %v10152 = vshrl.u32 %v9893, 16
      %v10154 = vrot.slane %v10152, 4
      %v10155 = vshll.u32 %v9893, 16
      %v10157 = vrot.slane %v10155, 5
      %v10158 = vor.u32 %v10154, %v10157
      %v10159 = vrot.slane %v10158, 4
      %v10161 = vshll.u32 %v9894, 16
      %v10163 = vrot.slane %v10161, 5
      %v10164 = vsel %vm912, %v10159, %v10163
      %v10165 = vshrl.u32 %v9894, 16
      %v10167 = vrot.slane %v10165, 4
      %v10168 = vor.u32 %v10167, %v10163
      %v10169 = vrot.slane %v10168, 4
      %v10171 = vshll.u32 %v9895, 16
      %v10173 = vrot.slane %v10171, 5
      %v10174 = vsel %vm912, %v10169, %v10173
      %v10176 = vshrl.u32 %v9896, 16
      %v10178 = vrot.slane %v10176, 4
      %v10179 = vshll.u32 %v9896, 16
      %v10181 = vrot.slane %v10179, 5
      %v10182 = vor.u32 %v10178, %v10181
      %v10183 = vrot.slane %v10182, 4
      %v10185 = vshll.u32 %v9897, 16
      %v10187 = vrot.slane %v10185, 5
      %v10188 = vsel %vm912, %v10183, %v10187
      %v10189 = vshrl.u32 %v9897, 16
      %v10191 = vrot.slane %v10189, 4
      %v10192 = vor.u32 %v10191, %v10187
      %v10193 = vrot.slane %v10192, 4
      %v10195 = vshll.u32 %v9898, 16
      %v10197 = vrot.slane %v10195, 5
      %v10198 = vsel %vm912, %v10193, %v10197
      %v10200 = vshrl.u32 %v9899, 16
      %v10202 = vrot.slane %v10200, 4
      %v10203 = vshll.u32 %v9899, 16
      %v10205 = vrot.slane %v10203, 5
      %v10206 = vor.u32 %v10202, %v10205
      %v10207 = vrot.slane %v10206, 4
      %v10209 = vshll.u32 %v9900, 16
      %v10211 = vrot.slane %v10209, 5
      %v10212 = vsel %vm912, %v10207, %v10211
      %v10213 = vshrl.u32 %v9900, 16
      %v10215 = vrot.slane %v10213, 4
      %v10216 = vor.u32 %v10215, %v10211
      %v10217 = vrot.slane %v10216, 4
      %v10219 = vshll.u32 %v9901, 16
      %v10221 = vrot.slane %v10219, 5
      %v10222 = vsel %vm912, %v10217, %v10221
      %v10224 = vshrl.u32 %v9902, 16
      %v10226 = vrot.slane %v10224, 4
      %v10227 = vshll.u32 %v9902, 16
      %v10229 = vrot.slane %v10227, 5
      %v10230 = vor.u32 %v10226, %v10229
      %v10231 = vrot.slane %v10230, 4
      %v10233 = vshll.u32 %v9903, 16
      %v10235 = vrot.slane %v10233, 5
      %v10236 = vsel %vm912, %v10231, %v10235
      %v10237 = vshrl.u32 %v9903, 16
      %v10239 = vrot.slane %v10237, 4
      %v10240 = vor.u32 %v10239, %v10235
      %v10241 = vrot.slane %v10240, 4
      %v10243 = vshll.u32 %v9904, 16
      %v10245 = vrot.slane %v10243, 5
      %v10246 = vsel %vm912, %v10241, %v10245
      %v10248 = vshrl.u32 %v9905, 16
      %v10250 = vrot.slane %v10248, 4
      %v10251 = vshll.u32 %v9905, 16
      %v10253 = vrot.slane %v10251, 5
      %v10254 = vor.u32 %v10250, %v10253
      %v10255 = vrot.slane %v10254, 4
      %v10257 = vshll.u32 %v9906, 16
      %v10259 = vrot.slane %v10257, 5
      %v10260 = vsel %vm912, %v10255, %v10259
      %v10261 = vshrl.u32 %v9906, 16
      %v10263 = vrot.slane %v10261, 4
      %v10264 = vor.u32 %v10263, %v10259
      %v10265 = vrot.slane %v10264, 4
      %v10267 = vshll.u32 %v9907, 16
      %v10269 = vrot.slane %v10267, 5
      %v10270 = vsel %vm912, %v10265, %v10269
      %v10272 = vshrl.u32 %v9908, 16
      %v10274 = vrot.slane %v10272, 4
      %v10275 = vshll.u32 %v9908, 16
      %v10277 = vrot.slane %v10275, 5
      %v10278 = vor.u32 %v10274, %v10277
      %v10279 = vrot.slane %v10278, 4
      %v10281 = vshll.u32 %v9909, 16
      %v10283 = vrot.slane %v10281, 5
      %v10284 = vsel %vm912, %v10279, %v10283
      %v10285 = vshrl.u32 %v9909, 16
      %v10287 = vrot.slane %v10285, 4
      %v10288 = vor.u32 %v10287, %v10283
      %v10289 = vrot.slane %v10288, 4
      %v10291 = vshll.u32 %v9910, 16
      %v10293 = vrot.slane %v10291, 5
      %v10294 = vsel %vm912, %v10289, %v10293
      %v10295 = vld [vmem:[%s2 + $0xc] sm:$0xc]
      %v10296 = vunpack.c.l.b16 %v9924
      %v10297 = vunpack.c.l.b16 %v9934
      %v10298 = vunpack.c.l.b16 %v9948
      %v10299 = vunpack.c.l.b16 %v9958
      %v10300 = vunpack.c.l.b16 %v9972
      %v10301 = vunpack.c.l.b16 %v9982
      %v10302 = vunpack.c.l.b16 %v9996
      %v10303 = vunpack.c.l.b16 %v10006
      %v10304 = vunpack.c.l.b16 %v10020
      %v10305 = vunpack.c.l.b16 %v10030
      %v10306 = vunpack.c.l.b16 %v10044
      %v10307 = vunpack.c.l.b16 %v10054
      %v10308 = vunpack.c.l.b16 %v10068
      %v10309 = vunpack.c.l.b16 %v10078
      %v10310 = vunpack.c.l.b16 %v10092
      %v10311 = vunpack.c.l.b16 %v10102
      %v10312 = vunpack.c.l.b16 %v10116
      %v10313 = vunpack.c.l.b16 %v10126
      %v10314 = vunpack.c.l.b16 %v10140
      %v10315 = vunpack.c.l.b16 %v10150
      %v10316 = vunpack.c.l.b16 %v10164
      %v10317 = vunpack.c.l.b16 %v10174
      %v10318 = vunpack.c.l.b16 %v10188
      %v10319 = vunpack.c.l.b16 %v10198
      %v10320 = vunpack.c.l.b16 %v10212
      %v10321 = vunpack.c.l.b16 %v10222
      %v10322 = vunpack.c.l.b16 %v10236
      %v10323 = vunpack.c.l.b16 %v10246
      %v10324 = vunpack.c.l.b16 %v10260
      %v10325 = vunpack.c.l.b16 %v10270
      %v10326 = vunpack.c.l.b16 %v10284
      %v10327 = vunpack.c.l.b16 %v10294
      %v10328 = vpack.c.b16 %v10297, %v10296
      %v10329 = vpack.c.b16 %v10299, %v10298
      %v10330 = vpack.c.b16 %v10301, %v10300
      %v10331 = vpack.c.b16 %v10303, %v10302
      %v10332 = vpack.c.b16 %v10305, %v10304
      %v10333 = vpack.c.b16 %v10307, %v10306
      %v10334 = vpack.c.b16 %v10309, %v10308
      %v10335 = vpack.c.b16 %v10311, %v10310
      %v10336 = vpack.c.b16 %v10313, %v10312
      %v10337 = vpack.c.b16 %v10315, %v10314
      %v10338 = vpack.c.b16 %v10317, %v10316
      %v10339 = vpack.c.b16 %v10319, %v10318
      %v10340 = vpack.c.b16 %v10321, %v10320
      %v10341 = vpack.c.b16 %v10323, %v10322
      %v10342 = vpack.c.b16 %v10325, %v10324
      %v10343 = vpack.c.b16 %v10327, %v10326
      %v10345 = vunpack.c.l.b16 %v10295
      %v10346 = vpack.c.b16 %v10345, %v10345
      %v10347 = vrot.slane %v10346, 2
      %v10349 = vsel %vm1404, %v10328, 0
      %v10352 = vsel %vm1404, %v10329, 0
      %v10355 = vsel %vm1404, %v10330, 0
      %v10358 = vsel %vm1404, %v10331, 0
      %v10361 = vsel %vm1404, %v10332, 0
      %v10364 = vsel %vm1404, %v10333, 0
      %v10367 = vsel %vm1404, %v10334, 0
      %v10370 = vsel %vm1404, %v10335, 0
      %v10373 = vsel %vm1404, %v10336, 0
      %v10376 = vsel %vm1404, %v10337, 0
      %v10379 = vsel %vm1404, %v10338, 0
      %v10382 = vsel %vm1404, %v10339, 0
      %v10385 = vsel %vm1404, %v10340, 0
      %v10388 = vsel %vm1404, %v10341, 0
      %v10391 = vsel %vm1404, %v10342, 0
      %v10394 = vsel %vm1404, %v10343, 0
      %v10397 = vsel %vm1459, %v10347, 0
      %10399 = vmatprep.subr.bf16.mxu0 0
      %10400 = vmatpush1.bf16.msra.mxu0 0
      %10401 = vmatprep.subr.bf16.mxu0 0
      %10402 = vmatpush1.bf16.msra.mxu0 0
      %10403 = vmatprep.subr.bf16.mxu0 0
      %10404 = vmatpush1.bf16.msra.mxu0 0
      %10405 = vmatprep.subr.bf16.mxu0 0
      %10406 = vmatpush1.bf16.msra.mxu0 0
      %10407 = vmatprep.subr.bf16.mxu0 0
      %10408 = vmatpush1.bf16.msra.mxu0 0
      %10409 = vmatprep.subr.bf16.mxu0 0
      %10410 = vmatpush1.bf16.msra.mxu0 0
      %10411 = vmatprep.subr.bf16.mxu0 0
      %10412 = vmatpush1.bf16.msra.mxu0 0
      %10413 = vmatprep.subr.bf16.mxu0 0
      %10414 = vmatpush1.bf16.msra.mxu0 %v10397
      %10415 = vmatprep.subr.bf16.mxu0 0
      %10416 = vmatpush2.bf16.msra.mxu0 0
      %10417 = vmatprep.subr.bf16.mxu0 0
      %10418 = vmatpush2.bf16.msra.mxu0 0
      %10419 = vmatprep.subr.bf16.mxu0 0
      %10420 = vmatpush2.bf16.msra.mxu0 0
      %10421 = vmatprep.subr.bf16.mxu0 0
      %10422 = vmatpush2.bf16.msra.mxu0 0
      %10423 = vmatprep.subr.bf16.mxu0 0
      %10424 = vmatpush2.bf16.msra.mxu0 0
      %10425 = vmatprep.subr.bf16.mxu0 0
      %10426 = vmatpush2.bf16.msra.mxu0 0
      %10427 = vmatprep.subr.bf16.mxu0 0
      %10428 = vmatpush2.bf16.msra.mxu0 0
      %10429 = vmatprep.subr.bf16.mxu0 0
      %10430 = vmatpush2.bf16.msra.mxu0 0
      %10431 = vmatprep.mubr.bf16.mxu0 0
      %10432 = vmatmul.mubr.bf16.gmra.mxu0 %v10349
      %v10433 = vpop.f32.mrf.mxu0
      %v10434 = vadd.f32 0.0, %v10433
      %v10435 = vpop.f32.mrf.mxu0
      %v10436 = vpop.f32.mrf.mxu0
      %v10437 = vadd.f32 0.0, %v10436
      %v10438 = vpop.f32.mrf.mxu0
      %10439 = vmatprep.mubr.bf16.mxu0 0
      %10440 = vmatmul.mubr.bf16.gmra.mxu0 %v10352
      %v10441 = vpop.f32.mrf.mxu0
      %v10442 = vadd.f32 0.0, %v10441
      %v10443 = vpop.f32.mrf.mxu0
      %v10444 = vpop.f32.mrf.mxu0
      %v10445 = vadd.f32 0.0, %v10444
      %v10446 = vpop.f32.mrf.mxu0
      %10447 = vmatprep.mubr.bf16.mxu0 0
      %10448 = vmatmul.mubr.bf16.gmra.mxu0 %v10355
      %v10449 = vpop.f32.mrf.mxu0
      %v10450 = vadd.f32 0.0, %v10449
      %v10451 = vpop.f32.mrf.mxu0
      %v10452 = vpop.f32.mrf.mxu0
      %v10453 = vadd.f32 0.0, %v10452
      %v10454 = vpop.f32.mrf.mxu0
      %10455 = vmatprep.mubr.bf16.mxu0 0
      %10456 = vmatmul.mubr.bf16.gmra.mxu0 %v10358
      %v10457 = vpop.f32.mrf.mxu0
      %v10458 = vadd.f32 0.0, %v10457
      %v10459 = vpop.f32.mrf.mxu0
      %v10460 = vpop.f32.mrf.mxu0
      %v10461 = vadd.f32 0.0, %v10460
      %v10462 = vpop.f32.mrf.mxu0
      %10463 = vmatprep.mubr.bf16.mxu0 0
      %10464 = vmatmul.mubr.bf16.gmra.mxu0 %v10361
      %v10465 = vpop.f32.mrf.mxu0
      %v10466 = vadd.f32 0.0, %v10465
      %v10467 = vpop.f32.mrf.mxu0
      %v10468 = vpop.f32.mrf.mxu0
      %v10469 = vadd.f32 0.0, %v10468
      %v10470 = vpop.f32.mrf.mxu0
      %10471 = vmatprep.mubr.bf16.mxu0 0
      %10472 = vmatmul.mubr.bf16.gmra.mxu0 %v10364
      %v10473 = vpop.f32.mrf.mxu0
      %v10474 = vadd.f32 0.0, %v10473
      %v10475 = vpop.f32.mrf.mxu0
      %v10476 = vpop.f32.mrf.mxu0
      %v10477 = vadd.f32 0.0, %v10476
      %v10478 = vpop.f32.mrf.mxu0
      %10479 = vmatprep.mubr.bf16.mxu0 0
      %10480 = vmatmul.mubr.bf16.gmra.mxu0 %v10367
      %v10481 = vpop.f32.mrf.mxu0
      %v10482 = vadd.f32 0.0, %v10481
      %v10483 = vpop.f32.mrf.mxu0
      %v10484 = vpop.f32.mrf.mxu0
      %v10485 = vadd.f32 0.0, %v10484
      %v10486 = vpop.f32.mrf.mxu0
      %10487 = vmatprep.mubr.bf16.mxu0 0
      %10488 = vmatmul.mubr.bf16.gmra.mxu0 %v10370
      %v10489 = vpop.f32.mrf.mxu0
      %v10490 = vadd.f32 0.0, %v10489
      %v10491 = vpop.f32.mrf.mxu0
      %v10492 = vpop.f32.mrf.mxu0
      %v10493 = vadd.f32 0.0, %v10492
      %v10494 = vpop.f32.mrf.mxu0
      %10495 = vmatprep.mubr.bf16.mxu0 0
      %10496 = vmatmul.mubr.bf16.gmra.mxu0 %v10373
      %v10497 = vpop.f32.mrf.mxu0
      %v10498 = vadd.f32 0.0, %v10497
      %v10499 = vpop.f32.mrf.mxu0
      %v10500 = vpop.f32.mrf.mxu0
      %v10501 = vadd.f32 0.0, %v10500
      %v10502 = vpop.f32.mrf.mxu0
      %10503 = vmatprep.mubr.bf16.mxu0 0
      %10504 = vmatmul.mubr.bf16.gmra.mxu0 %v10376
      %v10505 = vpop.f32.mrf.mxu0
      %v10506 = vadd.f32 0.0, %v10505
      %v10507 = vpop.f32.mrf.mxu0
      %v10508 = vpop.f32.mrf.mxu0
      %v10509 = vadd.f32 0.0, %v10508
      %v10510 = vpop.f32.mrf.mxu0
      %10511 = vmatprep.mubr.bf16.mxu0 0
      %10512 = vmatmul.mubr.bf16.gmra.mxu0 %v10379
      %v10513 = vpop.f32.mrf.mxu0
      %v10514 = vadd.f32 0.0, %v10513
      %v10515 = vpop.f32.mrf.mxu0
      %v10516 = vpop.f32.mrf.mxu0
      %v10517 = vadd.f32 0.0, %v10516
      %v10518 = vpop.f32.mrf.mxu0
      %10519 = vmatprep.mubr.bf16.mxu0 0
      %10520 = vmatmul.mubr.bf16.gmra.mxu0 %v10382
      %v10521 = vpop.f32.mrf.mxu0
      %v10522 = vadd.f32 0.0, %v10521
      %v10523 = vpop.f32.mrf.mxu0
      %v10524 = vpop.f32.mrf.mxu0
      %v10525 = vadd.f32 0.0, %v10524
      %v10526 = vpop.f32.mrf.mxu0
      %10527 = vmatprep.mubr.bf16.mxu0 0
      %10528 = vmatmul.mubr.bf16.gmra.mxu0 %v10385
      %v10529 = vpop.f32.mrf.mxu0
      %v10530 = vadd.f32 0.0, %v10529
      %v10531 = vpop.f32.mrf.mxu0
      %v10532 = vpop.f32.mrf.mxu0
      %v10533 = vadd.f32 0.0, %v10532
      %v10534 = vpop.f32.mrf.mxu0
      %10535 = vmatprep.mubr.bf16.mxu0 0
      %10536 = vmatmul.mubr.bf16.gmra.mxu0 %v10388
      %v10537 = vpop.f32.mrf.mxu0
      %v10538 = vadd.f32 0.0, %v10537
      %v10539 = vpop.f32.mrf.mxu0
      %v10540 = vpop.f32.mrf.mxu0
      %v10541 = vadd.f32 0.0, %v10540
      %v10542 = vpop.f32.mrf.mxu0
      %10543 = vmatprep.mubr.bf16.mxu0 0
      %10544 = vmatmul.mubr.bf16.gmra.mxu0 %v10391
      %v10545 = vpop.f32.mrf.mxu0
      %v10546 = vadd.f32 0.0, %v10545
      %v10547 = vpop.f32.mrf.mxu0
      %v10548 = vpop.f32.mrf.mxu0
      %v10549 = vadd.f32 0.0, %v10548
      %v10550 = vpop.f32.mrf.mxu0
      %10551 = vmatprep.mubr.bf16.mxu0 0
      %10552 = vmatmul.mubr.bf16.gmra.mxu0 %v10394
      %v10553 = vpop.f32.mrf.mxu0
      %v10554 = vadd.f32 0.0, %v10553
      %v10555 = vpop.f32.mrf.mxu0
      %v10556 = vpop.f32.mrf.mxu0
      %v10557 = vadd.f32 0.0, %v10556
      %v10558 = vpop.f32.mrf.mxu0
      %10559 = vdwg.mxu0
      %v10560 = vadd.f32 %v9831, %v10434
      %v10561 = vadd.f32 %v9832, %v10437
      %v10562 = vadd.f32 %v9833, %v10442
      %v10563 = vadd.f32 %v9834, %v10445
      %v10564 = vadd.f32 %v9835, %v10450
      %v10565 = vadd.f32 %v9836, %v10453
      %v10566 = vadd.f32 %v9837, %v10458
      %v10567 = vadd.f32 %v9838, %v10461
      %v10568 = vadd.f32 %v9839, %v10466
      %v10569 = vadd.f32 %v9840, %v10469
      %v10570 = vadd.f32 %v9841, %v10474
      %v10571 = vadd.f32 %v9842, %v10477
      %v10572 = vadd.f32 %v9843, %v10482
      %v10573 = vadd.f32 %v9844, %v10485
      %v10574 = vadd.f32 %v9845, %v10490
      %v10575 = vadd.f32 %v9846, %v10493
      %v10576 = vadd.f32 %v9847, %v10498
      %v10577 = vadd.f32 %v9848, %v10501
      %v10578 = vadd.f32 %v9849, %v10506
      %v10579 = vadd.f32 %v9850, %v10509
      %v10580 = vadd.f32 %v9851, %v10514
      %v10581 = vadd.f32 %v9852, %v10517
      %v10582 = vadd.f32 %v9853, %v10522
      %v10583 = vadd.f32 %v9854, %v10525
      %v10584 = vadd.f32 %v9855, %v10530
      %v10585 = vadd.f32 %v9856, %v10533
      %v10586 = vadd.f32 %v9857, %v10538
      %v10587 = vadd.f32 %v9858, %v10541
      %v10588 = vadd.f32 %v9859, %v10546
      %v10589 = vadd.f32 %v9860, %v10549
      %v10590 = vadd.f32 %v9861, %v10554
      %v10591 = vadd.f32 %v9862, %v10557
      %v10592 = vld [vmem:[%s657] sm:$0xe]
      %v10593 = vld [vmem:[%s657 + $0xc] sm:$0xe]
      %v10594 = vld [vmem:[%s657 + $0x18] sm:$0xe]
      %v10595 = vld [vmem:[%s657 + $0x24] sm:$0xe]
      %v10596 = vld [vmem:[%s657 + $0x30] sm:$0xe]
      %v10597 = vld [vmem:[%s657 + $0x3c] sm:$0xe]
      %v10598 = vld [vmem:[%s657 + $0x48] sm:$0xe]
      %v10599 = vld [vmem:[%s657 + $0x54] sm:$0xe]
      %v10600 = vld [vmem:[%s657 + $0x60] sm:$0xe]
      %v10601 = vld [vmem:[%s657 + $0x6c] sm:$0xe]
      %v10602 = vld [vmem:[%s657 + $0x78] sm:$0xe]
      %v10603 = vld [vmem:[%s657 + $0x84] sm:$0xe]
      %v10604 = vld [vmem:[%s657 + $0x90] sm:$0xe]
      %v10605 = vld [vmem:[%s657 + $0x9c] sm:$0xe]
      %v10606 = vld [vmem:[%s657 + $0xa8] sm:$0xe]
      %v10607 = vld [vmem:[%s657 + $0xb4] sm:$0xe]
      %v10656 = vrot.slane %v10592, 5
      %v10657 = vrot.slane %v10656, 4
      %v10658 = vrot.slane %v9864, 5
      %v10659 = vsel %vm2020, %v10657, %v10658
      %v10660 = vrot.slane %v10658, 4
      %v10661 = vrot.slane %v9865, 5
      %v10662 = vsel %vm2020, %v10660, %v10661
      %v10663 = vrot.slane %v10593, 5
      %v10664 = vrot.slane %v10663, 4
      %v10665 = vrot.slane %v9867, 5
      %v10666 = vsel %vm2020, %v10664, %v10665
      %v10667 = vrot.slane %v10665, 4
      %v10668 = vrot.slane %v9868, 5
      %v10669 = vsel %vm2020, %v10667, %v10668
      %v10670 = vrot.slane %v10594, 5
      %v10671 = vrot.slane %v10670, 4
      %v10672 = vrot.slane %v9870, 5
      %v10673 = vsel %vm2020, %v10671, %v10672
      %v10674 = vrot.slane %v10672, 4
      %v10675 = vrot.slane %v9871, 5
      %v10676 = vsel %vm2020, %v10674, %v10675
      %v10677 = vrot.slane %v10595, 5
      %v10678 = vrot.slane %v10677, 4
      %v10679 = vrot.slane %v9873, 5
      %v10680 = vsel %vm2020, %v10678, %v10679
      %v10681 = vrot.slane %v10679, 4
      %v10682 = vrot.slane %v9874, 5
      %v10683 = vsel %vm2020, %v10681, %v10682
      %v10684 = vrot.slane %v10596, 5
      %v10685 = vrot.slane %v10684, 4
      %v10686 = vrot.slane %v9876, 5
      %v10687 = vsel %vm2020, %v10685, %v10686
      %v10688 = vrot.slane %v10686, 4
      %v10689 = vrot.slane %v9877, 5
      %v10690 = vsel %vm2020, %v10688, %v10689
      %v10691 = vrot.slane %v10597, 5
      %v10692 = vrot.slane %v10691, 4
      %v10693 = vrot.slane %v9879, 5
      %v10694 = vsel %vm2020, %v10692, %v10693
      %v10695 = vrot.slane %v10693, 4
      %v10696 = vrot.slane %v9880, 5
      %v10697 = vsel %vm2020, %v10695, %v10696
      %v10698 = vrot.slane %v10598, 5
      %v10699 = vrot.slane %v10698, 4
      %v10700 = vrot.slane %v9882, 5
      %v10701 = vsel %vm2020, %v10699, %v10700
      %v10702 = vrot.slane %v10700, 4
      %v10703 = vrot.slane %v9883, 5
      %v10704 = vsel %vm2020, %v10702, %v10703
      %v10705 = vrot.slane %v10599, 5
      %v10706 = vrot.slane %v10705, 4
      %v10707 = vrot.slane %v9885, 5
      %v10708 = vsel %vm2020, %v10706, %v10707
      %v10709 = vrot.slane %v10707, 4
      %v10710 = vrot.slane %v9886, 5
      %v10711 = vsel %vm2020, %v10709, %v10710
      %v10712 = vrot.slane %v10600, 5
      %v10713 = vrot.slane %v10712, 4
      %v10714 = vrot.slane %v9888, 5
      %v10715 = vsel %vm2020, %v10713, %v10714
      %v10716 = vrot.slane %v10714, 4
      %v10717 = vrot.slane %v9889, 5
      %v10718 = vsel %vm2020, %v10716, %v10717
      %v10719 = vrot.slane %v10601, 5
      %v10720 = vrot.slane %v10719, 4
      %v10721 = vrot.slane %v9891, 5
      %v10722 = vsel %vm2020, %v10720, %v10721
      %v10723 = vrot.slane %v10721, 4
      %v10724 = vrot.slane %v9892, 5
      %v10725 = vsel %vm2020, %v10723, %v10724
      %v10726 = vrot.slane %v10602, 5
      %v10727 = vrot.slane %v10726, 4
      %v10728 = vrot.slane %v9894, 5
      %v10729 = vsel %vm2020, %v10727, %v10728
      %v10730 = vrot.slane %v10728, 4
      %v10731 = vrot.slane %v9895, 5
      %v10732 = vsel %vm2020, %v10730, %v10731
      %v10733 = vrot.slane %v10603, 5
      %v10734 = vrot.slane %v10733, 4
      %v10735 = vrot.slane %v9897, 5
      %v10736 = vsel %vm2020, %v10734, %v10735
      %v10737 = vrot.slane %v10735, 4
      %v10738 = vrot.slane %v9898, 5
      %v10739 = vsel %vm2020, %v10737, %v10738
      %v10740 = vrot.slane %v10604, 5
      %v10741 = vrot.slane %v10740, 4
      %v10742 = vrot.slane %v9900, 5
      %v10743 = vsel %vm2020, %v10741, %v10742
      %v10744 = vrot.slane %v10742, 4
      %v10745 = vrot.slane %v9901, 5
      %v10746 = vsel %vm2020, %v10744, %v10745
      %v10747 = vrot.slane %v10605, 5
      %v10748 = vrot.slane %v10747, 4
      %v10749 = vrot.slane %v9903, 5
      %v10750 = vsel %vm2020, %v10748, %v10749
      %v10751 = vrot.slane %v10749, 4
      %v10752 = vrot.slane %v9904, 5
      %v10753 = vsel %vm2020, %v10751, %v10752
      %v10754 = vrot.slane %v10606, 5
      %v10755 = vrot.slane %v10754, 4
      %v10756 = vrot.slane %v9906, 5
      %v10757 = vsel %vm2020, %v10755, %v10756
      %v10758 = vrot.slane %v10756, 4
      %v10759 = vrot.slane %v9907, 5
      %v10760 = vsel %vm2020, %v10758, %v10759
      %v10761 = vrot.slane %v10607, 5
      %v10762 = vrot.slane %v10761, 4
      %v10763 = vrot.slane %v9909, 5
      %v10764 = vsel %vm2020, %v10762, %v10763
      %v10765 = vrot.slane %v10763, 4
      %v10766 = vrot.slane %v9910, 5
      %v10767 = vsel %vm2020, %v10765, %v10766
      %v10768 = vld [vmem:[%s2 + $0x10] sm:$0x3]
      %v10769 = vunpack.c.l.b16 %v10659
      %v10770 = vunpack.c.l.b16 %v10662
      %v10771 = vunpack.c.l.b16 %v10666
      %v10772 = vunpack.c.l.b16 %v10669
      %v10773 = vunpack.c.l.b16 %v10673
      %v10774 = vunpack.c.l.b16 %v10676
      %v10775 = vunpack.c.l.b16 %v10680
      %v10776 = vunpack.c.l.b16 %v10683
      %v10777 = vunpack.c.l.b16 %v10687
      %v10778 = vunpack.c.l.b16 %v10690
      %v10779 = vunpack.c.l.b16 %v10694
      %v10780 = vunpack.c.l.b16 %v10697
      %v10781 = vunpack.c.l.b16 %v10701
      %v10782 = vunpack.c.l.b16 %v10704
      %v10783 = vunpack.c.l.b16 %v10708
      %v10784 = vunpack.c.l.b16 %v10711
      %v10785 = vunpack.c.l.b16 %v10715
      %v10786 = vunpack.c.l.b16 %v10718
      %v10787 = vunpack.c.l.b16 %v10722
      %v10788 = vunpack.c.l.b16 %v10725
      %v10789 = vunpack.c.l.b16 %v10729
      %v10790 = vunpack.c.l.b16 %v10732
      %v10791 = vunpack.c.l.b16 %v10736
      %v10792 = vunpack.c.l.b16 %v10739
      %v10793 = vunpack.c.l.b16 %v10743
      %v10794 = vunpack.c.l.b16 %v10746
      %v10795 = vunpack.c.l.b16 %v10750
      %v10796 = vunpack.c.l.b16 %v10753
      %v10797 = vunpack.c.l.b16 %v10757
      %v10798 = vunpack.c.l.b16 %v10760
      %v10799 = vunpack.c.l.b16 %v10764
      %v10800 = vunpack.c.l.b16 %v10767
      %v10801 = vpack.c.b16 %v10770, %v10769
      %v10802 = vpack.c.b16 %v10772, %v10771
      %v10803 = vpack.c.b16 %v10774, %v10773
      %v10804 = vpack.c.b16 %v10776, %v10775
      %v10805 = vpack.c.b16 %v10778, %v10777
      %v10806 = vpack.c.b16 %v10780, %v10779
      %v10807 = vpack.c.b16 %v10782, %v10781
      %v10808 = vpack.c.b16 %v10784, %v10783
      %v10809 = vpack.c.b16 %v10786, %v10785
      %v10810 = vpack.c.b16 %v10788, %v10787
      %v10811 = vpack.c.b16 %v10790, %v10789
      %v10812 = vpack.c.b16 %v10792, %v10791
      %v10813 = vpack.c.b16 %v10794, %v10793
      %v10814 = vpack.c.b16 %v10796, %v10795
      %v10815 = vpack.c.b16 %v10798, %v10797
      %v10816 = vpack.c.b16 %v10800, %v10799
      %v10818 = vsel %vm1404, %v10801, 0
      %v10821 = vsel %vm1404, %v10802, 0
      %v10824 = vsel %vm1404, %v10803, 0
      %v10827 = vsel %vm1404, %v10804, 0
      %v10830 = vsel %vm1404, %v10805, 0
      %v10833 = vsel %vm1404, %v10806, 0
      %v10836 = vsel %vm1404, %v10807, 0
      %v10839 = vsel %vm1404, %v10808, 0
      %v10842 = vsel %vm1404, %v10809, 0
      %v10845 = vsel %vm1404, %v10810, 0
      %v10848 = vsel %vm1404, %v10811, 0
      %v10851 = vsel %vm1404, %v10812, 0
      %v10854 = vsel %vm1404, %v10813, 0
      %v10857 = vsel %vm1404, %v10814, 0
      %v10860 = vsel %vm1404, %v10815, 0
      %v10863 = vsel %vm1404, %v10816, 0
      %v10866 = vsel %vm1459, %v10768, 0
      %10868 = vmatprep.subr.bf16.mxu0 0
      %10869 = vmatpush1.bf16.msra.mxu0 0
      %10870 = vmatprep.subr.bf16.mxu0 0
      %10871 = vmatpush1.bf16.msra.mxu0 0
      %10872 = vmatprep.subr.bf16.mxu0 0
      %10873 = vmatpush1.bf16.msra.mxu0 0
      %10874 = vmatprep.subr.bf16.mxu0 0
      %10875 = vmatpush1.bf16.msra.mxu0 0
      %10876 = vmatprep.subr.bf16.mxu0 0
      %10877 = vmatpush1.bf16.msra.mxu0 0
      %10878 = vmatprep.subr.bf16.mxu0 0
      %10879 = vmatpush1.bf16.msra.mxu0 0
      %10880 = vmatprep.subr.bf16.mxu0 0
      %10881 = vmatpush1.bf16.msra.mxu0 0
      %10882 = vmatprep.subr.bf16.mxu0 0
      %10883 = vmatpush1.bf16.msra.mxu0 %v10866
      %10884 = vmatprep.subr.bf16.mxu0 0
      %10885 = vmatpush2.bf16.msra.mxu0 0
      %10886 = vmatprep.subr.bf16.mxu0 0
      %10887 = vmatpush2.bf16.msra.mxu0 0
      %10888 = vmatprep.subr.bf16.mxu0 0
      %10889 = vmatpush2.bf16.msra.mxu0 0
      %10890 = vmatprep.subr.bf16.mxu0 0
      %10891 = vmatpush2.bf16.msra.mxu0 0
      %10892 = vmatprep.subr.bf16.mxu0 0
      %10893 = vmatpush2.bf16.msra.mxu0 0
      %10894 = vmatprep.subr.bf16.mxu0 0
      %10895 = vmatpush2.bf16.msra.mxu0 0
      %10896 = vmatprep.subr.bf16.mxu0 0
      %10897 = vmatpush2.bf16.msra.mxu0 0
      %10898 = vmatprep.subr.bf16.mxu0 0
      %10899 = vmatpush2.bf16.msra.mxu0 0
      %10900 = vmatprep.mubr.bf16.mxu0 0
      %10901 = vmatmul.mubr.bf16.gmra.mxu0 %v10818
      %v10902 = vpop.f32.mrf.mxu0
      %v10903 = vadd.f32 0.0, %v10902
      %v10904 = vpop.f32.mrf.mxu0
      %v10905 = vpop.f32.mrf.mxu0
      %v10906 = vadd.f32 0.0, %v10905
      %v10907 = vpop.f32.mrf.mxu0
      %10908 = vmatprep.mubr.bf16.mxu0 0
      %10909 = vmatmul.mubr.bf16.gmra.mxu0 %v10821
      %v10910 = vpop.f32.mrf.mxu0
      %v10911 = vadd.f32 0.0, %v10910
      %v10912 = vpop.f32.mrf.mxu0
      %v10913 = vpop.f32.mrf.mxu0
      %v10914 = vadd.f32 0.0, %v10913
      %v10915 = vpop.f32.mrf.mxu0
      %10916 = vmatprep.mubr.bf16.mxu0 0
      %10917 = vmatmul.mubr.bf16.gmra.mxu0 %v10824
      %v10918 = vpop.f32.mrf.mxu0
      %v10919 = vadd.f32 0.0, %v10918
      %v10920 = vpop.f32.mrf.mxu0
      %v10921 = vpop.f32.mrf.mxu0
      %v10922 = vadd.f32 0.0, %v10921
      %v10923 = vpop.f32.mrf.mxu0
      %10924 = vmatprep.mubr.bf16.mxu0 0
      %10925 = vmatmul.mubr.bf16.gmra.mxu0 %v10827
      %v10926 = vpop.f32.mrf.mxu0
      %v10927 = vadd.f32 0.0, %v10926
      %v10928 = vpop.f32.mrf.mxu0
      %v10929 = vpop.f32.mrf.mxu0
      %v10930 = vadd.f32 0.0, %v10929
      %v10931 = vpop.f32.mrf.mxu0
      %10932 = vmatprep.mubr.bf16.mxu0 0
      %10933 = vmatmul.mubr.bf16.gmra.mxu0 %v10830
      %v10934 = vpop.f32.mrf.mxu0
      %v10935 = vadd.f32 0.0, %v10934
      %v10936 = vpop.f32.mrf.mxu0
      %v10937 = vpop.f32.mrf.mxu0
      %v10938 = vadd.f32 0.0, %v10937
      %v10939 = vpop.f32.mrf.mxu0
      %10940 = vmatprep.mubr.bf16.mxu0 0
      %10941 = vmatmul.mubr.bf16.gmra.mxu0 %v10833
      %v10942 = vpop.f32.mrf.mxu0
      %v10943 = vadd.f32 0.0, %v10942
      %v10944 = vpop.f32.mrf.mxu0
      %v10945 = vpop.f32.mrf.mxu0
      %v10946 = vadd.f32 0.0, %v10945
      %v10947 = vpop.f32.mrf.mxu0
      %10948 = vmatprep.mubr.bf16.mxu0 0
      %10949 = vmatmul.mubr.bf16.gmra.mxu0 %v10836
      %v10950 = vpop.f32.mrf.mxu0
      %v10951 = vadd.f32 0.0, %v10950
      %v10952 = vpop.f32.mrf.mxu0
      %v10953 = vpop.f32.mrf.mxu0
      %v10954 = vadd.f32 0.0, %v10953
      %v10955 = vpop.f32.mrf.mxu0
      %10956 = vmatprep.mubr.bf16.mxu0 0
      %10957 = vmatmul.mubr.bf16.gmra.mxu0 %v10839
      %v10958 = vpop.f32.mrf.mxu0
      %v10959 = vadd.f32 0.0, %v10958
      %v10960 = vpop.f32.mrf.mxu0
      %v10961 = vpop.f32.mrf.mxu0
      %v10962 = vadd.f32 0.0, %v10961
      %v10963 = vpop.f32.mrf.mxu0
      %10964 = vmatprep.mubr.bf16.mxu0 0
      %10965 = vmatmul.mubr.bf16.gmra.mxu0 %v10842
      %v10966 = vpop.f32.mrf.mxu0
      %v10967 = vadd.f32 0.0, %v10966
      %v10968 = vpop.f32.mrf.mxu0
      %v10969 = vpop.f32.mrf.mxu0
      %v10970 = vadd.f32 0.0, %v10969
      %v10971 = vpop.f32.mrf.mxu0
      %10972 = vmatprep.mubr.bf16.mxu0 0
      %10973 = vmatmul.mubr.bf16.gmra.mxu0 %v10845
      %v10974 = vpop.f32.mrf.mxu0
      %v10975 = vadd.f32 0.0, %v10974
      %v10976 = vpop.f32.mrf.mxu0
      %v10977 = vpop.f32.mrf.mxu0
      %v10978 = vadd.f32 0.0, %v10977
      %v10979 = vpop.f32.mrf.mxu0
      %10980 = vmatprep.mubr.bf16.mxu0 0
      %10981 = vmatmul.mubr.bf16.gmra.mxu0 %v10848
      %v10982 = vpop.f32.mrf.mxu0
      %v10983 = vadd.f32 0.0, %v10982
      %v10984 = vpop.f32.mrf.mxu0
      %v10985 = vpop.f32.mrf.mxu0
      %v10986 = vadd.f32 0.0, %v10985
      %v10987 = vpop.f32.mrf.mxu0
      %10988 = vmatprep.mubr.bf16.mxu0 0
      %10989 = vmatmul.mubr.bf16.gmra.mxu0 %v10851
      %v10990 = vpop.f32.mrf.mxu0
      %v10991 = vadd.f32 0.0, %v10990
      %v10992 = vpop.f32.mrf.mxu0
      %v10993 = vpop.f32.mrf.mxu0
      %v10994 = vadd.f32 0.0, %v10993
      %v10995 = vpop.f32.mrf.mxu0
      %10996 = vmatprep.mubr.bf16.mxu0 0
      %10997 = vmatmul.mubr.bf16.gmra.mxu0 %v10854
      %v10998 = vpop.f32.mrf.mxu0
      %v10999 = vadd.f32 0.0, %v10998
      %v11000 = vpop.f32.mrf.mxu0
      %v11001 = vpop.f32.mrf.mxu0
      %v11002 = vadd.f32 0.0, %v11001
      %v11003 = vpop.f32.mrf.mxu0
      %11004 = vmatprep.mubr.bf16.mxu0 0
      %11005 = vmatmul.mubr.bf16.gmra.mxu0 %v10857
      %v11006 = vpop.f32.mrf.mxu0
      %v11007 = vadd.f32 0.0, %v11006
      %v11008 = vpop.f32.mrf.mxu0
      %v11009 = vpop.f32.mrf.mxu0
      %v11010 = vadd.f32 0.0, %v11009
      %v11011 = vpop.f32.mrf.mxu0
      %11012 = vmatprep.mubr.bf16.mxu0 0
      %11013 = vmatmul.mubr.bf16.gmra.mxu0 %v10860
      %v11014 = vpop.f32.mrf.mxu0
      %v11015 = vadd.f32 0.0, %v11014
      %v11016 = vpop.f32.mrf.mxu0
      %v11017 = vpop.f32.mrf.mxu0
      %v11018 = vadd.f32 0.0, %v11017
      %v11019 = vpop.f32.mrf.mxu0
      %11020 = vmatprep.mubr.bf16.mxu0 0
      %11021 = vmatmul.mubr.bf16.gmra.mxu0 %v10863
      %v11022 = vpop.f32.mrf.mxu0
      %v11023 = vadd.f32 0.0, %v11022
      %v11024 = vpop.f32.mrf.mxu0
      %v11025 = vpop.f32.mrf.mxu0
      %v11026 = vadd.f32 0.0, %v11025
      %v11027 = vpop.f32.mrf.mxu0
      %11028 = vdwg.mxu0
      %v11029 = vadd.f32 %v10560, %v10903
      %v11030 = vadd.f32 %v10561, %v10906
      %v11031 = vadd.f32 %v10562, %v10911
      %v11032 = vadd.f32 %v10563, %v10914
      %v11033 = vadd.f32 %v10564, %v10919
      %v11034 = vadd.f32 %v10565, %v10922
      %v11035 = vadd.f32 %v10566, %v10927
      %v11036 = vadd.f32 %v10567, %v10930
      %v11037 = vadd.f32 %v10568, %v10935
      %v11038 = vadd.f32 %v10569, %v10938
      %v11039 = vadd.f32 %v10570, %v10943
      %v11040 = vadd.f32 %v10571, %v10946
      %v11041 = vadd.f32 %v10572, %v10951
      %v11042 = vadd.f32 %v10573, %v10954
      %v11043 = vadd.f32 %v10574, %v10959
      %v11044 = vadd.f32 %v10575, %v10962
      %v11045 = vadd.f32 %v10576, %v10967
      %v11046 = vadd.f32 %v10577, %v10970
      %v11047 = vadd.f32 %v10578, %v10975
      %v11048 = vadd.f32 %v10579, %v10978
      %v11049 = vadd.f32 %v10580, %v10983
      %v11050 = vadd.f32 %v10581, %v10986
      %v11051 = vadd.f32 %v10582, %v10991
      %v11052 = vadd.f32 %v10583, %v10994
      %v11053 = vadd.f32 %v10584, %v10999
      %v11054 = vadd.f32 %v10585, %v11002
      %v11055 = vadd.f32 %v10586, %v11007
      %v11056 = vadd.f32 %v10587, %v11010
      %v11057 = vadd.f32 %v10588, %v11015
      %v11058 = vadd.f32 %v10589, %v11018
      %v11059 = vadd.f32 %v10590, %v11023
      %v11060 = vadd.f32 %v10591, %v11026
      %v11061 = vld [vmem:[%s4] sm:$0x1]
      %v11063 = vlaneseq
      %v11064 = vshrl.u32 %v11063, 7
      %v11065 = vsub.s32 0, %v11064
      %v11066 = vrot.slane %v11061, %v11065
      %v11068 = vadd.f32 %v11029, %v11066
      %v11069 = vadd.f32 %v11030, %v11066
      %v11070 = vadd.f32 %v11031, %v11066
      %v11071 = vadd.f32 %v11032, %v11066
      %v11072 = vadd.f32 %v11033, %v11066
      %v11073 = vadd.f32 %v11034, %v11066
      %v11074 = vadd.f32 %v11035, %v11066
      %v11075 = vadd.f32 %v11036, %v11066
      %v11076 = vadd.f32 %v11037, %v11066
      %v11077 = vadd.f32 %v11038, %v11066
      %v11078 = vadd.f32 %v11039, %v11066
      %v11079 = vadd.f32 %v11040, %v11066
      %v11080 = vadd.f32 %v11041, %v11066
      %v11081 = vadd.f32 %v11042, %v11066
      %v11082 = vadd.f32 %v11043, %v11066
      %v11083 = vadd.f32 %v11044, %v11066
      %v11084 = vadd.f32 %v11045, %v11066
      %v11085 = vadd.f32 %v11046, %v11066
      %v11086 = vadd.f32 %v11047, %v11066
      %v11087 = vadd.f32 %v11048, %v11066
      %v11088 = vadd.f32 %v11049, %v11066
      %v11089 = vadd.f32 %v11050, %v11066
      %v11090 = vadd.f32 %v11051, %v11066
      %v11091 = vadd.f32 %v11052, %v11066
      %v11092 = vadd.f32 %v11053, %v11066
      %v11093 = vadd.f32 %v11054, %v11066
      %v11094 = vadd.f32 %v11055, %v11066
      %v11095 = vadd.f32 %v11056, %v11066
      %v11096 = vadd.f32 %v11057, %v11066
      %v11097 = vadd.f32 %v11058, %v11066
      %v11098 = vadd.f32 %v11059, %v11066
      %v11099 = vadd.f32 %v11060, %v11066
      %v11100 = vld [vmem:[%s253] sm:$0xff]
      %v11101 = vld [vmem:[%s253 + $0x8] sm:$0xff]
      %v11102 = vld [vmem:[%s253 + $0x10] sm:$0xff]
      %v11103 = vld [vmem:[%s253 + $0x18] sm:$0xff]
      %v11104 = vld [vmem:[%s253 + $0x20] sm:$0xff]
      %v11105 = vld [vmem:[%s253 + $0x28] sm:$0xff]
      %v11106 = vld [vmem:[%s253 + $0x30] sm:$0xff]
      %v11107 = vld [vmem:[%s253 + $0x38] sm:$0xff]
      %v11108 = vld [vmem:[%s253 + $0x40] sm:$0xff]
      %v11109 = vld [vmem:[%s253 + $0x48] sm:$0xff]
      %v11110 = vld [vmem:[%s253 + $0x50] sm:$0xff]
      %v11111 = vld [vmem:[%s253 + $0x58] sm:$0xff]
      %v11112 = vld [vmem:[%s253 + $0x60] sm:$0xff]
      %v11113 = vld [vmem:[%s253 + $0x68] sm:$0xff]
      %v11114 = vld [vmem:[%s253 + $0x70] sm:$0xff]
      %v11115 = vld [vmem:[%s253 + $0x78] sm:$0xff]
      %v11116 = vld [vmem:[%s253 + $0x80] sm:$0xff]
      %v11117 = vld [vmem:[%s253 + $0x88] sm:$0xff]
      %v11118 = vld [vmem:[%s253 + $0x90] sm:$0xff]
      %v11119 = vld [vmem:[%s253 + $0x98] sm:$0xff]
      %v11120 = vld [vmem:[%s253 + $0xa0] sm:$0xff]
      %v11121 = vld [vmem:[%s253 + $0xa8] sm:$0xff]
      %v11122 = vld [vmem:[%s253 + $0xb0] sm:$0xff]
      %v11123 = vld [vmem:[%s253 + $0xb8] sm:$0xff]
      %v11124 = vld [vmem:[%s253 + $0xc0] sm:$0xff]
      %v11125 = vld [vmem:[%s253 + $0xc8] sm:$0xff]
      %v11126 = vld [vmem:[%s253 + $0xd0] sm:$0xff]
      %v11127 = vld [vmem:[%s253 + $0xd8] sm:$0xff]
      %v11128 = vld [vmem:[%s253 + $0xe0] sm:$0xff]
      %v11129 = vld [vmem:[%s253 + $0xe8] sm:$0xff]
      %v11130 = vld [vmem:[%s253 + $0xf0] sm:$0xff]
      %v11131 = vld [vmem:[%s253 + $0xf8] sm:$0xff]
      %v11132 = vadd.f32 %v11068, %v11100
      %v11133 = vadd.f32 %v11069, %v11101
      %v11134 = vadd.f32 %v11070, %v11102
      %v11135 = vadd.f32 %v11071, %v11103
      %v11136 = vadd.f32 %v11072, %v11104
      %v11137 = vadd.f32 %v11073, %v11105
      %v11138 = vadd.f32 %v11074, %v11106
      %v11139 = vadd.f32 %v11075, %v11107
      %v11140 = vadd.f32 %v11076, %v11108
      %v11141 = vadd.f32 %v11077, %v11109
      %v11142 = vadd.f32 %v11078, %v11110
      %v11143 = vadd.f32 %v11079, %v11111
      %v11144 = vadd.f32 %v11080, %v11112
      %v11145 = vadd.f32 %v11081, %v11113
      %v11146 = vadd.f32 %v11082, %v11114
      %v11147 = vadd.f32 %v11083, %v11115
      %v11148 = vadd.f32 %v11084, %v11116
      %v11149 = vadd.f32 %v11085, %v11117
      %v11150 = vadd.f32 %v11086, %v11118
      %v11151 = vadd.f32 %v11087, %v11119
      %v11152 = vadd.f32 %v11088, %v11120
      %v11153 = vadd.f32 %v11089, %v11121
      %v11154 = vadd.f32 %v11090, %v11122
      %v11155 = vadd.f32 %v11091, %v11123
      %v11156 = vadd.f32 %v11092, %v11124
      %v11157 = vadd.f32 %v11093, %v11125
      %v11158 = vadd.f32 %v11094, %v11126
      %v11159 = vadd.f32 %v11095, %v11127
      %v11160 = vadd.f32 %v11096, %v11128
      %v11161 = vadd.f32 %v11097, %v11129
      %v11162 = vadd.f32 %v11098, %v11130
      %v11163 = vadd.f32 %v11099, %v11131
      %11164 = vst.msk [vmem:[%s248] sm:$0xff] %vm1404, %v11132
      %11165 = vst.msk [vmem:[%s248 + $0x8] sm:$0xff] %vm1404, %v11133
      %11166 = vst.msk [vmem:[%s248 + $0x10] sm:$0xff] %vm1404, %v11134
      %11167 = vst.msk [vmem:[%s248 + $0x18] sm:$0xff] %vm1404, %v11135
      %11168 = vst.msk [vmem:[%s248 + $0x20] sm:$0xff] %vm1404, %v11136
      %11169 = vst.msk [vmem:[%s248 + $0x28] sm:$0xff] %vm1404, %v11137
      %11170 = vst.msk [vmem:[%s248 + $0x30] sm:$0xff] %vm1404, %v11138
      %11171 = vst.msk [vmem:[%s248 + $0x38] sm:$0xff] %vm1404, %v11139
      %11172 = vst.msk [vmem:[%s248 + $0x40] sm:$0xff] %vm1404, %v11140
      %11173 = vst.msk [vmem:[%s248 + $0x48] sm:$0xff] %vm1404, %v11141
      %11174 = vst.msk [vmem:[%s248 + $0x50] sm:$0xff] %vm1404, %v11142
      %11175 = vst.msk [vmem:[%s248 + $0x58] sm:$0xff] %vm1404, %v11143
      %11176 = vst.msk [vmem:[%s248 + $0x60] sm:$0xff] %vm1404, %v11144
      %11177 = vst.msk [vmem:[%s248 + $0x68] sm:$0xff] %vm1404, %v11145
      %11178 = vst.msk [vmem:[%s248 + $0x70] sm:$0xff] %vm1404, %v11146
      %11179 = vst.msk [vmem:[%s248 + $0x78] sm:$0xff] %vm1404, %v11147
      %11180 = vst.msk [vmem:[%s248 + $0x80] sm:$0xff] %vm1404, %v11148
      %11181 = vst.msk [vmem:[%s248 + $0x88] sm:$0xff] %vm1404, %v11149
      %11182 = vst.msk [vmem:[%s248 + $0x90] sm:$0xff] %vm1404, %v11150
      %11183 = vst.msk [vmem:[%s248 + $0x98] sm:$0xff] %vm1404, %v11151
      %11184 = vst.msk [vmem:[%s248 + $0xa0] sm:$0xff] %vm1404, %v11152
      %11185 = vst.msk [vmem:[%s248 + $0xa8] sm:$0xff] %vm1404, %v11153
      %11186 = vst.msk [vmem:[%s248 + $0xb0] sm:$0xff] %vm1404, %v11154
      %11187 = vst.msk [vmem:[%s248 + $0xb8] sm:$0xff] %vm1404, %v11155
      %11188 = vst.msk [vmem:[%s248 + $0xc0] sm:$0xff] %vm1404, %v11156
      %11189 = vst.msk [vmem:[%s248 + $0xc8] sm:$0xff] %vm1404, %v11157
      %11190 = vst.msk [vmem:[%s248 + $0xd0] sm:$0xff] %vm1404, %v11158
      %11191 = vst.msk [vmem:[%s248 + $0xd8] sm:$0xff] %vm1404, %v11159
      %11192 = vst.msk [vmem:[%s248 + $0xe0] sm:$0xff] %vm1404, %v11160
      %11193 = vst.msk [vmem:[%s248 + $0xe8] sm:$0xff] %vm1404, %v11161
      %11194 = vst.msk [vmem:[%s248 + $0xf0] sm:$0xff] %vm1404, %v11162
      %11195 = vst.msk [vmem:[%s248 + $0xf8] sm:$0xff] %vm1404, %v11163
      %s11196 = smul.u32 16, %s21
      %p11197 = scmp.lt.s32.totalorder %s20, 1
      %s11198 = scalar_select %p11197, %s20, 1
      %p11199 = scmp.lt.s32.totalorder %s11196, 15
      %s11200 = scalar_select %p11199, %s11196, 15
      %s11201 = smul.addr %s11200, 2
      %s11202 = smul.addr %s11198, 32
      %s11203 = sadd.s32 %s11201, %s11202
      %s11204 = smul.addr %s11203, 8
      %s11205 = scalar_lea.vmem %s5, %s11204
      // Predicated region
      $region61: #{tpu_custom_call.1} parent=39 // pred_check
        %p11206 = pneg %p158
      $region62: #{tpu_custom_call.1} parent=39 // pred_check_branch
        %11208 = sbr.rel (%p11206) target = $region64
      $region63: #{tpu_custom_call.1} parent=39 // pred_region
        %s11209 = smul.u32 16, %s21
      $region64: #{tpu_custom_call.1} parent=39 // pred_fallthru
        _
    $region40: #{tpu_custom_call.1} parent=5 // pred_fallthru
      _
    %p11210 = scmp.le.s32.totalorder 2, %s11
    // Predicated region
    $region65: #{tpu_custom_call.1} parent=5 // pred_check
      %p11211 = pneg %p11210
    $region66: #{tpu_custom_call.1} parent=5 // pred_check_branch
      %11213 = sbr.rel (%p11211) target = $region68
    $region67: #{tpu_custom_call.1} parent=5 // pred_region
      %s11214 = ssub.s32 %s11, 2
      // Predicated region
      $region69: #{tpu_custom_call.1} parent=67 // pred_check
        %p11215 = pneg %p164
      $region70: #{tpu_custom_call.1} parent=67 // pred_check_branch
        %11217 = sbr.rel (%p11215) target = $region72
      $region71: #{tpu_custom_call.1} parent=67 // pred_region
        %s11218 = smul.u32 16, %s23
        %p11219 = scmp.lt.s32.totalorder %s22, 1
        %s11220 = scalar_select %p11219, %s22, 1
        %p11221 = scmp.lt.s32.totalorder %s11218, 15
        %s11222 = scalar_select %p11221, %s11218, 15
        %s11223 = smul.addr %s11222, 2
        %s11224 = smul.addr %s11220, 32
        %s11225 = sadd.s32 %s11223, %s11224
        %s11226 = smul.addr %s11225, 8
        %s11227 = scalar_lea.vmem %s5, %s11226
      $region72: #{tpu_custom_call.1} parent=67 // pred_fallthru
        _
    $region68: #{tpu_custom_call.1} parent=5 // pred_fallthru
      _
  $region6: #{tpu_custom_call.1} parent=0 // loop_footer
    %s15 = sadd.s32 1, %s11
  $region7: #{tpu_custom_call.1} parent=0 // loop_footer_branch
    %10 = sbr.rel target = $region3
  $region8: #{tpu_custom_call.1} parent=0 // loop_exit
    _

</llo_original>
